<compile_context>
chip_gen: v7x
topology: tpu7x:2x2x1
jax: 0.10.0
libtpu: 0.0.40
codegen_flags: <defaults>
</compile_context>

<pallas_src>
import functools
import math

import jax
import jax.numpy as jnp
from jax.experimental import pallas as pl
from jax.experimental.pallas import tpu as pltpu


# ------------------------------ fused kernel ------------------------------- #

def _adapter_layer_kernel(
    x_ref, bias_ref,
    w_qkv_ref, b_qkv_ref, w_o_ref, b_o_ref,
    w_ff1_ref, b_ff1_ref, w_ff2_ref, b_ff2_ref,
    w_a1_ref, b_a1_ref, w_a2_ref, b_a2_ref,
    gamma_ref, beta_ref,
    o_ref,
    *, num_heads, eps, mxu_dtype):
    Bblk, _, S = bias_ref.shape              # bias block: (Bblk, 1, S)
    BS, D = x_ref.shape                      # x block:    (Bblk*S, D)
    H = num_heads
    Dh = D // H
    scale = 1.0 / math.sqrt(Dh)

    def mm(a, b):                            # MXU matmul, bf16 operands, f32 acc
        return jnp.dot(a.astype(mxu_dtype), b.astype(mxu_dtype),
                       preferred_element_type=jnp.float32)

    def ln(z):                               # LayerNorm (no affine), f32 stats
        mu = jnp.mean(z, axis=-1, keepdims=True)
        var = jnp.mean((z - mu) ** 2, axis=-1, keepdims=True)
        return (z - mu) * jax.lax.rsqrt(var + eps)

    # ---- fused Q/K/V projection: one wide (rows, D) @ (D, 3D) matmul ------
    qkv = mm(x_ref[...], w_qkv_ref[...]) + b_qkv_ref[...]          # (BS, 3D) f32

    # ---- multi-head self-attention, batch & heads statically unrolled -----
    attn_rows = []
    for bi in range(Bblk):
        r0 = bi * S
        bias_b = bias_ref[bi]                                       # (1, S) f32
        attn_b = None
        for h in range(H):
            c = h * Dh
            q_h = qkv[r0:r0 + S, c:c + Dh]                          # (S, Dh)
            k_h = qkv[r0:r0 + S, D + c:D + c + Dh]                  # (S, Dh)
            s = jax.lax.dot_general(                                # q @ k^T
                q_h.astype(mxu_dtype), k_h.astype(mxu_dtype),
                (((1,), (1,)), ((), ())),
                preferred_element_type=jnp.float32)
            s = s * scale + bias_b                                  # (S, S) f32
            m = jnp.max(s, axis=-1, keepdims=True)
            p = jnp.exp(s - m)
            l = jnp.sum(p, axis=-1, keepdims=True)
            v_h = qkv[r0:r0 + S, 2 * D + c:2 * D + c + Dh]          # (S, Dh)
            # deferred softmax normalisation: scale the (S, Dh) output, not p
            o_h = mm(p, v_h) * pl.reciprocal(l, approx=True)
            # out-proj folded per head: concat_h(o_h) @ W_o == sum_h o_h @ W_o[h]
            contrib = mm(o_h, w_o_ref[h])
            attn_b = contrib if attn_b is None else attn_b + contrib
        attn_rows.append(attn_b)
    attn = attn_rows[0] if Bblk == 1 else jnp.concatenate(attn_rows, axis=0)

    # ---- layer_norm(input + attn) ------------------------------------------
    x1 = ln(x_ref[...] + attn + b_o_ref[...])

    # ---- feed-forward -------------------------------------------------------
    h1 = jnp.maximum(mm(x1, w_ff1_ref[...]) + b_ff1_ref[...], 0.0)
    x2 = ln(x1 + mm(h1, w_ff2_ref[...]) + b_ff2_ref[...])

    # ---- adapter bottleneck (+ residual) ------------------------------------
    a1 = jnp.maximum(mm(x2, w_a1_ref[...]) + b_a1_ref[...], 0.0)
    adapter = x2 + mm(a1, w_a2_ref[...]) + b_a2_ref[...]

    # ---- trainable LayerNorm(input + adapter(x)) ----------------------------
    out = ln(x_ref[...] + adapter) * gamma_ref[...] + beta_ref[...]
    o_ref[...] = out.astype(o_ref.dtype)


# ------------------------------ python wrapper ------------------------------ #

_WEIGHT_NAMES = ("w_qkv", "b_qkv", "w_o", "b_o",
                 "w_ff1", "b_ff1", "w_ff2", "b_ff2",
                 "w_a1", "b_a1", "w_a2", "b_a2",
                 "gamma", "beta")


def _default_batch_per_step(batch):
    """v7x has 2 TensorCores/chip -> one batch element per 'parallel' grid step;
    single-TC chips (v5e/v6e) fold the whole batch into one step."""
    try:
        kind = jax.devices()[0].device_kind.lower()
    except Exception:
        kind = ""
    if "v7" in kind:
        return 1
    return batch


def adapter_transformer_encoder_layer(x, src_mask, src_key_padding_mask, params,
                                      *, num_heads, eps=1e-5,
                                      batch_per_step=None,
                                      mxu_dtype=jnp.bfloat16):
    """Forward of AdapterTransformerEncoderLayer (batch_first, eval mode).

    x: (B, S, D) float32; src_key_padding_mask: (B, S) bool (True == padded key).
    src_mask is accepted but unused, matching the PyTorch module.
    """
    del src_mask
    B, S, D = x.shape
    if batch_per_step is None:
        batch_per_step = _default_batch_per_step(B)
    Bblk = batch_per_step
    assert B % Bblk == 0
    grid = (B // Bblk,)

    # key_padding_mask -> additive key bias, f32 (-1e9 instead of -inf).
    bias = jnp.where(src_key_padding_mask,
                     jnp.float32(-1e9), jnp.float32(0.0))[:, None, :]     # (B, 1, S)

    x_flat = x.reshape(B * S, D)   # rows = batch*seq; per-step block = Bblk*S rows

    def resident(a):  # whole-array block, constant index -> stays VMEM-resident
        n = a.ndim
        return pl.BlockSpec(a.shape, lambda g, n=n: (0,) * n)

    weights = [params[name] for name in _WEIGHT_NAMES]

    kernel = functools.partial(_adapter_layer_kernel, num_heads=num_heads,
                               eps=eps, mxu_dtype=mxu_dtype)
    out_flat = pl.pallas_call(
        kernel,
        out_shape=jax.ShapeDtypeStruct((B * S, D), x.dtype),
        grid=grid,
        in_specs=[pl.BlockSpec((Bblk * S, D), lambda g: (g, 0)),
                  pl.BlockSpec((Bblk, 1, S), lambda g: (g, 0, 0))]
                 + [resident(w) for w in weights],
        out_specs=pl.BlockSpec((Bblk * S, D), lambda g: (g, 0)),
        compiler_params=pltpu.CompilerParams(
            dimension_semantics=("parallel",)),      # megacore-friendly batch axis
    )(x_flat, bias, *weights)
    return out_flat.reshape(B, S, D)


# --------------------------- synthetic parameters --------------------------- #

def init_params(key, d, num_heads, dim_ff, bottleneck):
    dh = d // num_heads

    def nxt():
        nonlocal key
        key, sub = jax.random.split(key)
        return sub

    def w(shape, scale=0.1):
        return (scale * jax.random.normal(nxt(), shape)).astype(jnp.float32)

    return dict(
        # fused Q/K/V projection (columns: [q heads | k heads | v heads])
        w_qkv=w((d, 3 * d)), b_qkv=w((1, 3 * d)),
        # output projection, per-head leading axis (folded inside the head loop)
        w_o=w((num_heads, dh, d)), b_o=w((1, d)),
        # feed-forward
        w_ff1=w((d, dim_ff)), b_ff1=w((1, dim_ff)),
        w_ff2=w((dim_ff, d)), b_ff2=w((1, d)),
        # adapter bottleneck
        w_a1=w((d, bottleneck)), b_a1=w((1, bottleneck)),
        w_a2=w((bottleneck, d)), b_a2=w((1, d)),
        # trainable LayerNorm affine
        gamma=(1.0 + w((1, d))).astype(jnp.float32), beta=w((1, d)),
    )


# --------------------------- pure-JAX reference ----------------------------- #

def _ln_ref(z, eps=1e-5):
    mu = jnp.mean(z, axis=-1, keepdims=True)
    var = jnp.mean((z - mu) ** 2, axis=-1, keepdims=True)
    return (z - mu) * jax.lax.rsqrt(var + eps)


def reference_forward(x, src_mask, key_padding_mask, p, num_heads, eps=1e-5):
    del src_mask
    B, S, D = x.shape
    H = num_heads
    Dh = D // H

    w_qkv = p["w_qkv"]
    b_qkv = p["b_qkv"].reshape(-1)
    w_q, w_k, w_v = w_qkv[:, :D], w_qkv[:, D:2 * D], w_qkv[:, 2 * D:]
    b_q, b_k, b_v = b_qkv[:D], b_qkv[D:2 * D], b_qkv[2 * D:]
    w_o = p["w_o"].reshape(D, D)
    b_o = p["b_o"].reshape(D)

    bias = jnp.where(key_padding_mask, -1e9, 0.0)[:, None, None, :]        # (B,1,1,S)

    def split(t):
        return t.reshape(B, S, H, Dh).transpose(0, 2, 1, 3)

    q = split(x @ w_q + b_q)
    k = split(x @ w_k + b_k)
    v = split(x @ w_v + b_v)
    s = q @ jnp.swapaxes(k, -1, -2) / math.sqrt(Dh) + bias
    a = jax.nn.softmax(s, axis=-1)
    attn = (a @ v).transpose(0, 2, 1, 3).reshape(B, S, D) @ w_o + b_o

    x1 = _ln_ref(x + attn, eps)
    ff = (jax.nn.relu(x1 @ p["w_ff1"] + p["b_ff1"].reshape(-1)) @ p["w_ff2"]
          + p["b_ff2"].reshape(-1))
    x2 = _ln_ref(x1 + ff, eps)
    adapter = x2 + (jax.nn.relu(x2 @ p["w_a1"] + p["b_a1"].reshape(-1)) @ p["w_a2"]
                    + p["b_a2"].reshape(-1))
    out = _ln_ref(x + adapter, eps) * p["gamma"].reshape(D) + p["beta"].reshape(D)
    return out


# ----------------------------------- main ----------------------------------- #

if __name__ == "__main__":
    input_size, num_heads, dim_feedforward, bottleneck = 32, 4, 64, 16
    B, S = 2, 128

    key = jax.random.PRNGKey(0)
    k_x, k_p = jax.random.split(key)
    x = jax.random.normal(k_x, (B, S, input_size), dtype=jnp.float32)

    # key_padding_mask: True == padded (ignored) key; batch 1 has a padded tail.
    lengths = jnp.array([S, 96], dtype=jnp.int32)
    key_padding_mask = jnp.arange(S)[None, :] >= lengths[:, None]          # (B, S) bool

    params = init_params(k_p, input_size, num_heads, dim_feedforward, bottleneck)

    fwd = jax.jit(functools.partial(adapter_transformer_encoder_layer,
                                    num_heads=num_heads))
    out = jax.block_until_ready(fwd(x, None, key_padding_mask, params))

    ref = reference_forward(x, None, key_padding_mask, params, num_heads)
    assert out.shape == (B, S, input_size)
    max_err = float(jnp.max(jnp.abs(out - ref)))
    # bf16 MXU operands + approx softmax reciprocal -> small deviation vs f32 ref
    assert jnp.allclose(out, ref, atol=2e-2, rtol=2e-2), \
        f"mismatch vs pure-JAX reference (max abs err {max_err})"

    print("KERNEL_OK")
</pallas_src>

<mosaic_0001>
module attributes {stable_mosaic.version = 11 : i64} {
  func.func @_adapter_layer_kernel(%arg0: i32, %arg1: memref<256x32xf32, #tpu.memory_space<vmem>>, %arg2: memref<2x1x128xf32, #tpu.memory_space<vmem>>, %arg3: memref<32x96xf32, #tpu.memory_space<vmem>>, %arg4: memref<1x96xf32, #tpu.memory_space<vmem>>, %arg5: memref<4x8x32xf32, #tpu.memory_space<vmem>>, %arg6: memref<1x32xf32, #tpu.memory_space<vmem>>, %arg7: memref<32x64xf32, #tpu.memory_space<vmem>>, %arg8: memref<1x64xf32, #tpu.memory_space<vmem>>, %arg9: memref<64x32xf32, #tpu.memory_space<vmem>>, %arg10: memref<1x32xf32, #tpu.memory_space<vmem>>, %arg11: memref<32x16xf32, #tpu.memory_space<vmem>>, %arg12: memref<1x16xf32, #tpu.memory_space<vmem>>, %arg13: memref<16x32xf32, #tpu.memory_space<vmem>>, %arg14: memref<1x32xf32, #tpu.memory_space<vmem>>, %arg15: memref<1x32xf32, #tpu.memory_space<vmem>>, %arg16: memref<1x32xf32, #tpu.memory_space<vmem>>, %arg17: memref<256x32xf32, #tpu.memory_space<vmem>>) attributes {dimension_semantics = [#tpu.dimension_semantics<parallel>], iteration_bounds = array<i64: 1>, scalar_prefetch = 0 : i64, scratch_operands = 0 : i64, tpu.core_type = #tpu.core_type<tc>, window_params = [{transform_indices = @transform_0, window_bounds = array<i64: 256, 32>}, {transform_indices = @transform_1, window_bounds = array<i64: 2, 1, 128>}, {pipeline_mode = #tpu.pipeline_mode<synchronous>, transform_indices = @transform_2, window_bounds = array<i64: 32, 96>}, {pipeline_mode = #tpu.pipeline_mode<synchronous>, transform_indices = @transform_3, window_bounds = array<i64: 1, 96>}, {pipeline_mode = #tpu.pipeline_mode<synchronous>, transform_indices = @transform_4, window_bounds = array<i64: 4, 8, 32>}, {pipeline_mode = #tpu.pipeline_mode<synchronous>, transform_indices = @transform_5, window_bounds = array<i64: 1, 32>}, {pipeline_mode = #tpu.pipeline_mode<synchronous>, transform_indices = @transform_6, window_bounds = array<i64: 32, 64>}, {pipeline_mode = #tpu.pipeline_mode<synchronous>, transform_indices = @transform_7, window_bounds = array<i64: 1, 64>}, {pipeline_mode = #tpu.pipeline_mode<synchronous>, transform_indices = @transform_8, window_bounds = array<i64: 64, 32>}, {pipeline_mode = #tpu.pipeline_mode<synchronous>, transform_indices = @transform_9, window_bounds = array<i64: 1, 32>}, {pipeline_mode = #tpu.pipeline_mode<synchronous>, transform_indices = @transform_10, window_bounds = array<i64: 32, 16>}, {pipeline_mode = #tpu.pipeline_mode<synchronous>, transform_indices = @transform_11, window_bounds = array<i64: 1, 16>}, {pipeline_mode = #tpu.pipeline_mode<synchronous>, transform_indices = @transform_12, window_bounds = array<i64: 16, 32>}, {pipeline_mode = #tpu.pipeline_mode<synchronous>, transform_indices = @transform_13, window_bounds = array<i64: 1, 32>}, {pipeline_mode = #tpu.pipeline_mode<synchronous>, transform_indices = @transform_14, window_bounds = array<i64: 1, 32>}, {pipeline_mode = #tpu.pipeline_mode<synchronous>, transform_indices = @transform_15, window_bounds = array<i64: 1, 32>}, {transform_indices = @transform_16, window_bounds = array<i64: 256, 32>}]} {
    %c0 = arith.constant 0 : index
    %c0_0 = arith.constant 0 : index
    %0 = vector.load %arg1[%c0, %c0_0] : memref<256x32xf32, #tpu.memory_space<vmem>>, vector<256x32xf32>
    %c0_1 = arith.constant 0 : index
    %c0_2 = arith.constant 0 : index
    %1 = vector.load %arg3[%c0_1, %c0_2] : memref<32x96xf32, #tpu.memory_space<vmem>>, vector<32x96xf32>
    %2 = arith.truncf %0 : vector<256x32xf32> to vector<256x32xbf16>
    %3 = arith.truncf %1 : vector<32x96xf32> to vector<32x96xbf16>
    %cst = arith.constant dense<0.000000e+00> : vector<256x96xf32>
    %4 = tpu.matmul %2, %3, %cst {dimension_numbers = #tpu.dot_dimension_numbers<[1], [0], [0], [1], [0, 0, 1, 1], [], []>} : vector<256x32xbf16>, vector<32x96xbf16>, vector<256x96xf32> -> vector<256x96xf32>
    %c0_3 = arith.constant 0 : index
    %c0_4 = arith.constant 0 : index
    %5 = vector.load %arg4[%c0_3, %c0_4] : memref<1x96xf32, #tpu.memory_space<vmem>>, vector<1x96xf32>
    %6 = vector.broadcast %5 : vector<1x96xf32> to vector<256x96xf32>
    %7 = arith.addf %4, %6 : vector<256x96xf32>
    %c0_5 = arith.constant 0 : index
    %c0_6 = arith.constant 0 : index
    %c0_7 = arith.constant 0 : index
    %8 = vector.load %arg2[%c0_5, %c0_6, %c0_7] : memref<2x1x128xf32, #tpu.memory_space<vmem>>, vector<1x1x128xf32>
    %9 = vector.shape_cast %8 : vector<1x1x128xf32> to vector<1x128xf32>
    %10 = vector.extract_strided_slice %7 {offsets = [0, 0], sizes = [128, 8], strides = [1, 1]} : vector<256x96xf32> to vector<128x8xf32>
    %11 = vector.extract_strided_slice %7 {offsets = [0, 32], sizes = [128, 8], strides = [1, 1]} : vector<256x96xf32> to vector<128x8xf32>
    %12 = arith.truncf %10 : vector<128x8xf32> to vector<128x8xbf16>
    %13 = arith.truncf %11 : vector<128x8xf32> to vector<128x8xbf16>
    %cst_8 = arith.constant dense<0.000000e+00> : vector<128x128xf32>
    %14 = tpu.matmul %12, %13, %cst_8 {dimension_numbers = #tpu.dot_dimension_numbers<[1], [1], [0], [0], [0, 0, 1, 0], [], []>} : vector<128x8xbf16>, vector<128x8xbf16>, vector<128x128xf32> -> vector<128x128xf32>
    %cst_9 = arith.constant 0.353553385 : f32
    %15 = vector.broadcast %cst_9 : f32 to vector<128x128xf32>
    %16 = arith.mulf %14, %15 : vector<128x128xf32>
    %17 = vector.broadcast %9 : vector<1x128xf32> to vector<128x128xf32>
    %18 = arith.addf %16, %17 : vector<128x128xf32>
    %cst_10 = arith.constant dense<0xFF800000> : vector<128xf32>
    %19 = vector.multi_reduction <maximumf>, %18, %cst_10 [1] : vector<128x128xf32> to vector<128xf32>
    %20 = vector.shape_cast %19 : vector<128xf32> to vector<128x1xf32>
    %21 = vector.broadcast %20 : vector<128x1xf32> to vector<128x128xf32>
    %22 = arith.subf %18, %21 : vector<128x128xf32>
    %23 = math.exp %22 : vector<128x128xf32>
    %cst_11 = arith.constant dense<0.000000e+00> : vector<128xf32>
    %24 = vector.multi_reduction <add>, %23, %cst_11 [1] : vector<128x128xf32> to vector<128xf32>
    %25 = vector.shape_cast %24 : vector<128xf32> to vector<128x1xf32>
    %26 = vector.extract_strided_slice %7 {offsets = [0, 64], sizes = [128, 8], strides = [1, 1]} : vector<256x96xf32> to vector<128x8xf32>
    %27 = arith.truncf %23 : vector<128x128xf32> to vector<128x128xbf16>
    %28 = arith.truncf %26 : vector<128x8xf32> to vector<128x8xbf16>
    %cst_12 = arith.constant dense<0.000000e+00> : vector<128x8xf32>
    %29 = tpu.matmul %27, %28, %cst_12 {dimension_numbers = #tpu.dot_dimension_numbers<[1], [0], [0], [1], [0, 0, 1, 1], [], []>} : vector<128x128xbf16>, vector<128x8xbf16>, vector<128x8xf32> -> vector<128x8xf32>
    %30 = tpu.reciprocal %25 {approx = true} : vector<128x1xf32> -> vector<128x1xf32>
    %31 = vector.broadcast %30 : vector<128x1xf32> to vector<128x8xf32>
    %32 = arith.mulf %29, %31 : vector<128x8xf32>
    %c0_13 = arith.constant 0 : index
    %c0_14 = arith.constant 0 : index
    %c0_15 = arith.constant 0 : index
    %33 = vector.load %arg5[%c0_13, %c0_14, %c0_15] : memref<4x8x32xf32, #tpu.memory_space<vmem>>, vector<1x8x32xf32>
    %34 = vector.shape_cast %33 : vector<1x8x32xf32> to vector<8x32xf32>
    %35 = arith.truncf %32 : vector<128x8xf32> to vector<128x8xbf16>
    %36 = arith.truncf %34 : vector<8x32xf32> to vector<8x32xbf16>
    %cst_16 = arith.constant dense<0.000000e+00> : vector<128x32xf32>
    %37 = tpu.matmul %35, %36, %cst_16 {dimension_numbers = #tpu.dot_dimension_numbers<[1], [0], [0], [1], [0, 0, 1, 1], [], []>} : vector<128x8xbf16>, vector<8x32xbf16>, vector<128x32xf32> -> vector<128x32xf32>
    %38 = vector.extract_strided_slice %7 {offsets = [0, 8], sizes = [128, 8], strides = [1, 1]} : vector<256x96xf32> to vector<128x8xf32>
    %39 = vector.extract_strided_slice %7 {offsets = [0, 40], sizes = [128, 8], strides = [1, 1]} : vector<256x96xf32> to vector<128x8xf32>
    %40 = arith.truncf %38 : vector<128x8xf32> to vector<128x8xbf16>
    %41 = arith.truncf %39 : vector<128x8xf32> to vector<128x8xbf16>
    %cst_17 = arith.constant dense<0.000000e+00> : vector<128x128xf32>
    %42 = tpu.matmul %40, %41, %cst_17 {dimension_numbers = #tpu.dot_dimension_numbers<[1], [1], [0], [0], [0, 0, 1, 0], [], []>} : vector<128x8xbf16>, vector<128x8xbf16>, vector<128x128xf32> -> vector<128x128xf32>
    %cst_18 = arith.constant 0.353553385 : f32
    %43 = vector.broadcast %cst_18 : f32 to vector<128x128xf32>
    %44 = arith.mulf %42, %43 : vector<128x128xf32>
    %45 = vector.broadcast %9 : vector<1x128xf32> to vector<128x128xf32>
    %46 = arith.addf %44, %45 : vector<128x128xf32>
    %cst_19 = arith.constant dense<0xFF800000> : vector<128xf32>
    %47 = vector.multi_reduction <maximumf>, %46, %cst_19 [1] : vector<128x128xf32> to vector<128xf32>
    %48 = vector.shape_cast %47 : vector<128xf32> to vector<128x1xf32>
    %49 = vector.broadcast %48 : vector<128x1xf32> to vector<128x128xf32>
    %50 = arith.subf %46, %49 : vector<128x128xf32>
    %51 = math.exp %50 : vector<128x128xf32>
    %cst_20 = arith.constant dense<0.000000e+00> : vector<128xf32>
    %52 = vector.multi_reduction <add>, %51, %cst_20 [1] : vector<128x128xf32> to vector<128xf32>
    %53 = vector.shape_cast %52 : vector<128xf32> to vector<128x1xf32>
    %54 = vector.extract_strided_slice %7 {offsets = [0, 72], sizes = [128, 8], strides = [1, 1]} : vector<256x96xf32> to vector<128x8xf32>
    %55 = arith.truncf %51 : vector<128x128xf32> to vector<128x128xbf16>
    %56 = arith.truncf %54 : vector<128x8xf32> to vector<128x8xbf16>
    %cst_21 = arith.constant dense<0.000000e+00> : vector<128x8xf32>
    %57 = tpu.matmul %55, %56, %cst_21 {dimension_numbers = #tpu.dot_dimension_numbers<[1], [0], [0], [1], [0, 0, 1, 1], [], []>} : vector<128x128xbf16>, vector<128x8xbf16>, vector<128x8xf32> -> vector<128x8xf32>
    %58 = tpu.reciprocal %53 {approx = true} : vector<128x1xf32> -> vector<128x1xf32>
    %59 = vector.broadcast %58 : vector<128x1xf32> to vector<128x8xf32>
    %60 = arith.mulf %57, %59 : vector<128x8xf32>
    %c1 = arith.constant 1 : index
    %c0_22 = arith.constant 0 : index
    %c0_23 = arith.constant 0 : index
    %61 = vector.load %arg5[%c1, %c0_22, %c0_23] : memref<4x8x32xf32, #tpu.memory_space<vmem>>, vector<1x8x32xf32>
    %62 = vector.shape_cast %61 : vector<1x8x32xf32> to vector<8x32xf32>
    %63 = arith.truncf %60 : vector<128x8xf32> to vector<128x8xbf16>
    %64 = arith.truncf %62 : vector<8x32xf32> to vector<8x32xbf16>
    %cst_24 = arith.constant dense<0.000000e+00> : vector<128x32xf32>
    %65 = tpu.matmul %63, %64, %cst_24 {dimension_numbers = #tpu.dot_dimension_numbers<[1], [0], [0], [1], [0, 0, 1, 1], [], []>} : vector<128x8xbf16>, vector<8x32xbf16>, vector<128x32xf32> -> vector<128x32xf32>
    %66 = arith.addf %37, %65 : vector<128x32xf32>
    %67 = vector.extract_strided_slice %7 {offsets = [0, 16], sizes = [128, 8], strides = [1, 1]} : vector<256x96xf32> to vector<128x8xf32>
    %68 = vector.extract_strided_slice %7 {offsets = [0, 48], sizes = [128, 8], strides = [1, 1]} : vector<256x96xf32> to vector<128x8xf32>
    %69 = arith.truncf %67 : vector<128x8xf32> to vector<128x8xbf16>
    %70 = arith.truncf %68 : vector<128x8xf32> to vector<128x8xbf16>
    %cst_25 = arith.constant dense<0.000000e+00> : vector<128x128xf32>
    %71 = tpu.matmul %69, %70, %cst_25 {dimension_numbers = #tpu.dot_dimension_numbers<[1], [1], [0], [0], [0, 0, 1, 0], [], []>} : vector<128x8xbf16>, vector<128x8xbf16>, vector<128x128xf32> -> vector<128x128xf32>
    %cst_26 = arith.constant 0.353553385 : f32
    %72 = vector.broadcast %cst_26 : f32 to vector<128x128xf32>
    %73 = arith.mulf %71, %72 : vector<128x128xf32>
    %74 = vector.broadcast %9 : vector<1x128xf32> to vector<128x128xf32>
    %75 = arith.addf %73, %74 : vector<128x128xf32>
    %cst_27 = arith.constant dense<0xFF800000> : vector<128xf32>
    %76 = vector.multi_reduction <maximumf>, %75, %cst_27 [1] : vector<128x128xf32> to vector<128xf32>
    %77 = vector.shape_cast %76 : vector<128xf32> to vector<128x1xf32>
    %78 = vector.broadcast %77 : vector<128x1xf32> to vector<128x128xf32>
    %79 = arith.subf %75, %78 : vector<128x128xf32>
    %80 = math.exp %79 : vector<128x128xf32>
    %cst_28 = arith.constant dense<0.000000e+00> : vector<128xf32>
    %81 = vector.multi_reduction <add>, %80, %cst_28 [1] : vector<128x128xf32> to vector<128xf32>
    %82 = vector.shape_cast %81 : vector<128xf32> to vector<128x1xf32>
    %83 = vector.extract_strided_slice %7 {offsets = [0, 80], sizes = [128, 8], strides = [1, 1]} : vector<256x96xf32> to vector<128x8xf32>
    %84 = arith.truncf %80 : vector<128x128xf32> to vector<128x128xbf16>
    %85 = arith.truncf %83 : vector<128x8xf32> to vector<128x8xbf16>
    %cst_29 = arith.constant dense<0.000000e+00> : vector<128x8xf32>
    %86 = tpu.matmul %84, %85, %cst_29 {dimension_numbers = #tpu.dot_dimension_numbers<[1], [0], [0], [1], [0, 0, 1, 1], [], []>} : vector<128x128xbf16>, vector<128x8xbf16>, vector<128x8xf32> -> vector<128x8xf32>
    %87 = tpu.reciprocal %82 {approx = true} : vector<128x1xf32> -> vector<128x1xf32>
    %88 = vector.broadcast %87 : vector<128x1xf32> to vector<128x8xf32>
    %89 = arith.mulf %86, %88 : vector<128x8xf32>
    %c2 = arith.constant 2 : index
    %c0_30 = arith.constant 0 : index
    %c0_31 = arith.constant 0 : index
    %90 = vector.load %arg5[%c2, %c0_30, %c0_31] : memref<4x8x32xf32, #tpu.memory_space<vmem>>, vector<1x8x32xf32>
    %91 = vector.shape_cast %90 : vector<1x8x32xf32> to vector<8x32xf32>
    %92 = arith.truncf %89 : vector<128x8xf32> to vector<128x8xbf16>
    %93 = arith.truncf %91 : vector<8x32xf32> to vector<8x32xbf16>
    %cst_32 = arith.constant dense<0.000000e+00> : vector<128x32xf32>
    %94 = tpu.matmul %92, %93, %cst_32 {dimension_numbers = #tpu.dot_dimension_numbers<[1], [0], [0], [1], [0, 0, 1, 1], [], []>} : vector<128x8xbf16>, vector<8x32xbf16>, vector<128x32xf32> -> vector<128x32xf32>
    %95 = arith.addf %66, %94 : vector<128x32xf32>
    %96 = vector.extract_strided_slice %7 {offsets = [0, 24], sizes = [128, 8], strides = [1, 1]} : vector<256x96xf32> to vector<128x8xf32>
    %97 = vector.extract_strided_slice %7 {offsets = [0, 56], sizes = [128, 8], strides = [1, 1]} : vector<256x96xf32> to vector<128x8xf32>
    %98 = arith.truncf %96 : vector<128x8xf32> to vector<128x8xbf16>
    %99 = arith.truncf %97 : vector<128x8xf32> to vector<128x8xbf16>
    %cst_33 = arith.constant dense<0.000000e+00> : vector<128x128xf32>
    %100 = tpu.matmul %98, %99, %cst_33 {dimension_numbers = #tpu.dot_dimension_numbers<[1], [1], [0], [0], [0, 0, 1, 0], [], []>} : vector<128x8xbf16>, vector<128x8xbf16>, vector<128x128xf32> -> vector<128x128xf32>
    %cst_34 = arith.constant 0.353553385 : f32
    %101 = vector.broadcast %cst_34 : f32 to vector<128x128xf32>
    %102 = arith.mulf %100, %101 : vector<128x128xf32>
    %103 = vector.broadcast %9 : vector<1x128xf32> to vector<128x128xf32>
    %104 = arith.addf %102, %103 : vector<128x128xf32>
    %cst_35 = arith.constant dense<0xFF800000> : vector<128xf32>
    %105 = vector.multi_reduction <maximumf>, %104, %cst_35 [1] : vector<128x128xf32> to vector<128xf32>
    %106 = vector.shape_cast %105 : vector<128xf32> to vector<128x1xf32>
    %107 = vector.broadcast %106 : vector<128x1xf32> to vector<128x128xf32>
    %108 = arith.subf %104, %107 : vector<128x128xf32>
    %109 = math.exp %108 : vector<128x128xf32>
    %cst_36 = arith.constant dense<0.000000e+00> : vector<128xf32>
    %110 = vector.multi_reduction <add>, %109, %cst_36 [1] : vector<128x128xf32> to vector<128xf32>
    %111 = vector.shape_cast %110 : vector<128xf32> to vector<128x1xf32>
    %112 = vector.extract_strided_slice %7 {offsets = [0, 88], sizes = [128, 8], strides = [1, 1]} : vector<256x96xf32> to vector<128x8xf32>
    %113 = arith.truncf %109 : vector<128x128xf32> to vector<128x128xbf16>
    %114 = arith.truncf %112 : vector<128x8xf32> to vector<128x8xbf16>
    %cst_37 = arith.constant dense<0.000000e+00> : vector<128x8xf32>
    %115 = tpu.matmul %113, %114, %cst_37 {dimension_numbers = #tpu.dot_dimension_numbers<[1], [0], [0], [1], [0, 0, 1, 1], [], []>} : vector<128x128xbf16>, vector<128x8xbf16>, vector<128x8xf32> -> vector<128x8xf32>
    %116 = tpu.reciprocal %111 {approx = true} : vector<128x1xf32> -> vector<128x1xf32>
    %117 = vector.broadcast %116 : vector<128x1xf32> to vector<128x8xf32>
    %118 = arith.mulf %115, %117 : vector<128x8xf32>
    %c3 = arith.constant 3 : index
    %c0_38 = arith.constant 0 : index
    %c0_39 = arith.constant 0 : index
    %119 = vector.load %arg5[%c3, %c0_38, %c0_39] : memref<4x8x32xf32, #tpu.memory_space<vmem>>, vector<1x8x32xf32>
    %120 = vector.shape_cast %119 : vector<1x8x32xf32> to vector<8x32xf32>
    %121 = arith.truncf %118 : vector<128x8xf32> to vector<128x8xbf16>
    %122 = arith.truncf %120 : vector<8x32xf32> to vector<8x32xbf16>
    %cst_40 = arith.constant dense<0.000000e+00> : vector<128x32xf32>
    %123 = tpu.matmul %121, %122, %cst_40 {dimension_numbers = #tpu.dot_dimension_numbers<[1], [0], [0], [1], [0, 0, 1, 1], [], []>} : vector<128x8xbf16>, vector<8x32xbf16>, vector<128x32xf32> -> vector<128x32xf32>
    %124 = arith.addf %95, %123 : vector<128x32xf32>
    %c1_41 = arith.constant 1 : index
    %c0_42 = arith.constant 0 : index
    %c0_43 = arith.constant 0 : index
    %125 = vector.load %arg2[%c1_41, %c0_42, %c0_43] : memref<2x1x128xf32, #tpu.memory_space<vmem>>, vector<1x1x128xf32>
    %126 = vector.shape_cast %125 : vector<1x1x128xf32> to vector<1x128xf32>
    %127 = vector.extract_strided_slice %7 {offsets = [128, 0], sizes = [128, 8], strides = [1, 1]} : vector<256x96xf32> to vector<128x8xf32>
    %128 = vector.extract_strided_slice %7 {offsets = [128, 32], sizes = [128, 8], strides = [1, 1]} : vector<256x96xf32> to vector<128x8xf32>
    %129 = arith.truncf %127 : vector<128x8xf32> to vector<128x8xbf16>
    %130 = arith.truncf %128 : vector<128x8xf32> to vector<128x8xbf16>
    %cst_44 = arith.constant dense<0.000000e+00> : vector<128x128xf32>
    %131 = tpu.matmul %129, %130, %cst_44 {dimension_numbers = #tpu.dot_dimension_numbers<[1], [1], [0], [0], [0, 0, 1, 0], [], []>} : vector<128x8xbf16>, vector<128x8xbf16>, vector<128x128xf32> -> vector<128x128xf32>
    %cst_45 = arith.constant 0.353553385 : f32
    %132 = vector.broadcast %cst_45 : f32 to vector<128x128xf32>
    %133 = arith.mulf %131, %132 : vector<128x128xf32>
    %134 = vector.broadcast %126 : vector<1x128xf32> to vector<128x128xf32>
    %135 = arith.addf %133, %134 : vector<128x128xf32>
    %cst_46 = arith.constant dense<0xFF800000> : vector<128xf32>
    %136 = vector.multi_reduction <maximumf>, %135, %cst_46 [1] : vector<128x128xf32> to vector<128xf32>
    %137 = vector.shape_cast %136 : vector<128xf32> to vector<128x1xf32>
    %138 = vector.broadcast %137 : vector<128x1xf32> to vector<128x128xf32>
    %139 = arith.subf %135, %138 : vector<128x128xf32>
    %140 = math.exp %139 : vector<128x128xf32>
    %cst_47 = arith.constant dense<0.000000e+00> : vector<128xf32>
    %141 = vector.multi_reduction <add>, %140, %cst_47 [1] : vector<128x128xf32> to vector<128xf32>
    %142 = vector.shape_cast %141 : vector<128xf32> to vector<128x1xf32>
    %143 = vector.extract_strided_slice %7 {offsets = [128, 64], sizes = [128, 8], strides = [1, 1]} : vector<256x96xf32> to vector<128x8xf32>
    %144 = arith.truncf %140 : vector<128x128xf32> to vector<128x128xbf16>
    %145 = arith.truncf %143 : vector<128x8xf32> to vector<128x8xbf16>
    %cst_48 = arith.constant dense<0.000000e+00> : vector<128x8xf32>
    %146 = tpu.matmul %144, %145, %cst_48 {dimension_numbers = #tpu.dot_dimension_numbers<[1], [0], [0], [1], [0, 0, 1, 1], [], []>} : vector<128x128xbf16>, vector<128x8xbf16>, vector<128x8xf32> -> vector<128x8xf32>
    %147 = tpu.reciprocal %142 {approx = true} : vector<128x1xf32> -> vector<128x1xf32>
    %148 = vector.broadcast %147 : vector<128x1xf32> to vector<128x8xf32>
    %149 = arith.mulf %146, %148 : vector<128x8xf32>
    %c0_49 = arith.constant 0 : index
    %c0_50 = arith.constant 0 : index
    %c0_51 = arith.constant 0 : index
    %150 = vector.load %arg5[%c0_49, %c0_50, %c0_51] : memref<4x8x32xf32, #tpu.memory_space<vmem>>, vector<1x8x32xf32>
    %151 = vector.shape_cast %150 : vector<1x8x32xf32> to vector<8x32xf32>
    %152 = arith.truncf %149 : vector<128x8xf32> to vector<128x8xbf16>
    %153 = arith.truncf %151 : vector<8x32xf32> to vector<8x32xbf16>
    %cst_52 = arith.constant dense<0.000000e+00> : vector<128x32xf32>
    %154 = tpu.matmul %152, %153, %cst_52 {dimension_numbers = #tpu.dot_dimension_numbers<[1], [0], [0], [1], [0, 0, 1, 1], [], []>} : vector<128x8xbf16>, vector<8x32xbf16>, vector<128x32xf32> -> vector<128x32xf32>
    %155 = vector.extract_strided_slice %7 {offsets = [128, 8], sizes = [128, 8], strides = [1, 1]} : vector<256x96xf32> to vector<128x8xf32>
    %156 = vector.extract_strided_slice %7 {offsets = [128, 40], sizes = [128, 8], strides = [1, 1]} : vector<256x96xf32> to vector<128x8xf32>
    %157 = arith.truncf %155 : vector<128x8xf32> to vector<128x8xbf16>
    %158 = arith.truncf %156 : vector<128x8xf32> to vector<128x8xbf16>
    %cst_53 = arith.constant dense<0.000000e+00> : vector<128x128xf32>
    %159 = tpu.matmul %157, %158, %cst_53 {dimension_numbers = #tpu.dot_dimension_numbers<[1], [1], [0], [0], [0, 0, 1, 0], [], []>} : vector<128x8xbf16>, vector<128x8xbf16>, vector<128x128xf32> -> vector<128x128xf32>
    %cst_54 = arith.constant 0.353553385 : f32
    %160 = vector.broadcast %cst_54 : f32 to vector<128x128xf32>
    %161 = arith.mulf %159, %160 : vector<128x128xf32>
    %162 = vector.broadcast %126 : vector<1x128xf32> to vector<128x128xf32>
    %163 = arith.addf %161, %162 : vector<128x128xf32>
    %cst_55 = arith.constant dense<0xFF800000> : vector<128xf32>
    %164 = vector.multi_reduction <maximumf>, %163, %cst_55 [1] : vector<128x128xf32> to vector<128xf32>
    %165 = vector.shape_cast %164 : vector<128xf32> to vector<128x1xf32>
    %166 = vector.broadcast %165 : vector<128x1xf32> to vector<128x128xf32>
    %167 = arith.subf %163, %166 : vector<128x128xf32>
    %168 = math.exp %167 : vector<128x128xf32>
    %cst_56 = arith.constant dense<0.000000e+00> : vector<128xf32>
    %169 = vector.multi_reduction <add>, %168, %cst_56 [1] : vector<128x128xf32> to vector<128xf32>
    %170 = vector.shape_cast %169 : vector<128xf32> to vector<128x1xf32>
    %171 = vector.extract_strided_slice %7 {offsets = [128, 72], sizes = [128, 8], strides = [1, 1]} : vector<256x96xf32> to vector<128x8xf32>
    %172 = arith.truncf %168 : vector<128x128xf32> to vector<128x128xbf16>
    %173 = arith.truncf %171 : vector<128x8xf32> to vector<128x8xbf16>
    %cst_57 = arith.constant dense<0.000000e+00> : vector<128x8xf32>
    %174 = tpu.matmul %172, %173, %cst_57 {dimension_numbers = #tpu.dot_dimension_numbers<[1], [0], [0], [1], [0, 0, 1, 1], [], []>} : vector<128x128xbf16>, vector<128x8xbf16>, vector<128x8xf32> -> vector<128x8xf32>
    %175 = tpu.reciprocal %170 {approx = true} : vector<128x1xf32> -> vector<128x1xf32>
    %176 = vector.broadcast %175 : vector<128x1xf32> to vector<128x8xf32>
    %177 = arith.mulf %174, %176 : vector<128x8xf32>
    %c1_58 = arith.constant 1 : index
    %c0_59 = arith.constant 0 : index
    %c0_60 = arith.constant 0 : index
    %178 = vector.load %arg5[%c1_58, %c0_59, %c0_60] : memref<4x8x32xf32, #tpu.memory_space<vmem>>, vector<1x8x32xf32>
    %179 = vector.shape_cast %178 : vector<1x8x32xf32> to vector<8x32xf32>
    %180 = arith.truncf %177 : vector<128x8xf32> to vector<128x8xbf16>
    %181 = arith.truncf %179 : vector<8x32xf32> to vector<8x32xbf16>
    %cst_61 = arith.constant dense<0.000000e+00> : vector<128x32xf32>
    %182 = tpu.matmul %180, %181, %cst_61 {dimension_numbers = #tpu.dot_dimension_numbers<[1], [0], [0], [1], [0, 0, 1, 1], [], []>} : vector<128x8xbf16>, vector<8x32xbf16>, vector<128x32xf32> -> vector<128x32xf32>
    %183 = arith.addf %154, %182 : vector<128x32xf32>
    %184 = vector.extract_strided_slice %7 {offsets = [128, 16], sizes = [128, 8], strides = [1, 1]} : vector<256x96xf32> to vector<128x8xf32>
    %185 = vector.extract_strided_slice %7 {offsets = [128, 48], sizes = [128, 8], strides = [1, 1]} : vector<256x96xf32> to vector<128x8xf32>
    %186 = arith.truncf %184 : vector<128x8xf32> to vector<128x8xbf16>
    %187 = arith.truncf %185 : vector<128x8xf32> to vector<128x8xbf16>
    %cst_62 = arith.constant dense<0.000000e+00> : vector<128x128xf32>
    %188 = tpu.matmul %186, %187, %cst_62 {dimension_numbers = #tpu.dot_dimension_numbers<[1], [1], [0], [0], [0, 0, 1, 0], [], []>} : vector<128x8xbf16>, vector<128x8xbf16>, vector<128x128xf32> -> vector<128x128xf32>
    %cst_63 = arith.constant 0.353553385 : f32
    %189 = vector.broadcast %cst_63 : f32 to vector<128x128xf32>
    %190 = arith.mulf %188, %189 : vector<128x128xf32>
    %191 = vector.broadcast %126 : vector<1x128xf32> to vector<128x128xf32>
    %192 = arith.addf %190, %191 : vector<128x128xf32>
    %cst_64 = arith.constant dense<0xFF800000> : vector<128xf32>
    %193 = vector.multi_reduction <maximumf>, %192, %cst_64 [1] : vector<128x128xf32> to vector<128xf32>
    %194 = vector.shape_cast %193 : vector<128xf32> to vector<128x1xf32>
    %195 = vector.broadcast %194 : vector<128x1xf32> to vector<128x128xf32>
    %196 = arith.subf %192, %195 : vector<128x128xf32>
    %197 = math.exp %196 : vector<128x128xf32>
    %cst_65 = arith.constant dense<0.000000e+00> : vector<128xf32>
    %198 = vector.multi_reduction <add>, %197, %cst_65 [1] : vector<128x128xf32> to vector<128xf32>
    %199 = vector.shape_cast %198 : vector<128xf32> to vector<128x1xf32>
    %200 = vector.extract_strided_slice %7 {offsets = [128, 80], sizes = [128, 8], strides = [1, 1]} : vector<256x96xf32> to vector<128x8xf32>
    %201 = arith.truncf %197 : vector<128x128xf32> to vector<128x128xbf16>
    %202 = arith.truncf %200 : vector<128x8xf32> to vector<128x8xbf16>
    %cst_66 = arith.constant dense<0.000000e+00> : vector<128x8xf32>
    %203 = tpu.matmul %201, %202, %cst_66 {dimension_numbers = #tpu.dot_dimension_numbers<[1], [0], [0], [1], [0, 0, 1, 1], [], []>} : vector<128x128xbf16>, vector<128x8xbf16>, vector<128x8xf32> -> vector<128x8xf32>
    %204 = tpu.reciprocal %199 {approx = true} : vector<128x1xf32> -> vector<128x1xf32>
    %205 = vector.broadcast %204 : vector<128x1xf32> to vector<128x8xf32>
    %206 = arith.mulf %203, %205 : vector<128x8xf32>
    %c2_67 = arith.constant 2 : index
    %c0_68 = arith.constant 0 : index
    %c0_69 = arith.constant 0 : index
    %207 = vector.load %arg5[%c2_67, %c0_68, %c0_69] : memref<4x8x32xf32, #tpu.memory_space<vmem>>, vector<1x8x32xf32>
    %208 = vector.shape_cast %207 : vector<1x8x32xf32> to vector<8x32xf32>
    %209 = arith.truncf %206 : vector<128x8xf32> to vector<128x8xbf16>
    %210 = arith.truncf %208 : vector<8x32xf32> to vector<8x32xbf16>
    %cst_70 = arith.constant dense<0.000000e+00> : vector<128x32xf32>
    %211 = tpu.matmul %209, %210, %cst_70 {dimension_numbers = #tpu.dot_dimension_numbers<[1], [0], [0], [1], [0, 0, 1, 1], [], []>} : vector<128x8xbf16>, vector<8x32xbf16>, vector<128x32xf32> -> vector<128x32xf32>
    %212 = arith.addf %183, %211 : vector<128x32xf32>
    %213 = vector.extract_strided_slice %7 {offsets = [128, 24], sizes = [128, 8], strides = [1, 1]} : vector<256x96xf32> to vector<128x8xf32>
    %214 = vector.extract_strided_slice %7 {offsets = [128, 56], sizes = [128, 8], strides = [1, 1]} : vector<256x96xf32> to vector<128x8xf32>
    %215 = arith.truncf %213 : vector<128x8xf32> to vector<128x8xbf16>
    %216 = arith.truncf %214 : vector<128x8xf32> to vector<128x8xbf16>
    %cst_71 = arith.constant dense<0.000000e+00> : vector<128x128xf32>
    %217 = tpu.matmul %215, %216, %cst_71 {dimension_numbers = #tpu.dot_dimension_numbers<[1], [1], [0], [0], [0, 0, 1, 0], [], []>} : vector<128x8xbf16>, vector<128x8xbf16>, vector<128x128xf32> -> vector<128x128xf32>
    %cst_72 = arith.constant 0.353553385 : f32
    %218 = vector.broadcast %cst_72 : f32 to vector<128x128xf32>
    %219 = arith.mulf %217, %218 : vector<128x128xf32>
    %220 = vector.broadcast %126 : vector<1x128xf32> to vector<128x128xf32>
    %221 = arith.addf %219, %220 : vector<128x128xf32>
    %cst_73 = arith.constant dense<0xFF800000> : vector<128xf32>
    %222 = vector.multi_reduction <maximumf>, %221, %cst_73 [1] : vector<128x128xf32> to vector<128xf32>
    %223 = vector.shape_cast %222 : vector<128xf32> to vector<128x1xf32>
    %224 = vector.broadcast %223 : vector<128x1xf32> to vector<128x128xf32>
    %225 = arith.subf %221, %224 : vector<128x128xf32>
    %226 = math.exp %225 : vector<128x128xf32>
    %cst_74 = arith.constant dense<0.000000e+00> : vector<128xf32>
    %227 = vector.multi_reduction <add>, %226, %cst_74 [1] : vector<128x128xf32> to vector<128xf32>
    %228 = vector.shape_cast %227 : vector<128xf32> to vector<128x1xf32>
    %229 = vector.extract_strided_slice %7 {offsets = [128, 88], sizes = [128, 8], strides = [1, 1]} : vector<256x96xf32> to vector<128x8xf32>
    %230 = arith.truncf %226 : vector<128x128xf32> to vector<128x128xbf16>
    %231 = arith.truncf %229 : vector<128x8xf32> to vector<128x8xbf16>
    %cst_75 = arith.constant dense<0.000000e+00> : vector<128x8xf32>
    %232 = tpu.matmul %230, %231, %cst_75 {dimension_numbers = #tpu.dot_dimension_numbers<[1], [0], [0], [1], [0, 0, 1, 1], [], []>} : vector<128x128xbf16>, vector<128x8xbf16>, vector<128x8xf32> -> vector<128x8xf32>
    %233 = tpu.reciprocal %228 {approx = true} : vector<128x1xf32> -> vector<128x1xf32>
    %234 = vector.broadcast %233 : vector<128x1xf32> to vector<128x8xf32>
    %235 = arith.mulf %232, %234 : vector<128x8xf32>
    %c3_76 = arith.constant 3 : index
    %c0_77 = arith.constant 0 : index
    %c0_78 = arith.constant 0 : index
    %236 = vector.load %arg5[%c3_76, %c0_77, %c0_78] : memref<4x8x32xf32, #tpu.memory_space<vmem>>, vector<1x8x32xf32>
    %237 = vector.shape_cast %236 : vector<1x8x32xf32> to vector<8x32xf32>
    %238 = arith.truncf %235 : vector<128x8xf32> to vector<128x8xbf16>
    %239 = arith.truncf %237 : vector<8x32xf32> to vector<8x32xbf16>
    %cst_79 = arith.constant dense<0.000000e+00> : vector<128x32xf32>
    %240 = tpu.matmul %238, %239, %cst_79 {dimension_numbers = #tpu.dot_dimension_numbers<[1], [0], [0], [1], [0, 0, 1, 1], [], []>} : vector<128x8xbf16>, vector<8x32xbf16>, vector<128x32xf32> -> vector<128x32xf32>
    %241 = arith.addf %212, %240 : vector<128x32xf32>
    %242 = tpu.concatenate %124, %241 in 0 : vector<128x32xf32>, vector<128x32xf32> -> vector<256x32xf32>
    %c0_80 = arith.constant 0 : index
    %c0_81 = arith.constant 0 : index
    %243 = vector.load %arg1[%c0_80, %c0_81] : memref<256x32xf32, #tpu.memory_space<vmem>>, vector<256x32xf32>
    %244 = arith.addf %243, %242 : vector<256x32xf32>
    %c0_82 = arith.constant 0 : index
    %c0_83 = arith.constant 0 : index
    %245 = vector.load %arg6[%c0_82, %c0_83] : memref<1x32xf32, #tpu.memory_space<vmem>>, vector<1x32xf32>
    %246 = vector.broadcast %245 : vector<1x32xf32> to vector<256x32xf32>
    %247 = arith.addf %244, %246 : vector<256x32xf32>
    %cst_84 = arith.constant dense<0.000000e+00> : vector<256xf32>
    %248 = vector.multi_reduction <add>, %247, %cst_84 [1] : vector<256x32xf32> to vector<256xf32>
    %249 = vector.shape_cast %248 : vector<256xf32> to vector<256x1xf32>
    %cst_85 = arith.constant 3.200000e+01 : f32
    %250 = vector.broadcast %cst_85 : f32 to vector<256x1xf32>
    %251 = arith.divf %249, %250 : vector<256x1xf32>
    %252 = vector.broadcast %251 : vector<256x1xf32> to vector<256x32xf32>
    %253 = arith.subf %247, %252 : vector<256x32xf32>
    %254 = arith.mulf %253, %253 : vector<256x32xf32>
    %cst_86 = arith.constant dense<0.000000e+00> : vector<256xf32>
    %255 = vector.multi_reduction <add>, %254, %cst_86 [1] : vector<256x32xf32> to vector<256xf32>
    %256 = vector.shape_cast %255 : vector<256xf32> to vector<256x1xf32>
    %cst_87 = arith.constant 3.200000e+01 : f32
    %257 = vector.broadcast %cst_87 : f32 to vector<256x1xf32>
    %258 = arith.divf %256, %257 : vector<256x1xf32>
    %259 = vector.broadcast %251 : vector<256x1xf32> to vector<256x32xf32>
    %260 = arith.subf %247, %259 : vector<256x32xf32>
    %cst_88 = arith.constant 9.99999974E-6 : f32
    %261 = vector.broadcast %cst_88 : f32 to vector<256x1xf32>
    %262 = arith.addf %258, %261 : vector<256x1xf32>
    %263 = math.rsqrt %262 : vector<256x1xf32>
    %264 = vector.broadcast %263 : vector<256x1xf32> to vector<256x32xf32>
    %265 = arith.mulf %260, %264 : vector<256x32xf32>
    %c0_89 = arith.constant 0 : index
    %c0_90 = arith.constant 0 : index
    %266 = vector.load %arg7[%c0_89, %c0_90] : memref<32x64xf32, #tpu.memory_space<vmem>>, vector<32x64xf32>
    %267 = arith.truncf %265 : vector<256x32xf32> to vector<256x32xbf16>
    %268 = arith.truncf %266 : vector<32x64xf32> to vector<32x64xbf16>
    %cst_91 = arith.constant dense<0.000000e+00> : vector<256x64xf32>
    %269 = tpu.matmul %267, %268, %cst_91 {dimension_numbers = #tpu.dot_dimension_numbers<[1], [0], [0], [1], [0, 0, 1, 1], [], []>} : vector<256x32xbf16>, vector<32x64xbf16>, vector<256x64xf32> -> vector<256x64xf32>
    %c0_92 = arith.constant 0 : index
    %c0_93 = arith.constant 0 : index
    %270 = vector.load %arg8[%c0_92, %c0_93] : memref<1x64xf32, #tpu.memory_space<vmem>>, vector<1x64xf32>
    %271 = vector.broadcast %270 : vector<1x64xf32> to vector<256x64xf32>
    %272 = arith.addf %269, %271 : vector<256x64xf32>
    %cst_94 = arith.constant 0.000000e+00 : f32
    %273 = vector.broadcast %cst_94 : f32 to vector<256x64xf32>
    %274 = arith.maximumf %272, %273 : vector<256x64xf32>
    %c0_95 = arith.constant 0 : index
    %c0_96 = arith.constant 0 : index
    %275 = vector.load %arg9[%c0_95, %c0_96] : memref<64x32xf32, #tpu.memory_space<vmem>>, vector<64x32xf32>
    %276 = arith.truncf %274 : vector<256x64xf32> to vector<256x64xbf16>
    %277 = arith.truncf %275 : vector<64x32xf32> to vector<64x32xbf16>
    %cst_97 = arith.constant dense<0.000000e+00> : vector<256x32xf32>
    %278 = tpu.matmul %276, %277, %cst_97 {dimension_numbers = #tpu.dot_dimension_numbers<[1], [0], [0], [1], [0, 0, 1, 1], [], []>} : vector<256x64xbf16>, vector<64x32xbf16>, vector<256x32xf32> -> vector<256x32xf32>
    %279 = arith.addf %265, %278 : vector<256x32xf32>
    %c0_98 = arith.constant 0 : index
    %c0_99 = arith.constant 0 : index
    %280 = vector.load %arg10[%c0_98, %c0_99] : memref<1x32xf32, #tpu.memory_space<vmem>>, vector<1x32xf32>
    %281 = vector.broadcast %280 : vector<1x32xf32> to vector<256x32xf32>
    %282 = arith.addf %279, %281 : vector<256x32xf32>
    %cst_100 = arith.constant dense<0.000000e+00> : vector<256xf32>
    %283 = vector.multi_reduction <add>, %282, %cst_100 [1] : vector<256x32xf32> to vector<256xf32>
    %284 = vector.shape_cast %283 : vector<256xf32> to vector<256x1xf32>
    %cst_101 = arith.constant 3.200000e+01 : f32
    %285 = vector.broadcast %cst_101 : f32 to vector<256x1xf32>
    %286 = arith.divf %284, %285 : vector<256x1xf32>
    %287 = vector.broadcast %286 : vector<256x1xf32> to vector<256x32xf32>
    %288 = arith.subf %282, %287 : vector<256x32xf32>
    %289 = arith.mulf %288, %288 : vector<256x32xf32>
    %cst_102 = arith.constant dense<0.000000e+00> : vector<256xf32>
    %290 = vector.multi_reduction <add>, %289, %cst_102 [1] : vector<256x32xf32> to vector<256xf32>
    %291 = vector.shape_cast %290 : vector<256xf32> to vector<256x1xf32>
    %cst_103 = arith.constant 3.200000e+01 : f32
    %292 = vector.broadcast %cst_103 : f32 to vector<256x1xf32>
    %293 = arith.divf %291, %292 : vector<256x1xf32>
    %294 = vector.broadcast %286 : vector<256x1xf32> to vector<256x32xf32>
    %295 = arith.subf %282, %294 : vector<256x32xf32>
    %cst_104 = arith.constant 9.99999974E-6 : f32
    %296 = vector.broadcast %cst_104 : f32 to vector<256x1xf32>
    %297 = arith.addf %293, %296 : vector<256x1xf32>
    %298 = math.rsqrt %297 : vector<256x1xf32>
    %299 = vector.broadcast %298 : vector<256x1xf32> to vector<256x32xf32>
    %300 = arith.mulf %295, %299 : vector<256x32xf32>
    %c0_105 = arith.constant 0 : index
    %c0_106 = arith.constant 0 : index
    %301 = vector.load %arg11[%c0_105, %c0_106] : memref<32x16xf32, #tpu.memory_space<vmem>>, vector<32x16xf32>
    %302 = arith.truncf %300 : vector<256x32xf32> to vector<256x32xbf16>
    %303 = arith.truncf %301 : vector<32x16xf32> to vector<32x16xbf16>
    %cst_107 = arith.constant dense<0.000000e+00> : vector<256x16xf32>
    %304 = tpu.matmul %302, %303, %cst_107 {dimension_numbers = #tpu.dot_dimension_numbers<[1], [0], [0], [1], [0, 0, 1, 1], [], []>} : vector<256x32xbf16>, vector<32x16xbf16>, vector<256x16xf32> -> vector<256x16xf32>
    %c0_108 = arith.constant 0 : index
    %c0_109 = arith.constant 0 : index
    %305 = vector.load %arg12[%c0_108, %c0_109] : memref<1x16xf32, #tpu.memory_space<vmem>>, vector<1x16xf32>
    %306 = vector.broadcast %305 : vector<1x16xf32> to vector<256x16xf32>
    %307 = arith.addf %304, %306 : vector<256x16xf32>
    %cst_110 = arith.constant 0.000000e+00 : f32
    %308 = vector.broadcast %cst_110 : f32 to vector<256x16xf32>
    %309 = arith.maximumf %307, %308 : vector<256x16xf32>
    %c0_111 = arith.constant 0 : index
    %c0_112 = arith.constant 0 : index
    %310 = vector.load %arg13[%c0_111, %c0_112] : memref<16x32xf32, #tpu.memory_space<vmem>>, vector<16x32xf32>
    %311 = arith.truncf %309 : vector<256x16xf32> to vector<256x16xbf16>
    %312 = arith.truncf %310 : vector<16x32xf32> to vector<16x32xbf16>
    %cst_113 = arith.constant dense<0.000000e+00> : vector<256x32xf32>
    %313 = tpu.matmul %311, %312, %cst_113 {dimension_numbers = #tpu.dot_dimension_numbers<[1], [0], [0], [1], [0, 0, 1, 1], [], []>} : vector<256x16xbf16>, vector<16x32xbf16>, vector<256x32xf32> -> vector<256x32xf32>
    %314 = arith.addf %300, %313 : vector<256x32xf32>
    %c0_114 = arith.constant 0 : index
    %c0_115 = arith.constant 0 : index
    %315 = vector.load %arg14[%c0_114, %c0_115] : memref<1x32xf32, #tpu.memory_space<vmem>>, vector<1x32xf32>
    %316 = vector.broadcast %315 : vector<1x32xf32> to vector<256x32xf32>
    %317 = arith.addf %314, %316 : vector<256x32xf32>
    %c0_116 = arith.constant 0 : index
    %c0_117 = arith.constant 0 : index
    %318 = vector.load %arg1[%c0_116, %c0_117] : memref<256x32xf32, #tpu.memory_space<vmem>>, vector<256x32xf32>
    %319 = arith.addf %318, %317 : vector<256x32xf32>
    %cst_118 = arith.constant dense<0.000000e+00> : vector<256xf32>
    %320 = vector.multi_reduction <add>, %319, %cst_118 [1] : vector<256x32xf32> to vector<256xf32>
    %321 = vector.shape_cast %320 : vector<256xf32> to vector<256x1xf32>
    %cst_119 = arith.constant 3.200000e+01 : f32
    %322 = vector.broadcast %cst_119 : f32 to vector<256x1xf32>
    %323 = arith.divf %321, %322 : vector<256x1xf32>
    %324 = vector.broadcast %323 : vector<256x1xf32> to vector<256x32xf32>
    %325 = arith.subf %319, %324 : vector<256x32xf32>
    %326 = arith.mulf %325, %325 : vector<256x32xf32>
    %cst_120 = arith.constant dense<0.000000e+00> : vector<256xf32>
    %327 = vector.multi_reduction <add>, %326, %cst_120 [1] : vector<256x32xf32> to vector<256xf32>
    %328 = vector.shape_cast %327 : vector<256xf32> to vector<256x1xf32>
    %cst_121 = arith.constant 3.200000e+01 : f32
    %329 = vector.broadcast %cst_121 : f32 to vector<256x1xf32>
    %330 = arith.divf %328, %329 : vector<256x1xf32>
    %331 = vector.broadcast %323 : vector<256x1xf32> to vector<256x32xf32>
    %332 = arith.subf %319, %331 : vector<256x32xf32>
    %cst_122 = arith.constant 9.99999974E-6 : f32
    %333 = vector.broadcast %cst_122 : f32 to vector<256x1xf32>
    %334 = arith.addf %330, %333 : vector<256x1xf32>
    %335 = math.rsqrt %334 : vector<256x1xf32>
    %336 = vector.broadcast %335 : vector<256x1xf32> to vector<256x32xf32>
    %337 = arith.mulf %332, %336 : vector<256x32xf32>
    %c0_123 = arith.constant 0 : index
    %c0_124 = arith.constant 0 : index
    %338 = vector.load %arg15[%c0_123, %c0_124] : memref<1x32xf32, #tpu.memory_space<vmem>>, vector<1x32xf32>
    %339 = vector.broadcast %338 : vector<1x32xf32> to vector<256x32xf32>
    %340 = arith.mulf %337, %339 : vector<256x32xf32>
    %c0_125 = arith.constant 0 : index
    %c0_126 = arith.constant 0 : index
    %341 = vector.load %arg16[%c0_125, %c0_126] : memref<1x32xf32, #tpu.memory_space<vmem>>, vector<1x32xf32>
    %342 = vector.broadcast %341 : vector<1x32xf32> to vector<256x32xf32>
    %343 = arith.addf %340, %342 : vector<256x32xf32>
    %c0_127 = arith.constant 0 : index
    %c0_128 = arith.constant 0 : index
    %344 = vector.load %arg17[%c0_127, %c0_128] : memref<256x32xf32, #tpu.memory_space<vmem>>, vector<256x32xf32>
    tpu.vector_store %arg17[%c0_127, %c0_128], %343 {strides = array<i32>} : memref<256x32xf32, #tpu.memory_space<vmem>>, vector<256x32xf32>,
    return
  }
  func.func @transform_0(%arg0: i32) -> (i32, i32) {
    %c0_i32 = arith.constant 0 : i32
    %c0_i32_0 = arith.constant 0 : i32
    return %arg0, %c0_i32 : i32, i32
  }
  func.func @transform_1(%arg0: i32) -> (i32, i32, i32) {
    %c0_i32 = arith.constant 0 : i32
    %c0_i32_0 = arith.constant 0 : i32
    %c0_i32_1 = arith.constant 0 : i32
    return %arg0, %c0_i32, %c0_i32_0 : i32, i32, i32
  }
  func.func @transform_2(%arg0: i32) -> (i32, i32) {
    %c0_i32 = arith.constant 0 : i32
    %c0_i32_0 = arith.constant 0 : i32
    %c0_i32_1 = arith.constant 0 : i32
    return %c0_i32, %c0_i32_0 : i32, i32
  }
  func.func @transform_3(%arg0: i32) -> (i32, i32) {
    %c0_i32 = arith.constant 0 : i32
    %c0_i32_0 = arith.constant 0 : i32
    %c0_i32_1 = arith.constant 0 : i32
    return %c0_i32, %c0_i32_0 : i32, i32
  }
  func.func @transform_4(%arg0: i32) -> (i32, i32, i32) {
    %c0_i32 = arith.constant 0 : i32
    %c0_i32_0 = arith.constant 0 : i32
    %c0_i32_1 = arith.constant 0 : i32
    %c0_i32_2 = arith.constant 0 : i32
    return %c0_i32, %c0_i32_0, %c0_i32_1 : i32, i32, i32
  }
  func.func @transform_5(%arg0: i32) -> (i32, i32) {
    %c0_i32 = arith.constant 0 : i32
    %c0_i32_0 = arith.constant 0 : i32
    %c0_i32_1 = arith.constant 0 : i32
    return %c0_i32, %c0_i32_0 : i32, i32
  }
  func.func @transform_6(%arg0: i32) -> (i32, i32) {
    %c0_i32 = arith.constant 0 : i32
    %c0_i32_0 = arith.constant 0 : i32
    %c0_i32_1 = arith.constant 0 : i32
    return %c0_i32, %c0_i32_0 : i32, i32
  }
  func.func @transform_7(%arg0: i32) -> (i32, i32) {
    %c0_i32 = arith.constant 0 : i32
    %c0_i32_0 = arith.constant 0 : i32
    %c0_i32_1 = arith.constant 0 : i32
    return %c0_i32, %c0_i32_0 : i32, i32
  }
  func.func @transform_8(%arg0: i32) -> (i32, i32) {
    %c0_i32 = arith.constant 0 : i32
    %c0_i32_0 = arith.constant 0 : i32
    %c0_i32_1 = arith.constant 0 : i32
    return %c0_i32, %c0_i32_0 : i32, i32
  }
  func.func @transform_9(%arg0: i32) -> (i32, i32) {
    %c0_i32 = arith.constant 0 : i32
    %c0_i32_0 = arith.constant 0 : i32
    %c0_i32_1 = arith.constant 0 : i32
    return %c0_i32, %c0_i32_0 : i32, i32
  }
  func.func @transform_10(%arg0: i32) -> (i32, i32) {
    %c0_i32 = arith.constant 0 : i32
    %c0_i32_0 = arith.constant 0 : i32
    %c0_i32_1 = arith.constant 0 : i32
    return %c0_i32, %c0_i32_0 : i32, i32
  }
  func.func @transform_11(%arg0: i32) -> (i32, i32) {
    %c0_i32 = arith.constant 0 : i32
    %c0_i32_0 = arith.constant 0 : i32
    %c0_i32_1 = arith.constant 0 : i32
    return %c0_i32, %c0_i32_0 : i32, i32
  }
  func.func @transform_12(%arg0: i32) -> (i32, i32) {
    %c0_i32 = arith.constant 0 : i32
    %c0_i32_0 = arith.constant 0 : i32
    %c0_i32_1 = arith.constant 0 : i32
    return %c0_i32, %c0_i32_0 : i32, i32
  }
  func.func @transform_13(%arg0: i32) -> (i32, i32) {
    %c0_i32 = arith.constant 0 : i32
    %c0_i32_0 = arith.constant 0 : i32
    %c0_i32_1 = arith.constant 0 : i32
    return %c0_i32, %c0_i32_0 : i32, i32
  }
  func.func @transform_14(%arg0: i32) -> (i32, i32) {
    %c0_i32 = arith.constant 0 : i32
    %c0_i32_0 = arith.constant 0 : i32
    %c0_i32_1 = arith.constant 0 : i32
    return %c0_i32, %c0_i32_0 : i32, i32
  }
  func.func @transform_15(%arg0: i32) -> (i32, i32) {
    %c0_i32 = arith.constant 0 : i32
    %c0_i32_0 = arith.constant 0 : i32
    %c0_i32_1 = arith.constant 0 : i32
    return %c0_i32, %c0_i32_0 : i32, i32
  }
  func.func @transform_16(%arg0: i32) -> (i32, i32) {
    %c0_i32 = arith.constant 0 : i32
    %c0_i32_0 = arith.constant 0 : i32
    return %arg0, %c0_i32 : i32, i32
  }
}

</mosaic_0001>

<llo_original>
// kernel: adapter_transformer_encoder_layer.1
$region0: #{adapter_transformer_encoder_layer.1}
  #allocation0 [shape = 'u32[]', space=smem, size = 0x4, offset = 0x4, fixed_abs, tag = 'smem constant byte address 0x4 - core index']
  #allocation1 [shape = 'u32[144,128]{1,0:T(1,128)}', space=vmem, size = 0x12000, scoped, tag = 'internal scratch']
  %s0 = inlined_call_operand.vmem [shape: f32[256,32], index: 0, kind: input, shape index: {}]
  %s1 = inlined_call_operand.vmem [shape: f32[2,1,128], index: 1, kind: input, shape index: {}]
  %s2 = inlined_call_operand.vmem [shape: f32[32,96], index: 2, kind: input, shape index: {}]
  %s3 = inlined_call_operand.vmem [shape: f32[1,96], index: 3, kind: input, shape index: {}]
  %s4 = inlined_call_operand.vmem [shape: f32[4,8,32], index: 4, kind: input, shape index: {}]
  %s5 = inlined_call_operand.vmem [shape: f32[1,32], index: 5, kind: input, shape index: {}]
  %s6 = inlined_call_operand.vmem [shape: f32[32,64], index: 6, kind: input, shape index: {}]
  %s7 = inlined_call_operand.vmem [shape: f32[1,64], index: 7, kind: input, shape index: {}]
  %s8 = inlined_call_operand.vmem [shape: f32[64,32], index: 8, kind: input, shape index: {}]
  %s9 = inlined_call_operand.vmem [shape: f32[1,32], index: 9, kind: input, shape index: {}]
  %s10 = inlined_call_operand.vmem [shape: f32[32,16], index: 10, kind: input, shape index: {}]
  %s11 = inlined_call_operand.vmem [shape: f32[1,16], index: 11, kind: input, shape index: {}]
  %s12 = inlined_call_operand.vmem [shape: f32[16,32], index: 12, kind: input, shape index: {}]
  %s13 = inlined_call_operand.vmem [shape: f32[1,32], index: 13, kind: input, shape index: {}]
  %s14 = inlined_call_operand.vmem [shape: f32[1,32], index: 14, kind: input, shape index: {}]
  %s15 = inlined_call_operand.vmem [shape: f32[1,32], index: 15, kind: input, shape index: {}]
  %s16 = inlined_call_operand.vmem [shape: f32[256,32], index: 16, kind: output, shape index: {}]
  %s17 = sld [smem:[#allocation0]]
  $region74: #{adapter_transformer_encoder_layer.1} parent=0
    _
  %s19 = ssub.s32 1, %s17
  %s20 = scalar_select 0, %s19, %s17
  // Predicated region
  $region2: #{adapter_transformer_encoder_layer.1} parent=0 // pred_check
    _
  $region3: #{adapter_transformer_encoder_layer.1} parent=0 // pred_check_branch
    %22 = sbr.rel (0) target = $region5
  $region4: #{adapter_transformer_encoder_layer.1} parent=0 // pred_region
    _
  $region5: #{adapter_transformer_encoder_layer.1} parent=0 // pred_fallthru
    _
  // Predicated region
  $region6: #{adapter_transformer_encoder_layer.1} parent=0 // pred_check
    _
  $region7: #{adapter_transformer_encoder_layer.1} parent=0 // pred_check_branch
    %24 = sbr.rel (0) target = $region9
  $region8: #{adapter_transformer_encoder_layer.1} parent=0 // pred_region
    _
  $region9: #{adapter_transformer_encoder_layer.1} parent=0 // pred_fallthru
    _
  // Predicated region
  $region10: #{adapter_transformer_encoder_layer.1} parent=0 // pred_check
    _
  $region11: #{adapter_transformer_encoder_layer.1} parent=0 // pred_check_branch
    %26 = sbr.rel (0) target = $region13
  $region12: #{adapter_transformer_encoder_layer.1} parent=0 // pred_region
    _
  $region13: #{adapter_transformer_encoder_layer.1} parent=0 // pred_fallthru
    _
  // Predicated region
  $region14: #{adapter_transformer_encoder_layer.1} parent=0 // pred_check
    _
  $region15: #{adapter_transformer_encoder_layer.1} parent=0 // pred_check_branch
    %28 = sbr.rel (0) target = $region17
  $region16: #{adapter_transformer_encoder_layer.1} parent=0 // pred_region
    _
  $region17: #{adapter_transformer_encoder_layer.1} parent=0 // pred_fallthru
    _
  // Predicated region
  $region18: #{adapter_transformer_encoder_layer.1} parent=0 // pred_check
    _
  $region19: #{adapter_transformer_encoder_layer.1} parent=0 // pred_check_branch
    %30 = sbr.rel (0) target = $region21
  $region20: #{adapter_transformer_encoder_layer.1} parent=0 // pred_region
    _
  $region21: #{adapter_transformer_encoder_layer.1} parent=0 // pred_fallthru
    _
  // Predicated region
  $region22: #{adapter_transformer_encoder_layer.1} parent=0 // pred_check
    _
  $region23: #{adapter_transformer_encoder_layer.1} parent=0 // pred_check_branch
    %32 = sbr.rel (0) target = $region25
  $region24: #{adapter_transformer_encoder_layer.1} parent=0 // pred_region
    _
  $region25: #{adapter_transformer_encoder_layer.1} parent=0 // pred_fallthru
    _
  // Predicated region
  $region26: #{adapter_transformer_encoder_layer.1} parent=0 // pred_check
    _
  $region27: #{adapter_transformer_encoder_layer.1} parent=0 // pred_check_branch
    %34 = sbr.rel (0) target = $region29
  $region28: #{adapter_transformer_encoder_layer.1} parent=0 // pred_region
    _
  $region29: #{adapter_transformer_encoder_layer.1} parent=0 // pred_fallthru
    _
  // Predicated region
  $region30: #{adapter_transformer_encoder_layer.1} parent=0 // pred_check
    _
  $region31: #{adapter_transformer_encoder_layer.1} parent=0 // pred_check_branch
    %36 = sbr.rel (0) target = $region33
  $region32: #{adapter_transformer_encoder_layer.1} parent=0 // pred_region
    _
  $region33: #{adapter_transformer_encoder_layer.1} parent=0 // pred_fallthru
    _
  // Predicated region
  $region34: #{adapter_transformer_encoder_layer.1} parent=0 // pred_check
    _
  $region35: #{adapter_transformer_encoder_layer.1} parent=0 // pred_check_branch
    %38 = sbr.rel (0) target = $region37
  $region36: #{adapter_transformer_encoder_layer.1} parent=0 // pred_region
    _
  $region37: #{adapter_transformer_encoder_layer.1} parent=0 // pred_fallthru
    _
  // Predicated region
  $region38: #{adapter_transformer_encoder_layer.1} parent=0 // pred_check
    _
  $region39: #{adapter_transformer_encoder_layer.1} parent=0 // pred_check_branch
    %40 = sbr.rel (0) target = $region41
  $region40: #{adapter_transformer_encoder_layer.1} parent=0 // pred_region
    _
  $region41: #{adapter_transformer_encoder_layer.1} parent=0 // pred_fallthru
    _
  // Predicated region
  $region42: #{adapter_transformer_encoder_layer.1} parent=0 // pred_check
    _
  $region43: #{adapter_transformer_encoder_layer.1} parent=0 // pred_check_branch
    %42 = sbr.rel (0) target = $region45
  $region44: #{adapter_transformer_encoder_layer.1} parent=0 // pred_region
    _
  $region45: #{adapter_transformer_encoder_layer.1} parent=0 // pred_fallthru
    _
  // Predicated region
  $region46: #{adapter_transformer_encoder_layer.1} parent=0 // pred_check
    _
  $region47: #{adapter_transformer_encoder_layer.1} parent=0 // pred_check_branch
    %44 = sbr.rel (0) target = $region49
  $region48: #{adapter_transformer_encoder_layer.1} parent=0 // pred_region
    _
  $region49: #{adapter_transformer_encoder_layer.1} parent=0 // pred_fallthru
    _
  // Predicated region
  $region50: #{adapter_transformer_encoder_layer.1} parent=0 // pred_check
    _
  $region51: #{adapter_transformer_encoder_layer.1} parent=0 // pred_check_branch
    %46 = sbr.rel (0) target = $region53
  $region52: #{adapter_transformer_encoder_layer.1} parent=0 // pred_region
    _
  $region53: #{adapter_transformer_encoder_layer.1} parent=0 // pred_fallthru
    _
  // Predicated region
  $region54: #{adapter_transformer_encoder_layer.1} parent=0 // pred_check
    _
  $region55: #{adapter_transformer_encoder_layer.1} parent=0 // pred_check_branch
    %48 = sbr.rel (0) target = $region57
  $region56: #{adapter_transformer_encoder_layer.1} parent=0 // pred_region
    _
  $region57: #{adapter_transformer_encoder_layer.1} parent=0 // pred_fallthru
    _
  // Predicated region
  $region58: #{adapter_transformer_encoder_layer.1} parent=0 // pred_check
    _
  $region59: #{adapter_transformer_encoder_layer.1} parent=0 // pred_check_branch
    %50 = sbr.rel (0) target = $region61
  $region60: #{adapter_transformer_encoder_layer.1} parent=0 // pred_region
    _
  $region61: #{adapter_transformer_encoder_layer.1} parent=0 // pred_fallthru
    _
  // Predicated region
  $region62: #{adapter_transformer_encoder_layer.1} parent=0 // pred_check
    _
  $region63: #{adapter_transformer_encoder_layer.1} parent=0 // pred_check_branch
    %52 = sbr.rel (0) target = $region65
  $region64: #{adapter_transformer_encoder_layer.1} parent=0 // pred_region
    _
  $region65: #{adapter_transformer_encoder_layer.1} parent=0 // pred_fallthru
    _
  %v54 = vld [vmem:[%s0] sm:$0xff]
  %v55 = vld [vmem:[%s0 + $0x8] sm:$0xff]
  %v56 = vld [vmem:[%s0 + $0x10] sm:$0xff]
  %v57 = vld [vmem:[%s0 + $0x18] sm:$0xff]
  %v58 = vld [vmem:[%s0 + $0x20] sm:$0xff]
  %v59 = vld [vmem:[%s0 + $0x28] sm:$0xff]
  %v60 = vld [vmem:[%s0 + $0x30] sm:$0xff]
  %v61 = vld [vmem:[%s0 + $0x38] sm:$0xff]
  %v62 = vld [vmem:[%s0 + $0x40] sm:$0xff]
  %v63 = vld [vmem:[%s0 + $0x48] sm:$0xff]
  %v64 = vld [vmem:[%s0 + $0x50] sm:$0xff]
  %v65 = vld [vmem:[%s0 + $0x58] sm:$0xff]
  %v66 = vld [vmem:[%s0 + $0x60] sm:$0xff]
  %v67 = vld [vmem:[%s0 + $0x68] sm:$0xff]
  %v68 = vld [vmem:[%s0 + $0x70] sm:$0xff]
  %v69 = vld [vmem:[%s0 + $0x78] sm:$0xff]
  %v70 = vld [vmem:[%s0 + $0x80] sm:$0xff]
  %v71 = vld [vmem:[%s0 + $0x88] sm:$0xff]
  %v72 = vld [vmem:[%s0 + $0x90] sm:$0xff]
  %v73 = vld [vmem:[%s0 + $0x98] sm:$0xff]
  %v74 = vld [vmem:[%s0 + $0xa0] sm:$0xff]
  %v75 = vld [vmem:[%s0 + $0xa8] sm:$0xff]
  %v76 = vld [vmem:[%s0 + $0xb0] sm:$0xff]
  %v77 = vld [vmem:[%s0 + $0xb8] sm:$0xff]
  %v78 = vld [vmem:[%s0 + $0xc0] sm:$0xff]
  %v79 = vld [vmem:[%s0 + $0xc8] sm:$0xff]
  %v80 = vld [vmem:[%s0 + $0xd0] sm:$0xff]
  %v81 = vld [vmem:[%s0 + $0xd8] sm:$0xff]
  %v82 = vld [vmem:[%s0 + $0xe0] sm:$0xff]
  %v83 = vld [vmem:[%s0 + $0xe8] sm:$0xff]
  %v84 = vld [vmem:[%s0 + $0xf0] sm:$0xff]
  %v85 = vld [vmem:[%s0 + $0xf8] sm:$0xff]
  %v86 = vld [vmem:[%s2] sm:$0xff]
  %v87 = vld [vmem:[%s2 + $0x8] sm:$0xff]
  %v88 = vld [vmem:[%s2 + $0x10] sm:$0xff]
  %v89 = vld [vmem:[%s2 + $0x18] sm:$0xff]
  %v90 = vpack.c.bf16 %v55, %v54
  %v91 = vpack.c.bf16 %v57, %v56
  %v92 = vpack.c.bf16 %v59, %v58
  %v93 = vpack.c.bf16 %v61, %v60
  %v94 = vpack.c.bf16 %v63, %v62
  %v95 = vpack.c.bf16 %v65, %v64
  %v96 = vpack.c.bf16 %v67, %v66
  %v97 = vpack.c.bf16 %v69, %v68
  %v98 = vpack.c.bf16 %v71, %v70
  %v99 = vpack.c.bf16 %v73, %v72
  %v100 = vpack.c.bf16 %v75, %v74
  %v101 = vpack.c.bf16 %v77, %v76
  %v102 = vpack.c.bf16 %v79, %v78
  %v103 = vpack.c.bf16 %v81, %v80
  %v104 = vpack.c.bf16 %v83, %v82
  %v105 = vpack.c.bf16 %v85, %v84
  %v106 = vpack.c.bf16 %v87, %v86
  %v107 = vpack.c.bf16 %v89, %v88
  %v108 = vld [vmem:[%s3] sm:$0x1]
  %v110 = vlaneseq
  %v111 = vshrl.u32 %v110, 7
  %v112 = vsub.s32 0, %v111
  %v113 = vrot.slane %v108, %v112
  %vm115 = vcmask 261120
  %v117 = vsel %vm115, %v90, 0
  %v120 = vsel %vm115, %v91, 0
  %v123 = vsel %vm115, %v92, 0
  %v126 = vsel %vm115, %v93, 0
  %v129 = vsel %vm115, %v94, 0
  %v132 = vsel %vm115, %v95, 0
  %v135 = vsel %vm115, %v96, 0
  %v138 = vsel %vm115, %v97, 0
  %v141 = vsel %vm115, %v98, 0
  %v144 = vsel %vm115, %v99, 0
  %v147 = vsel %vm115, %v100, 0
  %v150 = vsel %vm115, %v101, 0
  %v153 = vsel %vm115, %v102, 0
  %v156 = vsel %vm115, %v103, 0
  %v159 = vsel %vm115, %v104, 0
  %v162 = vsel %vm115, %v105, 0
  %164 = vmatprep.subr.bf16.mxu0 0
  %165 = vmatpush1.bf16.msra.mxu0 %v106
  %166 = vmatprep.subr.bf16.mxu0 0
  %167 = vmatpush1.bf16.msra.mxu0 %v107
  %168 = vmatprep.subr.bf16.mxu0 0
  %169 = vmatpush1.bf16.msra.mxu0 0
  %170 = vmatprep.subr.bf16.mxu0 0
  %171 = vmatpush1.bf16.msra.mxu0 0
  %172 = vmatprep.subr.bf16.mxu0 0
  %173 = vmatpush1.bf16.msra.mxu0 0
  %174 = vmatprep.subr.bf16.mxu0 0
  %175 = vmatpush1.bf16.msra.mxu0 0
  %176 = vmatprep.subr.bf16.mxu0 0
  %177 = vmatpush1.bf16.msra.mxu0 0
  %178 = vmatprep.subr.bf16.mxu0 0
  %179 = vmatpush1.bf16.msra.mxu0 0
  %180 = vmatprep.subr.bf16.mxu0 0
  %181 = vmatpush1.bf16.msra.mxu0 0
  %182 = vmatprep.subr.bf16.mxu0 0
  %183 = vmatpush1.bf16.msra.mxu0 0
  %184 = vmatprep.subr.bf16.mxu0 0
  %185 = vmatpush1.bf16.msra.mxu0 0
  %186 = vmatprep.subr.bf16.mxu0 0
  %187 = vmatpush1.bf16.msra.mxu0 0
  %188 = vmatprep.subr.bf16.mxu0 0
  %189 = vmatpush1.bf16.msra.mxu0 0
  %190 = vmatprep.subr.bf16.mxu0 0
  %191 = vmatpush1.bf16.msra.mxu0 0
  %192 = vmatprep.subr.bf16.mxu0 0
  %193 = vmatpush1.bf16.msra.mxu0 0
  %194 = vmatprep.subr.bf16.mxu0 0
  %195 = vmatpush1.bf16.msra.mxu0 0
  %196 = vmatprep.mubr.bf16.mxu0 0
  %197 = vmatmul.mubr.bf16.gmra.mrb[0].mxu0 %v117
  %v198 = vpop.f32.mrb[0].mxu0
  %v199 = vadd.f32 %v113, %v198
  %v200 = vpop.f32.mrb[0].mxu0
  %v201 = vpop.f32.mrb[0].mxu0
  %v202 = vadd.f32 %v113, %v201
  %v203 = vpop.f32.mrb[0].mxu0
  %204 = vmatprep.mubr.bf16.mxu0 0
  %205 = vmatmul.mubr.bf16.gmra.mrb[0].mxu0 %v120
  %v206 = vpop.f32.mrb[0].mxu0
  %v207 = vadd.f32 %v113, %v206
  %v208 = vpop.f32.mrb[0].mxu0
  %v209 = vpop.f32.mrb[0].mxu0
  %v210 = vadd.f32 %v113, %v209
  %v211 = vpop.f32.mrb[0].mxu0
  %212 = vmatprep.mubr.bf16.mxu0 0
  %213 = vmatmul.mubr.bf16.gmra.mrb[0].mxu0 %v123
  %v214 = vpop.f32.mrb[0].mxu0
  %v215 = vadd.f32 %v113, %v214
  %v216 = vpop.f32.mrb[0].mxu0
  %v217 = vpop.f32.mrb[0].mxu0
  %v218 = vadd.f32 %v113, %v217
  %v219 = vpop.f32.mrb[0].mxu0
  %220 = vmatprep.mubr.bf16.mxu0 0
  %221 = vmatmul.mubr.bf16.gmra.mrb[0].mxu0 %v126
  %v222 = vpop.f32.mrb[0].mxu0
  %v223 = vadd.f32 %v113, %v222
  %v224 = vpop.f32.mrb[0].mxu0
  %v225 = vpop.f32.mrb[0].mxu0
  %v226 = vadd.f32 %v113, %v225
  %v227 = vpop.f32.mrb[0].mxu0
  %228 = vmatprep.mubr.bf16.mxu0 0
  %229 = vmatmul.mubr.bf16.gmra.mrb[0].mxu0 %v129
  %v230 = vpop.f32.mrb[0].mxu0
  %v231 = vadd.f32 %v113, %v230
  %v232 = vpop.f32.mrb[0].mxu0
  %v233 = vpop.f32.mrb[0].mxu0
  %v234 = vadd.f32 %v113, %v233
  %v235 = vpop.f32.mrb[0].mxu0
  %236 = vmatprep.mubr.bf16.mxu0 0
  %237 = vmatmul.mubr.bf16.gmra.mrb[0].mxu0 %v132
  %v238 = vpop.f32.mrb[0].mxu0
  %v239 = vadd.f32 %v113, %v238
  %v240 = vpop.f32.mrb[0].mxu0
  %v241 = vpop.f32.mrb[0].mxu0
  %v242 = vadd.f32 %v113, %v241
  %v243 = vpop.f32.mrb[0].mxu0
  %244 = vmatprep.mubr.bf16.mxu0 0
  %245 = vmatmul.mubr.bf16.gmra.mrb[0].mxu0 %v135
  %v246 = vpop.f32.mrb[0].mxu0
  %v247 = vadd.f32 %v113, %v246
  %v248 = vpop.f32.mrb[0].mxu0
  %v249 = vpop.f32.mrb[0].mxu0
  %v250 = vadd.f32 %v113, %v249
  %v251 = vpop.f32.mrb[0].mxu0
  %252 = vmatprep.mubr.bf16.mxu0 0
  %253 = vmatmul.mubr.bf16.gmra.mrb[0].mxu0 %v138
  %v254 = vpop.f32.mrb[0].mxu0
  %v255 = vadd.f32 %v113, %v254
  %v256 = vpop.f32.mrb[0].mxu0
  %v257 = vpop.f32.mrb[0].mxu0
  %v258 = vadd.f32 %v113, %v257
  %v259 = vpop.f32.mrb[0].mxu0
  %260 = vmatprep.mubr.bf16.mxu0 0
  %261 = vmatmul.mubr.bf16.gmra.mrb[0].mxu0 %v141
  %v262 = vpop.f32.mrb[0].mxu0
  %v263 = vadd.f32 %v113, %v262
  %v264 = vpop.f32.mrb[0].mxu0
  %v265 = vpop.f32.mrb[0].mxu0
  %v266 = vadd.f32 %v113, %v265
  %v267 = vpop.f32.mrb[0].mxu0
  %268 = vmatprep.mubr.bf16.mxu0 0
  %269 = vmatmul.mubr.bf16.gmra.mrb[0].mxu0 %v144
  %v270 = vpop.f32.mrb[0].mxu0
  %v271 = vadd.f32 %v113, %v270
  %v272 = vpop.f32.mrb[0].mxu0
  %v273 = vpop.f32.mrb[0].mxu0
  %v274 = vadd.f32 %v113, %v273
  %v275 = vpop.f32.mrb[0].mxu0
  %276 = vmatprep.mubr.bf16.mxu0 0
  %277 = vmatmul.mubr.bf16.gmra.mrb[0].mxu0 %v147
  %v278 = vpop.f32.mrb[0].mxu0
  %v279 = vadd.f32 %v113, %v278
  %v280 = vpop.f32.mrb[0].mxu0
  %v281 = vpop.f32.mrb[0].mxu0
  %v282 = vadd.f32 %v113, %v281
  %v283 = vpop.f32.mrb[0].mxu0
  %284 = vmatprep.mubr.bf16.mxu0 0
  %285 = vmatmul.mubr.bf16.gmra.mrb[0].mxu0 %v150
  %v286 = vpop.f32.mrb[0].mxu0
  %v287 = vadd.f32 %v113, %v286
  %v288 = vpop.f32.mrb[0].mxu0
  %v289 = vpop.f32.mrb[0].mxu0
  %v290 = vadd.f32 %v113, %v289
  %v291 = vpop.f32.mrb[0].mxu0
  %292 = vmatprep.mubr.bf16.mxu0 0
  %293 = vmatmul.mubr.bf16.gmra.mrb[0].mxu0 %v153
  %v294 = vpop.f32.mrb[0].mxu0
  %v295 = vadd.f32 %v113, %v294
  %v296 = vpop.f32.mrb[0].mxu0
  %v297 = vpop.f32.mrb[0].mxu0
  %v298 = vadd.f32 %v113, %v297
  %v299 = vpop.f32.mrb[0].mxu0
  %300 = vmatprep.mubr.bf16.mxu0 0
  %301 = vmatmul.mubr.bf16.gmra.mrb[0].mxu0 %v156
  %v302 = vpop.f32.mrb[0].mxu0
  %v303 = vadd.f32 %v113, %v302
  %v304 = vpop.f32.mrb[0].mxu0
  %v305 = vpop.f32.mrb[0].mxu0
  %v306 = vadd.f32 %v113, %v305
  %v307 = vpop.f32.mrb[0].mxu0
  %308 = vmatprep.mubr.bf16.mxu0 0
  %309 = vmatmul.mubr.bf16.gmra.mrb[0].mxu0 %v159
  %v310 = vpop.f32.mrb[0].mxu0
  %v311 = vadd.f32 %v113, %v310
  %v312 = vpop.f32.mrb[0].mxu0
  %v313 = vpop.f32.mrb[0].mxu0
  %v314 = vadd.f32 %v113, %v313
  %v315 = vpop.f32.mrb[0].mxu0
  %316 = vmatprep.mubr.bf16.mxu0 0
  %317 = vmatmul.mubr.bf16.gmra.mrb[0].mxu0 %v162
  %v318 = vpop.f32.mrb[0].mxu0
  %v319 = vadd.f32 %v113, %v318
  %v320 = vpop.f32.mrb[0].mxu0
  %v321 = vpop.f32.mrb[0].mxu0
  %v322 = vadd.f32 %v113, %v321
  %v323 = vpop.f32.mrb[0].mxu0
  %324 = vdwg.mxu0
  %v325 = vld [vmem:[%s1] sm:$0x1]
  %v326 = vpack.c.bf16 %v202, %v199
  %v327 = vpack.c.bf16 %v210, %v207
  %v328 = vpack.c.bf16 %v218, %v215
  %v329 = vpack.c.bf16 %v226, %v223
  %v330 = vpack.c.bf16 %v234, %v231
  %v331 = vpack.c.bf16 %v242, %v239
  %v332 = vpack.c.bf16 %v250, %v247
  %v333 = vpack.c.bf16 %v258, %v255
  %342 = vrot.lane.b32.xlu0 %v326, 96
  %v343 = vpop.permute.xlu0 %342
  %344 = vrot.lane.b32.xlu0 %v327, 96
  %v345 = vpop.permute.xlu0 %344
  %346 = vrot.lane.b32.xlu0 %v328, 96
  %v347 = vpop.permute.xlu0 %346
  %348 = vrot.lane.b32.xlu0 %v329, 96
  %v349 = vpop.permute.xlu0 %348
  %350 = vrot.lane.b32.xlu0 %v330, 96
  %v351 = vpop.permute.xlu0 %350
  %352 = vrot.lane.b32.xlu0 %v331, 96
  %v353 = vpop.permute.xlu0 %352
  %354 = vrot.lane.b32.xlu0 %v332, 96
  %v355 = vpop.permute.xlu0 %354
  %356 = vrot.lane.b32.xlu0 %v333, 96
  %v357 = vpop.permute.xlu0 %356
  %vm358 = vcmask 64512
  %v360 = vsel %vm358, %v326, 0
  %v363 = vsel %vm358, %v327, 0
  %v366 = vsel %vm358, %v328, 0
  %v369 = vsel %vm358, %v329, 0
  %v372 = vsel %vm358, %v330, 0
  %v375 = vsel %vm358, %v331, 0
  %v378 = vsel %vm358, %v332, 0
  %v381 = vsel %vm358, %v333, 0
  %v384 = vsel %vm358, %v343, 0
  %v387 = vsel %vm358, %v345, 0
  %v390 = vsel %vm358, %v347, 0
  %v393 = vsel %vm358, %v349, 0
  %v396 = vsel %vm358, %v351, 0
  %v399 = vsel %vm358, %v353, 0
  %v402 = vsel %vm358, %v355, 0
  %v405 = vsel %vm358, %v357, 0
  %407 = vmatprep.subr.bf16.mxu0 0
  %408 = vmatpush1.bf16.xpose.msra.mxu0 %v384
  %409 = vmatprep.subr.bf16.mxu0 0
  %410 = vmatpush1.bf16.xpose.msra.mxu0 %v387
  %411 = vmatprep.subr.bf16.mxu0 0
  %412 = vmatpush1.bf16.xpose.msra.mxu0 %v390
  %413 = vmatprep.subr.bf16.mxu0 0
  %414 = vmatpush1.bf16.xpose.msra.mxu0 %v393
  %415 = vmatprep.subr.bf16.mxu0 0
  %416 = vmatpush1.bf16.xpose.msra.mxu0 %v396
  %417 = vmatprep.subr.bf16.mxu0 0
  %418 = vmatpush1.bf16.xpose.msra.mxu0 %v399
  %419 = vmatprep.subr.bf16.mxu0 0
  %420 = vmatpush1.bf16.xpose.msra.mxu0 %v402
  %421 = vmatprep.subr.bf16.mxu0 0
  %422 = vmatpush1.bf16.xpose.msra.mxu0 %v405
  %423 = vmatprep.subr.bf16.mxu0 0
  %424 = vmatpush1.bf16.xpose.msra.mxu0 0
  %425 = vmatprep.subr.bf16.mxu0 0
  %426 = vmatpush1.bf16.xpose.msra.mxu0 0
  %427 = vmatprep.subr.bf16.mxu0 0
  %428 = vmatpush1.bf16.xpose.msra.mxu0 0
  %429 = vmatprep.subr.bf16.mxu0 0
  %430 = vmatpush1.bf16.xpose.msra.mxu0 0
  %431 = vmatprep.subr.bf16.mxu0 0
  %432 = vmatpush1.bf16.xpose.msra.mxu0 0
  %433 = vmatprep.subr.bf16.mxu0 0
  %434 = vmatpush1.bf16.xpose.msra.mxu0 0
  %435 = vmatprep.subr.bf16.mxu0 0
  %436 = vmatpush1.bf16.xpose.msra.mxu0 0
  %437 = vmatprep.subr.bf16.mxu0 0
  %438 = vmatpush1.bf16.xpose.msra.mxu0 0
  %439 = vmatprep.mubr.bf16.mxu0 0
  %440 = vmatmul.mubr.bf16.gmra.mrb[0].mxu0 %v360
  %v441 = vpop.f32.mrb[0].mxu0
  %v442 = vadd.f32 0.0, %v441
  %v443 = vpop.f32.mrb[0].mxu0
  %v444 = vpop.f32.mrb[0].mxu0
  %v445 = vadd.f32 0.0, %v444
  %v446 = vpop.f32.mrb[0].mxu0
  %447 = vmatprep.mubr.bf16.mxu0 0
  %448 = vmatmul.mubr.bf16.gmra.mrb[0].mxu0 %v363
  %v449 = vpop.f32.mrb[0].mxu0
  %v450 = vadd.f32 0.0, %v449
  %v451 = vpop.f32.mrb[0].mxu0
  %v452 = vpop.f32.mrb[0].mxu0
  %v453 = vadd.f32 0.0, %v452
  %v454 = vpop.f32.mrb[0].mxu0
  %455 = vmatprep.mubr.bf16.mxu0 0
  %456 = vmatmul.mubr.bf16.gmra.mrb[0].mxu0 %v366
  %v457 = vpop.f32.mrb[0].mxu0
  %v458 = vadd.f32 0.0, %v457
  %v459 = vpop.f32.mrb[0].mxu0
  %v460 = vpop.f32.mrb[0].mxu0
  %v461 = vadd.f32 0.0, %v460
  %v462 = vpop.f32.mrb[0].mxu0
  %463 = vmatprep.mubr.bf16.mxu0 0
  %464 = vmatmul.mubr.bf16.gmra.mrb[0].mxu0 %v369
  %v465 = vpop.f32.mrb[0].mxu0
  %v466 = vadd.f32 0.0, %v465
  %v467 = vpop.f32.mrb[0].mxu0
  %v468 = vpop.f32.mrb[0].mxu0
  %v469 = vadd.f32 0.0, %v468
  %v470 = vpop.f32.mrb[0].mxu0
  %471 = vmatprep.mubr.bf16.mxu0 0
  %472 = vmatmul.mubr.bf16.gmra.mrb[0].mxu0 %v372
  %v473 = vpop.f32.mrb[0].mxu0
  %v474 = vadd.f32 0.0, %v473
  %v475 = vpop.f32.mrb[0].mxu0
  %v476 = vpop.f32.mrb[0].mxu0
  %v477 = vadd.f32 0.0, %v476
  %v478 = vpop.f32.mrb[0].mxu0
  %479 = vmatprep.mubr.bf16.mxu0 0
  %480 = vmatmul.mubr.bf16.gmra.mrb[0].mxu0 %v375
  %v481 = vpop.f32.mrb[0].mxu0
  %v482 = vadd.f32 0.0, %v481
  %v483 = vpop.f32.mrb[0].mxu0
  %v484 = vpop.f32.mrb[0].mxu0
  %v485 = vadd.f32 0.0, %v484
  %v486 = vpop.f32.mrb[0].mxu0
  %487 = vmatprep.mubr.bf16.mxu0 0
  %488 = vmatmul.mubr.bf16.gmra.mrb[0].mxu0 %v378
  %v489 = vpop.f32.mrb[0].mxu0
  %v490 = vadd.f32 0.0, %v489
  %v491 = vpop.f32.mrb[0].mxu0
  %v492 = vpop.f32.mrb[0].mxu0
  %v493 = vadd.f32 0.0, %v492
  %v494 = vpop.f32.mrb[0].mxu0
  %495 = vmatprep.mubr.bf16.mxu0 0
  %496 = vmatmul.mubr.bf16.gmra.mrb[0].mxu0 %v381
  %v497 = vpop.f32.mrb[0].mxu0
  %v498 = vadd.f32 0.0, %v497
  %v499 = vpop.f32.mrb[0].mxu0
  %v500 = vpop.f32.mrb[0].mxu0
  %v501 = vadd.f32 0.0, %v500
  %v502 = vpop.f32.mrb[0].mxu0
  %503 = vdwg.mxu0
  %v504 = vmul.f32 %v442, 0.35355338
  %v505 = vmul.f32 %v445, 0.35355338
  %v506 = vmul.f32 %v450, 0.35355338
  %v507 = vmul.f32 %v453, 0.35355338
  %v508 = vmul.f32 %v458, 0.35355338
  %v509 = vmul.f32 %v461, 0.35355338
  %v510 = vmul.f32 %v466, 0.35355338
  %v511 = vmul.f32 %v469, 0.35355338
  %v512 = vmul.f32 %v474, 0.35355338
  %v513 = vmul.f32 %v477, 0.35355338
  %v514 = vmul.f32 %v482, 0.35355338
  %v515 = vmul.f32 %v485, 0.35355338
  %v516 = vmul.f32 %v490, 0.35355338
  %v517 = vmul.f32 %v493, 0.35355338
  %v518 = vmul.f32 %v498, 0.35355338
  %v519 = vmul.f32 %v501, 0.35355338
  %v521 = vlaneseq
  %v522 = vshrl.u32 %v521, 7
  %v523 = vsub.s32 0, %v522
  %v524 = vrot.slane %v325, %v523
  %v526 = vadd.f32 %v504, %v524
  %v527 = vadd.f32 %v505, %v524
  %v528 = vadd.f32 %v506, %v524
  %v529 = vadd.f32 %v507, %v524
  %v530 = vadd.f32 %v508, %v524
  %v531 = vadd.f32 %v509, %v524
  %v532 = vadd.f32 %v510, %v524
  %v533 = vadd.f32 %v511, %v524
  %v534 = vadd.f32 %v512, %v524
  %v535 = vadd.f32 %v513, %v524
  %v536 = vadd.f32 %v514, %v524
  %v537 = vadd.f32 %v515, %v524
  %v538 = vadd.f32 %v516, %v524
  %v539 = vadd.f32 %v517, %v524
  %v540 = vadd.f32 %v518, %v524
  %v541 = vadd.f32 %v519, %v524
  %542 = vmax.xlane.f32.xlu0 %v526
  %v543 = vpop.xlane.xlu0 %542
  %544 = vmax.xlane.f32.xlu0 %v527
  %v545 = vpop.xlane.xlu0 %544
  %546 = vmax.xlane.f32.xlu0 %v528
  %v547 = vpop.xlane.xlu0 %546
  %548 = vmax.xlane.f32.xlu0 %v529
  %v549 = vpop.xlane.xlu0 %548
  %550 = vmax.xlane.f32.xlu0 %v530
  %v551 = vpop.xlane.xlu0 %550
  %552 = vmax.xlane.f32.xlu0 %v531
  %v553 = vpop.xlane.xlu0 %552
  %554 = vmax.xlane.f32.xlu0 %v532
  %v555 = vpop.xlane.xlu0 %554
  %556 = vmax.xlane.f32.xlu0 %v533
  %v557 = vpop.xlane.xlu0 %556
  %558 = vmax.xlane.f32.xlu0 %v534
  %v559 = vpop.xlane.xlu0 %558
  %560 = vmax.xlane.f32.xlu0 %v535
  %v561 = vpop.xlane.xlu0 %560
  %562 = vmax.xlane.f32.xlu0 %v536
  %v563 = vpop.xlane.xlu0 %562
  %564 = vmax.xlane.f32.xlu0 %v537
  %v565 = vpop.xlane.xlu0 %564
  %566 = vmax.xlane.f32.xlu0 %v538
  %v567 = vpop.xlane.xlu0 %566
  %568 = vmax.xlane.f32.xlu0 %v539
  %v569 = vpop.xlane.xlu0 %568
  %570 = vmax.xlane.f32.xlu0 %v540
  %v571 = vpop.xlane.xlu0 %570
  %572 = vmax.xlane.f32.xlu0 %v541
  %v573 = vpop.xlane.xlu0 %572
  %v574 = vsub.f32 %v526, %v543
  %v575 = vsub.f32 %v527, %v545
  %v576 = vsub.f32 %v528, %v547
  %v577 = vsub.f32 %v529, %v549
  %v578 = vsub.f32 %v530, %v551
  %v579 = vsub.f32 %v531, %v553
  %v580 = vsub.f32 %v532, %v555
  %v581 = vsub.f32 %v533, %v557
  %v582 = vsub.f32 %v534, %v559
  %v583 = vsub.f32 %v535, %v561
  %v584 = vsub.f32 %v536, %v563
  %v585 = vsub.f32 %v537, %v565
  %v586 = vsub.f32 %v538, %v567
  %v587 = vsub.f32 %v539, %v569
  %v588 = vsub.f32 %v540, %v571
  %v589 = vsub.f32 %v541, %v573
  %v590 = vmul.f32 %v574, 1.442695
  %v591 = vpow.pop %v590
  %v592 = vmul.f32 %v575, 1.442695
  %v593 = vpow.pop %v592
  %v594 = vmul.f32 %v576, 1.442695
  %v595 = vpow.pop %v594
  %v596 = vmul.f32 %v577, 1.442695
  %v597 = vpow.pop %v596
  %v598 = vmul.f32 %v578, 1.442695
  %v599 = vpow.pop %v598
  %v600 = vmul.f32 %v579, 1.442695
  %v601 = vpow.pop %v600
  %v602 = vmul.f32 %v580, 1.442695
  %v603 = vpow.pop %v602
  %v604 = vmul.f32 %v581, 1.442695
  %v605 = vpow.pop %v604
  %v606 = vmul.f32 %v582, 1.442695
  %v607 = vpow.pop %v606
  %v608 = vmul.f32 %v583, 1.442695
  %v609 = vpow.pop %v608
  %v610 = vmul.f32 %v584, 1.442695
  %v611 = vpow.pop %v610
  %v612 = vmul.f32 %v585, 1.442695
  %v613 = vpow.pop %v612
  %v614 = vmul.f32 %v586, 1.442695
  %v615 = vpow.pop %v614
  %v616 = vmul.f32 %v587, 1.442695
  %v617 = vpow.pop %v616
  %v618 = vmul.f32 %v588, 1.442695
  %v619 = vpow.pop %v618
  %v620 = vmul.f32 %v589, 1.442695
  %v621 = vpow.pop %v620
  %622 = vadd.xlane.f32.xlu0 %v591
  %v623 = vpop.xlane.xlu0 %622
  %624 = vadd.xlane.f32.xlu0 %v593
  %v625 = vpop.xlane.xlu0 %624
  %626 = vadd.xlane.f32.xlu0 %v595
  %v627 = vpop.xlane.xlu0 %626
  %628 = vadd.xlane.f32.xlu0 %v597
  %v629 = vpop.xlane.xlu0 %628
  %630 = vadd.xlane.f32.xlu0 %v599
  %v631 = vpop.xlane.xlu0 %630
  %632 = vadd.xlane.f32.xlu0 %v601
  %v633 = vpop.xlane.xlu0 %632
  %634 = vadd.xlane.f32.xlu0 %v603
  %v635 = vpop.xlane.xlu0 %634
  %636 = vadd.xlane.f32.xlu0 %v605
  %v637 = vpop.xlane.xlu0 %636
  %638 = vadd.xlane.f32.xlu0 %v607
  %v639 = vpop.xlane.xlu0 %638
  %640 = vadd.xlane.f32.xlu0 %v609
  %v641 = vpop.xlane.xlu0 %640
  %642 = vadd.xlane.f32.xlu0 %v611
  %v643 = vpop.xlane.xlu0 %642
  %644 = vadd.xlane.f32.xlu0 %v613
  %v645 = vpop.xlane.xlu0 %644
  %646 = vadd.xlane.f32.xlu0 %v615
  %v647 = vpop.xlane.xlu0 %646
  %648 = vadd.xlane.f32.xlu0 %v617
  %v649 = vpop.xlane.xlu0 %648
  %650 = vadd.xlane.f32.xlu0 %v619
  %v651 = vpop.xlane.xlu0 %650
  %652 = vadd.xlane.f32.xlu0 %v621
  %v653 = vpop.xlane.xlu0 %652
  %v654 = vpack.c.bf16 %v593, %v591
  %v655 = vpack.c.bf16 %v597, %v595
  %v656 = vpack.c.bf16 %v601, %v599
  %v657 = vpack.c.bf16 %v605, %v603
  %v658 = vpack.c.bf16 %v609, %v607
  %v659 = vpack.c.bf16 %v613, %v611
  %v660 = vpack.c.bf16 %v617, %v615
  %v661 = vpack.c.bf16 %v621, %v619
  %662 = vrot.lane.b32.xlu0 %v326, 64
  %v663 = vpop.permute.xlu0 %662
  %664 = vrot.lane.b32.xlu0 %v327, 64
  %v665 = vpop.permute.xlu0 %664
  %666 = vrot.lane.b32.xlu0 %v328, 64
  %v667 = vpop.permute.xlu0 %666
  %668 = vrot.lane.b32.xlu0 %v329, 64
  %v669 = vpop.permute.xlu0 %668
  %670 = vrot.lane.b32.xlu0 %v330, 64
  %v671 = vpop.permute.xlu0 %670
  %672 = vrot.lane.b32.xlu0 %v331, 64
  %v673 = vpop.permute.xlu0 %672
  %674 = vrot.lane.b32.xlu0 %v332, 64
  %v675 = vpop.permute.xlu0 %674
  %676 = vrot.lane.b32.xlu0 %v333, 64
  %v677 = vpop.permute.xlu0 %676
  %686 = vmatprep.subr.bf16.mxu0 0
  %687 = vmatpush1.bf16.msra.mxu0 %v663
  %688 = vmatprep.subr.bf16.mxu0 0
  %689 = vmatpush1.bf16.msra.mxu0 %v665
  %690 = vmatprep.subr.bf16.mxu0 0
  %691 = vmatpush1.bf16.msra.mxu0 %v667
  %692 = vmatprep.subr.bf16.mxu0 0
  %693 = vmatpush1.bf16.msra.mxu0 %v669
  %694 = vmatprep.subr.bf16.mxu0 0
  %695 = vmatpush1.bf16.msra.mxu0 %v671
  %696 = vmatprep.subr.bf16.mxu0 0
  %697 = vmatpush1.bf16.msra.mxu0 %v673
  %698 = vmatprep.subr.bf16.mxu0 0
  %699 = vmatpush1.bf16.msra.mxu0 %v675
  %700 = vmatprep.subr.bf16.mxu0 0
  %701 = vmatpush1.bf16.msra.mxu0 %v677
  %702 = vmatprep.subr.bf16.mxu0 0
  %703 = vmatpush1.bf16.msra.mxu0 0
  %704 = vmatprep.subr.bf16.mxu0 0
  %705 = vmatpush1.bf16.msra.mxu0 0
  %706 = vmatprep.subr.bf16.mxu0 0
  %707 = vmatpush1.bf16.msra.mxu0 0
  %708 = vmatprep.subr.bf16.mxu0 0
  %709 = vmatpush1.bf16.msra.mxu0 0
  %710 = vmatprep.subr.bf16.mxu0 0
  %711 = vmatpush1.bf16.msra.mxu0 0
  %712 = vmatprep.subr.bf16.mxu0 0
  %713 = vmatpush1.bf16.msra.mxu0 0
  %714 = vmatprep.subr.bf16.mxu0 0
  %715 = vmatpush1.bf16.msra.mxu0 0
  %716 = vmatprep.subr.bf16.mxu0 0
  %717 = vmatpush1.bf16.msra.mxu0 0
  %718 = vmatprep.mubr.bf16.mxu0 0
  %719 = vmatmul.mubr.bf16.gmra.mrb[0].mxu0 %v654
  %v720 = vpop.f32.mrb[0].mxu0
  %v721 = vadd.f32 0.0, %v720
  %v722 = vpop.f32.mrb[0].mxu0
  %v723 = vpop.f32.mrb[0].mxu0
  %v724 = vadd.f32 0.0, %v723
  %v725 = vpop.f32.mrb[0].mxu0
  %726 = vmatprep.mubr.bf16.mxu0 0
  %727 = vmatmul.mubr.bf16.gmra.mrb[0].mxu0 %v655
  %v728 = vpop.f32.mrb[0].mxu0
  %v729 = vadd.f32 0.0, %v728
  %v730 = vpop.f32.mrb[0].mxu0
  %v731 = vpop.f32.mrb[0].mxu0
  %v732 = vadd.f32 0.0, %v731
  %v733 = vpop.f32.mrb[0].mxu0
  %734 = vmatprep.mubr.bf16.mxu0 0
  %735 = vmatmul.mubr.bf16.gmra.mrb[0].mxu0 %v656
  %v736 = vpop.f32.mrb[0].mxu0
  %v737 = vadd.f32 0.0, %v736
  %v738 = vpop.f32.mrb[0].mxu0
  %v739 = vpop.f32.mrb[0].mxu0
  %v740 = vadd.f32 0.0, %v739
  %v741 = vpop.f32.mrb[0].mxu0
  %742 = vmatprep.mubr.bf16.mxu0 0
  %743 = vmatmul.mubr.bf16.gmra.mrb[0].mxu0 %v657
  %v744 = vpop.f32.mrb[0].mxu0
  %v745 = vadd.f32 0.0, %v744
  %v746 = vpop.f32.mrb[0].mxu0
  %v747 = vpop.f32.mrb[0].mxu0
  %v748 = vadd.f32 0.0, %v747
  %v749 = vpop.f32.mrb[0].mxu0
  %750 = vmatprep.mubr.bf16.mxu0 0
  %751 = vmatmul.mubr.bf16.gmra.mrb[0].mxu0 %v658
  %v752 = vpop.f32.mrb[0].mxu0
  %v753 = vadd.f32 0.0, %v752
  %v754 = vpop.f32.mrb[0].mxu0
  %v755 = vpop.f32.mrb[0].mxu0
  %v756 = vadd.f32 0.0, %v755
  %v757 = vpop.f32.mrb[0].mxu0
  %758 = vmatprep.mubr.bf16.mxu0 0
  %759 = vmatmul.mubr.bf16.gmra.mrb[0].mxu0 %v659
  %v760 = vpop.f32.mrb[0].mxu0
  %v761 = vadd.f32 0.0, %v760
  %v762 = vpop.f32.mrb[0].mxu0
  %v763 = vpop.f32.mrb[0].mxu0
  %v764 = vadd.f32 0.0, %v763
  %v765 = vpop.f32.mrb[0].mxu0
  %766 = vmatprep.mubr.bf16.mxu0 0
  %767 = vmatmul.mubr.bf16.gmra.mrb[0].mxu0 %v660
  %v768 = vpop.f32.mrb[0].mxu0
  %v769 = vadd.f32 0.0, %v768
  %v770 = vpop.f32.mrb[0].mxu0
  %v771 = vpop.f32.mrb[0].mxu0
  %v772 = vadd.f32 0.0, %v771
  %v773 = vpop.f32.mrb[0].mxu0
  %774 = vmatprep.mubr.bf16.mxu0 0
  %775 = vmatmul.mubr.bf16.gmra.mrb[0].mxu0 %v661
  %v776 = vpop.f32.mrb[0].mxu0
  %v777 = vadd.f32 0.0, %v776
  %v778 = vpop.f32.mrb[0].mxu0
  %v779 = vpop.f32.mrb[0].mxu0
  %v780 = vadd.f32 0.0, %v779
  %v781 = vpop.f32.mrb[0].mxu0
  %782 = vdwg.mxu0
  %v783 = vrcp.pop %v623
  %v784 = vrcp.pop %v625
  %v785 = vrcp.pop %v627
  %v786 = vrcp.pop %v629
  %v787 = vrcp.pop %v631
  %v788 = vrcp.pop %v633
  %v789 = vrcp.pop %v635
  %v790 = vrcp.pop %v637
  %v791 = vrcp.pop %v639
  %v792 = vrcp.pop %v641
  %v793 = vrcp.pop %v643
  %v794 = vrcp.pop %v645
  %v795 = vrcp.pop %v647
  %v796 = vrcp.pop %v649
  %v797 = vrcp.pop %v651
  %v798 = vrcp.pop %v653
  %v799 = vmul.f32 %v721, %v783
  %v800 = vmul.f32 %v724, %v784
  %v801 = vmul.f32 %v729, %v785
  %v802 = vmul.f32 %v732, %v786
  %v803 = vmul.f32 %v737, %v787
  %v804 = vmul.f32 %v740, %v788
  %v805 = vmul.f32 %v745, %v789
  %v806 = vmul.f32 %v748, %v790
  %v807 = vmul.f32 %v753, %v791
  %v808 = vmul.f32 %v756, %v792
  %v809 = vmul.f32 %v761, %v793
  %v810 = vmul.f32 %v764, %v794
  %v811 = vmul.f32 %v769, %v795
  %v812 = vmul.f32 %v772, %v796
  %v813 = vmul.f32 %v777, %v797
  %v814 = vmul.f32 %v780, %v798
  %v815 = vld [vmem:[%s4] sm:$0xff]
  %v816 = vpack.c.bf16 %v800, %v799
  %v817 = vpack.c.bf16 %v802, %v801
  %v818 = vpack.c.bf16 %v804, %v803
  %v819 = vpack.c.bf16 %v806, %v805
  %v820 = vpack.c.bf16 %v808, %v807
  %v821 = vpack.c.bf16 %v810, %v809
  %v822 = vpack.c.bf16 %v812, %v811
  %v823 = vpack.c.bf16 %v814, %v813
  %v824 = vpack.c.bf16 %v815, %v815
  %825 = vrot.lane.b32.xlu0 %v326, 120
  %v826 = vpop.permute.xlu0 %825
  %827 = vrot.lane.b32.xlu0 %v327, 120
  %v828 = vpop.permute.xlu0 %827
  %829 = vrot.lane.b32.xlu0 %v328, 120
  %v830 = vpop.permute.xlu0 %829
  %831 = vrot.lane.b32.xlu0 %v329, 120
  %v832 = vpop.permute.xlu0 %831
  %833 = vrot.lane.b32.xlu0 %v330, 120
  %v834 = vpop.permute.xlu0 %833
  %835 = vrot.lane.b32.xlu0 %v331, 120
  %v836 = vpop.permute.xlu0 %835
  %837 = vrot.lane.b32.xlu0 %v332, 120
  %v838 = vpop.permute.xlu0 %837
  %839 = vrot.lane.b32.xlu0 %v333, 120
  %v840 = vpop.permute.xlu0 %839
  %841 = vrot.lane.b32.xlu0 %v326, 88
  %v842 = vpop.permute.xlu0 %841
  %843 = vrot.lane.b32.xlu0 %v327, 88
  %v844 = vpop.permute.xlu0 %843
  %845 = vrot.lane.b32.xlu0 %v328, 88
  %v846 = vpop.permute.xlu0 %845
  %847 = vrot.lane.b32.xlu0 %v329, 88
  %v848 = vpop.permute.xlu0 %847
  %849 = vrot.lane.b32.xlu0 %v330, 88
  %v850 = vpop.permute.xlu0 %849
  %851 = vrot.lane.b32.xlu0 %v331, 88
  %v852 = vpop.permute.xlu0 %851
  %853 = vrot.lane.b32.xlu0 %v332, 88
  %v854 = vpop.permute.xlu0 %853
  %855 = vrot.lane.b32.xlu0 %v333, 88
  %v856 = vpop.permute.xlu0 %855
  %v858 = vsel %vm358, %v826, 0
  %v861 = vsel %vm358, %v828, 0
  %v864 = vsel %vm358, %v830, 0
  %v867 = vsel %vm358, %v832, 0
  %v870 = vsel %vm358, %v834, 0
  %v873 = vsel %vm358, %v836, 0
  %v876 = vsel %vm358, %v838, 0
  %v879 = vsel %vm358, %v840, 0
  %v882 = vsel %vm358, %v842, 0
  %v885 = vsel %vm358, %v844, 0
  %v888 = vsel %vm358, %v846, 0
  %v891 = vsel %vm358, %v848, 0
  %v894 = vsel %vm358, %v850, 0
  %v897 = vsel %vm358, %v852, 0
  %v900 = vsel %vm358, %v854, 0
  %v903 = vsel %vm358, %v856, 0
  %905 = vmatprep.subr.bf16.mxu0 0
  %906 = vmatpush1.bf16.xpose.msra.mxu0 %v882
  %907 = vmatprep.subr.bf16.mxu0 0
  %908 = vmatpush1.bf16.xpose.msra.mxu0 %v885
  %909 = vmatprep.subr.bf16.mxu0 0
  %910 = vmatpush1.bf16.xpose.msra.mxu0 %v888
  %911 = vmatprep.subr.bf16.mxu0 0
  %912 = vmatpush1.bf16.xpose.msra.mxu0 %v891
  %913 = vmatprep.subr.bf16.mxu0 0
  %914 = vmatpush1.bf16.xpose.msra.mxu0 %v894
  %915 = vmatprep.subr.bf16.mxu0 0
  %916 = vmatpush1.bf16.xpose.msra.mxu0 %v897
  %917 = vmatprep.subr.bf16.mxu0 0
  %918 = vmatpush1.bf16.xpose.msra.mxu0 %v900
  %919 = vmatprep.subr.bf16.mxu0 0
  %920 = vmatpush1.bf16.xpose.msra.mxu0 %v903
  %921 = vmatprep.subr.bf16.mxu0 0
  %922 = vmatpush1.bf16.xpose.msra.mxu0 0
  %923 = vmatprep.subr.bf16.mxu0 0
  %924 = vmatpush1.bf16.xpose.msra.mxu0 0
  %925 = vmatprep.subr.bf16.mxu0 0
  %926 = vmatpush1.bf16.xpose.msra.mxu0 0
  %927 = vmatprep.subr.bf16.mxu0 0
  %928 = vmatpush1.bf16.xpose.msra.mxu0 0
  %929 = vmatprep.subr.bf16.mxu0 0
  %930 = vmatpush1.bf16.xpose.msra.mxu0 0
  %931 = vmatprep.subr.bf16.mxu0 0
  %932 = vmatpush1.bf16.xpose.msra.mxu0 0
  %933 = vmatprep.subr.bf16.mxu0 0
  %934 = vmatpush1.bf16.xpose.msra.mxu0 0
  %935 = vmatprep.subr.bf16.mxu0 0
  %936 = vmatpush1.bf16.xpose.msra.mxu0 0
  %937 = vmatprep.mubr.bf16.mxu0 0
  %938 = vmatmul.mubr.bf16.gmra.mrb[0].mxu0 %v858
  %v939 = vpop.f32.mrb[0].mxu0
  %v940 = vadd.f32 0.0, %v939
  %v941 = vpop.f32.mrb[0].mxu0
  %v942 = vpop.f32.mrb[0].mxu0
  %v943 = vadd.f32 0.0, %v942
  %v944 = vpop.f32.mrb[0].mxu0
  %945 = vmatprep.mubr.bf16.mxu0 0
  %946 = vmatmul.mubr.bf16.gmra.mrb[0].mxu0 %v861
  %v947 = vpop.f32.mrb[0].mxu0
  %v948 = vadd.f32 0.0, %v947
  %v949 = vpop.f32.mrb[0].mxu0
  %v950 = vpop.f32.mrb[0].mxu0
  %v951 = vadd.f32 0.0, %v950
  %v952 = vpop.f32.mrb[0].mxu0
  %953 = vmatprep.mubr.bf16.mxu0 0
  %954 = vmatmul.mubr.bf16.gmra.mrb[0].mxu0 %v864
  %v955 = vpop.f32.mrb[0].mxu0
  %v956 = vadd.f32 0.0, %v955
  %v957 = vpop.f32.mrb[0].mxu0
  %v958 = vpop.f32.mrb[0].mxu0
  %v959 = vadd.f32 0.0, %v958
  %v960 = vpop.f32.mrb[0].mxu0
  %961 = vmatprep.mubr.bf16.mxu0 0
  %962 = vmatmul.mubr.bf16.gmra.mrb[0].mxu0 %v867
  %v963 = vpop.f32.mrb[0].mxu0
  %v964 = vadd.f32 0.0, %v963
  %v965 = vpop.f32.mrb[0].mxu0
  %v966 = vpop.f32.mrb[0].mxu0
  %v967 = vadd.f32 0.0, %v966
  %v968 = vpop.f32.mrb[0].mxu0
  %969 = vmatprep.mubr.bf16.mxu0 0
  %970 = vmatmul.mubr.bf16.gmra.mrb[0].mxu0 %v870
  %v971 = vpop.f32.mrb[0].mxu0
  %v972 = vadd.f32 0.0, %v971
  %v973 = vpop.f32.mrb[0].mxu0
  %v974 = vpop.f32.mrb[0].mxu0
  %v975 = vadd.f32 0.0, %v974
  %v976 = vpop.f32.mrb[0].mxu0
  %977 = vmatprep.mubr.bf16.mxu0 0
  %978 = vmatmul.mubr.bf16.gmra.mrb[0].mxu0 %v873
  %v979 = vpop.f32.mrb[0].mxu0
  %v980 = vadd.f32 0.0, %v979
  %v981 = vpop.f32.mrb[0].mxu0
  %v982 = vpop.f32.mrb[0].mxu0
  %v983 = vadd.f32 0.0, %v982
  %v984 = vpop.f32.mrb[0].mxu0
  %985 = vmatprep.mubr.bf16.mxu0 0
  %986 = vmatmul.mubr.bf16.gmra.mrb[0].mxu0 %v876
  %v987 = vpop.f32.mrb[0].mxu0
  %v988 = vadd.f32 0.0, %v987
  %v989 = vpop.f32.mrb[0].mxu0
  %v990 = vpop.f32.mrb[0].mxu0
  %v991 = vadd.f32 0.0, %v990
  %v992 = vpop.f32.mrb[0].mxu0
  %993 = vmatprep.mubr.bf16.mxu0 0
  %994 = vmatmul.mubr.bf16.gmra.mrb[0].mxu0 %v879
  %v995 = vpop.f32.mrb[0].mxu0
  %v996 = vadd.f32 0.0, %v995
  %v997 = vpop.f32.mrb[0].mxu0
  %v998 = vpop.f32.mrb[0].mxu0
  %v999 = vadd.f32 0.0, %v998
  %v1000 = vpop.f32.mrb[0].mxu0
  %1001 = vdwg.mxu0
  %v1002 = vmul.f32 %v940, 0.35355338
  %v1003 = vmul.f32 %v943, 0.35355338
  %v1004 = vmul.f32 %v948, 0.35355338
  %v1005 = vmul.f32 %v951, 0.35355338
  %v1006 = vmul.f32 %v956, 0.35355338
  %v1007 = vmul.f32 %v959, 0.35355338
  %v1008 = vmul.f32 %v964, 0.35355338
  %v1009 = vmul.f32 %v967, 0.35355338
  %v1010 = vmul.f32 %v972, 0.35355338
  %v1011 = vmul.f32 %v975, 0.35355338
  %v1012 = vmul.f32 %v980, 0.35355338
  %v1013 = vmul.f32 %v983, 0.35355338
  %v1014 = vmul.f32 %v988, 0.35355338
  %v1015 = vmul.f32 %v991, 0.35355338
  %v1016 = vmul.f32 %v996, 0.35355338
  %v1017 = vmul.f32 %v999, 0.35355338
  %v1018 = vadd.f32 %v1002, %v524
  %v1019 = vadd.f32 %v1003, %v524
  %v1020 = vadd.f32 %v1004, %v524
  %v1021 = vadd.f32 %v1005, %v524
  %v1022 = vadd.f32 %v1006, %v524
  %v1023 = vadd.f32 %v1007, %v524
  %v1024 = vadd.f32 %v1008, %v524
  %v1025 = vadd.f32 %v1009, %v524
  %v1026 = vadd.f32 %v1010, %v524
  %v1027 = vadd.f32 %v1011, %v524
  %v1028 = vadd.f32 %v1012, %v524
  %v1029 = vadd.f32 %v1013, %v524
  %v1030 = vadd.f32 %v1014, %v524
  %v1031 = vadd.f32 %v1015, %v524
  %v1032 = vadd.f32 %v1016, %v524
  %v1033 = vadd.f32 %v1017, %v524
  %1034 = vmax.xlane.f32.xlu0 %v1018
  %v1035 = vpop.xlane.xlu0 %1034
  %1036 = vmax.xlane.f32.xlu0 %v1019
  %v1037 = vpop.xlane.xlu0 %1036
  %1038 = vmax.xlane.f32.xlu0 %v1020
  %v1039 = vpop.xlane.xlu0 %1038
  %1040 = vmax.xlane.f32.xlu0 %v1021
  %v1041 = vpop.xlane.xlu0 %1040
  %1042 = vmax.xlane.f32.xlu0 %v1022
  %v1043 = vpop.xlane.xlu0 %1042
  %1044 = vmax.xlane.f32.xlu0 %v1023
  %v1045 = vpop.xlane.xlu0 %1044
  %1046 = vmax.xlane.f32.xlu0 %v1024
  %v1047 = vpop.xlane.xlu0 %1046
  %1048 = vmax.xlane.f32.xlu0 %v1025
  %v1049 = vpop.xlane.xlu0 %1048
  %1050 = vmax.xlane.f32.xlu0 %v1026
  %v1051 = vpop.xlane.xlu0 %1050
  %1052 = vmax.xlane.f32.xlu0 %v1027
  %v1053 = vpop.xlane.xlu0 %1052
  %1054 = vmax.xlane.f32.xlu0 %v1028
  %v1055 = vpop.xlane.xlu0 %1054
  %1056 = vmax.xlane.f32.xlu0 %v1029
  %v1057 = vpop.xlane.xlu0 %1056
  %1058 = vmax.xlane.f32.xlu0 %v1030
  %v1059 = vpop.xlane.xlu0 %1058
  %1060 = vmax.xlane.f32.xlu0 %v1031
  %v1061 = vpop.xlane.xlu0 %1060
  %1062 = vmax.xlane.f32.xlu0 %v1032
  %v1063 = vpop.xlane.xlu0 %1062
  %1064 = vmax.xlane.f32.xlu0 %v1033
  %v1065 = vpop.xlane.xlu0 %1064
  %v1066 = vsub.f32 %v1018, %v1035
  %v1067 = vsub.f32 %v1019, %v1037
  %v1068 = vsub.f32 %v1020, %v1039
  %v1069 = vsub.f32 %v1021, %v1041
  %v1070 = vsub.f32 %v1022, %v1043
  %v1071 = vsub.f32 %v1023, %v1045
  %v1072 = vsub.f32 %v1024, %v1047
  %v1073 = vsub.f32 %v1025, %v1049
  %v1074 = vsub.f32 %v1026, %v1051
  %v1075 = vsub.f32 %v1027, %v1053
  %v1076 = vsub.f32 %v1028, %v1055
  %v1077 = vsub.f32 %v1029, %v1057
  %v1078 = vsub.f32 %v1030, %v1059
  %v1079 = vsub.f32 %v1031, %v1061
  %v1080 = vsub.f32 %v1032, %v1063
  %v1081 = vsub.f32 %v1033, %v1065
  %v1082 = vmul.f32 %v1066, 1.442695
  %v1083 = vpow.pop %v1082
  %v1084 = vmul.f32 %v1067, 1.442695
  %v1085 = vpow.pop %v1084
  %v1086 = vmul.f32 %v1068, 1.442695
  %v1087 = vpow.pop %v1086
  %v1088 = vmul.f32 %v1069, 1.442695
  %v1089 = vpow.pop %v1088
  %v1090 = vmul.f32 %v1070, 1.442695
  %v1091 = vpow.pop %v1090
  %v1092 = vmul.f32 %v1071, 1.442695
  %v1093 = vpow.pop %v1092
  %v1094 = vmul.f32 %v1072, 1.442695
  %v1095 = vpow.pop %v1094
  %v1096 = vmul.f32 %v1073, 1.442695
  %v1097 = vpow.pop %v1096
  %v1098 = vmul.f32 %v1074, 1.442695
  %v1099 = vpow.pop %v1098
  %v1100 = vmul.f32 %v1075, 1.442695
  %v1101 = vpow.pop %v1100
  %v1102 = vmul.f32 %v1076, 1.442695
  %v1103 = vpow.pop %v1102
  %v1104 = vmul.f32 %v1077, 1.442695
  %v1105 = vpow.pop %v1104
  %v1106 = vmul.f32 %v1078, 1.442695
  %v1107 = vpow.pop %v1106
  %v1108 = vmul.f32 %v1079, 1.442695
  %v1109 = vpow.pop %v1108
  %v1110 = vmul.f32 %v1080, 1.442695
  %v1111 = vpow.pop %v1110
  %v1112 = vmul.f32 %v1081, 1.442695
  %v1113 = vpow.pop %v1112
  %1114 = vadd.xlane.f32.xlu0 %v1083
  %v1115 = vpop.xlane.xlu0 %1114
  %1116 = vadd.xlane.f32.xlu0 %v1085
  %v1117 = vpop.xlane.xlu0 %1116
  %1118 = vadd.xlane.f32.xlu0 %v1087
  %v1119 = vpop.xlane.xlu0 %1118
  %1120 = vadd.xlane.f32.xlu0 %v1089
  %v1121 = vpop.xlane.xlu0 %1120
  %1122 = vadd.xlane.f32.xlu0 %v1091
  %v1123 = vpop.xlane.xlu0 %1122
  %1124 = vadd.xlane.f32.xlu0 %v1093
  %v1125 = vpop.xlane.xlu0 %1124
  %1126 = vadd.xlane.f32.xlu0 %v1095
  %v1127 = vpop.xlane.xlu0 %1126
  %1128 = vadd.xlane.f32.xlu0 %v1097
  %v1129 = vpop.xlane.xlu0 %1128
  %1130 = vadd.xlane.f32.xlu0 %v1099
  %v1131 = vpop.xlane.xlu0 %1130
  %1132 = vadd.xlane.f32.xlu0 %v1101
  %v1133 = vpop.xlane.xlu0 %1132
  %1134 = vadd.xlane.f32.xlu0 %v1103
  %v1135 = vpop.xlane.xlu0 %1134
  %1136 = vadd.xlane.f32.xlu0 %v1105
  %v1137 = vpop.xlane.xlu0 %1136
  %1138 = vadd.xlane.f32.xlu0 %v1107
  %v1139 = vpop.xlane.xlu0 %1138
  %1140 = vadd.xlane.f32.xlu0 %v1109
  %v1141 = vpop.xlane.xlu0 %1140
  %1142 = vadd.xlane.f32.xlu0 %v1111
  %v1143 = vpop.xlane.xlu0 %1142
  %1144 = vadd.xlane.f32.xlu0 %v1113
  %v1145 = vpop.xlane.xlu0 %1144
  %v1146 = vpack.c.bf16 %v1085, %v1083
  %v1147 = vpack.c.bf16 %v1089, %v1087
  %v1148 = vpack.c.bf16 %v1093, %v1091
  %v1149 = vpack.c.bf16 %v1097, %v1095
  %v1150 = vpack.c.bf16 %v1101, %v1099
  %v1151 = vpack.c.bf16 %v1105, %v1103
  %v1152 = vpack.c.bf16 %v1109, %v1107
  %v1153 = vpack.c.bf16 %v1113, %v1111
  %1154 = vrot.lane.b32.xlu0 %v326, 56
  %v1155 = vpop.permute.xlu0 %1154
  %1156 = vrot.lane.b32.xlu0 %v327, 56
  %v1157 = vpop.permute.xlu0 %1156
  %1158 = vrot.lane.b32.xlu0 %v328, 56
  %v1159 = vpop.permute.xlu0 %1158
  %1160 = vrot.lane.b32.xlu0 %v329, 56
  %v1161 = vpop.permute.xlu0 %1160
  %1162 = vrot.lane.b32.xlu0 %v330, 56
  %v1163 = vpop.permute.xlu0 %1162
  %1164 = vrot.lane.b32.xlu0 %v331, 56
  %v1165 = vpop.permute.xlu0 %1164
  %1166 = vrot.lane.b32.xlu0 %v332, 56
  %v1167 = vpop.permute.xlu0 %1166
  %1168 = vrot.lane.b32.xlu0 %v333, 56
  %v1169 = vpop.permute.xlu0 %1168
  %1178 = vmatprep.subr.bf16.mxu0 0
  %1179 = vmatpush1.bf16.msra.mxu0 %v1155
  %1180 = vmatprep.subr.bf16.mxu0 0
  %1181 = vmatpush1.bf16.msra.mxu0 %v1157
  %1182 = vmatprep.subr.bf16.mxu0 0
  %1183 = vmatpush1.bf16.msra.mxu0 %v1159
  %1184 = vmatprep.subr.bf16.mxu0 0
  %1185 = vmatpush1.bf16.msra.mxu0 %v1161
  %1186 = vmatprep.subr.bf16.mxu0 0
  %1187 = vmatpush1.bf16.msra.mxu0 %v1163
  %1188 = vmatprep.subr.bf16.mxu0 0
  %1189 = vmatpush1.bf16.msra.mxu0 %v1165
  %1190 = vmatprep.subr.bf16.mxu0 0
  %1191 = vmatpush1.bf16.msra.mxu0 %v1167
  %1192 = vmatprep.subr.bf16.mxu0 0
  %1193 = vmatpush1.bf16.msra.mxu0 %v1169
  %1194 = vmatprep.subr.bf16.mxu0 0
  %1195 = vmatpush1.bf16.msra.mxu0 0
  %1196 = vmatprep.subr.bf16.mxu0 0
  %1197 = vmatpush1.bf16.msra.mxu0 0
  %1198 = vmatprep.subr.bf16.mxu0 0
  %1199 = vmatpush1.bf16.msra.mxu0 0
  %1200 = vmatprep.subr.bf16.mxu0 0
  %1201 = vmatpush1.bf16.msra.mxu0 0
  %1202 = vmatprep.subr.bf16.mxu0 0
  %1203 = vmatpush1.bf16.msra.mxu0 0
  %1204 = vmatprep.subr.bf16.mxu0 0
  %1205 = vmatpush1.bf16.msra.mxu0 0
  %1206 = vmatprep.subr.bf16.mxu0 0
  %1207 = vmatpush1.bf16.msra.mxu0 0
  %1208 = vmatprep.subr.bf16.mxu0 0
  %1209 = vmatpush1.bf16.msra.mxu0 0
  %1210 = vmatprep.mubr.bf16.mxu0 0
  %1211 = vmatmul.mubr.bf16.gmra.mrb[0].mxu0 %v1146
  %v1212 = vpop.f32.mrb[0].mxu0
  %v1213 = vadd.f32 0.0, %v1212
  %v1214 = vpop.f32.mrb[0].mxu0
  %v1215 = vpop.f32.mrb[0].mxu0
  %v1216 = vadd.f32 0.0, %v1215
  %v1217 = vpop.f32.mrb[0].mxu0
  %1218 = vmatprep.mubr.bf16.mxu0 0
  %1219 = vmatmul.mubr.bf16.gmra.mrb[0].mxu0 %v1147
  %v1220 = vpop.f32.mrb[0].mxu0
  %v1221 = vadd.f32 0.0, %v1220
  %v1222 = vpop.f32.mrb[0].mxu0
  %v1223 = vpop.f32.mrb[0].mxu0
  %v1224 = vadd.f32 0.0, %v1223
  %v1225 = vpop.f32.mrb[0].mxu0
  %1226 = vmatprep.mubr.bf16.mxu0 0
  %1227 = vmatmul.mubr.bf16.gmra.mrb[0].mxu0 %v1148
  %v1228 = vpop.f32.mrb[0].mxu0
  %v1229 = vadd.f32 0.0, %v1228
  %v1230 = vpop.f32.mrb[0].mxu0
  %v1231 = vpop.f32.mrb[0].mxu0
  %v1232 = vadd.f32 0.0, %v1231
  %v1233 = vpop.f32.mrb[0].mxu0
  %1234 = vmatprep.mubr.bf16.mxu0 0
  %1235 = vmatmul.mubr.bf16.gmra.mrb[0].mxu0 %v1149
  %v1236 = vpop.f32.mrb[0].mxu0
  %v1237 = vadd.f32 0.0, %v1236
  %v1238 = vpop.f32.mrb[0].mxu0
  %v1239 = vpop.f32.mrb[0].mxu0
  %v1240 = vadd.f32 0.0, %v1239
  %v1241 = vpop.f32.mrb[0].mxu0
  %1242 = vmatprep.mubr.bf16.mxu0 0
  %1243 = vmatmul.mubr.bf16.gmra.mrb[0].mxu0 %v1150
  %v1244 = vpop.f32.mrb[0].mxu0
  %v1245 = vadd.f32 0.0, %v1244
  %v1246 = vpop.f32.mrb[0].mxu0
  %v1247 = vpop.f32.mrb[0].mxu0
  %v1248 = vadd.f32 0.0, %v1247
  %v1249 = vpop.f32.mrb[0].mxu0
  %1250 = vmatprep.mubr.bf16.mxu0 0
  %1251 = vmatmul.mubr.bf16.gmra.mrb[0].mxu0 %v1151
  %v1252 = vpop.f32.mrb[0].mxu0
  %v1253 = vadd.f32 0.0, %v1252
  %v1254 = vpop.f32.mrb[0].mxu0
  %v1255 = vpop.f32.mrb[0].mxu0
  %v1256 = vadd.f32 0.0, %v1255
  %v1257 = vpop.f32.mrb[0].mxu0
  %1258 = vmatprep.mubr.bf16.mxu0 0
  %1259 = vmatmul.mubr.bf16.gmra.mrb[0].mxu0 %v1152
  %v1260 = vpop.f32.mrb[0].mxu0
  %v1261 = vadd.f32 0.0, %v1260
  %v1262 = vpop.f32.mrb[0].mxu0
  %v1263 = vpop.f32.mrb[0].mxu0
  %v1264 = vadd.f32 0.0, %v1263
  %v1265 = vpop.f32.mrb[0].mxu0
  %1266 = vmatprep.mubr.bf16.mxu0 0
  %1267 = vmatmul.mubr.bf16.gmra.mrb[0].mxu0 %v1153
  %v1268 = vpop.f32.mrb[0].mxu0
  %v1269 = vadd.f32 0.0, %v1268
  %v1270 = vpop.f32.mrb[0].mxu0
  %v1271 = vpop.f32.mrb[0].mxu0
  %v1272 = vadd.f32 0.0, %v1271
  %v1273 = vpop.f32.mrb[0].mxu0
  %1274 = vdwg.mxu0
  %v1275 = vrcp.pop %v1115
  %v1276 = vrcp.pop %v1117
  %v1277 = vrcp.pop %v1119
  %v1278 = vrcp.pop %v1121
  %v1279 = vrcp.pop %v1123
  %v1280 = vrcp.pop %v1125
  %v1281 = vrcp.pop %v1127
  %v1282 = vrcp.pop %v1129
  %v1283 = vrcp.pop %v1131
  %v1284 = vrcp.pop %v1133
  %v1285 = vrcp.pop %v1135
  %v1286 = vrcp.pop %v1137
  %v1287 = vrcp.pop %v1139
  %v1288 = vrcp.pop %v1141
  %v1289 = vrcp.pop %v1143
  %v1290 = vrcp.pop %v1145
  %v1291 = vmul.f32 %v1213, %v1275
  %v1292 = vmul.f32 %v1216, %v1276
  %v1293 = vmul.f32 %v1221, %v1277
  %v1294 = vmul.f32 %v1224, %v1278
  %v1295 = vmul.f32 %v1229, %v1279
  %v1296 = vmul.f32 %v1232, %v1280
  %v1297 = vmul.f32 %v1237, %v1281
  %v1298 = vmul.f32 %v1240, %v1282
  %v1299 = vmul.f32 %v1245, %v1283
  %v1300 = vmul.f32 %v1248, %v1284
  %v1301 = vmul.f32 %v1253, %v1285
  %v1302 = vmul.f32 %v1256, %v1286
  %v1303 = vmul.f32 %v1261, %v1287
  %v1304 = vmul.f32 %v1264, %v1288
  %v1305 = vmul.f32 %v1269, %v1289
  %v1306 = vmul.f32 %v1272, %v1290
  %s1307 = scalar_lea.vmem %s4, 8
  %v1308 = vld [vmem:[%s1307] sm:$0xff]
  %v1309 = vpack.c.bf16 %v1292, %v1291
  %v1310 = vpack.c.bf16 %v1294, %v1293
  %v1311 = vpack.c.bf16 %v1296, %v1295
  %v1312 = vpack.c.bf16 %v1298, %v1297
  %v1313 = vpack.c.bf16 %v1300, %v1299
  %v1314 = vpack.c.bf16 %v1302, %v1301
  %v1315 = vpack.c.bf16 %v1304, %v1303
  %v1316 = vpack.c.bf16 %v1306, %v1305
  %v1317 = vpack.c.bf16 %v1308, %v1308
  %v1319 = vsel %vm358, %v1309, 0
  %v1322 = vsel %vm358, %v1310, 0
  %v1325 = vsel %vm358, %v1311, 0
  %v1328 = vsel %vm358, %v1312, 0
  %v1331 = vsel %vm358, %v1313, 0
  %v1334 = vsel %vm358, %v1314, 0
  %v1337 = vsel %vm358, %v1315, 0
  %v1340 = vsel %vm358, %v1316, 0
  %vm1342 = vcmask 1043456
  %v1344 = vsel %vm1342, %v1317, 0
  %1346 = vmatprep.subr.bf16.mxu0 0
  %1347 = vmatpush1.bf16.msra.mxu0 %v1344
  %1348 = vmatprep.subr.bf16.mxu0 0
  %1349 = vmatpush1.bf16.msra.mxu0 0
  %1350 = vmatprep.subr.bf16.mxu0 0
  %1351 = vmatpush1.bf16.msra.mxu0 0
  %1352 = vmatprep.subr.bf16.mxu0 0
  %1353 = vmatpush1.bf16.msra.mxu0 0
  %1354 = vmatprep.subr.bf16.mxu0 0
  %1355 = vmatpush1.bf16.msra.mxu0 0
  %1356 = vmatprep.subr.bf16.mxu0 0
  %1357 = vmatpush1.bf16.msra.mxu0 0
  %1358 = vmatprep.subr.bf16.mxu0 0
  %1359 = vmatpush1.bf16.msra.mxu0 0
  %1360 = vmatprep.subr.bf16.mxu0 0
  %1361 = vmatpush1.bf16.msra.mxu0 0
  %1362 = vmatprep.subr.bf16.mxu0 0
  %1363 = vmatpush1.bf16.msra.mxu0 0
  %1364 = vmatprep.subr.bf16.mxu0 0
  %1365 = vmatpush1.bf16.msra.mxu0 0
  %1366 = vmatprep.subr.bf16.mxu0 0
  %1367 = vmatpush1.bf16.msra.mxu0 0
  %1368 = vmatprep.subr.bf16.mxu0 0
  %1369 = vmatpush1.bf16.msra.mxu0 0
  %1370 = vmatprep.subr.bf16.mxu0 0
  %1371 = vmatpush1.bf16.msra.mxu0 0
  %1372 = vmatprep.subr.bf16.mxu0 0
  %1373 = vmatpush1.bf16.msra.mxu0 0
  %1374 = vmatprep.subr.bf16.mxu0 0
  %1375 = vmatpush1.bf16.msra.mxu0 0
  %1376 = vmatprep.subr.bf16.mxu0 0
  %1377 = vmatpush1.bf16.msra.mxu0 0
  %1378 = vmatprep.mubr.bf16.mxu0 0
  %1379 = vmatmul.mubr.bf16.gmra.mrb[0].mxu0 %v1319
  %v1380 = vpop.f32.mrb[0].mxu0
  %v1381 = vadd.f32 0.0, %v1380
  %v1382 = vpop.f32.mrb[0].mxu0
  %v1383 = vpop.f32.mrb[0].mxu0
  %v1384 = vadd.f32 0.0, %v1383
  %v1385 = vpop.f32.mrb[0].mxu0
  %1386 = vmatprep.mubr.bf16.mxu0 0
  %1387 = vmatmul.mubr.bf16.gmra.mrb[0].mxu0 %v1322
  %v1388 = vpop.f32.mrb[0].mxu0
  %v1389 = vadd.f32 0.0, %v1388
  %v1390 = vpop.f32.mrb[0].mxu0
  %v1391 = vpop.f32.mrb[0].mxu0
  %v1392 = vadd.f32 0.0, %v1391
  %v1393 = vpop.f32.mrb[0].mxu0
  %1394 = vmatprep.mubr.bf16.mxu0 0
  %1395 = vmatmul.mubr.bf16.gmra.mrb[0].mxu0 %v1325
  %v1396 = vpop.f32.mrb[0].mxu0
  %v1397 = vadd.f32 0.0, %v1396
  %v1398 = vpop.f32.mrb[0].mxu0
  %v1399 = vpop.f32.mrb[0].mxu0
  %v1400 = vadd.f32 0.0, %v1399
  %v1401 = vpop.f32.mrb[0].mxu0
  %1402 = vmatprep.mubr.bf16.mxu0 0
  %1403 = vmatmul.mubr.bf16.gmra.mrb[0].mxu0 %v1328
  %v1404 = vpop.f32.mrb[0].mxu0
  %v1405 = vadd.f32 0.0, %v1404
  %v1406 = vpop.f32.mrb[0].mxu0
  %v1407 = vpop.f32.mrb[0].mxu0
  %v1408 = vadd.f32 0.0, %v1407
  %v1409 = vpop.f32.mrb[0].mxu0
  %1410 = vmatprep.mubr.bf16.mxu0 0
  %1411 = vmatmul.mubr.bf16.gmra.mrb[0].mxu0 %v1331
  %v1412 = vpop.f32.mrb[0].mxu0
  %v1413 = vadd.f32 0.0, %v1412
  %v1414 = vpop.f32.mrb[0].mxu0
  %v1415 = vpop.f32.mrb[0].mxu0
  %v1416 = vadd.f32 0.0, %v1415
  %v1417 = vpop.f32.mrb[0].mxu0
  %1418 = vmatprep.mubr.bf16.mxu0 0
  %1419 = vmatmul.mubr.bf16.gmra.mrb[0].mxu0 %v1334
  %v1420 = vpop.f32.mrb[0].mxu0
  %v1421 = vadd.f32 0.0, %v1420
  %v1422 = vpop.f32.mrb[0].mxu0
  %v1423 = vpop.f32.mrb[0].mxu0
  %v1424 = vadd.f32 0.0, %v1423
  %v1425 = vpop.f32.mrb[0].mxu0
  %1426 = vmatprep.mubr.bf16.mxu0 0
  %1427 = vmatmul.mubr.bf16.gmra.mrb[0].mxu0 %v1337
  %v1428 = vpop.f32.mrb[0].mxu0
  %v1429 = vadd.f32 0.0, %v1428
  %v1430 = vpop.f32.mrb[0].mxu0
  %v1431 = vpop.f32.mrb[0].mxu0
  %v1432 = vadd.f32 0.0, %v1431
  %v1433 = vpop.f32.mrb[0].mxu0
  %1434 = vmatprep.mubr.bf16.mxu0 0
  %1435 = vmatmul.mubr.bf16.gmra.mrb[0].mxu0 %v1340
  %v1436 = vpop.f32.mrb[0].mxu0
  %v1437 = vadd.f32 0.0, %v1436
  %v1438 = vpop.f32.mrb[0].mxu0
  %v1439 = vpop.f32.mrb[0].mxu0
  %v1440 = vadd.f32 0.0, %v1439
  %v1441 = vpop.f32.mrb[0].mxu0
  %1442 = vdwg.mxu0
  %v1444 = vsel %vm358, %v816, 0
  %v1447 = vsel %vm358, %v817, 0
  %v1450 = vsel %vm358, %v818, 0
  %v1453 = vsel %vm358, %v819, 0
  %v1456 = vsel %vm358, %v820, 0
  %v1459 = vsel %vm358, %v821, 0
  %v1462 = vsel %vm358, %v822, 0
  %v1465 = vsel %vm358, %v823, 0
  %v1468 = vsel %vm1342, %v824, 0
  %1470 = vmatprep.subr.bf16.mxu0 0
  %1471 = vmatpush1.bf16.msra.mxu0 %v1468
  %1472 = vmatprep.subr.bf16.mxu0 0
  %1473 = vmatpush1.bf16.msra.mxu0 0
  %1474 = vmatprep.subr.bf16.mxu0 0
  %1475 = vmatpush1.bf16.msra.mxu0 0
  %1476 = vmatprep.subr.bf16.mxu0 0
  %1477 = vmatpush1.bf16.msra.mxu0 0
  %1478 = vmatprep.subr.bf16.mxu0 0
  %1479 = vmatpush1.bf16.msra.mxu0 0
  %1480 = vmatprep.subr.bf16.mxu0 0
  %1481 = vmatpush1.bf16.msra.mxu0 0
  %1482 = vmatprep.subr.bf16.mxu0 0
  %1483 = vmatpush1.bf16.msra.mxu0 0
  %1484 = vmatprep.subr.bf16.mxu0 0
  %1485 = vmatpush1.bf16.msra.mxu0 0
  %1486 = vmatprep.subr.bf16.mxu0 0
  %1487 = vmatpush1.bf16.msra.mxu0 0
  %1488 = vmatprep.subr.bf16.mxu0 0
  %1489 = vmatpush1.bf16.msra.mxu0 0
  %1490 = vmatprep.subr.bf16.mxu0 0
  %1491 = vmatpush1.bf16.msra.mxu0 0
  %1492 = vmatprep.subr.bf16.mxu0 0
  %1493 = vmatpush1.bf16.msra.mxu0 0
  %1494 = vmatprep.subr.bf16.mxu0 0
  %1495 = vmatpush1.bf16.msra.mxu0 0
  %1496 = vmatprep.subr.bf16.mxu0 0
  %1497 = vmatpush1.bf16.msra.mxu0 0
  %1498 = vmatprep.subr.bf16.mxu0 0
  %1499 = vmatpush1.bf16.msra.mxu0 0
  %1500 = vmatprep.subr.bf16.mxu0 0
  %1501 = vmatpush1.bf16.msra.mxu0 0
  %1502 = vmatprep.mubr.bf16.mxu0 0
  %1503 = vmatmul.mubr.bf16.gmra.mrb[0].mxu0 %v1444
  %v1504 = vpop.f32.mrb[0].mxu0
  %v1505 = vadd.f32 %v1381, %v1504
  %v1506 = vpop.f32.mrb[0].mxu0
  %v1507 = vpop.f32.mrb[0].mxu0
  %v1508 = vadd.f32 %v1384, %v1507
  %v1509 = vpop.f32.mrb[0].mxu0
  %1510 = vmatprep.mubr.bf16.mxu0 0
  %1511 = vmatmul.mubr.bf16.gmra.mrb[0].mxu0 %v1447
  %v1512 = vpop.f32.mrb[0].mxu0
  %v1513 = vadd.f32 %v1389, %v1512
  %v1514 = vpop.f32.mrb[0].mxu0
  %v1515 = vpop.f32.mrb[0].mxu0
  %v1516 = vadd.f32 %v1392, %v1515
  %v1517 = vpop.f32.mrb[0].mxu0
  %1518 = vmatprep.mubr.bf16.mxu0 0
  %1519 = vmatmul.mubr.bf16.gmra.mrb[0].mxu0 %v1450
  %v1520 = vpop.f32.mrb[0].mxu0
  %v1521 = vadd.f32 %v1397, %v1520
  %v1522 = vpop.f32.mrb[0].mxu0
  %v1523 = vpop.f32.mrb[0].mxu0
  %v1524 = vadd.f32 %v1400, %v1523
  %v1525 = vpop.f32.mrb[0].mxu0
  %1526 = vmatprep.mubr.bf16.mxu0 0
  %1527 = vmatmul.mubr.bf16.gmra.mrb[0].mxu0 %v1453
  %v1528 = vpop.f32.mrb[0].mxu0
  %v1529 = vadd.f32 %v1405, %v1528
  %v1530 = vpop.f32.mrb[0].mxu0
  %v1531 = vpop.f32.mrb[0].mxu0
  %v1532 = vadd.f32 %v1408, %v1531
  %v1533 = vpop.f32.mrb[0].mxu0
  %1534 = vmatprep.mubr.bf16.mxu0 0
  %1535 = vmatmul.mubr.bf16.gmra.mrb[0].mxu0 %v1456
  %v1536 = vpop.f32.mrb[0].mxu0
  %v1537 = vadd.f32 %v1413, %v1536
  %v1538 = vpop.f32.mrb[0].mxu0
  %v1539 = vpop.f32.mrb[0].mxu0
  %v1540 = vadd.f32 %v1416, %v1539
  %v1541 = vpop.f32.mrb[0].mxu0
  %1542 = vmatprep.mubr.bf16.mxu0 0
  %1543 = vmatmul.mubr.bf16.gmra.mrb[0].mxu0 %v1459
  %v1544 = vpop.f32.mrb[0].mxu0
  %v1545 = vadd.f32 %v1421, %v1544
  %v1546 = vpop.f32.mrb[0].mxu0
  %v1547 = vpop.f32.mrb[0].mxu0
  %v1548 = vadd.f32 %v1424, %v1547
  %v1549 = vpop.f32.mrb[0].mxu0
  %1550 = vmatprep.mubr.bf16.mxu0 0
  %1551 = vmatmul.mubr.bf16.gmra.mrb[0].mxu0 %v1462
  %v1552 = vpop.f32.mrb[0].mxu0
  %v1553 = vadd.f32 %v1429, %v1552
  %v1554 = vpop.f32.mrb[0].mxu0
  %v1555 = vpop.f32.mrb[0].mxu0
  %v1556 = vadd.f32 %v1432, %v1555
  %v1557 = vpop.f32.mrb[0].mxu0
  %1558 = vmatprep.mubr.bf16.mxu0 0
  %1559 = vmatmul.mubr.bf16.gmra.mrb[0].mxu0 %v1465
  %v1560 = vpop.f32.mrb[0].mxu0
  %v1561 = vadd.f32 %v1437, %v1560
  %v1562 = vpop.f32.mrb[0].mxu0
  %v1563 = vpop.f32.mrb[0].mxu0
  %v1564 = vadd.f32 %v1440, %v1563
  %v1565 = vpop.f32.mrb[0].mxu0
  %1566 = vdwg.mxu0
  %1567 = vrot.lane.b32.xlu0 %v326, 112
  %v1568 = vpop.permute.xlu0 %1567
  %1569 = vrot.lane.b32.xlu0 %v327, 112
  %v1570 = vpop.permute.xlu0 %1569
  %1571 = vrot.lane.b32.xlu0 %v328, 112
  %v1572 = vpop.permute.xlu0 %1571
  %1573 = vrot.lane.b32.xlu0 %v329, 112
  %v1574 = vpop.permute.xlu0 %1573
  %1575 = vrot.lane.b32.xlu0 %v330, 112
  %v1576 = vpop.permute.xlu0 %1575
  %1577 = vrot.lane.b32.xlu0 %v331, 112
  %v1578 = vpop.permute.xlu0 %1577
  %1579 = vrot.lane.b32.xlu0 %v332, 112
  %v1580 = vpop.permute.xlu0 %1579
  %1581 = vrot.lane.b32.xlu0 %v333, 112
  %v1582 = vpop.permute.xlu0 %1581
  %1583 = vrot.lane.b32.xlu0 %v326, 80
  %v1584 = vpop.permute.xlu0 %1583
  %1585 = vrot.lane.b32.xlu0 %v327, 80
  %v1586 = vpop.permute.xlu0 %1585
  %1587 = vrot.lane.b32.xlu0 %v328, 80
  %v1588 = vpop.permute.xlu0 %1587
  %1589 = vrot.lane.b32.xlu0 %v329, 80
  %v1590 = vpop.permute.xlu0 %1589
  %1591 = vrot.lane.b32.xlu0 %v330, 80
  %v1592 = vpop.permute.xlu0 %1591
  %1593 = vrot.lane.b32.xlu0 %v331, 80
  %v1594 = vpop.permute.xlu0 %1593
  %1595 = vrot.lane.b32.xlu0 %v332, 80
  %v1596 = vpop.permute.xlu0 %1595
  %1597 = vrot.lane.b32.xlu0 %v333, 80
  %v1598 = vpop.permute.xlu0 %1597
  %v1600 = vsel %vm358, %v1568, 0
  %v1603 = vsel %vm358, %v1570, 0
  %v1606 = vsel %vm358, %v1572, 0
  %v1609 = vsel %vm358, %v1574, 0
  %v1612 = vsel %vm358, %v1576, 0
  %v1615 = vsel %vm358, %v1578, 0
  %v1618 = vsel %vm358, %v1580, 0
  %v1621 = vsel %vm358, %v1582, 0
  %v1624 = vsel %vm358, %v1584, 0
  %v1627 = vsel %vm358, %v1586, 0
  %v1630 = vsel %vm358, %v1588, 0
  %v1633 = vsel %vm358, %v1590, 0
  %v1636 = vsel %vm358, %v1592, 0
  %v1639 = vsel %vm358, %v1594, 0
  %v1642 = vsel %vm358, %v1596, 0
  %v1645 = vsel %vm358, %v1598, 0
  %1647 = vmatprep.subr.bf16.mxu0 0
  %1648 = vmatpush1.bf16.xpose.msra.mxu0 %v1624
  %1649 = vmatprep.subr.bf16.mxu0 0
  %1650 = vmatpush1.bf16.xpose.msra.mxu0 %v1627
  %1651 = vmatprep.subr.bf16.mxu0 0
  %1652 = vmatpush1.bf16.xpose.msra.mxu0 %v1630
  %1653 = vmatprep.subr.bf16.mxu0 0
  %1654 = vmatpush1.bf16.xpose.msra.mxu0 %v1633
  %1655 = vmatprep.subr.bf16.mxu0 0
  %1656 = vmatpush1.bf16.xpose.msra.mxu0 %v1636
  %1657 = vmatprep.subr.bf16.mxu0 0
  %1658 = vmatpush1.bf16.xpose.msra.mxu0 %v1639
  %1659 = vmatprep.subr.bf16.mxu0 0
  %1660 = vmatpush1.bf16.xpose.msra.mxu0 %v1642
  %1661 = vmatprep.subr.bf16.mxu0 0
  %1662 = vmatpush1.bf16.xpose.msra.mxu0 %v1645
  %1663 = vmatprep.subr.bf16.mxu0 0
  %1664 = vmatpush1.bf16.xpose.msra.mxu0 0
  %1665 = vmatprep.subr.bf16.mxu0 0
  %1666 = vmatpush1.bf16.xpose.msra.mxu0 0
  %1667 = vmatprep.subr.bf16.mxu0 0
  %1668 = vmatpush1.bf16.xpose.msra.mxu0 0
  %1669 = vmatprep.subr.bf16.mxu0 0
  %1670 = vmatpush1.bf16.xpose.msra.mxu0 0
  %1671 = vmatprep.subr.bf16.mxu0 0
  %1672 = vmatpush1.bf16.xpose.msra.mxu0 0
  %1673 = vmatprep.subr.bf16.mxu0 0
  %1674 = vmatpush1.bf16.xpose.msra.mxu0 0
  %1675 = vmatprep.subr.bf16.mxu0 0
  %1676 = vmatpush1.bf16.xpose.msra.mxu0 0
  %1677 = vmatprep.subr.bf16.mxu0 0
  %1678 = vmatpush1.bf16.xpose.msra.mxu0 0
  %1679 = vmatprep.mubr.bf16.mxu0 0
  %1680 = vmatmul.mubr.bf16.gmra.mrb[0].mxu0 %v1600
  %v1681 = vpop.f32.mrb[0].mxu0
  %v1682 = vadd.f32 0.0, %v1681
  %v1683 = vpop.f32.mrb[0].mxu0
  %v1684 = vpop.f32.mrb[0].mxu0
  %v1685 = vadd.f32 0.0, %v1684
  %v1686 = vpop.f32.mrb[0].mxu0
  %1687 = vmatprep.mubr.bf16.mxu0 0
  %1688 = vmatmul.mubr.bf16.gmra.mrb[0].mxu0 %v1603
  %v1689 = vpop.f32.mrb[0].mxu0
  %v1690 = vadd.f32 0.0, %v1689
  %v1691 = vpop.f32.mrb[0].mxu0
  %v1692 = vpop.f32.mrb[0].mxu0
  %v1693 = vadd.f32 0.0, %v1692
  %v1694 = vpop.f32.mrb[0].mxu0
  %1695 = vmatprep.mubr.bf16.mxu0 0
  %1696 = vmatmul.mubr.bf16.gmra.mrb[0].mxu0 %v1606
  %v1697 = vpop.f32.mrb[0].mxu0
  %v1698 = vadd.f32 0.0, %v1697
  %v1699 = vpop.f32.mrb[0].mxu0
  %v1700 = vpop.f32.mrb[0].mxu0
  %v1701 = vadd.f32 0.0, %v1700
  %v1702 = vpop.f32.mrb[0].mxu0
  %1703 = vmatprep.mubr.bf16.mxu0 0
  %1704 = vmatmul.mubr.bf16.gmra.mrb[0].mxu0 %v1609
  %v1705 = vpop.f32.mrb[0].mxu0
  %v1706 = vadd.f32 0.0, %v1705
  %v1707 = vpop.f32.mrb[0].mxu0
  %v1708 = vpop.f32.mrb[0].mxu0
  %v1709 = vadd.f32 0.0, %v1708
  %v1710 = vpop.f32.mrb[0].mxu0
  %1711 = vmatprep.mubr.bf16.mxu0 0
  %1712 = vmatmul.mubr.bf16.gmra.mrb[0].mxu0 %v1612
  %v1713 = vpop.f32.mrb[0].mxu0
  %v1714 = vadd.f32 0.0, %v1713
  %v1715 = vpop.f32.mrb[0].mxu0
  %v1716 = vpop.f32.mrb[0].mxu0
  %v1717 = vadd.f32 0.0, %v1716
  %v1718 = vpop.f32.mrb[0].mxu0
  %1719 = vmatprep.mubr.bf16.mxu0 0
  %1720 = vmatmul.mubr.bf16.gmra.mrb[0].mxu0 %v1615
  %v1721 = vpop.f32.mrb[0].mxu0
  %v1722 = vadd.f32 0.0, %v1721
  %v1723 = vpop.f32.mrb[0].mxu0
  %v1724 = vpop.f32.mrb[0].mxu0
  %v1725 = vadd.f32 0.0, %v1724
  %v1726 = vpop.f32.mrb[0].mxu0
  %1727 = vmatprep.mubr.bf16.mxu0 0
  %1728 = vmatmul.mubr.bf16.gmra.mrb[0].mxu0 %v1618
  %v1729 = vpop.f32.mrb[0].mxu0
  %v1730 = vadd.f32 0.0, %v1729
  %v1731 = vpop.f32.mrb[0].mxu0
  %v1732 = vpop.f32.mrb[0].mxu0
  %v1733 = vadd.f32 0.0, %v1732
  %v1734 = vpop.f32.mrb[0].mxu0
  %1735 = vmatprep.mubr.bf16.mxu0 0
  %1736 = vmatmul.mubr.bf16.gmra.mrb[0].mxu0 %v1621
  %v1737 = vpop.f32.mrb[0].mxu0
  %v1738 = vadd.f32 0.0, %v1737
  %v1739 = vpop.f32.mrb[0].mxu0
  %v1740 = vpop.f32.mrb[0].mxu0
  %v1741 = vadd.f32 0.0, %v1740
  %v1742 = vpop.f32.mrb[0].mxu0
  %1743 = vdwg.mxu0
  %v1744 = vmul.f32 %v1682, 0.35355338
  %v1745 = vmul.f32 %v1685, 0.35355338
  %v1746 = vmul.f32 %v1690, 0.35355338
  %v1747 = vmul.f32 %v1693, 0.35355338
  %v1748 = vmul.f32 %v1698, 0.35355338
  %v1749 = vmul.f32 %v1701, 0.35355338
  %v1750 = vmul.f32 %v1706, 0.35355338
  %v1751 = vmul.f32 %v1709, 0.35355338
  %v1752 = vmul.f32 %v1714, 0.35355338
  %v1753 = vmul.f32 %v1717, 0.35355338
  %v1754 = vmul.f32 %v1722, 0.35355338
  %v1755 = vmul.f32 %v1725, 0.35355338
  %v1756 = vmul.f32 %v1730, 0.35355338
  %v1757 = vmul.f32 %v1733, 0.35355338
  %v1758 = vmul.f32 %v1738, 0.35355338
  %v1759 = vmul.f32 %v1741, 0.35355338
  %v1760 = vadd.f32 %v1744, %v524
  %v1761 = vadd.f32 %v1745, %v524
  %v1762 = vadd.f32 %v1746, %v524
  %v1763 = vadd.f32 %v1747, %v524
  %v1764 = vadd.f32 %v1748, %v524
  %v1765 = vadd.f32 %v1749, %v524
  %v1766 = vadd.f32 %v1750, %v524
  %v1767 = vadd.f32 %v1751, %v524
  %v1768 = vadd.f32 %v1752, %v524
  %v1769 = vadd.f32 %v1753, %v524
  %v1770 = vadd.f32 %v1754, %v524
  %v1771 = vadd.f32 %v1755, %v524
  %v1772 = vadd.f32 %v1756, %v524
  %v1773 = vadd.f32 %v1757, %v524
  %v1774 = vadd.f32 %v1758, %v524
  %v1775 = vadd.f32 %v1759, %v524
  %1776 = vmax.xlane.f32.xlu0 %v1760
  %v1777 = vpop.xlane.xlu0 %1776
  %1778 = vmax.xlane.f32.xlu0 %v1761
  %v1779 = vpop.xlane.xlu0 %1778
  %1780 = vmax.xlane.f32.xlu0 %v1762
  %v1781 = vpop.xlane.xlu0 %1780
  %1782 = vmax.xlane.f32.xlu0 %v1763
  %v1783 = vpop.xlane.xlu0 %1782
  %1784 = vmax.xlane.f32.xlu0 %v1764
  %v1785 = vpop.xlane.xlu0 %1784
  %1786 = vmax.xlane.f32.xlu0 %v1765
  %v1787 = vpop.xlane.xlu0 %1786
  %1788 = vmax.xlane.f32.xlu0 %v1766
  %v1789 = vpop.xlane.xlu0 %1788
  %1790 = vmax.xlane.f32.xlu0 %v1767
  %v1791 = vpop.xlane.xlu0 %1790
  %1792 = vmax.xlane.f32.xlu0 %v1768
  %v1793 = vpop.xlane.xlu0 %1792
  %1794 = vmax.xlane.f32.xlu0 %v1769
  %v1795 = vpop.xlane.xlu0 %1794
  %1796 = vmax.xlane.f32.xlu0 %v1770
  %v1797 = vpop.xlane.xlu0 %1796
  %1798 = vmax.xlane.f32.xlu0 %v1771
  %v1799 = vpop.xlane.xlu0 %1798
  %1800 = vmax.xlane.f32.xlu0 %v1772
  %v1801 = vpop.xlane.xlu0 %1800
  %1802 = vmax.xlane.f32.xlu0 %v1773
  %v1803 = vpop.xlane.xlu0 %1802
  %1804 = vmax.xlane.f32.xlu0 %v1774
  %v1805 = vpop.xlane.xlu0 %1804
  %1806 = vmax.xlane.f32.xlu0 %v1775
  %v1807 = vpop.xlane.xlu0 %1806
  %v1808 = vsub.f32 %v1760, %v1777
  %v1809 = vsub.f32 %v1761, %v1779
  %v1810 = vsub.f32 %v1762, %v1781
  %v1811 = vsub.f32 %v1763, %v1783
  %v1812 = vsub.f32 %v1764, %v1785
  %v1813 = vsub.f32 %v1765, %v1787
  %v1814 = vsub.f32 %v1766, %v1789
  %v1815 = vsub.f32 %v1767, %v1791
  %v1816 = vsub.f32 %v1768, %v1793
  %v1817 = vsub.f32 %v1769, %v1795
  %v1818 = vsub.f32 %v1770, %v1797
  %v1819 = vsub.f32 %v1771, %v1799
  %v1820 = vsub.f32 %v1772, %v1801
  %v1821 = vsub.f32 %v1773, %v1803
  %v1822 = vsub.f32 %v1774, %v1805
  %v1823 = vsub.f32 %v1775, %v1807
  %v1824 = vmul.f32 %v1808, 1.442695
  %v1825 = vpow.pop %v1824
  %v1826 = vmul.f32 %v1809, 1.442695
  %v1827 = vpow.pop %v1826
  %v1828 = vmul.f32 %v1810, 1.442695
  %v1829 = vpow.pop %v1828
  %v1830 = vmul.f32 %v1811, 1.442695
  %v1831 = vpow.pop %v1830
  %v1832 = vmul.f32 %v1812, 1.442695
  %v1833 = vpow.pop %v1832
  %v1834 = vmul.f32 %v1813, 1.442695
  %v1835 = vpow.pop %v1834
  %v1836 = vmul.f32 %v1814, 1.442695
  %v1837 = vpow.pop %v1836
  %v1838 = vmul.f32 %v1815, 1.442695
  %v1839 = vpow.pop %v1838
  %v1840 = vmul.f32 %v1816, 1.442695
  %v1841 = vpow.pop %v1840
  %v1842 = vmul.f32 %v1817, 1.442695
  %v1843 = vpow.pop %v1842
  %v1844 = vmul.f32 %v1818, 1.442695
  %v1845 = vpow.pop %v1844
  %v1846 = vmul.f32 %v1819, 1.442695
  %v1847 = vpow.pop %v1846
  %v1848 = vmul.f32 %v1820, 1.442695
  %v1849 = vpow.pop %v1848
  %v1850 = vmul.f32 %v1821, 1.442695
  %v1851 = vpow.pop %v1850
  %v1852 = vmul.f32 %v1822, 1.442695
  %v1853 = vpow.pop %v1852
  %v1854 = vmul.f32 %v1823, 1.442695
  %v1855 = vpow.pop %v1854
  %1856 = vadd.xlane.f32.xlu0 %v1825
  %v1857 = vpop.xlane.xlu0 %1856
  %1858 = vadd.xlane.f32.xlu0 %v1827
  %v1859 = vpop.xlane.xlu0 %1858
  %1860 = vadd.xlane.f32.xlu0 %v1829
  %v1861 = vpop.xlane.xlu0 %1860
  %1862 = vadd.xlane.f32.xlu0 %v1831
  %v1863 = vpop.xlane.xlu0 %1862
  %1864 = vadd.xlane.f32.xlu0 %v1833
  %v1865 = vpop.xlane.xlu0 %1864
  %1866 = vadd.xlane.f32.xlu0 %v1835
  %v1867 = vpop.xlane.xlu0 %1866
  %1868 = vadd.xlane.f32.xlu0 %v1837
  %v1869 = vpop.xlane.xlu0 %1868
  %1870 = vadd.xlane.f32.xlu0 %v1839
  %v1871 = vpop.xlane.xlu0 %1870
  %1872 = vadd.xlane.f32.xlu0 %v1841
  %v1873 = vpop.xlane.xlu0 %1872
  %1874 = vadd.xlane.f32.xlu0 %v1843
  %v1875 = vpop.xlane.xlu0 %1874
  %1876 = vadd.xlane.f32.xlu0 %v1845
  %v1877 = vpop.xlane.xlu0 %1876
  %1878 = vadd.xlane.f32.xlu0 %v1847
  %v1879 = vpop.xlane.xlu0 %1878
  %1880 = vadd.xlane.f32.xlu0 %v1849
  %v1881 = vpop.xlane.xlu0 %1880
  %1882 = vadd.xlane.f32.xlu0 %v1851
  %v1883 = vpop.xlane.xlu0 %1882
  %1884 = vadd.xlane.f32.xlu0 %v1853
  %v1885 = vpop.xlane.xlu0 %1884
  %1886 = vadd.xlane.f32.xlu0 %v1855
  %v1887 = vpop.xlane.xlu0 %1886
  %v1888 = vpack.c.bf16 %v1827, %v1825
  %v1889 = vpack.c.bf16 %v1831, %v1829
  %v1890 = vpack.c.bf16 %v1835, %v1833
  %v1891 = vpack.c.bf16 %v1839, %v1837
  %v1892 = vpack.c.bf16 %v1843, %v1841
  %v1893 = vpack.c.bf16 %v1847, %v1845
  %v1894 = vpack.c.bf16 %v1851, %v1849
  %v1895 = vpack.c.bf16 %v1855, %v1853
  %1896 = vrot.lane.b32.xlu0 %v326, 48
  %v1897 = vpop.permute.xlu0 %1896
  %1898 = vrot.lane.b32.xlu0 %v327, 48
  %v1899 = vpop.permute.xlu0 %1898
  %1900 = vrot.lane.b32.xlu0 %v328, 48
  %v1901 = vpop.permute.xlu0 %1900
  %1902 = vrot.lane.b32.xlu0 %v329, 48
  %v1903 = vpop.permute.xlu0 %1902
  %1904 = vrot.lane.b32.xlu0 %v330, 48
  %v1905 = vpop.permute.xlu0 %1904
  %1906 = vrot.lane.b32.xlu0 %v331, 48
  %v1907 = vpop.permute.xlu0 %1906
  %1908 = vrot.lane.b32.xlu0 %v332, 48
  %v1909 = vpop.permute.xlu0 %1908
  %1910 = vrot.lane.b32.xlu0 %v333, 48
  %v1911 = vpop.permute.xlu0 %1910
  %1920 = vmatprep.subr.bf16.mxu0 0
  %1921 = vmatpush1.bf16.msra.mxu0 %v1897
  %1922 = vmatprep.subr.bf16.mxu0 0
  %1923 = vmatpush1.bf16.msra.mxu0 %v1899
  %1924 = vmatprep.subr.bf16.mxu0 0
  %1925 = vmatpush1.bf16.msra.mxu0 %v1901
  %1926 = vmatprep.subr.bf16.mxu0 0
  %1927 = vmatpush1.bf16.msra.mxu0 %v1903
  %1928 = vmatprep.subr.bf16.mxu0 0
  %1929 = vmatpush1.bf16.msra.mxu0 %v1905
  %1930 = vmatprep.subr.bf16.mxu0 0
  %1931 = vmatpush1.bf16.msra.mxu0 %v1907
  %1932 = vmatprep.subr.bf16.mxu0 0
  %1933 = vmatpush1.bf16.msra.mxu0 %v1909
  %1934 = vmatprep.subr.bf16.mxu0 0
  %1935 = vmatpush1.bf16.msra.mxu0 %v1911
  %1936 = vmatprep.subr.bf16.mxu0 0
  %1937 = vmatpush1.bf16.msra.mxu0 0
  %1938 = vmatprep.subr.bf16.mxu0 0
  %1939 = vmatpush1.bf16.msra.mxu0 0
  %1940 = vmatprep.subr.bf16.mxu0 0
  %1941 = vmatpush1.bf16.msra.mxu0 0
  %1942 = vmatprep.subr.bf16.mxu0 0
  %1943 = vmatpush1.bf16.msra.mxu0 0
  %1944 = vmatprep.subr.bf16.mxu0 0
  %1945 = vmatpush1.bf16.msra.mxu0 0
  %1946 = vmatprep.subr.bf16.mxu0 0
  %1947 = vmatpush1.bf16.msra.mxu0 0
  %1948 = vmatprep.subr.bf16.mxu0 0
  %1949 = vmatpush1.bf16.msra.mxu0 0
  %1950 = vmatprep.subr.bf16.mxu0 0
  %1951 = vmatpush1.bf16.msra.mxu0 0
  %1952 = vmatprep.mubr.bf16.mxu0 0
  %1953 = vmatmul.mubr.bf16.gmra.mrb[0].mxu0 %v1888
  %v1954 = vpop.f32.mrb[0].mxu0
  %v1955 = vadd.f32 0.0, %v1954
  %v1956 = vpop.f32.mrb[0].mxu0
  %v1957 = vpop.f32.mrb[0].mxu0
  %v1958 = vadd.f32 0.0, %v1957
  %v1959 = vpop.f32.mrb[0].mxu0
  %1960 = vmatprep.mubr.bf16.mxu0 0
  %1961 = vmatmul.mubr.bf16.gmra.mrb[0].mxu0 %v1889
  %v1962 = vpop.f32.mrb[0].mxu0
  %v1963 = vadd.f32 0.0, %v1962
  %v1964 = vpop.f32.mrb[0].mxu0
  %v1965 = vpop.f32.mrb[0].mxu0
  %v1966 = vadd.f32 0.0, %v1965
  %v1967 = vpop.f32.mrb[0].mxu0
  %1968 = vmatprep.mubr.bf16.mxu0 0
  %1969 = vmatmul.mubr.bf16.gmra.mrb[0].mxu0 %v1890
  %v1970 = vpop.f32.mrb[0].mxu0
  %v1971 = vadd.f32 0.0, %v1970
  %v1972 = vpop.f32.mrb[0].mxu0
  %v1973 = vpop.f32.mrb[0].mxu0
  %v1974 = vadd.f32 0.0, %v1973
  %v1975 = vpop.f32.mrb[0].mxu0
  %1976 = vmatprep.mubr.bf16.mxu0 0
  %1977 = vmatmul.mubr.bf16.gmra.mrb[0].mxu0 %v1891
  %v1978 = vpop.f32.mrb[0].mxu0
  %v1979 = vadd.f32 0.0, %v1978
  %v1980 = vpop.f32.mrb[0].mxu0
  %v1981 = vpop.f32.mrb[0].mxu0
  %v1982 = vadd.f32 0.0, %v1981
  %v1983 = vpop.f32.mrb[0].mxu0
  %1984 = vmatprep.mubr.bf16.mxu0 0
  %1985 = vmatmul.mubr.bf16.gmra.mrb[0].mxu0 %v1892
  %v1986 = vpop.f32.mrb[0].mxu0
  %v1987 = vadd.f32 0.0, %v1986
  %v1988 = vpop.f32.mrb[0].mxu0
  %v1989 = vpop.f32.mrb[0].mxu0
  %v1990 = vadd.f32 0.0, %v1989
  %v1991 = vpop.f32.mrb[0].mxu0
  %1992 = vmatprep.mubr.bf16.mxu0 0
  %1993 = vmatmul.mubr.bf16.gmra.mrb[0].mxu0 %v1893
  %v1994 = vpop.f32.mrb[0].mxu0
  %v1995 = vadd.f32 0.0, %v1994
  %v1996 = vpop.f32.mrb[0].mxu0
  %v1997 = vpop.f32.mrb[0].mxu0
  %v1998 = vadd.f32 0.0, %v1997
  %v1999 = vpop.f32.mrb[0].mxu0
  %2000 = vmatprep.mubr.bf16.mxu0 0
  %2001 = vmatmul.mubr.bf16.gmra.mrb[0].mxu0 %v1894
  %v2002 = vpop.f32.mrb[0].mxu0
  %v2003 = vadd.f32 0.0, %v2002
  %v2004 = vpop.f32.mrb[0].mxu0
  %v2005 = vpop.f32.mrb[0].mxu0
  %v2006 = vadd.f32 0.0, %v2005
  %v2007 = vpop.f32.mrb[0].mxu0
  %2008 = vmatprep.mubr.bf16.mxu0 0
  %2009 = vmatmul.mubr.bf16.gmra.mrb[0].mxu0 %v1895
  %v2010 = vpop.f32.mrb[0].mxu0
  %v2011 = vadd.f32 0.0, %v2010
  %v2012 = vpop.f32.mrb[0].mxu0
  %v2013 = vpop.f32.mrb[0].mxu0
  %v2014 = vadd.f32 0.0, %v2013
  %v2015 = vpop.f32.mrb[0].mxu0
  %2016 = vdwg.mxu0
  %v2017 = vrcp.pop %v1857
  %v2018 = vrcp.pop %v1859
  %v2019 = vrcp.pop %v1861
  %v2020 = vrcp.pop %v1863
  %v2021 = vrcp.pop %v1865
  %v2022 = vrcp.pop %v1867
  %v2023 = vrcp.pop %v1869
  %v2024 = vrcp.pop %v1871
  %v2025 = vrcp.pop %v1873
  %v2026 = vrcp.pop %v1875
  %v2027 = vrcp.pop %v1877
  %v2028 = vrcp.pop %v1879
  %v2029 = vrcp.pop %v1881
  %v2030 = vrcp.pop %v1883
  %v2031 = vrcp.pop %v1885
  %v2032 = vrcp.pop %v1887
  %v2033 = vmul.f32 %v1955, %v2017
  %v2034 = vmul.f32 %v1958, %v2018
  %v2035 = vmul.f32 %v1963, %v2019
  %v2036 = vmul.f32 %v1966, %v2020
  %v2037 = vmul.f32 %v1971, %v2021
  %v2038 = vmul.f32 %v1974, %v2022
  %v2039 = vmul.f32 %v1979, %v2023
  %v2040 = vmul.f32 %v1982, %v2024
  %v2041 = vmul.f32 %v1987, %v2025
  %v2042 = vmul.f32 %v1990, %v2026
  %v2043 = vmul.f32 %v1995, %v2027
  %v2044 = vmul.f32 %v1998, %v2028
  %v2045 = vmul.f32 %v2003, %v2029
  %v2046 = vmul.f32 %v2006, %v2030
  %v2047 = vmul.f32 %v2011, %v2031
  %v2048 = vmul.f32 %v2014, %v2032
  %s2049 = scalar_lea.vmem %s4, 16
  %v2050 = vld [vmem:[%s2049] sm:$0xff]
  %v2051 = vpack.c.bf16 %v2034, %v2033
  %v2052 = vpack.c.bf16 %v2036, %v2035
  %v2053 = vpack.c.bf16 %v2038, %v2037
  %v2054 = vpack.c.bf16 %v2040, %v2039
  %v2055 = vpack.c.bf16 %v2042, %v2041
  %v2056 = vpack.c.bf16 %v2044, %v2043
  %v2057 = vpack.c.bf16 %v2046, %v2045
  %v2058 = vpack.c.bf16 %v2048, %v2047
  %v2059 = vpack.c.bf16 %v2050, %v2050
  %v2061 = vsel %vm358, %v2051, 0
  %v2064 = vsel %vm358, %v2052, 0
  %v2067 = vsel %vm358, %v2053, 0
  %v2070 = vsel %vm358, %v2054, 0
  %v2073 = vsel %vm358, %v2055, 0
  %v2076 = vsel %vm358, %v2056, 0
  %v2079 = vsel %vm358, %v2057, 0
  %v2082 = vsel %vm358, %v2058, 0
  %v2085 = vsel %vm1342, %v2059, 0
  %2087 = vmatprep.subr.bf16.mxu0 0
  %2088 = vmatpush1.bf16.msra.mxu0 %v2085
  %2089 = vmatprep.subr.bf16.mxu0 0
  %2090 = vmatpush1.bf16.msra.mxu0 0
  %2091 = vmatprep.subr.bf16.mxu0 0
  %2092 = vmatpush1.bf16.msra.mxu0 0
  %2093 = vmatprep.subr.bf16.mxu0 0
  %2094 = vmatpush1.bf16.msra.mxu0 0
  %2095 = vmatprep.subr.bf16.mxu0 0
  %2096 = vmatpush1.bf16.msra.mxu0 0
  %2097 = vmatprep.subr.bf16.mxu0 0
  %2098 = vmatpush1.bf16.msra.mxu0 0
  %2099 = vmatprep.subr.bf16.mxu0 0
  %2100 = vmatpush1.bf16.msra.mxu0 0
  %2101 = vmatprep.subr.bf16.mxu0 0
  %2102 = vmatpush1.bf16.msra.mxu0 0
  %2103 = vmatprep.subr.bf16.mxu0 0
  %2104 = vmatpush1.bf16.msra.mxu0 0
  %2105 = vmatprep.subr.bf16.mxu0 0
  %2106 = vmatpush1.bf16.msra.mxu0 0
  %2107 = vmatprep.subr.bf16.mxu0 0
  %2108 = vmatpush1.bf16.msra.mxu0 0
  %2109 = vmatprep.subr.bf16.mxu0 0
  %2110 = vmatpush1.bf16.msra.mxu0 0
  %2111 = vmatprep.subr.bf16.mxu0 0
  %2112 = vmatpush1.bf16.msra.mxu0 0
  %2113 = vmatprep.subr.bf16.mxu0 0
  %2114 = vmatpush1.bf16.msra.mxu0 0
  %2115 = vmatprep.subr.bf16.mxu0 0
  %2116 = vmatpush1.bf16.msra.mxu0 0
  %2117 = vmatprep.subr.bf16.mxu0 0
  %2118 = vmatpush1.bf16.msra.mxu0 0
  %2119 = vmatprep.mubr.bf16.mxu0 0
  %2120 = vmatmul.mubr.bf16.gmra.mrb[0].mxu0 %v2061
  %v2121 = vpop.f32.mrb[0].mxu0
  %v2122 = vadd.f32 0.0, %v2121
  %v2123 = vpop.f32.mrb[0].mxu0
  %v2124 = vpop.f32.mrb[0].mxu0
  %v2125 = vadd.f32 0.0, %v2124
  %v2126 = vpop.f32.mrb[0].mxu0
  %2127 = vmatprep.mubr.bf16.mxu0 0
  %2128 = vmatmul.mubr.bf16.gmra.mrb[0].mxu0 %v2064
  %v2129 = vpop.f32.mrb[0].mxu0
  %v2130 = vadd.f32 0.0, %v2129
  %v2131 = vpop.f32.mrb[0].mxu0
  %v2132 = vpop.f32.mrb[0].mxu0
  %v2133 = vadd.f32 0.0, %v2132
  %v2134 = vpop.f32.mrb[0].mxu0
  %2135 = vmatprep.mubr.bf16.mxu0 0
  %2136 = vmatmul.mubr.bf16.gmra.mrb[0].mxu0 %v2067
  %v2137 = vpop.f32.mrb[0].mxu0
  %v2138 = vadd.f32 0.0, %v2137
  %v2139 = vpop.f32.mrb[0].mxu0
  %v2140 = vpop.f32.mrb[0].mxu0
  %v2141 = vadd.f32 0.0, %v2140
  %v2142 = vpop.f32.mrb[0].mxu0
  %2143 = vmatprep.mubr.bf16.mxu0 0
  %2144 = vmatmul.mubr.bf16.gmra.mrb[0].mxu0 %v2070
  %v2145 = vpop.f32.mrb[0].mxu0
  %v2146 = vadd.f32 0.0, %v2145
  %v2147 = vpop.f32.mrb[0].mxu0
  %v2148 = vpop.f32.mrb[0].mxu0
  %v2149 = vadd.f32 0.0, %v2148
  %v2150 = vpop.f32.mrb[0].mxu0
  %2151 = vmatprep.mubr.bf16.mxu0 0
  %2152 = vmatmul.mubr.bf16.gmra.mrb[0].mxu0 %v2073
  %v2153 = vpop.f32.mrb[0].mxu0
  %v2154 = vadd.f32 0.0, %v2153
  %v2155 = vpop.f32.mrb[0].mxu0
  %v2156 = vpop.f32.mrb[0].mxu0
  %v2157 = vadd.f32 0.0, %v2156
  %v2158 = vpop.f32.mrb[0].mxu0
  %2159 = vmatprep.mubr.bf16.mxu0 0
  %2160 = vmatmul.mubr.bf16.gmra.mrb[0].mxu0 %v2076
  %v2161 = vpop.f32.mrb[0].mxu0
  %v2162 = vadd.f32 0.0, %v2161
  %v2163 = vpop.f32.mrb[0].mxu0
  %v2164 = vpop.f32.mrb[0].mxu0
  %v2165 = vadd.f32 0.0, %v2164
  %v2166 = vpop.f32.mrb[0].mxu0
  %2167 = vmatprep.mubr.bf16.mxu0 0
  %2168 = vmatmul.mubr.bf16.gmra.mrb[0].mxu0 %v2079
  %v2169 = vpop.f32.mrb[0].mxu0
  %v2170 = vadd.f32 0.0, %v2169
  %v2171 = vpop.f32.mrb[0].mxu0
  %v2172 = vpop.f32.mrb[0].mxu0
  %v2173 = vadd.f32 0.0, %v2172
  %v2174 = vpop.f32.mrb[0].mxu0
  %2175 = vmatprep.mubr.bf16.mxu0 0
  %2176 = vmatmul.mubr.bf16.gmra.mrb[0].mxu0 %v2082
  %v2177 = vpop.f32.mrb[0].mxu0
  %v2178 = vadd.f32 0.0, %v2177
  %v2179 = vpop.f32.mrb[0].mxu0
  %v2180 = vpop.f32.mrb[0].mxu0
  %v2181 = vadd.f32 0.0, %v2180
  %v2182 = vpop.f32.mrb[0].mxu0
  %2183 = vdwg.mxu0
  %v2184 = vadd.f32 %v1505, %v2122
  %v2185 = vadd.f32 %v1508, %v2125
  %v2186 = vadd.f32 %v1513, %v2130
  %v2187 = vadd.f32 %v1516, %v2133
  %v2188 = vadd.f32 %v1521, %v2138
  %v2189 = vadd.f32 %v1524, %v2141
  %v2190 = vadd.f32 %v1529, %v2146
  %v2191 = vadd.f32 %v1532, %v2149
  %v2192 = vadd.f32 %v1537, %v2154
  %v2193 = vadd.f32 %v1540, %v2157
  %v2194 = vadd.f32 %v1545, %v2162
  %v2195 = vadd.f32 %v1548, %v2165
  %v2196 = vadd.f32 %v1553, %v2170
  %v2197 = vadd.f32 %v1556, %v2173
  %v2198 = vadd.f32 %v1561, %v2178
  %v2199 = vadd.f32 %v1564, %v2181
  %2200 = vrot.lane.b32.xlu0 %v326, 104
  %v2201 = vpop.permute.xlu0 %2200
  %2202 = vrot.lane.b32.xlu0 %v327, 104
  %v2203 = vpop.permute.xlu0 %2202
  %2204 = vrot.lane.b32.xlu0 %v328, 104
  %v2205 = vpop.permute.xlu0 %2204
  %2206 = vrot.lane.b32.xlu0 %v329, 104
  %v2207 = vpop.permute.xlu0 %2206
  %2208 = vrot.lane.b32.xlu0 %v330, 104
  %v2209 = vpop.permute.xlu0 %2208
  %2210 = vrot.lane.b32.xlu0 %v331, 104
  %v2211 = vpop.permute.xlu0 %2210
  %2212 = vrot.lane.b32.xlu0 %v332, 104
  %v2213 = vpop.permute.xlu0 %2212
  %2214 = vrot.lane.b32.xlu0 %v333, 104
  %v2215 = vpop.permute.xlu0 %2214
  %2216 = vrot.lane.b32.xlu0 %v326, 72
  %v2217 = vpop.permute.xlu0 %2216
  %2218 = vrot.lane.b32.xlu0 %v327, 72
  %v2219 = vpop.permute.xlu0 %2218
  %2220 = vrot.lane.b32.xlu0 %v328, 72
  %v2221 = vpop.permute.xlu0 %2220
  %2222 = vrot.lane.b32.xlu0 %v329, 72
  %v2223 = vpop.permute.xlu0 %2222
  %2224 = vrot.lane.b32.xlu0 %v330, 72
  %v2225 = vpop.permute.xlu0 %2224
  %2226 = vrot.lane.b32.xlu0 %v331, 72
  %v2227 = vpop.permute.xlu0 %2226
  %2228 = vrot.lane.b32.xlu0 %v332, 72
  %v2229 = vpop.permute.xlu0 %2228
  %2230 = vrot.lane.b32.xlu0 %v333, 72
  %v2231 = vpop.permute.xlu0 %2230
  %v2233 = vsel %vm358, %v2201, 0
  %v2236 = vsel %vm358, %v2203, 0
  %v2239 = vsel %vm358, %v2205, 0
  %v2242 = vsel %vm358, %v2207, 0
  %v2245 = vsel %vm358, %v2209, 0
  %v2248 = vsel %vm358, %v2211, 0
  %v2251 = vsel %vm358, %v2213, 0
  %v2254 = vsel %vm358, %v2215, 0
  %v2257 = vsel %vm358, %v2217, 0
  %v2260 = vsel %vm358, %v2219, 0
  %v2263 = vsel %vm358, %v2221, 0
  %v2266 = vsel %vm358, %v2223, 0
  %v2269 = vsel %vm358, %v2225, 0
  %v2272 = vsel %vm358, %v2227, 0
  %v2275 = vsel %vm358, %v2229, 0
  %v2278 = vsel %vm358, %v2231, 0
  %2280 = vmatprep.subr.bf16.mxu0 0
  %2281 = vmatpush1.bf16.xpose.msra.mxu0 %v2257
  %2282 = vmatprep.subr.bf16.mxu0 0
  %2283 = vmatpush1.bf16.xpose.msra.mxu0 %v2260
  %2284 = vmatprep.subr.bf16.mxu0 0
  %2285 = vmatpush1.bf16.xpose.msra.mxu0 %v2263
  %2286 = vmatprep.subr.bf16.mxu0 0
  %2287 = vmatpush1.bf16.xpose.msra.mxu0 %v2266
  %2288 = vmatprep.subr.bf16.mxu0 0
  %2289 = vmatpush1.bf16.xpose.msra.mxu0 %v2269
  %2290 = vmatprep.subr.bf16.mxu0 0
  %2291 = vmatpush1.bf16.xpose.msra.mxu0 %v2272
  %2292 = vmatprep.subr.bf16.mxu0 0
  %2293 = vmatpush1.bf16.xpose.msra.mxu0 %v2275
  %2294 = vmatprep.subr.bf16.mxu0 0
  %2295 = vmatpush1.bf16.xpose.msra.mxu0 %v2278
  %2296 = vmatprep.subr.bf16.mxu0 0
  %2297 = vmatpush1.bf16.xpose.msra.mxu0 0
  %2298 = vmatprep.subr.bf16.mxu0 0
  %2299 = vmatpush1.bf16.xpose.msra.mxu0 0
  %2300 = vmatprep.subr.bf16.mxu0 0
  %2301 = vmatpush1.bf16.xpose.msra.mxu0 0
  %2302 = vmatprep.subr.bf16.mxu0 0
  %2303 = vmatpush1.bf16.xpose.msra.mxu0 0
  %2304 = vmatprep.subr.bf16.mxu0 0
  %2305 = vmatpush1.bf16.xpose.msra.mxu0 0
  %2306 = vmatprep.subr.bf16.mxu0 0
  %2307 = vmatpush1.bf16.xpose.msra.mxu0 0
  %2308 = vmatprep.subr.bf16.mxu0 0
  %2309 = vmatpush1.bf16.xpose.msra.mxu0 0
  %2310 = vmatprep.subr.bf16.mxu0 0
  %2311 = vmatpush1.bf16.xpose.msra.mxu0 0
  %2312 = vmatprep.mubr.bf16.mxu0 0
  %2313 = vmatmul.mubr.bf16.gmra.mrb[0].mxu0 %v2233
  %v2314 = vpop.f32.mrb[0].mxu0
  %v2315 = vadd.f32 0.0, %v2314
  %v2316 = vpop.f32.mrb[0].mxu0
  %v2317 = vpop.f32.mrb[0].mxu0
  %v2318 = vadd.f32 0.0, %v2317
  %v2319 = vpop.f32.mrb[0].mxu0
  %2320 = vmatprep.mubr.bf16.mxu0 0
  %2321 = vmatmul.mubr.bf16.gmra.mrb[0].mxu0 %v2236
  %v2322 = vpop.f32.mrb[0].mxu0
  %v2323 = vadd.f32 0.0, %v2322
  %v2324 = vpop.f32.mrb[0].mxu0
  %v2325 = vpop.f32.mrb[0].mxu0
  %v2326 = vadd.f32 0.0, %v2325
  %v2327 = vpop.f32.mrb[0].mxu0
  %2328 = vmatprep.mubr.bf16.mxu0 0
  %2329 = vmatmul.mubr.bf16.gmra.mrb[0].mxu0 %v2239
  %v2330 = vpop.f32.mrb[0].mxu0
  %v2331 = vadd.f32 0.0, %v2330
  %v2332 = vpop.f32.mrb[0].mxu0
  %v2333 = vpop.f32.mrb[0].mxu0
  %v2334 = vadd.f32 0.0, %v2333
  %v2335 = vpop.f32.mrb[0].mxu0
  %2336 = vmatprep.mubr.bf16.mxu0 0
  %2337 = vmatmul.mubr.bf16.gmra.mrb[0].mxu0 %v2242
  %v2338 = vpop.f32.mrb[0].mxu0
  %v2339 = vadd.f32 0.0, %v2338
  %v2340 = vpop.f32.mrb[0].mxu0
  %v2341 = vpop.f32.mrb[0].mxu0
  %v2342 = vadd.f32 0.0, %v2341
  %v2343 = vpop.f32.mrb[0].mxu0
  %2344 = vmatprep.mubr.bf16.mxu0 0
  %2345 = vmatmul.mubr.bf16.gmra.mrb[0].mxu0 %v2245
  %v2346 = vpop.f32.mrb[0].mxu0
  %v2347 = vadd.f32 0.0, %v2346
  %v2348 = vpop.f32.mrb[0].mxu0
  %v2349 = vpop.f32.mrb[0].mxu0
  %v2350 = vadd.f32 0.0, %v2349
  %v2351 = vpop.f32.mrb[0].mxu0
  %2352 = vmatprep.mubr.bf16.mxu0 0
  %2353 = vmatmul.mubr.bf16.gmra.mrb[0].mxu0 %v2248
  %v2354 = vpop.f32.mrb[0].mxu0
  %v2355 = vadd.f32 0.0, %v2354
  %v2356 = vpop.f32.mrb[0].mxu0
  %v2357 = vpop.f32.mrb[0].mxu0
  %v2358 = vadd.f32 0.0, %v2357
  %v2359 = vpop.f32.mrb[0].mxu0
  %2360 = vmatprep.mubr.bf16.mxu0 0
  %2361 = vmatmul.mubr.bf16.gmra.mrb[0].mxu0 %v2251
  %v2362 = vpop.f32.mrb[0].mxu0
  %v2363 = vadd.f32 0.0, %v2362
  %v2364 = vpop.f32.mrb[0].mxu0
  %v2365 = vpop.f32.mrb[0].mxu0
  %v2366 = vadd.f32 0.0, %v2365
  %v2367 = vpop.f32.mrb[0].mxu0
  %2368 = vmatprep.mubr.bf16.mxu0 0
  %2369 = vmatmul.mubr.bf16.gmra.mrb[0].mxu0 %v2254
  %v2370 = vpop.f32.mrb[0].mxu0
  %v2371 = vadd.f32 0.0, %v2370
  %v2372 = vpop.f32.mrb[0].mxu0
  %v2373 = vpop.f32.mrb[0].mxu0
  %v2374 = vadd.f32 0.0, %v2373
  %v2375 = vpop.f32.mrb[0].mxu0
  %2376 = vdwg.mxu0
  %v2377 = vmul.f32 %v2315, 0.35355338
  %v2378 = vmul.f32 %v2318, 0.35355338
  %v2379 = vmul.f32 %v2323, 0.35355338
  %v2380 = vmul.f32 %v2326, 0.35355338
  %v2381 = vmul.f32 %v2331, 0.35355338
  %v2382 = vmul.f32 %v2334, 0.35355338
  %v2383 = vmul.f32 %v2339, 0.35355338
  %v2384 = vmul.f32 %v2342, 0.35355338
  %v2385 = vmul.f32 %v2347, 0.35355338
  %v2386 = vmul.f32 %v2350, 0.35355338
  %v2387 = vmul.f32 %v2355, 0.35355338
  %v2388 = vmul.f32 %v2358, 0.35355338
  %v2389 = vmul.f32 %v2363, 0.35355338
  %v2390 = vmul.f32 %v2366, 0.35355338
  %v2391 = vmul.f32 %v2371, 0.35355338
  %v2392 = vmul.f32 %v2374, 0.35355338
  %v2393 = vadd.f32 %v2377, %v524
  %v2394 = vadd.f32 %v2378, %v524
  %v2395 = vadd.f32 %v2379, %v524
  %v2396 = vadd.f32 %v2380, %v524
  %v2397 = vadd.f32 %v2381, %v524
  %v2398 = vadd.f32 %v2382, %v524
  %v2399 = vadd.f32 %v2383, %v524
  %v2400 = vadd.f32 %v2384, %v524
  %v2401 = vadd.f32 %v2385, %v524
  %v2402 = vadd.f32 %v2386, %v524
  %v2403 = vadd.f32 %v2387, %v524
  %v2404 = vadd.f32 %v2388, %v524
  %v2405 = vadd.f32 %v2389, %v524
  %v2406 = vadd.f32 %v2390, %v524
  %v2407 = vadd.f32 %v2391, %v524
  %v2408 = vadd.f32 %v2392, %v524
  %2409 = vmax.xlane.f32.xlu0 %v2393
  %v2410 = vpop.xlane.xlu0 %2409
  %2411 = vmax.xlane.f32.xlu0 %v2394
  %v2412 = vpop.xlane.xlu0 %2411
  %2413 = vmax.xlane.f32.xlu0 %v2395
  %v2414 = vpop.xlane.xlu0 %2413
  %2415 = vmax.xlane.f32.xlu0 %v2396
  %v2416 = vpop.xlane.xlu0 %2415
  %2417 = vmax.xlane.f32.xlu0 %v2397
  %v2418 = vpop.xlane.xlu0 %2417
  %2419 = vmax.xlane.f32.xlu0 %v2398
  %v2420 = vpop.xlane.xlu0 %2419
  %2421 = vmax.xlane.f32.xlu0 %v2399
  %v2422 = vpop.xlane.xlu0 %2421
  %2423 = vmax.xlane.f32.xlu0 %v2400
  %v2424 = vpop.xlane.xlu0 %2423
  %2425 = vmax.xlane.f32.xlu0 %v2401
  %v2426 = vpop.xlane.xlu0 %2425
  %2427 = vmax.xlane.f32.xlu0 %v2402
  %v2428 = vpop.xlane.xlu0 %2427
  %2429 = vmax.xlane.f32.xlu0 %v2403
  %v2430 = vpop.xlane.xlu0 %2429
  %2431 = vmax.xlane.f32.xlu0 %v2404
  %v2432 = vpop.xlane.xlu0 %2431
  %2433 = vmax.xlane.f32.xlu0 %v2405
  %v2434 = vpop.xlane.xlu0 %2433
  %2435 = vmax.xlane.f32.xlu0 %v2406
  %v2436 = vpop.xlane.xlu0 %2435
  %2437 = vmax.xlane.f32.xlu0 %v2407
  %v2438 = vpop.xlane.xlu0 %2437
  %2439 = vmax.xlane.f32.xlu0 %v2408
  %v2440 = vpop.xlane.xlu0 %2439
  %v2441 = vsub.f32 %v2393, %v2410
  %v2442 = vsub.f32 %v2394, %v2412
  %v2443 = vsub.f32 %v2395, %v2414
  %v2444 = vsub.f32 %v2396, %v2416
  %v2445 = vsub.f32 %v2397, %v2418
  %v2446 = vsub.f32 %v2398, %v2420
  %v2447 = vsub.f32 %v2399, %v2422
  %v2448 = vsub.f32 %v2400, %v2424
  %v2449 = vsub.f32 %v2401, %v2426
  %v2450 = vsub.f32 %v2402, %v2428
  %v2451 = vsub.f32 %v2403, %v2430
  %v2452 = vsub.f32 %v2404, %v2432
  %v2453 = vsub.f32 %v2405, %v2434
  %v2454 = vsub.f32 %v2406, %v2436
  %v2455 = vsub.f32 %v2407, %v2438
  %v2456 = vsub.f32 %v2408, %v2440
  %v2457 = vmul.f32 %v2441, 1.442695
  %v2458 = vpow.pop %v2457
  %v2459 = vmul.f32 %v2442, 1.442695
  %v2460 = vpow.pop %v2459
  %v2461 = vmul.f32 %v2443, 1.442695
  %v2462 = vpow.pop %v2461
  %v2463 = vmul.f32 %v2444, 1.442695
  %v2464 = vpow.pop %v2463
  %v2465 = vmul.f32 %v2445, 1.442695
  %v2466 = vpow.pop %v2465
  %v2467 = vmul.f32 %v2446, 1.442695
  %v2468 = vpow.pop %v2467
  %v2469 = vmul.f32 %v2447, 1.442695
  %v2470 = vpow.pop %v2469
  %v2471 = vmul.f32 %v2448, 1.442695
  %v2472 = vpow.pop %v2471
  %v2473 = vmul.f32 %v2449, 1.442695
  %v2474 = vpow.pop %v2473
  %v2475 = vmul.f32 %v2450, 1.442695
  %v2476 = vpow.pop %v2475
  %v2477 = vmul.f32 %v2451, 1.442695
  %v2478 = vpow.pop %v2477
  %v2479 = vmul.f32 %v2452, 1.442695
  %v2480 = vpow.pop %v2479
  %v2481 = vmul.f32 %v2453, 1.442695
  %v2482 = vpow.pop %v2481
  %v2483 = vmul.f32 %v2454, 1.442695
  %v2484 = vpow.pop %v2483
  %v2485 = vmul.f32 %v2455, 1.442695
  %v2486 = vpow.pop %v2485
  %v2487 = vmul.f32 %v2456, 1.442695
  %v2488 = vpow.pop %v2487
  %2489 = vadd.xlane.f32.xlu0 %v2458
  %v2490 = vpop.xlane.xlu0 %2489
  %2491 = vadd.xlane.f32.xlu0 %v2460
  %v2492 = vpop.xlane.xlu0 %2491
  %2493 = vadd.xlane.f32.xlu0 %v2462
  %v2494 = vpop.xlane.xlu0 %2493
  %2495 = vadd.xlane.f32.xlu0 %v2464
  %v2496 = vpop.xlane.xlu0 %2495
  %2497 = vadd.xlane.f32.xlu0 %v2466
  %v2498 = vpop.xlane.xlu0 %2497
  %2499 = vadd.xlane.f32.xlu0 %v2468
  %v2500 = vpop.xlane.xlu0 %2499
  %2501 = vadd.xlane.f32.xlu0 %v2470
  %v2502 = vpop.xlane.xlu0 %2501
  %2503 = vadd.xlane.f32.xlu0 %v2472
  %v2504 = vpop.xlane.xlu0 %2503
  %2505 = vadd.xlane.f32.xlu0 %v2474
  %v2506 = vpop.xlane.xlu0 %2505
  %2507 = vadd.xlane.f32.xlu0 %v2476
  %v2508 = vpop.xlane.xlu0 %2507
  %2509 = vadd.xlane.f32.xlu0 %v2478
  %v2510 = vpop.xlane.xlu0 %2509
  %2511 = vadd.xlane.f32.xlu0 %v2480
  %v2512 = vpop.xlane.xlu0 %2511
  %2513 = vadd.xlane.f32.xlu0 %v2482
  %v2514 = vpop.xlane.xlu0 %2513
  %2515 = vadd.xlane.f32.xlu0 %v2484
  %v2516 = vpop.xlane.xlu0 %2515
  %2517 = vadd.xlane.f32.xlu0 %v2486
  %v2518 = vpop.xlane.xlu0 %2517
  %2519 = vadd.xlane.f32.xlu0 %v2488
  %v2520 = vpop.xlane.xlu0 %2519
  %v2521 = vpack.c.bf16 %v2460, %v2458
  %v2522 = vpack.c.bf16 %v2464, %v2462
  %v2523 = vpack.c.bf16 %v2468, %v2466
  %v2524 = vpack.c.bf16 %v2472, %v2470
  %v2525 = vpack.c.bf16 %v2476, %v2474
  %v2526 = vpack.c.bf16 %v2480, %v2478
  %v2527 = vpack.c.bf16 %v2484, %v2482
  %v2528 = vpack.c.bf16 %v2488, %v2486
  %2529 = vrot.lane.b32.xlu0 %v326, 40
  %v2530 = vpop.permute.xlu0 %2529
  %2531 = vrot.lane.b32.xlu0 %v327, 40
  %v2532 = vpop.permute.xlu0 %2531
  %2533 = vrot.lane.b32.xlu0 %v328, 40
  %v2534 = vpop.permute.xlu0 %2533
  %2535 = vrot.lane.b32.xlu0 %v329, 40
  %v2536 = vpop.permute.xlu0 %2535
  %2537 = vrot.lane.b32.xlu0 %v330, 40
  %v2538 = vpop.permute.xlu0 %2537
  %2539 = vrot.lane.b32.xlu0 %v331, 40
  %v2540 = vpop.permute.xlu0 %2539
  %2541 = vrot.lane.b32.xlu0 %v332, 40
  %v2542 = vpop.permute.xlu0 %2541
  %2543 = vrot.lane.b32.xlu0 %v333, 40
  %v2544 = vpop.permute.xlu0 %2543
  %2553 = vmatprep.subr.bf16.mxu0 0
  %2554 = vmatpush1.bf16.msra.mxu0 %v2530
  %2555 = vmatprep.subr.bf16.mxu0 0
  %2556 = vmatpush1.bf16.msra.mxu0 %v2532
  %2557 = vmatprep.subr.bf16.mxu0 0
  %2558 = vmatpush1.bf16.msra.mxu0 %v2534
  %2559 = vmatprep.subr.bf16.mxu0 0
  %2560 = vmatpush1.bf16.msra.mxu0 %v2536
  %2561 = vmatprep.subr.bf16.mxu0 0
  %2562 = vmatpush1.bf16.msra.mxu0 %v2538
  %2563 = vmatprep.subr.bf16.mxu0 0
  %2564 = vmatpush1.bf16.msra.mxu0 %v2540
  %2565 = vmatprep.subr.bf16.mxu0 0
  %2566 = vmatpush1.bf16.msra.mxu0 %v2542
  %2567 = vmatprep.subr.bf16.mxu0 0
  %2568 = vmatpush1.bf16.msra.mxu0 %v2544
  %2569 = vmatprep.subr.bf16.mxu0 0
  %2570 = vmatpush1.bf16.msra.mxu0 0
  %2571 = vmatprep.subr.bf16.mxu0 0
  %2572 = vmatpush1.bf16.msra.mxu0 0
  %2573 = vmatprep.subr.bf16.mxu0 0
  %2574 = vmatpush1.bf16.msra.mxu0 0
  %2575 = vmatprep.subr.bf16.mxu0 0
  %2576 = vmatpush1.bf16.msra.mxu0 0
  %2577 = vmatprep.subr.bf16.mxu0 0
  %2578 = vmatpush1.bf16.msra.mxu0 0
  %2579 = vmatprep.subr.bf16.mxu0 0
  %2580 = vmatpush1.bf16.msra.mxu0 0
  %2581 = vmatprep.subr.bf16.mxu0 0
  %2582 = vmatpush1.bf16.msra.mxu0 0
  %2583 = vmatprep.subr.bf16.mxu0 0
  %2584 = vmatpush1.bf16.msra.mxu0 0
  %2585 = vmatprep.mubr.bf16.mxu0 0
  %2586 = vmatmul.mubr.bf16.gmra.mrb[0].mxu0 %v2521
  %v2587 = vpop.f32.mrb[0].mxu0
  %v2588 = vadd.f32 0.0, %v2587
  %v2589 = vpop.f32.mrb[0].mxu0
  %v2590 = vpop.f32.mrb[0].mxu0
  %v2591 = vadd.f32 0.0, %v2590
  %v2592 = vpop.f32.mrb[0].mxu0
  %2593 = vmatprep.mubr.bf16.mxu0 0
  %2594 = vmatmul.mubr.bf16.gmra.mrb[0].mxu0 %v2522
  %v2595 = vpop.f32.mrb[0].mxu0
  %v2596 = vadd.f32 0.0, %v2595
  %v2597 = vpop.f32.mrb[0].mxu0
  %v2598 = vpop.f32.mrb[0].mxu0
  %v2599 = vadd.f32 0.0, %v2598
  %v2600 = vpop.f32.mrb[0].mxu0
  %2601 = vmatprep.mubr.bf16.mxu0 0
  %2602 = vmatmul.mubr.bf16.gmra.mrb[0].mxu0 %v2523
  %v2603 = vpop.f32.mrb[0].mxu0
  %v2604 = vadd.f32 0.0, %v2603
  %v2605 = vpop.f32.mrb[0].mxu0
  %v2606 = vpop.f32.mrb[0].mxu0
  %v2607 = vadd.f32 0.0, %v2606
  %v2608 = vpop.f32.mrb[0].mxu0
  %2609 = vmatprep.mubr.bf16.mxu0 0
  %2610 = vmatmul.mubr.bf16.gmra.mrb[0].mxu0 %v2524
  %v2611 = vpop.f32.mrb[0].mxu0
  %v2612 = vadd.f32 0.0, %v2611
  %v2613 = vpop.f32.mrb[0].mxu0
  %v2614 = vpop.f32.mrb[0].mxu0
  %v2615 = vadd.f32 0.0, %v2614
  %v2616 = vpop.f32.mrb[0].mxu0
  %2617 = vmatprep.mubr.bf16.mxu0 0
  %2618 = vmatmul.mubr.bf16.gmra.mrb[0].mxu0 %v2525
  %v2619 = vpop.f32.mrb[0].mxu0
  %v2620 = vadd.f32 0.0, %v2619
  %v2621 = vpop.f32.mrb[0].mxu0
  %v2622 = vpop.f32.mrb[0].mxu0
  %v2623 = vadd.f32 0.0, %v2622
  %v2624 = vpop.f32.mrb[0].mxu0
  %2625 = vmatprep.mubr.bf16.mxu0 0
  %2626 = vmatmul.mubr.bf16.gmra.mrb[0].mxu0 %v2526
  %v2627 = vpop.f32.mrb[0].mxu0
  %v2628 = vadd.f32 0.0, %v2627
  %v2629 = vpop.f32.mrb[0].mxu0
  %v2630 = vpop.f32.mrb[0].mxu0
  %v2631 = vadd.f32 0.0, %v2630
  %v2632 = vpop.f32.mrb[0].mxu0
  %2633 = vmatprep.mubr.bf16.mxu0 0
  %2634 = vmatmul.mubr.bf16.gmra.mrb[0].mxu0 %v2527
  %v2635 = vpop.f32.mrb[0].mxu0
  %v2636 = vadd.f32 0.0, %v2635
  %v2637 = vpop.f32.mrb[0].mxu0
  %v2638 = vpop.f32.mrb[0].mxu0
  %v2639 = vadd.f32 0.0, %v2638
  %v2640 = vpop.f32.mrb[0].mxu0
  %2641 = vmatprep.mubr.bf16.mxu0 0
  %2642 = vmatmul.mubr.bf16.gmra.mrb[0].mxu0 %v2528
  %v2643 = vpop.f32.mrb[0].mxu0
  %v2644 = vadd.f32 0.0, %v2643
  %v2645 = vpop.f32.mrb[0].mxu0
  %v2646 = vpop.f32.mrb[0].mxu0
  %v2647 = vadd.f32 0.0, %v2646
  %v2648 = vpop.f32.mrb[0].mxu0
  %2649 = vdwg.mxu0
  %v2650 = vrcp.pop %v2490
  %v2651 = vrcp.pop %v2492
  %v2652 = vrcp.pop %v2494
  %v2653 = vrcp.pop %v2496
  %v2654 = vrcp.pop %v2498
  %v2655 = vrcp.pop %v2500
  %v2656 = vrcp.pop %v2502
  %v2657 = vrcp.pop %v2504
  %v2658 = vrcp.pop %v2506
  %v2659 = vrcp.pop %v2508
  %v2660 = vrcp.pop %v2510
  %v2661 = vrcp.pop %v2512
  %v2662 = vrcp.pop %v2514
  %v2663 = vrcp.pop %v2516
  %v2664 = vrcp.pop %v2518
  %v2665 = vrcp.pop %v2520
  %v2666 = vmul.f32 %v2588, %v2650
  %v2667 = vmul.f32 %v2591, %v2651
  %v2668 = vmul.f32 %v2596, %v2652
  %v2669 = vmul.f32 %v2599, %v2653
  %v2670 = vmul.f32 %v2604, %v2654
  %v2671 = vmul.f32 %v2607, %v2655
  %v2672 = vmul.f32 %v2612, %v2656
  %v2673 = vmul.f32 %v2615, %v2657
  %v2674 = vmul.f32 %v2620, %v2658
  %v2675 = vmul.f32 %v2623, %v2659
  %v2676 = vmul.f32 %v2628, %v2660
  %v2677 = vmul.f32 %v2631, %v2661
  %v2678 = vmul.f32 %v2636, %v2662
  %v2679 = vmul.f32 %v2639, %v2663
  %v2680 = vmul.f32 %v2644, %v2664
  %v2681 = vmul.f32 %v2647, %v2665
  %s2682 = scalar_lea.vmem %s4, 24
  %v2683 = vld [vmem:[%s2682] sm:$0xff]
  %v2684 = vpack.c.bf16 %v2667, %v2666
  %v2685 = vpack.c.bf16 %v2669, %v2668
  %v2686 = vpack.c.bf16 %v2671, %v2670
  %v2687 = vpack.c.bf16 %v2673, %v2672
  %v2688 = vpack.c.bf16 %v2675, %v2674
  %v2689 = vpack.c.bf16 %v2677, %v2676
  %v2690 = vpack.c.bf16 %v2679, %v2678
  %v2691 = vpack.c.bf16 %v2681, %v2680
  %v2692 = vpack.c.bf16 %v2683, %v2683
  %v2694 = vsel %vm358, %v2684, 0
  %v2697 = vsel %vm358, %v2685, 0
  %v2700 = vsel %vm358, %v2686, 0
  %v2703 = vsel %vm358, %v2687, 0
  %v2706 = vsel %vm358, %v2688, 0
  %v2709 = vsel %vm358, %v2689, 0
  %v2712 = vsel %vm358, %v2690, 0
  %v2715 = vsel %vm358, %v2691, 0
  %v2718 = vsel %vm1342, %v2692, 0
  %2720 = vmatprep.subr.bf16.mxu0 0
  %2721 = vmatpush1.bf16.msra.mxu0 %v2718
  %2722 = vmatprep.subr.bf16.mxu0 0
  %2723 = vmatpush1.bf16.msra.mxu0 0
  %2724 = vmatprep.subr.bf16.mxu0 0
  %2725 = vmatpush1.bf16.msra.mxu0 0
  %2726 = vmatprep.subr.bf16.mxu0 0
  %2727 = vmatpush1.bf16.msra.mxu0 0
  %2728 = vmatprep.subr.bf16.mxu0 0
  %2729 = vmatpush1.bf16.msra.mxu0 0
  %2730 = vmatprep.subr.bf16.mxu0 0
  %2731 = vmatpush1.bf16.msra.mxu0 0
  %2732 = vmatprep.subr.bf16.mxu0 0
  %2733 = vmatpush1.bf16.msra.mxu0 0
  %2734 = vmatprep.subr.bf16.mxu0 0
  %2735 = vmatpush1.bf16.msra.mxu0 0
  %2736 = vmatprep.subr.bf16.mxu0 0
  %2737 = vmatpush1.bf16.msra.mxu0 0
  %2738 = vmatprep.subr.bf16.mxu0 0
  %2739 = vmatpush1.bf16.msra.mxu0 0
  %2740 = vmatprep.subr.bf16.mxu0 0
  %2741 = vmatpush1.bf16.msra.mxu0 0
  %2742 = vmatprep.subr.bf16.mxu0 0
  %2743 = vmatpush1.bf16.msra.mxu0 0
  %2744 = vmatprep.subr.bf16.mxu0 0
  %2745 = vmatpush1.bf16.msra.mxu0 0
  %2746 = vmatprep.subr.bf16.mxu0 0
  %2747 = vmatpush1.bf16.msra.mxu0 0
  %2748 = vmatprep.subr.bf16.mxu0 0
  %2749 = vmatpush1.bf16.msra.mxu0 0
  %2750 = vmatprep.subr.bf16.mxu0 0
  %2751 = vmatpush1.bf16.msra.mxu0 0
  %2752 = vmatprep.mubr.bf16.mxu0 0
  %2753 = vmatmul.mubr.bf16.gmra.mrb[0].mxu0 %v2694
  %v2754 = vpop.f32.mrb[0].mxu0
  %v2755 = vadd.f32 0.0, %v2754
  %v2756 = vpop.f32.mrb[0].mxu0
  %v2757 = vpop.f32.mrb[0].mxu0
  %v2758 = vadd.f32 0.0, %v2757
  %v2759 = vpop.f32.mrb[0].mxu0
  %2760 = vmatprep.mubr.bf16.mxu0 0
  %2761 = vmatmul.mubr.bf16.gmra.mrb[0].mxu0 %v2697
  %v2762 = vpop.f32.mrb[0].mxu0
  %v2763 = vadd.f32 0.0, %v2762
  %v2764 = vpop.f32.mrb[0].mxu0
  %v2765 = vpop.f32.mrb[0].mxu0
  %v2766 = vadd.f32 0.0, %v2765
  %v2767 = vpop.f32.mrb[0].mxu0
  %2768 = vmatprep.mubr.bf16.mxu0 0
  %2769 = vmatmul.mubr.bf16.gmra.mrb[0].mxu0 %v2700
  %v2770 = vpop.f32.mrb[0].mxu0
  %v2771 = vadd.f32 0.0, %v2770
  %v2772 = vpop.f32.mrb[0].mxu0
  %v2773 = vpop.f32.mrb[0].mxu0
  %v2774 = vadd.f32 0.0, %v2773
  %v2775 = vpop.f32.mrb[0].mxu0
  %2776 = vmatprep.mubr.bf16.mxu0 0
  %2777 = vmatmul.mubr.bf16.gmra.mrb[0].mxu0 %v2703
  %v2778 = vpop.f32.mrb[0].mxu0
  %v2779 = vadd.f32 0.0, %v2778
  %v2780 = vpop.f32.mrb[0].mxu0
  %v2781 = vpop.f32.mrb[0].mxu0
  %v2782 = vadd.f32 0.0, %v2781
  %v2783 = vpop.f32.mrb[0].mxu0
  %2784 = vmatprep.mubr.bf16.mxu0 0
  %2785 = vmatmul.mubr.bf16.gmra.mrb[0].mxu0 %v2706
  %v2786 = vpop.f32.mrb[0].mxu0
  %v2787 = vadd.f32 0.0, %v2786
  %v2788 = vpop.f32.mrb[0].mxu0
  %v2789 = vpop.f32.mrb[0].mxu0
  %v2790 = vadd.f32 0.0, %v2789
  %v2791 = vpop.f32.mrb[0].mxu0
  %2792 = vmatprep.mubr.bf16.mxu0 0
  %2793 = vmatmul.mubr.bf16.gmra.mrb[0].mxu0 %v2709
  %v2794 = vpop.f32.mrb[0].mxu0
  %v2795 = vadd.f32 0.0, %v2794
  %v2796 = vpop.f32.mrb[0].mxu0
  %v2797 = vpop.f32.mrb[0].mxu0
  %v2798 = vadd.f32 0.0, %v2797
  %v2799 = vpop.f32.mrb[0].mxu0
  %2800 = vmatprep.mubr.bf16.mxu0 0
  %2801 = vmatmul.mubr.bf16.gmra.mrb[0].mxu0 %v2712
  %v2802 = vpop.f32.mrb[0].mxu0
  %v2803 = vadd.f32 0.0, %v2802
  %v2804 = vpop.f32.mrb[0].mxu0
  %v2805 = vpop.f32.mrb[0].mxu0
  %v2806 = vadd.f32 0.0, %v2805
  %v2807 = vpop.f32.mrb[0].mxu0
  %2808 = vmatprep.mubr.bf16.mxu0 0
  %2809 = vmatmul.mubr.bf16.gmra.mrb[0].mxu0 %v2715
  %v2810 = vpop.f32.mrb[0].mxu0
  %v2811 = vadd.f32 0.0, %v2810
  %v2812 = vpop.f32.mrb[0].mxu0
  %v2813 = vpop.f32.mrb[0].mxu0
  %v2814 = vadd.f32 0.0, %v2813
  %v2815 = vpop.f32.mrb[0].mxu0
  %2816 = vdwg.mxu0
  %v2817 = vadd.f32 %v2184, %v2755
  %v2818 = vadd.f32 %v2185, %v2758
  %v2819 = vadd.f32 %v2186, %v2763
  %v2820 = vadd.f32 %v2187, %v2766
  %v2821 = vadd.f32 %v2188, %v2771
  %v2822 = vadd.f32 %v2189, %v2774
  %v2823 = vadd.f32 %v2190, %v2779
  %v2824 = vadd.f32 %v2191, %v2782
  %v2825 = vadd.f32 %v2192, %v2787
  %v2826 = vadd.f32 %v2193, %v2790
  %v2827 = vadd.f32 %v2194, %v2795
  %v2828 = vadd.f32 %v2195, %v2798
  %v2829 = vadd.f32 %v2196, %v2803
  %v2830 = vadd.f32 %v2197, %v2806
  %v2831 = vadd.f32 %v2198, %v2811
  %v2832 = vadd.f32 %v2199, %v2814
  %s2833 = scalar_lea.vmem %s1, 1
  %v2834 = vld [vmem:[%s2833] sm:$0x1]
  %v2835 = vpack.c.bf16 %v266, %v263
  %v2836 = vpack.c.bf16 %v274, %v271
  %v2837 = vpack.c.bf16 %v282, %v279
  %v2838 = vpack.c.bf16 %v290, %v287
  %v2839 = vpack.c.bf16 %v298, %v295
  %v2840 = vpack.c.bf16 %v306, %v303
  %v2841 = vpack.c.bf16 %v314, %v311
  %v2842 = vpack.c.bf16 %v322, %v319
  %2851 = vrot.lane.b32.xlu0 %v2835, 96
  %v2852 = vpop.permute.xlu0 %2851
  %2853 = vrot.lane.b32.xlu0 %v2836, 96
  %v2854 = vpop.permute.xlu0 %2853
  %2855 = vrot.lane.b32.xlu0 %v2837, 96
  %v2856 = vpop.permute.xlu0 %2855
  %2857 = vrot.lane.b32.xlu0 %v2838, 96
  %v2858 = vpop.permute.xlu0 %2857
  %2859 = vrot.lane.b32.xlu0 %v2839, 96
  %v2860 = vpop.permute.xlu0 %2859
  %2861 = vrot.lane.b32.xlu0 %v2840, 96
  %v2862 = vpop.permute.xlu0 %2861
  %2863 = vrot.lane.b32.xlu0 %v2841, 96
  %v2864 = vpop.permute.xlu0 %2863
  %2865 = vrot.lane.b32.xlu0 %v2842, 96
  %v2866 = vpop.permute.xlu0 %2865
  %v2868 = vsel %vm358, %v2835, 0
  %v2871 = vsel %vm358, %v2836, 0
  %v2874 = vsel %vm358, %v2837, 0
  %v2877 = vsel %vm358, %v2838, 0
  %v2880 = vsel %vm358, %v2839, 0
  %v2883 = vsel %vm358, %v2840, 0
  %v2886 = vsel %vm358, %v2841, 0
  %v2889 = vsel %vm358, %v2842, 0
  %v2892 = vsel %vm358, %v2852, 0
  %v2895 = vsel %vm358, %v2854, 0
  %v2898 = vsel %vm358, %v2856, 0
  %v2901 = vsel %vm358, %v2858, 0
  %v2904 = vsel %vm358, %v2860, 0
  %v2907 = vsel %vm358, %v2862, 0
  %v2910 = vsel %vm358, %v2864, 0
  %v2913 = vsel %vm358, %v2866, 0
  %2915 = vmatprep.subr.bf16.mxu0 0
  %2916 = vmatpush1.bf16.xpose.msra.mxu0 %v2892
  %2917 = vmatprep.subr.bf16.mxu0 0
  %2918 = vmatpush1.bf16.xpose.msra.mxu0 %v2895
  %2919 = vmatprep.subr.bf16.mxu0 0
  %2920 = vmatpush1.bf16.xpose.msra.mxu0 %v2898
  %2921 = vmatprep.subr.bf16.mxu0 0
  %2922 = vmatpush1.bf16.xpose.msra.mxu0 %v2901
  %2923 = vmatprep.subr.bf16.mxu0 0
  %2924 = vmatpush1.bf16.xpose.msra.mxu0 %v2904
  %2925 = vmatprep.subr.bf16.mxu0 0
  %2926 = vmatpush1.bf16.xpose.msra.mxu0 %v2907
  %2927 = vmatprep.subr.bf16.mxu0 0
  %2928 = vmatpush1.bf16.xpose.msra.mxu0 %v2910
  %2929 = vmatprep.subr.bf16.mxu0 0
  %2930 = vmatpush1.bf16.xpose.msra.mxu0 %v2913
  %2931 = vmatprep.subr.bf16.mxu0 0
  %2932 = vmatpush1.bf16.xpose.msra.mxu0 0
  %2933 = vmatprep.subr.bf16.mxu0 0
  %2934 = vmatpush1.bf16.xpose.msra.mxu0 0
  %2935 = vmatprep.subr.bf16.mxu0 0
  %2936 = vmatpush1.bf16.xpose.msra.mxu0 0
  %2937 = vmatprep.subr.bf16.mxu0 0
  %2938 = vmatpush1.bf16.xpose.msra.mxu0 0
  %2939 = vmatprep.subr.bf16.mxu0 0
  %2940 = vmatpush1.bf16.xpose.msra.mxu0 0
  %2941 = vmatprep.subr.bf16.mxu0 0
  %2942 = vmatpush1.bf16.xpose.msra.mxu0 0
  %2943 = vmatprep.subr.bf16.mxu0 0
  %2944 = vmatpush1.bf16.xpose.msra.mxu0 0
  %2945 = vmatprep.subr.bf16.mxu0 0
  %2946 = vmatpush1.bf16.xpose.msra.mxu0 0
  %2947 = vmatprep.mubr.bf16.mxu0 0
  %2948 = vmatmul.mubr.bf16.gmra.mrb[0].mxu0 %v2868
  %v2949 = vpop.f32.mrb[0].mxu0
  %v2950 = vadd.f32 0.0, %v2949
  %v2951 = vpop.f32.mrb[0].mxu0
  %v2952 = vpop.f32.mrb[0].mxu0
  %v2953 = vadd.f32 0.0, %v2952
  %v2954 = vpop.f32.mrb[0].mxu0
  %2955 = vmatprep.mubr.bf16.mxu0 0
  %2956 = vmatmul.mubr.bf16.gmra.mrb[0].mxu0 %v2871
  %v2957 = vpop.f32.mrb[0].mxu0
  %v2958 = vadd.f32 0.0, %v2957
  %v2959 = vpop.f32.mrb[0].mxu0
  %v2960 = vpop.f32.mrb[0].mxu0
  %v2961 = vadd.f32 0.0, %v2960
  %v2962 = vpop.f32.mrb[0].mxu0
  %2963 = vmatprep.mubr.bf16.mxu0 0
  %2964 = vmatmul.mubr.bf16.gmra.mrb[0].mxu0 %v2874
  %v2965 = vpop.f32.mrb[0].mxu0
  %v2966 = vadd.f32 0.0, %v2965
  %v2967 = vpop.f32.mrb[0].mxu0
  %v2968 = vpop.f32.mrb[0].mxu0
  %v2969 = vadd.f32 0.0, %v2968
  %v2970 = vpop.f32.mrb[0].mxu0
  %2971 = vmatprep.mubr.bf16.mxu0 0
  %2972 = vmatmul.mubr.bf16.gmra.mrb[0].mxu0 %v2877
  %v2973 = vpop.f32.mrb[0].mxu0
  %v2974 = vadd.f32 0.0, %v2973
  %v2975 = vpop.f32.mrb[0].mxu0
  %v2976 = vpop.f32.mrb[0].mxu0
  %v2977 = vadd.f32 0.0, %v2976
  %v2978 = vpop.f32.mrb[0].mxu0
  %2979 = vmatprep.mubr.bf16.mxu0 0
  %2980 = vmatmul.mubr.bf16.gmra.mrb[0].mxu0 %v2880
  %v2981 = vpop.f32.mrb[0].mxu0
  %v2982 = vadd.f32 0.0, %v2981
  %v2983 = vpop.f32.mrb[0].mxu0
  %v2984 = vpop.f32.mrb[0].mxu0
  %v2985 = vadd.f32 0.0, %v2984
  %v2986 = vpop.f32.mrb[0].mxu0
  %2987 = vmatprep.mubr.bf16.mxu0 0
  %2988 = vmatmul.mubr.bf16.gmra.mrb[0].mxu0 %v2883
  %v2989 = vpop.f32.mrb[0].mxu0
  %v2990 = vadd.f32 0.0, %v2989
  %v2991 = vpop.f32.mrb[0].mxu0
  %v2992 = vpop.f32.mrb[0].mxu0
  %v2993 = vadd.f32 0.0, %v2992
  %v2994 = vpop.f32.mrb[0].mxu0
  %2995 = vmatprep.mubr.bf16.mxu0 0
  %2996 = vmatmul.mubr.bf16.gmra.mrb[0].mxu0 %v2886
  %v2997 = vpop.f32.mrb[0].mxu0
  %v2998 = vadd.f32 0.0, %v2997
  %v2999 = vpop.f32.mrb[0].mxu0
  %v3000 = vpop.f32.mrb[0].mxu0
  %v3001 = vadd.f32 0.0, %v3000
  %v3002 = vpop.f32.mrb[0].mxu0
  %3003 = vmatprep.mubr.bf16.mxu0 0
  %3004 = vmatmul.mubr.bf16.gmra.mrb[0].mxu0 %v2889
  %v3005 = vpop.f32.mrb[0].mxu0
  %v3006 = vadd.f32 0.0, %v3005
  %v3007 = vpop.f32.mrb[0].mxu0
  %v3008 = vpop.f32.mrb[0].mxu0
  %v3009 = vadd.f32 0.0, %v3008
  %v3010 = vpop.f32.mrb[0].mxu0
  %3011 = vdwg.mxu0
  %v3012 = vmul.f32 %v2950, 0.35355338
  %v3013 = vmul.f32 %v2953, 0.35355338
  %v3014 = vmul.f32 %v2958, 0.35355338
  %v3015 = vmul.f32 %v2961, 0.35355338
  %v3016 = vmul.f32 %v2966, 0.35355338
  %v3017 = vmul.f32 %v2969, 0.35355338
  %v3018 = vmul.f32 %v2974, 0.35355338
  %v3019 = vmul.f32 %v2977, 0.35355338
  %v3020 = vmul.f32 %v2982, 0.35355338
  %v3021 = vmul.f32 %v2985, 0.35355338
  %v3022 = vmul.f32 %v2990, 0.35355338
  %v3023 = vmul.f32 %v2993, 0.35355338
  %v3024 = vmul.f32 %v2998, 0.35355338
  %v3025 = vmul.f32 %v3001, 0.35355338
  %v3026 = vmul.f32 %v3006, 0.35355338
  %v3027 = vmul.f32 %v3009, 0.35355338
  %v3029 = vlaneseq
  %v3030 = vshrl.u32 %v3029, 7
  %v3031 = vsub.s32 0, %v3030
  %v3032 = vrot.slane %v2834, %v3031
  %v3034 = vadd.f32 %v3012, %v3032
  %v3035 = vadd.f32 %v3013, %v3032
  %v3036 = vadd.f32 %v3014, %v3032
  %v3037 = vadd.f32 %v3015, %v3032
  %v3038 = vadd.f32 %v3016, %v3032
  %v3039 = vadd.f32 %v3017, %v3032
  %v3040 = vadd.f32 %v3018, %v3032
  %v3041 = vadd.f32 %v3019, %v3032
  %v3042 = vadd.f32 %v3020, %v3032
  %v3043 = vadd.f32 %v3021, %v3032
  %v3044 = vadd.f32 %v3022, %v3032
  %v3045 = vadd.f32 %v3023, %v3032
  %v3046 = vadd.f32 %v3024, %v3032
  %v3047 = vadd.f32 %v3025, %v3032
  %v3048 = vadd.f32 %v3026, %v3032
  %v3049 = vadd.f32 %v3027, %v3032
  %3050 = vmax.xlane.f32.xlu0 %v3034
  %v3051 = vpop.xlane.xlu0 %3050
  %3052 = vmax.xlane.f32.xlu0 %v3035
  %v3053 = vpop.xlane.xlu0 %3052
  %3054 = vmax.xlane.f32.xlu0 %v3036
  %v3055 = vpop.xlane.xlu0 %3054
  %3056 = vmax.xlane.f32.xlu0 %v3037
  %v3057 = vpop.xlane.xlu0 %3056
  %3058 = vmax.xlane.f32.xlu0 %v3038
  %v3059 = vpop.xlane.xlu0 %3058
  %3060 = vmax.xlane.f32.xlu0 %v3039
  %v3061 = vpop.xlane.xlu0 %3060
  %3062 = vmax.xlane.f32.xlu0 %v3040
  %v3063 = vpop.xlane.xlu0 %3062
  %3064 = vmax.xlane.f32.xlu0 %v3041
  %v3065 = vpop.xlane.xlu0 %3064
  %3066 = vmax.xlane.f32.xlu0 %v3042
  %v3067 = vpop.xlane.xlu0 %3066
  %3068 = vmax.xlane.f32.xlu0 %v3043
  %v3069 = vpop.xlane.xlu0 %3068
  %3070 = vmax.xlane.f32.xlu0 %v3044
  %v3071 = vpop.xlane.xlu0 %3070
  %3072 = vmax.xlane.f32.xlu0 %v3045
  %v3073 = vpop.xlane.xlu0 %3072
  %3074 = vmax.xlane.f32.xlu0 %v3046
  %v3075 = vpop.xlane.xlu0 %3074
  %3076 = vmax.xlane.f32.xlu0 %v3047
  %v3077 = vpop.xlane.xlu0 %3076
  %3078 = vmax.xlane.f32.xlu0 %v3048
  %v3079 = vpop.xlane.xlu0 %3078
  %3080 = vmax.xlane.f32.xlu0 %v3049
  %v3081 = vpop.xlane.xlu0 %3080
  %v3082 = vsub.f32 %v3034, %v3051
  %v3083 = vsub.f32 %v3035, %v3053
  %v3084 = vsub.f32 %v3036, %v3055
  %v3085 = vsub.f32 %v3037, %v3057
  %v3086 = vsub.f32 %v3038, %v3059
  %v3087 = vsub.f32 %v3039, %v3061
  %v3088 = vsub.f32 %v3040, %v3063
  %v3089 = vsub.f32 %v3041, %v3065
  %v3090 = vsub.f32 %v3042, %v3067
  %v3091 = vsub.f32 %v3043, %v3069
  %v3092 = vsub.f32 %v3044, %v3071
  %v3093 = vsub.f32 %v3045, %v3073
  %v3094 = vsub.f32 %v3046, %v3075
  %v3095 = vsub.f32 %v3047, %v3077
  %v3096 = vsub.f32 %v3048, %v3079
  %v3097 = vsub.f32 %v3049, %v3081
  %v3098 = vmul.f32 %v3082, 1.442695
  %v3099 = vpow.pop %v3098
  %v3100 = vmul.f32 %v3083, 1.442695
  %v3101 = vpow.pop %v3100
  %v3102 = vmul.f32 %v3084, 1.442695
  %v3103 = vpow.pop %v3102
  %v3104 = vmul.f32 %v3085, 1.442695
  %v3105 = vpow.pop %v3104
  %v3106 = vmul.f32 %v3086, 1.442695
  %v3107 = vpow.pop %v3106
  %v3108 = vmul.f32 %v3087, 1.442695
  %v3109 = vpow.pop %v3108
  %v3110 = vmul.f32 %v3088, 1.442695
  %v3111 = vpow.pop %v3110
  %v3112 = vmul.f32 %v3089, 1.442695
  %v3113 = vpow.pop %v3112
  %v3114 = vmul.f32 %v3090, 1.442695
  %v3115 = vpow.pop %v3114
  %v3116 = vmul.f32 %v3091, 1.442695
  %v3117 = vpow.pop %v3116
  %v3118 = vmul.f32 %v3092, 1.442695
  %v3119 = vpow.pop %v3118
  %v3120 = vmul.f32 %v3093, 1.442695
  %v3121 = vpow.pop %v3120
  %v3122 = vmul.f32 %v3094, 1.442695
  %v3123 = vpow.pop %v3122
  %v3124 = vmul.f32 %v3095, 1.442695
  %v3125 = vpow.pop %v3124
  %v3126 = vmul.f32 %v3096, 1.442695
  %v3127 = vpow.pop %v3126
  %v3128 = vmul.f32 %v3097, 1.442695
  %v3129 = vpow.pop %v3128
  %3130 = vadd.xlane.f32.xlu0 %v3099
  %v3131 = vpop.xlane.xlu0 %3130
  %3132 = vadd.xlane.f32.xlu0 %v3101
  %v3133 = vpop.xlane.xlu0 %3132
  %3134 = vadd.xlane.f32.xlu0 %v3103
  %v3135 = vpop.xlane.xlu0 %3134
  %3136 = vadd.xlane.f32.xlu0 %v3105
  %v3137 = vpop.xlane.xlu0 %3136
  %3138 = vadd.xlane.f32.xlu0 %v3107
  %v3139 = vpop.xlane.xlu0 %3138
  %3140 = vadd.xlane.f32.xlu0 %v3109
  %v3141 = vpop.xlane.xlu0 %3140
  %3142 = vadd.xlane.f32.xlu0 %v3111
  %v3143 = vpop.xlane.xlu0 %3142
  %3144 = vadd.xlane.f32.xlu0 %v3113
  %v3145 = vpop.xlane.xlu0 %3144
  %3146 = vadd.xlane.f32.xlu0 %v3115
  %v3147 = vpop.xlane.xlu0 %3146
  %3148 = vadd.xlane.f32.xlu0 %v3117
  %v3149 = vpop.xlane.xlu0 %3148
  %3150 = vadd.xlane.f32.xlu0 %v3119
  %v3151 = vpop.xlane.xlu0 %3150
  %3152 = vadd.xlane.f32.xlu0 %v3121
  %v3153 = vpop.xlane.xlu0 %3152
  %3154 = vadd.xlane.f32.xlu0 %v3123
  %v3155 = vpop.xlane.xlu0 %3154
  %3156 = vadd.xlane.f32.xlu0 %v3125
  %v3157 = vpop.xlane.xlu0 %3156
  %3158 = vadd.xlane.f32.xlu0 %v3127
  %v3159 = vpop.xlane.xlu0 %3158
  %3160 = vadd.xlane.f32.xlu0 %v3129
  %v3161 = vpop.xlane.xlu0 %3160
  %v3162 = vpack.c.bf16 %v3101, %v3099
  %v3163 = vpack.c.bf16 %v3105, %v3103
  %v3164 = vpack.c.bf16 %v3109, %v3107
  %v3165 = vpack.c.bf16 %v3113, %v3111
  %v3166 = vpack.c.bf16 %v3117, %v3115
  %v3167 = vpack.c.bf16 %v3121, %v3119
  %v3168 = vpack.c.bf16 %v3125, %v3123
  %v3169 = vpack.c.bf16 %v3129, %v3127
  %3170 = vrot.lane.b32.xlu0 %v2835, 64
  %v3171 = vpop.permute.xlu0 %3170
  %3172 = vrot.lane.b32.xlu0 %v2836, 64
  %v3173 = vpop.permute.xlu0 %3172
  %3174 = vrot.lane.b32.xlu0 %v2837, 64
  %v3175 = vpop.permute.xlu0 %3174
  %3176 = vrot.lane.b32.xlu0 %v2838, 64
  %v3177 = vpop.permute.xlu0 %3176
  %3178 = vrot.lane.b32.xlu0 %v2839, 64
  %v3179 = vpop.permute.xlu0 %3178
  %3180 = vrot.lane.b32.xlu0 %v2840, 64
  %v3181 = vpop.permute.xlu0 %3180
  %3182 = vrot.lane.b32.xlu0 %v2841, 64
  %v3183 = vpop.permute.xlu0 %3182
  %3184 = vrot.lane.b32.xlu0 %v2842, 64
  %v3185 = vpop.permute.xlu0 %3184
  %3194 = vmatprep.subr.bf16.mxu0 0
  %3195 = vmatpush1.bf16.msra.mxu0 %v3171
  %3196 = vmatprep.subr.bf16.mxu0 0
  %3197 = vmatpush1.bf16.msra.mxu0 %v3173
  %3198 = vmatprep.subr.bf16.mxu0 0
  %3199 = vmatpush1.bf16.msra.mxu0 %v3175
  %3200 = vmatprep.subr.bf16.mxu0 0
  %3201 = vmatpush1.bf16.msra.mxu0 %v3177
  %3202 = vmatprep.subr.bf16.mxu0 0
  %3203 = vmatpush1.bf16.msra.mxu0 %v3179
  %3204 = vmatprep.subr.bf16.mxu0 0
  %3205 = vmatpush1.bf16.msra.mxu0 %v3181
  %3206 = vmatprep.subr.bf16.mxu0 0
  %3207 = vmatpush1.bf16.msra.mxu0 %v3183
  %3208 = vmatprep.subr.bf16.mxu0 0
  %3209 = vmatpush1.bf16.msra.mxu0 %v3185
  %3210 = vmatprep.subr.bf16.mxu0 0
  %3211 = vmatpush1.bf16.msra.mxu0 0
  %3212 = vmatprep.subr.bf16.mxu0 0
  %3213 = vmatpush1.bf16.msra.mxu0 0
  %3214 = vmatprep.subr.bf16.mxu0 0
  %3215 = vmatpush1.bf16.msra.mxu0 0
  %3216 = vmatprep.subr.bf16.mxu0 0
  %3217 = vmatpush1.bf16.msra.mxu0 0
  %3218 = vmatprep.subr.bf16.mxu0 0
  %3219 = vmatpush1.bf16.msra.mxu0 0
  %3220 = vmatprep.subr.bf16.mxu0 0
  %3221 = vmatpush1.bf16.msra.mxu0 0
  %3222 = vmatprep.subr.bf16.mxu0 0
  %3223 = vmatpush1.bf16.msra.mxu0 0
  %3224 = vmatprep.subr.bf16.mxu0 0
  %3225 = vmatpush1.bf16.msra.mxu0 0
  %3226 = vmatprep.mubr.bf16.mxu0 0
  %3227 = vmatmul.mubr.bf16.gmra.mrb[0].mxu0 %v3162
  %v3228 = vpop.f32.mrb[0].mxu0
  %v3229 = vadd.f32 0.0, %v3228
  %v3230 = vpop.f32.mrb[0].mxu0
  %v3231 = vpop.f32.mrb[0].mxu0
  %v3232 = vadd.f32 0.0, %v3231
  %v3233 = vpop.f32.mrb[0].mxu0
  %3234 = vmatprep.mubr.bf16.mxu0 0
  %3235 = vmatmul.mubr.bf16.gmra.mrb[0].mxu0 %v3163
  %v3236 = vpop.f32.mrb[0].mxu0
  %v3237 = vadd.f32 0.0, %v3236
  %v3238 = vpop.f32.mrb[0].mxu0
  %v3239 = vpop.f32.mrb[0].mxu0
  %v3240 = vadd.f32 0.0, %v3239
  %v3241 = vpop.f32.mrb[0].mxu0
  %3242 = vmatprep.mubr.bf16.mxu0 0
  %3243 = vmatmul.mubr.bf16.gmra.mrb[0].mxu0 %v3164
  %v3244 = vpop.f32.mrb[0].mxu0
  %v3245 = vadd.f32 0.0, %v3244
  %v3246 = vpop.f32.mrb[0].mxu0
  %v3247 = vpop.f32.mrb[0].mxu0
  %v3248 = vadd.f32 0.0, %v3247
  %v3249 = vpop.f32.mrb[0].mxu0
  %3250 = vmatprep.mubr.bf16.mxu0 0
  %3251 = vmatmul.mubr.bf16.gmra.mrb[0].mxu0 %v3165
  %v3252 = vpop.f32.mrb[0].mxu0
  %v3253 = vadd.f32 0.0, %v3252
  %v3254 = vpop.f32.mrb[0].mxu0
  %v3255 = vpop.f32.mrb[0].mxu0
  %v3256 = vadd.f32 0.0, %v3255
  %v3257 = vpop.f32.mrb[0].mxu0
  %3258 = vmatprep.mubr.bf16.mxu0 0
  %3259 = vmatmul.mubr.bf16.gmra.mrb[0].mxu0 %v3166
  %v3260 = vpop.f32.mrb[0].mxu0
  %v3261 = vadd.f32 0.0, %v3260
  %v3262 = vpop.f32.mrb[0].mxu0
  %v3263 = vpop.f32.mrb[0].mxu0
  %v3264 = vadd.f32 0.0, %v3263
  %v3265 = vpop.f32.mrb[0].mxu0
  %3266 = vmatprep.mubr.bf16.mxu0 0
  %3267 = vmatmul.mubr.bf16.gmra.mrb[0].mxu0 %v3167
  %v3268 = vpop.f32.mrb[0].mxu0
  %v3269 = vadd.f32 0.0, %v3268
  %v3270 = vpop.f32.mrb[0].mxu0
  %v3271 = vpop.f32.mrb[0].mxu0
  %v3272 = vadd.f32 0.0, %v3271
  %v3273 = vpop.f32.mrb[0].mxu0
  %3274 = vmatprep.mubr.bf16.mxu0 0
  %3275 = vmatmul.mubr.bf16.gmra.mrb[0].mxu0 %v3168
  %v3276 = vpop.f32.mrb[0].mxu0
  %v3277 = vadd.f32 0.0, %v3276
  %v3278 = vpop.f32.mrb[0].mxu0
  %v3279 = vpop.f32.mrb[0].mxu0
  %v3280 = vadd.f32 0.0, %v3279
  %v3281 = vpop.f32.mrb[0].mxu0
  %3282 = vmatprep.mubr.bf16.mxu0 0
  %3283 = vmatmul.mubr.bf16.gmra.mrb[0].mxu0 %v3169
  %v3284 = vpop.f32.mrb[0].mxu0
  %v3285 = vadd.f32 0.0, %v3284
  %v3286 = vpop.f32.mrb[0].mxu0
  %v3287 = vpop.f32.mrb[0].mxu0
  %v3288 = vadd.f32 0.0, %v3287
  %v3289 = vpop.f32.mrb[0].mxu0
  %3290 = vdwg.mxu0
  %v3291 = vrcp.pop %v3131
  %v3292 = vrcp.pop %v3133
  %v3293 = vrcp.pop %v3135
  %v3294 = vrcp.pop %v3137
  %v3295 = vrcp.pop %v3139
  %v3296 = vrcp.pop %v3141
  %v3297 = vrcp.pop %v3143
  %v3298 = vrcp.pop %v3145
  %v3299 = vrcp.pop %v3147
  %v3300 = vrcp.pop %v3149
  %v3301 = vrcp.pop %v3151
  %v3302 = vrcp.pop %v3153
  %v3303 = vrcp.pop %v3155
  %v3304 = vrcp.pop %v3157
  %v3305 = vrcp.pop %v3159
  %v3306 = vrcp.pop %v3161
  %v3307 = vmul.f32 %v3229, %v3291
  %v3308 = vmul.f32 %v3232, %v3292
  %v3309 = vmul.f32 %v3237, %v3293
  %v3310 = vmul.f32 %v3240, %v3294
  %v3311 = vmul.f32 %v3245, %v3295
  %v3312 = vmul.f32 %v3248, %v3296
  %v3313 = vmul.f32 %v3253, %v3297
  %v3314 = vmul.f32 %v3256, %v3298
  %v3315 = vmul.f32 %v3261, %v3299
  %v3316 = vmul.f32 %v3264, %v3300
  %v3317 = vmul.f32 %v3269, %v3301
  %v3318 = vmul.f32 %v3272, %v3302
  %v3319 = vmul.f32 %v3277, %v3303
  %v3320 = vmul.f32 %v3280, %v3304
  %v3321 = vmul.f32 %v3285, %v3305
  %v3322 = vmul.f32 %v3288, %v3306
  %v3323 = vpack.c.bf16 %v3308, %v3307
  %v3324 = vpack.c.bf16 %v3310, %v3309
  %v3325 = vpack.c.bf16 %v3312, %v3311
  %v3326 = vpack.c.bf16 %v3314, %v3313
  %v3327 = vpack.c.bf16 %v3316, %v3315
  %v3328 = vpack.c.bf16 %v3318, %v3317
  %v3329 = vpack.c.bf16 %v3320, %v3319
  %v3330 = vpack.c.bf16 %v3322, %v3321
  %3331 = vrot.lane.b32.xlu0 %v2835, 120
  %v3332 = vpop.permute.xlu0 %3331
  %3333 = vrot.lane.b32.xlu0 %v2836, 120
  %v3334 = vpop.permute.xlu0 %3333
  %3335 = vrot.lane.b32.xlu0 %v2837, 120
  %v3336 = vpop.permute.xlu0 %3335
  %3337 = vrot.lane.b32.xlu0 %v2838, 120
  %v3338 = vpop.permute.xlu0 %3337
  %3339 = vrot.lane.b32.xlu0 %v2839, 120
  %v3340 = vpop.permute.xlu0 %3339
  %3341 = vrot.lane.b32.xlu0 %v2840, 120
  %v3342 = vpop.permute.xlu0 %3341
  %3343 = vrot.lane.b32.xlu0 %v2841, 120
  %v3344 = vpop.permute.xlu0 %3343
  %3345 = vrot.lane.b32.xlu0 %v2842, 120
  %v3346 = vpop.permute.xlu0 %3345
  %3347 = vrot.lane.b32.xlu0 %v2835, 88
  %v3348 = vpop.permute.xlu0 %3347
  %3349 = vrot.lane.b32.xlu0 %v2836, 88
  %v3350 = vpop.permute.xlu0 %3349
  %3351 = vrot.lane.b32.xlu0 %v2837, 88
  %v3352 = vpop.permute.xlu0 %3351
  %3353 = vrot.lane.b32.xlu0 %v2838, 88
  %v3354 = vpop.permute.xlu0 %3353
  %3355 = vrot.lane.b32.xlu0 %v2839, 88
  %v3356 = vpop.permute.xlu0 %3355
  %3357 = vrot.lane.b32.xlu0 %v2840, 88
  %v3358 = vpop.permute.xlu0 %3357
  %3359 = vrot.lane.b32.xlu0 %v2841, 88
  %v3360 = vpop.permute.xlu0 %3359
  %3361 = vrot.lane.b32.xlu0 %v2842, 88
  %v3362 = vpop.permute.xlu0 %3361
  %v3364 = vsel %vm358, %v3332, 0
  %v3367 = vsel %vm358, %v3334, 0
  %v3370 = vsel %vm358, %v3336, 0
  %v3373 = vsel %vm358, %v3338, 0
  %v3376 = vsel %vm358, %v3340, 0
  %v3379 = vsel %vm358, %v3342, 0
  %v3382 = vsel %vm358, %v3344, 0
  %v3385 = vsel %vm358, %v3346, 0
  %v3388 = vsel %vm358, %v3348, 0
  %v3391 = vsel %vm358, %v3350, 0
  %v3394 = vsel %vm358, %v3352, 0
  %v3397 = vsel %vm358, %v3354, 0
  %v3400 = vsel %vm358, %v3356, 0
  %v3403 = vsel %vm358, %v3358, 0
  %v3406 = vsel %vm358, %v3360, 0
  %v3409 = vsel %vm358, %v3362, 0
  %3411 = vmatprep.subr.bf16.mxu0 0
  %3412 = vmatpush1.bf16.xpose.msra.mxu0 %v3388
  %3413 = vmatprep.subr.bf16.mxu0 0
  %3414 = vmatpush1.bf16.xpose.msra.mxu0 %v3391
  %3415 = vmatprep.subr.bf16.mxu0 0
  %3416 = vmatpush1.bf16.xpose.msra.mxu0 %v3394
  %3417 = vmatprep.subr.bf16.mxu0 0
  %3418 = vmatpush1.bf16.xpose.msra.mxu0 %v3397
  %3419 = vmatprep.subr.bf16.mxu0 0
  %3420 = vmatpush1.bf16.xpose.msra.mxu0 %v3400
  %3421 = vmatprep.subr.bf16.mxu0 0
  %3422 = vmatpush1.bf16.xpose.msra.mxu0 %v3403
  %3423 = vmatprep.subr.bf16.mxu0 0
  %3424 = vmatpush1.bf16.xpose.msra.mxu0 %v3406
  %3425 = vmatprep.subr.bf16.mxu0 0
  %3426 = vmatpush1.bf16.xpose.msra.mxu0 %v3409
  %3427 = vmatprep.subr.bf16.mxu0 0
  %3428 = vmatpush1.bf16.xpose.msra.mxu0 0
  %3429 = vmatprep.subr.bf16.mxu0 0
  %3430 = vmatpush1.bf16.xpose.msra.mxu0 0
  %3431 = vmatprep.subr.bf16.mxu0 0
  %3432 = vmatpush1.bf16.xpose.msra.mxu0 0
  %3433 = vmatprep.subr.bf16.mxu0 0
  %3434 = vmatpush1.bf16.xpose.msra.mxu0 0
  %3435 = vmatprep.subr.bf16.mxu0 0
  %3436 = vmatpush1.bf16.xpose.msra.mxu0 0
  %3437 = vmatprep.subr.bf16.mxu0 0
  %3438 = vmatpush1.bf16.xpose.msra.mxu0 0
  %3439 = vmatprep.subr.bf16.mxu0 0
  %3440 = vmatpush1.bf16.xpose.msra.mxu0 0
  %3441 = vmatprep.subr.bf16.mxu0 0
  %3442 = vmatpush1.bf16.xpose.msra.mxu0 0
  %3443 = vmatprep.mubr.bf16.mxu0 0
  %3444 = vmatmul.mubr.bf16.gmra.mrb[0].mxu0 %v3364
  %v3445 = vpop.f32.mrb[0].mxu0
  %v3446 = vadd.f32 0.0, %v3445
  %v3447 = vpop.f32.mrb[0].mxu0
  %v3448 = vpop.f32.mrb[0].mxu0
  %v3449 = vadd.f32 0.0, %v3448
  %v3450 = vpop.f32.mrb[0].mxu0
  %3451 = vmatprep.mubr.bf16.mxu0 0
  %3452 = vmatmul.mubr.bf16.gmra.mrb[0].mxu0 %v3367
  %v3453 = vpop.f32.mrb[0].mxu0
  %v3454 = vadd.f32 0.0, %v3453
  %v3455 = vpop.f32.mrb[0].mxu0
  %v3456 = vpop.f32.mrb[0].mxu0
  %v3457 = vadd.f32 0.0, %v3456
  %v3458 = vpop.f32.mrb[0].mxu0
  %3459 = vmatprep.mubr.bf16.mxu0 0
  %3460 = vmatmul.mubr.bf16.gmra.mrb[0].mxu0 %v3370
  %v3461 = vpop.f32.mrb[0].mxu0
  %v3462 = vadd.f32 0.0, %v3461
  %v3463 = vpop.f32.mrb[0].mxu0
  %v3464 = vpop.f32.mrb[0].mxu0
  %v3465 = vadd.f32 0.0, %v3464
  %v3466 = vpop.f32.mrb[0].mxu0
  %3467 = vmatprep.mubr.bf16.mxu0 0
  %3468 = vmatmul.mubr.bf16.gmra.mrb[0].mxu0 %v3373
  %v3469 = vpop.f32.mrb[0].mxu0
  %v3470 = vadd.f32 0.0, %v3469
  %v3471 = vpop.f32.mrb[0].mxu0
  %v3472 = vpop.f32.mrb[0].mxu0
  %v3473 = vadd.f32 0.0, %v3472
  %v3474 = vpop.f32.mrb[0].mxu0
  %3475 = vmatprep.mubr.bf16.mxu0 0
  %3476 = vmatmul.mubr.bf16.gmra.mrb[0].mxu0 %v3376
  %v3477 = vpop.f32.mrb[0].mxu0
  %v3478 = vadd.f32 0.0, %v3477
  %v3479 = vpop.f32.mrb[0].mxu0
  %v3480 = vpop.f32.mrb[0].mxu0
  %v3481 = vadd.f32 0.0, %v3480
  %v3482 = vpop.f32.mrb[0].mxu0
  %3483 = vmatprep.mubr.bf16.mxu0 0
  %3484 = vmatmul.mubr.bf16.gmra.mrb[0].mxu0 %v3379
  %v3485 = vpop.f32.mrb[0].mxu0
  %v3486 = vadd.f32 0.0, %v3485
  %v3487 = vpop.f32.mrb[0].mxu0
  %v3488 = vpop.f32.mrb[0].mxu0
  %v3489 = vadd.f32 0.0, %v3488
  %v3490 = vpop.f32.mrb[0].mxu0
  %3491 = vmatprep.mubr.bf16.mxu0 0
  %3492 = vmatmul.mubr.bf16.gmra.mrb[0].mxu0 %v3382
  %v3493 = vpop.f32.mrb[0].mxu0
  %v3494 = vadd.f32 0.0, %v3493
  %v3495 = vpop.f32.mrb[0].mxu0
  %v3496 = vpop.f32.mrb[0].mxu0
  %v3497 = vadd.f32 0.0, %v3496
  %v3498 = vpop.f32.mrb[0].mxu0
  %3499 = vmatprep.mubr.bf16.mxu0 0
  %3500 = vmatmul.mubr.bf16.gmra.mrb[0].mxu0 %v3385
  %v3501 = vpop.f32.mrb[0].mxu0
  %v3502 = vadd.f32 0.0, %v3501
  %v3503 = vpop.f32.mrb[0].mxu0
  %v3504 = vpop.f32.mrb[0].mxu0
  %v3505 = vadd.f32 0.0, %v3504
  %v3506 = vpop.f32.mrb[0].mxu0
  %3507 = vdwg.mxu0
  %v3508 = vmul.f32 %v3446, 0.35355338
  %v3509 = vmul.f32 %v3449, 0.35355338
  %v3510 = vmul.f32 %v3454, 0.35355338
  %v3511 = vmul.f32 %v3457, 0.35355338
  %v3512 = vmul.f32 %v3462, 0.35355338
  %v3513 = vmul.f32 %v3465, 0.35355338
  %v3514 = vmul.f32 %v3470, 0.35355338
  %v3515 = vmul.f32 %v3473, 0.35355338
  %v3516 = vmul.f32 %v3478, 0.35355338
  %v3517 = vmul.f32 %v3481, 0.35355338
  %v3518 = vmul.f32 %v3486, 0.35355338
  %v3519 = vmul.f32 %v3489, 0.35355338
  %v3520 = vmul.f32 %v3494, 0.35355338
  %v3521 = vmul.f32 %v3497, 0.35355338
  %v3522 = vmul.f32 %v3502, 0.35355338
  %v3523 = vmul.f32 %v3505, 0.35355338
  %v3524 = vadd.f32 %v3508, %v3032
  %v3525 = vadd.f32 %v3509, %v3032
  %v3526 = vadd.f32 %v3510, %v3032
  %v3527 = vadd.f32 %v3511, %v3032
  %v3528 = vadd.f32 %v3512, %v3032
  %v3529 = vadd.f32 %v3513, %v3032
  %v3530 = vadd.f32 %v3514, %v3032
  %v3531 = vadd.f32 %v3515, %v3032
  %v3532 = vadd.f32 %v3516, %v3032
  %v3533 = vadd.f32 %v3517, %v3032
  %v3534 = vadd.f32 %v3518, %v3032
  %v3535 = vadd.f32 %v3519, %v3032
  %v3536 = vadd.f32 %v3520, %v3032
  %v3537 = vadd.f32 %v3521, %v3032
  %v3538 = vadd.f32 %v3522, %v3032
  %v3539 = vadd.f32 %v3523, %v3032
  %3540 = vmax.xlane.f32.xlu0 %v3524
  %v3541 = vpop.xlane.xlu0 %3540
  %3542 = vmax.xlane.f32.xlu0 %v3525
  %v3543 = vpop.xlane.xlu0 %3542
  %3544 = vmax.xlane.f32.xlu0 %v3526
  %v3545 = vpop.xlane.xlu0 %3544
  %3546 = vmax.xlane.f32.xlu0 %v3527
  %v3547 = vpop.xlane.xlu0 %3546
  %3548 = vmax.xlane.f32.xlu0 %v3528
  %v3549 = vpop.xlane.xlu0 %3548
  %3550 = vmax.xlane.f32.xlu0 %v3529
  %v3551 = vpop.xlane.xlu0 %3550
  %3552 = vmax.xlane.f32.xlu0 %v3530
  %v3553 = vpop.xlane.xlu0 %3552
  %3554 = vmax.xlane.f32.xlu0 %v3531
  %v3555 = vpop.xlane.xlu0 %3554
  %3556 = vmax.xlane.f32.xlu0 %v3532
  %v3557 = vpop.xlane.xlu0 %3556
  %3558 = vmax.xlane.f32.xlu0 %v3533
  %v3559 = vpop.xlane.xlu0 %3558
  %3560 = vmax.xlane.f32.xlu0 %v3534
  %v3561 = vpop.xlane.xlu0 %3560
  %3562 = vmax.xlane.f32.xlu0 %v3535
  %v3563 = vpop.xlane.xlu0 %3562
  %3564 = vmax.xlane.f32.xlu0 %v3536
  %v3565 = vpop.xlane.xlu0 %3564
  %3566 = vmax.xlane.f32.xlu0 %v3537
  %v3567 = vpop.xlane.xlu0 %3566
  %3568 = vmax.xlane.f32.xlu0 %v3538
  %v3569 = vpop.xlane.xlu0 %3568
  %3570 = vmax.xlane.f32.xlu0 %v3539
  %v3571 = vpop.xlane.xlu0 %3570
  %v3572 = vsub.f32 %v3524, %v3541
  %v3573 = vsub.f32 %v3525, %v3543
  %v3574 = vsub.f32 %v3526, %v3545
  %v3575 = vsub.f32 %v3527, %v3547
  %v3576 = vsub.f32 %v3528, %v3549
  %v3577 = vsub.f32 %v3529, %v3551
  %v3578 = vsub.f32 %v3530, %v3553
  %v3579 = vsub.f32 %v3531, %v3555
  %v3580 = vsub.f32 %v3532, %v3557
  %v3581 = vsub.f32 %v3533, %v3559
  %v3582 = vsub.f32 %v3534, %v3561
  %v3583 = vsub.f32 %v3535, %v3563
  %v3584 = vsub.f32 %v3536, %v3565
  %v3585 = vsub.f32 %v3537, %v3567
  %v3586 = vsub.f32 %v3538, %v3569
  %v3587 = vsub.f32 %v3539, %v3571
  %v3588 = vmul.f32 %v3572, 1.442695
  %v3589 = vpow.pop %v3588
  %v3590 = vmul.f32 %v3573, 1.442695
  %v3591 = vpow.pop %v3590
  %v3592 = vmul.f32 %v3574, 1.442695
  %v3593 = vpow.pop %v3592
  %v3594 = vmul.f32 %v3575, 1.442695
  %v3595 = vpow.pop %v3594
  %v3596 = vmul.f32 %v3576, 1.442695
  %v3597 = vpow.pop %v3596
  %v3598 = vmul.f32 %v3577, 1.442695
  %v3599 = vpow.pop %v3598
  %v3600 = vmul.f32 %v3578, 1.442695
  %v3601 = vpow.pop %v3600
  %v3602 = vmul.f32 %v3579, 1.442695
  %v3603 = vpow.pop %v3602
  %v3604 = vmul.f32 %v3580, 1.442695
  %v3605 = vpow.pop %v3604
  %v3606 = vmul.f32 %v3581, 1.442695
  %v3607 = vpow.pop %v3606
  %v3608 = vmul.f32 %v3582, 1.442695
  %v3609 = vpow.pop %v3608
  %v3610 = vmul.f32 %v3583, 1.442695
  %v3611 = vpow.pop %v3610
  %v3612 = vmul.f32 %v3584, 1.442695
  %v3613 = vpow.pop %v3612
  %v3614 = vmul.f32 %v3585, 1.442695
  %v3615 = vpow.pop %v3614
  %v3616 = vmul.f32 %v3586, 1.442695
  %v3617 = vpow.pop %v3616
  %v3618 = vmul.f32 %v3587, 1.442695
  %v3619 = vpow.pop %v3618
  %3620 = vadd.xlane.f32.xlu0 %v3589
  %v3621 = vpop.xlane.xlu0 %3620
  %3622 = vadd.xlane.f32.xlu0 %v3591
  %v3623 = vpop.xlane.xlu0 %3622
  %3624 = vadd.xlane.f32.xlu0 %v3593
  %v3625 = vpop.xlane.xlu0 %3624
  %3626 = vadd.xlane.f32.xlu0 %v3595
  %v3627 = vpop.xlane.xlu0 %3626
  %3628 = vadd.xlane.f32.xlu0 %v3597
  %v3629 = vpop.xlane.xlu0 %3628
  %3630 = vadd.xlane.f32.xlu0 %v3599
  %v3631 = vpop.xlane.xlu0 %3630
  %3632 = vadd.xlane.f32.xlu0 %v3601
  %v3633 = vpop.xlane.xlu0 %3632
  %3634 = vadd.xlane.f32.xlu0 %v3603
  %v3635 = vpop.xlane.xlu0 %3634
  %3636 = vadd.xlane.f32.xlu0 %v3605
  %v3637 = vpop.xlane.xlu0 %3636
  %3638 = vadd.xlane.f32.xlu0 %v3607
  %v3639 = vpop.xlane.xlu0 %3638
  %3640 = vadd.xlane.f32.xlu0 %v3609
  %v3641 = vpop.xlane.xlu0 %3640
  %3642 = vadd.xlane.f32.xlu0 %v3611
  %v3643 = vpop.xlane.xlu0 %3642
  %3644 = vadd.xlane.f32.xlu0 %v3613
  %v3645 = vpop.xlane.xlu0 %3644
  %3646 = vadd.xlane.f32.xlu0 %v3615
  %v3647 = vpop.xlane.xlu0 %3646
  %3648 = vadd.xlane.f32.xlu0 %v3617
  %v3649 = vpop.xlane.xlu0 %3648
  %3650 = vadd.xlane.f32.xlu0 %v3619
  %v3651 = vpop.xlane.xlu0 %3650
  %v3652 = vpack.c.bf16 %v3591, %v3589
  %v3653 = vpack.c.bf16 %v3595, %v3593
  %v3654 = vpack.c.bf16 %v3599, %v3597
  %v3655 = vpack.c.bf16 %v3603, %v3601
  %v3656 = vpack.c.bf16 %v3607, %v3605
  %v3657 = vpack.c.bf16 %v3611, %v3609
  %v3658 = vpack.c.bf16 %v3615, %v3613
  %v3659 = vpack.c.bf16 %v3619, %v3617
  %3660 = vrot.lane.b32.xlu0 %v2835, 56
  %v3661 = vpop.permute.xlu0 %3660
  %3662 = vrot.lane.b32.xlu0 %v2836, 56
  %v3663 = vpop.permute.xlu0 %3662
  %3664 = vrot.lane.b32.xlu0 %v2837, 56
  %v3665 = vpop.permute.xlu0 %3664
  %3666 = vrot.lane.b32.xlu0 %v2838, 56
  %v3667 = vpop.permute.xlu0 %3666
  %3668 = vrot.lane.b32.xlu0 %v2839, 56
  %v3669 = vpop.permute.xlu0 %3668
  %3670 = vrot.lane.b32.xlu0 %v2840, 56
  %v3671 = vpop.permute.xlu0 %3670
  %3672 = vrot.lane.b32.xlu0 %v2841, 56
  %v3673 = vpop.permute.xlu0 %3672
  %3674 = vrot.lane.b32.xlu0 %v2842, 56
  %v3675 = vpop.permute.xlu0 %3674
  %3684 = vmatprep.subr.bf16.mxu0 0
  %3685 = vmatpush1.bf16.msra.mxu0 %v3661
  %3686 = vmatprep.subr.bf16.mxu0 0
  %3687 = vmatpush1.bf16.msra.mxu0 %v3663
  %3688 = vmatprep.subr.bf16.mxu0 0
  %3689 = vmatpush1.bf16.msra.mxu0 %v3665
  %3690 = vmatprep.subr.bf16.mxu0 0
  %3691 = vmatpush1.bf16.msra.mxu0 %v3667
  %3692 = vmatprep.subr.bf16.mxu0 0
  %3693 = vmatpush1.bf16.msra.mxu0 %v3669
  %3694 = vmatprep.subr.bf16.mxu0 0
  %3695 = vmatpush1.bf16.msra.mxu0 %v3671
  %3696 = vmatprep.subr.bf16.mxu0 0
  %3697 = vmatpush1.bf16.msra.mxu0 %v3673
  %3698 = vmatprep.subr.bf16.mxu0 0
  %3699 = vmatpush1.bf16.msra.mxu0 %v3675
  %3700 = vmatprep.subr.bf16.mxu0 0
  %3701 = vmatpush1.bf16.msra.mxu0 0
  %3702 = vmatprep.subr.bf16.mxu0 0
  %3703 = vmatpush1.bf16.msra.mxu0 0
  %3704 = vmatprep.subr.bf16.mxu0 0
  %3705 = vmatpush1.bf16.msra.mxu0 0
  %3706 = vmatprep.subr.bf16.mxu0 0
  %3707 = vmatpush1.bf16.msra.mxu0 0
  %3708 = vmatprep.subr.bf16.mxu0 0
  %3709 = vmatpush1.bf16.msra.mxu0 0
  %3710 = vmatprep.subr.bf16.mxu0 0
  %3711 = vmatpush1.bf16.msra.mxu0 0
  %3712 = vmatprep.subr.bf16.mxu0 0
  %3713 = vmatpush1.bf16.msra.mxu0 0
  %3714 = vmatprep.subr.bf16.mxu0 0
  %3715 = vmatpush1.bf16.msra.mxu0 0
  %3716 = vmatprep.mubr.bf16.mxu0 0
  %3717 = vmatmul.mubr.bf16.gmra.mrb[0].mxu0 %v3652
  %v3718 = vpop.f32.mrb[0].mxu0
  %v3719 = vadd.f32 0.0, %v3718
  %v3720 = vpop.f32.mrb[0].mxu0
  %v3721 = vpop.f32.mrb[0].mxu0
  %v3722 = vadd.f32 0.0, %v3721
  %v3723 = vpop.f32.mrb[0].mxu0
  %3724 = vmatprep.mubr.bf16.mxu0 0
  %3725 = vmatmul.mubr.bf16.gmra.mrb[0].mxu0 %v3653
  %v3726 = vpop.f32.mrb[0].mxu0
  %v3727 = vadd.f32 0.0, %v3726
  %v3728 = vpop.f32.mrb[0].mxu0
  %v3729 = vpop.f32.mrb[0].mxu0
  %v3730 = vadd.f32 0.0, %v3729
  %v3731 = vpop.f32.mrb[0].mxu0
  %3732 = vmatprep.mubr.bf16.mxu0 0
  %3733 = vmatmul.mubr.bf16.gmra.mrb[0].mxu0 %v3654
  %v3734 = vpop.f32.mrb[0].mxu0
  %v3735 = vadd.f32 0.0, %v3734
  %v3736 = vpop.f32.mrb[0].mxu0
  %v3737 = vpop.f32.mrb[0].mxu0
  %v3738 = vadd.f32 0.0, %v3737
  %v3739 = vpop.f32.mrb[0].mxu0
  %3740 = vmatprep.mubr.bf16.mxu0 0
  %3741 = vmatmul.mubr.bf16.gmra.mrb[0].mxu0 %v3655
  %v3742 = vpop.f32.mrb[0].mxu0
  %v3743 = vadd.f32 0.0, %v3742
  %v3744 = vpop.f32.mrb[0].mxu0
  %v3745 = vpop.f32.mrb[0].mxu0
  %v3746 = vadd.f32 0.0, %v3745
  %v3747 = vpop.f32.mrb[0].mxu0
  %3748 = vmatprep.mubr.bf16.mxu0 0
  %3749 = vmatmul.mubr.bf16.gmra.mrb[0].mxu0 %v3656
  %v3750 = vpop.f32.mrb[0].mxu0
  %v3751 = vadd.f32 0.0, %v3750
  %v3752 = vpop.f32.mrb[0].mxu0
  %v3753 = vpop.f32.mrb[0].mxu0
  %v3754 = vadd.f32 0.0, %v3753
  %v3755 = vpop.f32.mrb[0].mxu0
  %3756 = vmatprep.mubr.bf16.mxu0 0
  %3757 = vmatmul.mubr.bf16.gmra.mrb[0].mxu0 %v3657
  %v3758 = vpop.f32.mrb[0].mxu0
  %v3759 = vadd.f32 0.0, %v3758
  %v3760 = vpop.f32.mrb[0].mxu0
  %v3761 = vpop.f32.mrb[0].mxu0
  %v3762 = vadd.f32 0.0, %v3761
  %v3763 = vpop.f32.mrb[0].mxu0
  %3764 = vmatprep.mubr.bf16.mxu0 0
  %3765 = vmatmul.mubr.bf16.gmra.mrb[0].mxu0 %v3658
  %v3766 = vpop.f32.mrb[0].mxu0
  %v3767 = vadd.f32 0.0, %v3766
  %v3768 = vpop.f32.mrb[0].mxu0
  %v3769 = vpop.f32.mrb[0].mxu0
  %v3770 = vadd.f32 0.0, %v3769
  %v3771 = vpop.f32.mrb[0].mxu0
  %3772 = vmatprep.mubr.bf16.mxu0 0
  %3773 = vmatmul.mubr.bf16.gmra.mrb[0].mxu0 %v3659
  %v3774 = vpop.f32.mrb[0].mxu0
  %v3775 = vadd.f32 0.0, %v3774
  %v3776 = vpop.f32.mrb[0].mxu0
  %v3777 = vpop.f32.mrb[0].mxu0
  %v3778 = vadd.f32 0.0, %v3777
  %v3779 = vpop.f32.mrb[0].mxu0
  %3780 = vdwg.mxu0
  %v3781 = vrcp.pop %v3621
  %v3782 = vrcp.pop %v3623
  %v3783 = vrcp.pop %v3625
  %v3784 = vrcp.pop %v3627
  %v3785 = vrcp.pop %v3629
  %v3786 = vrcp.pop %v3631
  %v3787 = vrcp.pop %v3633
  %v3788 = vrcp.pop %v3635
  %v3789 = vrcp.pop %v3637
  %v3790 = vrcp.pop %v3639
  %v3791 = vrcp.pop %v3641
  %v3792 = vrcp.pop %v3643
  %v3793 = vrcp.pop %v3645
  %v3794 = vrcp.pop %v3647
  %v3795 = vrcp.pop %v3649
  %v3796 = vrcp.pop %v3651
  %v3797 = vmul.f32 %v3719, %v3781
  %v3798 = vmul.f32 %v3722, %v3782
  %v3799 = vmul.f32 %v3727, %v3783
  %v3800 = vmul.f32 %v3730, %v3784
  %v3801 = vmul.f32 %v3735, %v3785
  %v3802 = vmul.f32 %v3738, %v3786
  %v3803 = vmul.f32 %v3743, %v3787
  %v3804 = vmul.f32 %v3746, %v3788
  %v3805 = vmul.f32 %v3751, %v3789
  %v3806 = vmul.f32 %v3754, %v3790
  %v3807 = vmul.f32 %v3759, %v3791
  %v3808 = vmul.f32 %v3762, %v3792
  %v3809 = vmul.f32 %v3767, %v3793
  %v3810 = vmul.f32 %v3770, %v3794
  %v3811 = vmul.f32 %v3775, %v3795
  %v3812 = vmul.f32 %v3778, %v3796
  %v3813 = vpack.c.bf16 %v3798, %v3797
  %v3814 = vpack.c.bf16 %v3800, %v3799
  %v3815 = vpack.c.bf16 %v3802, %v3801
  %v3816 = vpack.c.bf16 %v3804, %v3803
  %v3817 = vpack.c.bf16 %v3806, %v3805
  %v3818 = vpack.c.bf16 %v3808, %v3807
  %v3819 = vpack.c.bf16 %v3810, %v3809
  %v3820 = vpack.c.bf16 %v3812, %v3811
  %v3822 = vsel %vm358, %v3813, 0
  %v3825 = vsel %vm358, %v3814, 0
  %v3828 = vsel %vm358, %v3815, 0
  %v3831 = vsel %vm358, %v3816, 0
  %v3834 = vsel %vm358, %v3817, 0
  %v3837 = vsel %vm358, %v3818, 0
  %v3840 = vsel %vm358, %v3819, 0
  %v3843 = vsel %vm358, %v3820, 0
  %3845 = vmatprep.subr.bf16.mxu0 0
  %3846 = vmatpush1.bf16.msra.mxu0 %v1344
  %3847 = vmatprep.subr.bf16.mxu0 0
  %3848 = vmatpush1.bf16.msra.mxu0 0
  %3849 = vmatprep.subr.bf16.mxu0 0
  %3850 = vmatpush1.bf16.msra.mxu0 0
  %3851 = vmatprep.subr.bf16.mxu0 0
  %3852 = vmatpush1.bf16.msra.mxu0 0
  %3853 = vmatprep.subr.bf16.mxu0 0
  %3854 = vmatpush1.bf16.msra.mxu0 0
  %3855 = vmatprep.subr.bf16.mxu0 0
  %3856 = vmatpush1.bf16.msra.mxu0 0
  %3857 = vmatprep.subr.bf16.mxu0 0
  %3858 = vmatpush1.bf16.msra.mxu0 0
  %3859 = vmatprep.subr.bf16.mxu0 0
  %3860 = vmatpush1.bf16.msra.mxu0 0
  %3861 = vmatprep.subr.bf16.mxu0 0
  %3862 = vmatpush1.bf16.msra.mxu0 0
  %3863 = vmatprep.subr.bf16.mxu0 0
  %3864 = vmatpush1.bf16.msra.mxu0 0
  %3865 = vmatprep.subr.bf16.mxu0 0
  %3866 = vmatpush1.bf16.msra.mxu0 0
  %3867 = vmatprep.subr.bf16.mxu0 0
  %3868 = vmatpush1.bf16.msra.mxu0 0
  %3869 = vmatprep.subr.bf16.mxu0 0
  %3870 = vmatpush1.bf16.msra.mxu0 0
  %3871 = vmatprep.subr.bf16.mxu0 0
  %3872 = vmatpush1.bf16.msra.mxu0 0
  %3873 = vmatprep.subr.bf16.mxu0 0
  %3874 = vmatpush1.bf16.msra.mxu0 0
  %3875 = vmatprep.subr.bf16.mxu0 0
  %3876 = vmatpush1.bf16.msra.mxu0 0
  %3877 = vmatprep.mubr.bf16.mxu0 0
  %3878 = vmatmul.mubr.bf16.gmra.mrb[0].mxu0 %v3822
  %v3879 = vpop.f32.mrb[0].mxu0
  %v3880 = vadd.f32 0.0, %v3879
  %v3881 = vpop.f32.mrb[0].mxu0
  %v3882 = vpop.f32.mrb[0].mxu0
  %v3883 = vadd.f32 0.0, %v3882
  %v3884 = vpop.f32.mrb[0].mxu0
  %3885 = vmatprep.mubr.bf16.mxu0 0
  %3886 = vmatmul.mubr.bf16.gmra.mrb[0].mxu0 %v3825
  %v3887 = vpop.f32.mrb[0].mxu0
  %v3888 = vadd.f32 0.0, %v3887
  %v3889 = vpop.f32.mrb[0].mxu0
  %v3890 = vpop.f32.mrb[0].mxu0
  %v3891 = vadd.f32 0.0, %v3890
  %v3892 = vpop.f32.mrb[0].mxu0
  %3893 = vmatprep.mubr.bf16.mxu0 0
  %3894 = vmatmul.mubr.bf16.gmra.mrb[0].mxu0 %v3828
  %v3895 = vpop.f32.mrb[0].mxu0
  %v3896 = vadd.f32 0.0, %v3895
  %v3897 = vpop.f32.mrb[0].mxu0
  %v3898 = vpop.f32.mrb[0].mxu0
  %v3899 = vadd.f32 0.0, %v3898
  %v3900 = vpop.f32.mrb[0].mxu0
  %3901 = vmatprep.mubr.bf16.mxu0 0
  %3902 = vmatmul.mubr.bf16.gmra.mrb[0].mxu0 %v3831
  %v3903 = vpop.f32.mrb[0].mxu0
  %v3904 = vadd.f32 0.0, %v3903
  %v3905 = vpop.f32.mrb[0].mxu0
  %v3906 = vpop.f32.mrb[0].mxu0
  %v3907 = vadd.f32 0.0, %v3906
  %v3908 = vpop.f32.mrb[0].mxu0
  %3909 = vmatprep.mubr.bf16.mxu0 0
  %3910 = vmatmul.mubr.bf16.gmra.mrb[0].mxu0 %v3834
  %v3911 = vpop.f32.mrb[0].mxu0
  %v3912 = vadd.f32 0.0, %v3911
  %v3913 = vpop.f32.mrb[0].mxu0
  %v3914 = vpop.f32.mrb[0].mxu0
  %v3915 = vadd.f32 0.0, %v3914
  %v3916 = vpop.f32.mrb[0].mxu0
  %3917 = vmatprep.mubr.bf16.mxu0 0
  %3918 = vmatmul.mubr.bf16.gmra.mrb[0].mxu0 %v3837
  %v3919 = vpop.f32.mrb[0].mxu0
  %v3920 = vadd.f32 0.0, %v3919
  %v3921 = vpop.f32.mrb[0].mxu0
  %v3922 = vpop.f32.mrb[0].mxu0
  %v3923 = vadd.f32 0.0, %v3922
  %v3924 = vpop.f32.mrb[0].mxu0
  %3925 = vmatprep.mubr.bf16.mxu0 0
  %3926 = vmatmul.mubr.bf16.gmra.mrb[0].mxu0 %v3840
  %v3927 = vpop.f32.mrb[0].mxu0
  %v3928 = vadd.f32 0.0, %v3927
  %v3929 = vpop.f32.mrb[0].mxu0
  %v3930 = vpop.f32.mrb[0].mxu0
  %v3931 = vadd.f32 0.0, %v3930
  %v3932 = vpop.f32.mrb[0].mxu0
  %3933 = vmatprep.mubr.bf16.mxu0 0
  %3934 = vmatmul.mubr.bf16.gmra.mrb[0].mxu0 %v3843
  %v3935 = vpop.f32.mrb[0].mxu0
  %v3936 = vadd.f32 0.0, %v3935
  %v3937 = vpop.f32.mrb[0].mxu0
  %v3938 = vpop.f32.mrb[0].mxu0
  %v3939 = vadd.f32 0.0, %v3938
  %v3940 = vpop.f32.mrb[0].mxu0
  %3941 = vdwg.mxu0
  %v3943 = vsel %vm358, %v3323, 0
  %v3946 = vsel %vm358, %v3324, 0
  %v3949 = vsel %vm358, %v3325, 0
  %v3952 = vsel %vm358, %v3326, 0
  %v3955 = vsel %vm358, %v3327, 0
  %v3958 = vsel %vm358, %v3328, 0
  %v3961 = vsel %vm358, %v3329, 0
  %v3964 = vsel %vm358, %v3330, 0
  %3966 = vmatprep.subr.bf16.mxu0 0
  %3967 = vmatpush1.bf16.msra.mxu0 %v1468
  %3968 = vmatprep.subr.bf16.mxu0 0
  %3969 = vmatpush1.bf16.msra.mxu0 0
  %3970 = vmatprep.subr.bf16.mxu0 0
  %3971 = vmatpush1.bf16.msra.mxu0 0
  %3972 = vmatprep.subr.bf16.mxu0 0
  %3973 = vmatpush1.bf16.msra.mxu0 0
  %3974 = vmatprep.subr.bf16.mxu0 0
  %3975 = vmatpush1.bf16.msra.mxu0 0
  %3976 = vmatprep.subr.bf16.mxu0 0
  %3977 = vmatpush1.bf16.msra.mxu0 0
  %3978 = vmatprep.subr.bf16.mxu0 0
  %3979 = vmatpush1.bf16.msra.mxu0 0
  %3980 = vmatprep.subr.bf16.mxu0 0
  %3981 = vmatpush1.bf16.msra.mxu0 0
  %3982 = vmatprep.subr.bf16.mxu0 0
  %3983 = vmatpush1.bf16.msra.mxu0 0
  %3984 = vmatprep.subr.bf16.mxu0 0
  %3985 = vmatpush1.bf16.msra.mxu0 0
  %3986 = vmatprep.subr.bf16.mxu0 0
  %3987 = vmatpush1.bf16.msra.mxu0 0
  %3988 = vmatprep.subr.bf16.mxu0 0
  %3989 = vmatpush1.bf16.msra.mxu0 0
  %3990 = vmatprep.subr.bf16.mxu0 0
  %3991 = vmatpush1.bf16.msra.mxu0 0
  %3992 = vmatprep.subr.bf16.mxu0 0
  %3993 = vmatpush1.bf16.msra.mxu0 0
  %3994 = vmatprep.subr.bf16.mxu0 0
  %3995 = vmatpush1.bf16.msra.mxu0 0
  %3996 = vmatprep.subr.bf16.mxu0 0
  %3997 = vmatpush1.bf16.msra.mxu0 0
  %3998 = vmatprep.mubr.bf16.mxu0 0
  %3999 = vmatmul.mubr.bf16.gmra.mrb[0].mxu0 %v3943
  %v4000 = vpop.f32.mrb[0].mxu0
  %v4001 = vadd.f32 %v3880, %v4000
  %v4002 = vpop.f32.mrb[0].mxu0
  %v4003 = vpop.f32.mrb[0].mxu0
  %v4004 = vadd.f32 %v3883, %v4003
  %v4005 = vpop.f32.mrb[0].mxu0
  %4006 = vmatprep.mubr.bf16.mxu0 0
  %4007 = vmatmul.mubr.bf16.gmra.mrb[0].mxu0 %v3946
  %v4008 = vpop.f32.mrb[0].mxu0
  %v4009 = vadd.f32 %v3888, %v4008
  %v4010 = vpop.f32.mrb[0].mxu0
  %v4011 = vpop.f32.mrb[0].mxu0
  %v4012 = vadd.f32 %v3891, %v4011
  %v4013 = vpop.f32.mrb[0].mxu0
  %4014 = vmatprep.mubr.bf16.mxu0 0
  %4015 = vmatmul.mubr.bf16.gmra.mrb[0].mxu0 %v3949
  %v4016 = vpop.f32.mrb[0].mxu0
  %v4017 = vadd.f32 %v3896, %v4016
  %v4018 = vpop.f32.mrb[0].mxu0
  %v4019 = vpop.f32.mrb[0].mxu0
  %v4020 = vadd.f32 %v3899, %v4019
  %v4021 = vpop.f32.mrb[0].mxu0
  %4022 = vmatprep.mubr.bf16.mxu0 0
  %4023 = vmatmul.mubr.bf16.gmra.mrb[0].mxu0 %v3952
  %v4024 = vpop.f32.mrb[0].mxu0
  %v4025 = vadd.f32 %v3904, %v4024
  %v4026 = vpop.f32.mrb[0].mxu0
  %v4027 = vpop.f32.mrb[0].mxu0
  %v4028 = vadd.f32 %v3907, %v4027
  %v4029 = vpop.f32.mrb[0].mxu0
  %4030 = vmatprep.mubr.bf16.mxu0 0
  %4031 = vmatmul.mubr.bf16.gmra.mrb[0].mxu0 %v3955
  %v4032 = vpop.f32.mrb[0].mxu0
  %v4033 = vadd.f32 %v3912, %v4032
  %v4034 = vpop.f32.mrb[0].mxu0
  %v4035 = vpop.f32.mrb[0].mxu0
  %v4036 = vadd.f32 %v3915, %v4035
  %v4037 = vpop.f32.mrb[0].mxu0
  %4038 = vmatprep.mubr.bf16.mxu0 0
  %4039 = vmatmul.mubr.bf16.gmra.mrb[0].mxu0 %v3958
  %v4040 = vpop.f32.mrb[0].mxu0
  %v4041 = vadd.f32 %v3920, %v4040
  %v4042 = vpop.f32.mrb[0].mxu0
  %v4043 = vpop.f32.mrb[0].mxu0
  %v4044 = vadd.f32 %v3923, %v4043
  %v4045 = vpop.f32.mrb[0].mxu0
  %4046 = vmatprep.mubr.bf16.mxu0 0
  %4047 = vmatmul.mubr.bf16.gmra.mrb[0].mxu0 %v3961
  %v4048 = vpop.f32.mrb[0].mxu0
  %v4049 = vadd.f32 %v3928, %v4048
  %v4050 = vpop.f32.mrb[0].mxu0
  %v4051 = vpop.f32.mrb[0].mxu0
  %v4052 = vadd.f32 %v3931, %v4051
  %v4053 = vpop.f32.mrb[0].mxu0
  %4054 = vmatprep.mubr.bf16.mxu0 0
  %4055 = vmatmul.mubr.bf16.gmra.mrb[0].mxu0 %v3964
  %v4056 = vpop.f32.mrb[0].mxu0
  %v4057 = vadd.f32 %v3936, %v4056
  %v4058 = vpop.f32.mrb[0].mxu0
  %v4059 = vpop.f32.mrb[0].mxu0
  %v4060 = vadd.f32 %v3939, %v4059
  %v4061 = vpop.f32.mrb[0].mxu0
  %4062 = vdwg.mxu0
  %4063 = vrot.lane.b32.xlu0 %v2835, 112
  %v4064 = vpop.permute.xlu0 %4063
  %4065 = vrot.lane.b32.xlu0 %v2836, 112
  %v4066 = vpop.permute.xlu0 %4065
  %4067 = vrot.lane.b32.xlu0 %v2837, 112
  %v4068 = vpop.permute.xlu0 %4067
  %4069 = vrot.lane.b32.xlu0 %v2838, 112
  %v4070 = vpop.permute.xlu0 %4069
  %4071 = vrot.lane.b32.xlu0 %v2839, 112
  %v4072 = vpop.permute.xlu0 %4071
  %4073 = vrot.lane.b32.xlu0 %v2840, 112
  %v4074 = vpop.permute.xlu0 %4073
  %4075 = vrot.lane.b32.xlu0 %v2841, 112
  %v4076 = vpop.permute.xlu0 %4075
  %4077 = vrot.lane.b32.xlu0 %v2842, 112
  %v4078 = vpop.permute.xlu0 %4077
  %4079 = vrot.lane.b32.xlu0 %v2835, 80
  %v4080 = vpop.permute.xlu0 %4079
  %4081 = vrot.lane.b32.xlu0 %v2836, 80
  %v4082 = vpop.permute.xlu0 %4081
  %4083 = vrot.lane.b32.xlu0 %v2837, 80
  %v4084 = vpop.permute.xlu0 %4083
  %4085 = vrot.lane.b32.xlu0 %v2838, 80
  %v4086 = vpop.permute.xlu0 %4085
  %4087 = vrot.lane.b32.xlu0 %v2839, 80
  %v4088 = vpop.permute.xlu0 %4087
  %4089 = vrot.lane.b32.xlu0 %v2840, 80
  %v4090 = vpop.permute.xlu0 %4089
  %4091 = vrot.lane.b32.xlu0 %v2841, 80
  %v4092 = vpop.permute.xlu0 %4091
  %4093 = vrot.lane.b32.xlu0 %v2842, 80
  %v4094 = vpop.permute.xlu0 %4093
  %v4096 = vsel %vm358, %v4064, 0
  %v4099 = vsel %vm358, %v4066, 0
  %v4102 = vsel %vm358, %v4068, 0
  %v4105 = vsel %vm358, %v4070, 0
  %v4108 = vsel %vm358, %v4072, 0
  %v4111 = vsel %vm358, %v4074, 0
  %v4114 = vsel %vm358, %v4076, 0
  %v4117 = vsel %vm358, %v4078, 0
  %v4120 = vsel %vm358, %v4080, 0
  %v4123 = vsel %vm358, %v4082, 0
  %v4126 = vsel %vm358, %v4084, 0
  %v4129 = vsel %vm358, %v4086, 0
  %v4132 = vsel %vm358, %v4088, 0
  %v4135 = vsel %vm358, %v4090, 0
  %v4138 = vsel %vm358, %v4092, 0
  %v4141 = vsel %vm358, %v4094, 0
  %4143 = vmatprep.subr.bf16.mxu0 0
  %4144 = vmatpush1.bf16.xpose.msra.mxu0 %v4120
  %4145 = vmatprep.subr.bf16.mxu0 0
  %4146 = vmatpush1.bf16.xpose.msra.mxu0 %v4123
  %4147 = vmatprep.subr.bf16.mxu0 0
  %4148 = vmatpush1.bf16.xpose.msra.mxu0 %v4126
  %4149 = vmatprep.subr.bf16.mxu0 0
  %4150 = vmatpush1.bf16.xpose.msra.mxu0 %v4129
  %4151 = vmatprep.subr.bf16.mxu0 0
  %4152 = vmatpush1.bf16.xpose.msra.mxu0 %v4132
  %4153 = vmatprep.subr.bf16.mxu0 0
  %4154 = vmatpush1.bf16.xpose.msra.mxu0 %v4135
  %4155 = vmatprep.subr.bf16.mxu0 0
  %4156 = vmatpush1.bf16.xpose.msra.mxu0 %v4138
  %4157 = vmatprep.subr.bf16.mxu0 0
  %4158 = vmatpush1.bf16.xpose.msra.mxu0 %v4141
  %4159 = vmatprep.subr.bf16.mxu0 0
  %4160 = vmatpush1.bf16.xpose.msra.mxu0 0
  %4161 = vmatprep.subr.bf16.mxu0 0
  %4162 = vmatpush1.bf16.xpose.msra.mxu0 0
  %4163 = vmatprep.subr.bf16.mxu0 0
  %4164 = vmatpush1.bf16.xpose.msra.mxu0 0
  %4165 = vmatprep.subr.bf16.mxu0 0
  %4166 = vmatpush1.bf16.xpose.msra.mxu0 0
  %4167 = vmatprep.subr.bf16.mxu0 0
  %4168 = vmatpush1.bf16.xpose.msra.mxu0 0
  %4169 = vmatprep.subr.bf16.mxu0 0
  %4170 = vmatpush1.bf16.xpose.msra.mxu0 0
  %4171 = vmatprep.subr.bf16.mxu0 0
  %4172 = vmatpush1.bf16.xpose.msra.mxu0 0
  %4173 = vmatprep.subr.bf16.mxu0 0
  %4174 = vmatpush1.bf16.xpose.msra.mxu0 0
  %4175 = vmatprep.mubr.bf16.mxu0 0
  %4176 = vmatmul.mubr.bf16.gmra.mrb[0].mxu0 %v4096
  %v4177 = vpop.f32.mrb[0].mxu0
  %v4178 = vadd.f32 0.0, %v4177
  %v4179 = vpop.f32.mrb[0].mxu0
  %v4180 = vpop.f32.mrb[0].mxu0
  %v4181 = vadd.f32 0.0, %v4180
  %v4182 = vpop.f32.mrb[0].mxu0
  %4183 = vmatprep.mubr.bf16.mxu0 0
  %4184 = vmatmul.mubr.bf16.gmra.mrb[0].mxu0 %v4099
  %v4185 = vpop.f32.mrb[0].mxu0
  %v4186 = vadd.f32 0.0, %v4185
  %v4187 = vpop.f32.mrb[0].mxu0
  %v4188 = vpop.f32.mrb[0].mxu0
  %v4189 = vadd.f32 0.0, %v4188
  %v4190 = vpop.f32.mrb[0].mxu0
  %4191 = vmatprep.mubr.bf16.mxu0 0
  %4192 = vmatmul.mubr.bf16.gmra.mrb[0].mxu0 %v4102
  %v4193 = vpop.f32.mrb[0].mxu0
  %v4194 = vadd.f32 0.0, %v4193
  %v4195 = vpop.f32.mrb[0].mxu0
  %v4196 = vpop.f32.mrb[0].mxu0
  %v4197 = vadd.f32 0.0, %v4196
  %v4198 = vpop.f32.mrb[0].mxu0
  %4199 = vmatprep.mubr.bf16.mxu0 0
  %4200 = vmatmul.mubr.bf16.gmra.mrb[0].mxu0 %v4105
  %v4201 = vpop.f32.mrb[0].mxu0
  %v4202 = vadd.f32 0.0, %v4201
  %v4203 = vpop.f32.mrb[0].mxu0
  %v4204 = vpop.f32.mrb[0].mxu0
  %v4205 = vadd.f32 0.0, %v4204
  %v4206 = vpop.f32.mrb[0].mxu0
  %4207 = vmatprep.mubr.bf16.mxu0 0
  %4208 = vmatmul.mubr.bf16.gmra.mrb[0].mxu0 %v4108
  %v4209 = vpop.f32.mrb[0].mxu0
  %v4210 = vadd.f32 0.0, %v4209
  %v4211 = vpop.f32.mrb[0].mxu0
  %v4212 = vpop.f32.mrb[0].mxu0
  %v4213 = vadd.f32 0.0, %v4212
  %v4214 = vpop.f32.mrb[0].mxu0
  %4215 = vmatprep.mubr.bf16.mxu0 0
  %4216 = vmatmul.mubr.bf16.gmra.mrb[0].mxu0 %v4111
  %v4217 = vpop.f32.mrb[0].mxu0
  %v4218 = vadd.f32 0.0, %v4217
  %v4219 = vpop.f32.mrb[0].mxu0
  %v4220 = vpop.f32.mrb[0].mxu0
  %v4221 = vadd.f32 0.0, %v4220
  %v4222 = vpop.f32.mrb[0].mxu0
  %4223 = vmatprep.mubr.bf16.mxu0 0
  %4224 = vmatmul.mubr.bf16.gmra.mrb[0].mxu0 %v4114
  %v4225 = vpop.f32.mrb[0].mxu0
  %v4226 = vadd.f32 0.0, %v4225
  %v4227 = vpop.f32.mrb[0].mxu0
  %v4228 = vpop.f32.mrb[0].mxu0
  %v4229 = vadd.f32 0.0, %v4228
  %v4230 = vpop.f32.mrb[0].mxu0
  %4231 = vmatprep.mubr.bf16.mxu0 0
  %4232 = vmatmul.mubr.bf16.gmra.mrb[0].mxu0 %v4117
  %v4233 = vpop.f32.mrb[0].mxu0
  %v4234 = vadd.f32 0.0, %v4233
  %v4235 = vpop.f32.mrb[0].mxu0
  %v4236 = vpop.f32.mrb[0].mxu0
  %v4237 = vadd.f32 0.0, %v4236
  %v4238 = vpop.f32.mrb[0].mxu0
  %4239 = vdwg.mxu0
  %v4240 = vmul.f32 %v4178, 0.35355338
  %v4241 = vmul.f32 %v4181, 0.35355338
  %v4242 = vmul.f32 %v4186, 0.35355338
  %v4243 = vmul.f32 %v4189, 0.35355338
  %v4244 = vmul.f32 %v4194, 0.35355338
  %v4245 = vmul.f32 %v4197, 0.35355338
  %v4246 = vmul.f32 %v4202, 0.35355338
  %v4247 = vmul.f32 %v4205, 0.35355338
  %v4248 = vmul.f32 %v4210, 0.35355338
  %v4249 = vmul.f32 %v4213, 0.35355338
  %v4250 = vmul.f32 %v4218, 0.35355338
  %v4251 = vmul.f32 %v4221, 0.35355338
  %v4252 = vmul.f32 %v4226, 0.35355338
  %v4253 = vmul.f32 %v4229, 0.35355338
  %v4254 = vmul.f32 %v4234, 0.35355338
  %v4255 = vmul.f32 %v4237, 0.35355338
  %v4256 = vadd.f32 %v4240, %v3032
  %v4257 = vadd.f32 %v4241, %v3032
  %v4258 = vadd.f32 %v4242, %v3032
  %v4259 = vadd.f32 %v4243, %v3032
  %v4260 = vadd.f32 %v4244, %v3032
  %v4261 = vadd.f32 %v4245, %v3032
  %v4262 = vadd.f32 %v4246, %v3032
  %v4263 = vadd.f32 %v4247, %v3032
  %v4264 = vadd.f32 %v4248, %v3032
  %v4265 = vadd.f32 %v4249, %v3032
  %v4266 = vadd.f32 %v4250, %v3032
  %v4267 = vadd.f32 %v4251, %v3032
  %v4268 = vadd.f32 %v4252, %v3032
  %v4269 = vadd.f32 %v4253, %v3032
  %v4270 = vadd.f32 %v4254, %v3032
  %v4271 = vadd.f32 %v4255, %v3032
  %4272 = vmax.xlane.f32.xlu0 %v4256
  %v4273 = vpop.xlane.xlu0 %4272
  %4274 = vmax.xlane.f32.xlu0 %v4257
  %v4275 = vpop.xlane.xlu0 %4274
  %4276 = vmax.xlane.f32.xlu0 %v4258
  %v4277 = vpop.xlane.xlu0 %4276
  %4278 = vmax.xlane.f32.xlu0 %v4259
  %v4279 = vpop.xlane.xlu0 %4278
  %4280 = vmax.xlane.f32.xlu0 %v4260
  %v4281 = vpop.xlane.xlu0 %4280
  %4282 = vmax.xlane.f32.xlu0 %v4261
  %v4283 = vpop.xlane.xlu0 %4282
  %4284 = vmax.xlane.f32.xlu0 %v4262
  %v4285 = vpop.xlane.xlu0 %4284
  %4286 = vmax.xlane.f32.xlu0 %v4263
  %v4287 = vpop.xlane.xlu0 %4286
  %4288 = vmax.xlane.f32.xlu0 %v4264
  %v4289 = vpop.xlane.xlu0 %4288
  %4290 = vmax.xlane.f32.xlu0 %v4265
  %v4291 = vpop.xlane.xlu0 %4290
  %4292 = vmax.xlane.f32.xlu0 %v4266
  %v4293 = vpop.xlane.xlu0 %4292
  %4294 = vmax.xlane.f32.xlu0 %v4267
  %v4295 = vpop.xlane.xlu0 %4294
  %4296 = vmax.xlane.f32.xlu0 %v4268
  %v4297 = vpop.xlane.xlu0 %4296
  %4298 = vmax.xlane.f32.xlu0 %v4269
  %v4299 = vpop.xlane.xlu0 %4298
  %4300 = vmax.xlane.f32.xlu0 %v4270
  %v4301 = vpop.xlane.xlu0 %4300
  %4302 = vmax.xlane.f32.xlu0 %v4271
  %v4303 = vpop.xlane.xlu0 %4302
  %v4304 = vsub.f32 %v4256, %v4273
  %v4305 = vsub.f32 %v4257, %v4275
  %v4306 = vsub.f32 %v4258, %v4277
  %v4307 = vsub.f32 %v4259, %v4279
  %v4308 = vsub.f32 %v4260, %v4281
  %v4309 = vsub.f32 %v4261, %v4283
  %v4310 = vsub.f32 %v4262, %v4285
  %v4311 = vsub.f32 %v4263, %v4287
  %v4312 = vsub.f32 %v4264, %v4289
  %v4313 = vsub.f32 %v4265, %v4291
  %v4314 = vsub.f32 %v4266, %v4293
  %v4315 = vsub.f32 %v4267, %v4295
  %v4316 = vsub.f32 %v4268, %v4297
  %v4317 = vsub.f32 %v4269, %v4299
  %v4318 = vsub.f32 %v4270, %v4301
  %v4319 = vsub.f32 %v4271, %v4303
  %v4320 = vmul.f32 %v4304, 1.442695
  %v4321 = vpow.pop %v4320
  %v4322 = vmul.f32 %v4305, 1.442695
  %v4323 = vpow.pop %v4322
  %v4324 = vmul.f32 %v4306, 1.442695
  %v4325 = vpow.pop %v4324
  %v4326 = vmul.f32 %v4307, 1.442695
  %v4327 = vpow.pop %v4326
  %v4328 = vmul.f32 %v4308, 1.442695
  %v4329 = vpow.pop %v4328
  %v4330 = vmul.f32 %v4309, 1.442695
  %v4331 = vpow.pop %v4330
  %v4332 = vmul.f32 %v4310, 1.442695
  %v4333 = vpow.pop %v4332
  %v4334 = vmul.f32 %v4311, 1.442695
  %v4335 = vpow.pop %v4334
  %v4336 = vmul.f32 %v4312, 1.442695
  %v4337 = vpow.pop %v4336
  %v4338 = vmul.f32 %v4313, 1.442695
  %v4339 = vpow.pop %v4338
  %v4340 = vmul.f32 %v4314, 1.442695
  %v4341 = vpow.pop %v4340
  %v4342 = vmul.f32 %v4315, 1.442695
  %v4343 = vpow.pop %v4342
  %v4344 = vmul.f32 %v4316, 1.442695
  %v4345 = vpow.pop %v4344
  %v4346 = vmul.f32 %v4317, 1.442695
  %v4347 = vpow.pop %v4346
  %v4348 = vmul.f32 %v4318, 1.442695
  %v4349 = vpow.pop %v4348
  %v4350 = vmul.f32 %v4319, 1.442695
  %v4351 = vpow.pop %v4350
  %4352 = vadd.xlane.f32.xlu0 %v4321
  %v4353 = vpop.xlane.xlu0 %4352
  %4354 = vadd.xlane.f32.xlu0 %v4323
  %v4355 = vpop.xlane.xlu0 %4354
  %4356 = vadd.xlane.f32.xlu0 %v4325
  %v4357 = vpop.xlane.xlu0 %4356
  %4358 = vadd.xlane.f32.xlu0 %v4327
  %v4359 = vpop.xlane.xlu0 %4358
  %4360 = vadd.xlane.f32.xlu0 %v4329
  %v4361 = vpop.xlane.xlu0 %4360
  %4362 = vadd.xlane.f32.xlu0 %v4331
  %v4363 = vpop.xlane.xlu0 %4362
  %4364 = vadd.xlane.f32.xlu0 %v4333
  %v4365 = vpop.xlane.xlu0 %4364
  %4366 = vadd.xlane.f32.xlu0 %v4335
  %v4367 = vpop.xlane.xlu0 %4366
  %4368 = vadd.xlane.f32.xlu0 %v4337
  %v4369 = vpop.xlane.xlu0 %4368
  %4370 = vadd.xlane.f32.xlu0 %v4339
  %v4371 = vpop.xlane.xlu0 %4370
  %4372 = vadd.xlane.f32.xlu0 %v4341
  %v4373 = vpop.xlane.xlu0 %4372
  %4374 = vadd.xlane.f32.xlu0 %v4343
  %v4375 = vpop.xlane.xlu0 %4374
  %4376 = vadd.xlane.f32.xlu0 %v4345
  %v4377 = vpop.xlane.xlu0 %4376
  %4378 = vadd.xlane.f32.xlu0 %v4347
  %v4379 = vpop.xlane.xlu0 %4378
  %4380 = vadd.xlane.f32.xlu0 %v4349
  %v4381 = vpop.xlane.xlu0 %4380
  %4382 = vadd.xlane.f32.xlu0 %v4351
  %v4383 = vpop.xlane.xlu0 %4382
  %v4384 = vpack.c.bf16 %v4323, %v4321
  %v4385 = vpack.c.bf16 %v4327, %v4325
  %v4386 = vpack.c.bf16 %v4331, %v4329
  %v4387 = vpack.c.bf16 %v4335, %v4333
  %v4388 = vpack.c.bf16 %v4339, %v4337
  %v4389 = vpack.c.bf16 %v4343, %v4341
  %v4390 = vpack.c.bf16 %v4347, %v4345
  %v4391 = vpack.c.bf16 %v4351, %v4349
  %4392 = vrot.lane.b32.xlu0 %v2835, 48
  %v4393 = vpop.permute.xlu0 %4392
  %4394 = vrot.lane.b32.xlu0 %v2836, 48
  %v4395 = vpop.permute.xlu0 %4394
  %4396 = vrot.lane.b32.xlu0 %v2837, 48
  %v4397 = vpop.permute.xlu0 %4396
  %4398 = vrot.lane.b32.xlu0 %v2838, 48
  %v4399 = vpop.permute.xlu0 %4398
  %4400 = vrot.lane.b32.xlu0 %v2839, 48
  %v4401 = vpop.permute.xlu0 %4400
  %4402 = vrot.lane.b32.xlu0 %v2840, 48
  %v4403 = vpop.permute.xlu0 %4402
  %4404 = vrot.lane.b32.xlu0 %v2841, 48
  %v4405 = vpop.permute.xlu0 %4404
  %4406 = vrot.lane.b32.xlu0 %v2842, 48
  %v4407 = vpop.permute.xlu0 %4406
  %4416 = vmatprep.subr.bf16.mxu0 0
  %4417 = vmatpush1.bf16.msra.mxu0 %v4393
  %4418 = vmatprep.subr.bf16.mxu0 0
  %4419 = vmatpush1.bf16.msra.mxu0 %v4395
  %4420 = vmatprep.subr.bf16.mxu0 0
  %4421 = vmatpush1.bf16.msra.mxu0 %v4397
  %4422 = vmatprep.subr.bf16.mxu0 0
  %4423 = vmatpush1.bf16.msra.mxu0 %v4399
  %4424 = vmatprep.subr.bf16.mxu0 0
  %4425 = vmatpush1.bf16.msra.mxu0 %v4401
  %4426 = vmatprep.subr.bf16.mxu0 0
  %4427 = vmatpush1.bf16.msra.mxu0 %v4403
  %4428 = vmatprep.subr.bf16.mxu0 0
  %4429 = vmatpush1.bf16.msra.mxu0 %v4405
  %4430 = vmatprep.subr.bf16.mxu0 0
  %4431 = vmatpush1.bf16.msra.mxu0 %v4407
  %4432 = vmatprep.subr.bf16.mxu0 0
  %4433 = vmatpush1.bf16.msra.mxu0 0
  %4434 = vmatprep.subr.bf16.mxu0 0
  %4435 = vmatpush1.bf16.msra.mxu0 0
  %4436 = vmatprep.subr.bf16.mxu0 0
  %4437 = vmatpush1.bf16.msra.mxu0 0
  %4438 = vmatprep.subr.bf16.mxu0 0
  %4439 = vmatpush1.bf16.msra.mxu0 0
  %4440 = vmatprep.subr.bf16.mxu0 0
  %4441 = vmatpush1.bf16.msra.mxu0 0
  %4442 = vmatprep.subr.bf16.mxu0 0
  %4443 = vmatpush1.bf16.msra.mxu0 0
  %4444 = vmatprep.subr.bf16.mxu0 0
  %4445 = vmatpush1.bf16.msra.mxu0 0
  %4446 = vmatprep.subr.bf16.mxu0 0
  %4447 = vmatpush1.bf16.msra.mxu0 0
  %4448 = vmatprep.mubr.bf16.mxu0 0
  %4449 = vmatmul.mubr.bf16.gmra.mrb[0].mxu0 %v4384
  %v4450 = vpop.f32.mrb[0].mxu0
  %v4451 = vadd.f32 0.0, %v4450
  %v4452 = vpop.f32.mrb[0].mxu0
  %v4453 = vpop.f32.mrb[0].mxu0
  %v4454 = vadd.f32 0.0, %v4453
  %v4455 = vpop.f32.mrb[0].mxu0
  %4456 = vmatprep.mubr.bf16.mxu0 0
  %4457 = vmatmul.mubr.bf16.gmra.mrb[0].mxu0 %v4385
  %v4458 = vpop.f32.mrb[0].mxu0
  %v4459 = vadd.f32 0.0, %v4458
  %v4460 = vpop.f32.mrb[0].mxu0
  %v4461 = vpop.f32.mrb[0].mxu0
  %v4462 = vadd.f32 0.0, %v4461
  %v4463 = vpop.f32.mrb[0].mxu0
  %4464 = vmatprep.mubr.bf16.mxu0 0
  %4465 = vmatmul.mubr.bf16.gmra.mrb[0].mxu0 %v4386
  %v4466 = vpop.f32.mrb[0].mxu0
  %v4467 = vadd.f32 0.0, %v4466
  %v4468 = vpop.f32.mrb[0].mxu0
  %v4469 = vpop.f32.mrb[0].mxu0
  %v4470 = vadd.f32 0.0, %v4469
  %v4471 = vpop.f32.mrb[0].mxu0
  %4472 = vmatprep.mubr.bf16.mxu0 0
  %4473 = vmatmul.mubr.bf16.gmra.mrb[0].mxu0 %v4387
  %v4474 = vpop.f32.mrb[0].mxu0
  %v4475 = vadd.f32 0.0, %v4474
  %v4476 = vpop.f32.mrb[0].mxu0
  %v4477 = vpop.f32.mrb[0].mxu0
  %v4478 = vadd.f32 0.0, %v4477
  %v4479 = vpop.f32.mrb[0].mxu0
  %4480 = vmatprep.mubr.bf16.mxu0 0
  %4481 = vmatmul.mubr.bf16.gmra.mrb[0].mxu0 %v4388
  %v4482 = vpop.f32.mrb[0].mxu0
  %v4483 = vadd.f32 0.0, %v4482
  %v4484 = vpop.f32.mrb[0].mxu0
  %v4485 = vpop.f32.mrb[0].mxu0
  %v4486 = vadd.f32 0.0, %v4485
  %v4487 = vpop.f32.mrb[0].mxu0
  %4488 = vmatprep.mubr.bf16.mxu0 0
  %4489 = vmatmul.mubr.bf16.gmra.mrb[0].mxu0 %v4389
  %v4490 = vpop.f32.mrb[0].mxu0
  %v4491 = vadd.f32 0.0, %v4490
  %v4492 = vpop.f32.mrb[0].mxu0
  %v4493 = vpop.f32.mrb[0].mxu0
  %v4494 = vadd.f32 0.0, %v4493
  %v4495 = vpop.f32.mrb[0].mxu0
  %4496 = vmatprep.mubr.bf16.mxu0 0
  %4497 = vmatmul.mubr.bf16.gmra.mrb[0].mxu0 %v4390
  %v4498 = vpop.f32.mrb[0].mxu0
  %v4499 = vadd.f32 0.0, %v4498
  %v4500 = vpop.f32.mrb[0].mxu0
  %v4501 = vpop.f32.mrb[0].mxu0
  %v4502 = vadd.f32 0.0, %v4501
  %v4503 = vpop.f32.mrb[0].mxu0
  %4504 = vmatprep.mubr.bf16.mxu0 0
  %4505 = vmatmul.mubr.bf16.gmra.mrb[0].mxu0 %v4391
  %v4506 = vpop.f32.mrb[0].mxu0
  %v4507 = vadd.f32 0.0, %v4506
  %v4508 = vpop.f32.mrb[0].mxu0
  %v4509 = vpop.f32.mrb[0].mxu0
  %v4510 = vadd.f32 0.0, %v4509
  %v4511 = vpop.f32.mrb[0].mxu0
  %4512 = vdwg.mxu0
  %v4513 = vrcp.pop %v4353
  %v4514 = vrcp.pop %v4355
  %v4515 = vrcp.pop %v4357
  %v4516 = vrcp.pop %v4359
  %v4517 = vrcp.pop %v4361
  %v4518 = vrcp.pop %v4363
  %v4519 = vrcp.pop %v4365
  %v4520 = vrcp.pop %v4367
  %v4521 = vrcp.pop %v4369
  %v4522 = vrcp.pop %v4371
  %v4523 = vrcp.pop %v4373
  %v4524 = vrcp.pop %v4375
  %v4525 = vrcp.pop %v4377
  %v4526 = vrcp.pop %v4379
  %v4527 = vrcp.pop %v4381
  %v4528 = vrcp.pop %v4383
  %v4529 = vmul.f32 %v4451, %v4513
  %v4530 = vmul.f32 %v4454, %v4514
  %v4531 = vmul.f32 %v4459, %v4515
  %v4532 = vmul.f32 %v4462, %v4516
  %v4533 = vmul.f32 %v4467, %v4517
  %v4534 = vmul.f32 %v4470, %v4518
  %v4535 = vmul.f32 %v4475, %v4519
  %v4536 = vmul.f32 %v4478, %v4520
  %v4537 = vmul.f32 %v4483, %v4521
  %v4538 = vmul.f32 %v4486, %v4522
  %v4539 = vmul.f32 %v4491, %v4523
  %v4540 = vmul.f32 %v4494, %v4524
  %v4541 = vmul.f32 %v4499, %v4525
  %v4542 = vmul.f32 %v4502, %v4526
  %v4543 = vmul.f32 %v4507, %v4527
  %v4544 = vmul.f32 %v4510, %v4528
  %v4545 = vpack.c.bf16 %v4530, %v4529
  %v4546 = vpack.c.bf16 %v4532, %v4531
  %v4547 = vpack.c.bf16 %v4534, %v4533
  %v4548 = vpack.c.bf16 %v4536, %v4535
  %v4549 = vpack.c.bf16 %v4538, %v4537
  %v4550 = vpack.c.bf16 %v4540, %v4539
  %v4551 = vpack.c.bf16 %v4542, %v4541
  %v4552 = vpack.c.bf16 %v4544, %v4543
  %v4554 = vsel %vm358, %v4545, 0
  %v4557 = vsel %vm358, %v4546, 0
  %v4560 = vsel %vm358, %v4547, 0
  %v4563 = vsel %vm358, %v4548, 0
  %v4566 = vsel %vm358, %v4549, 0
  %v4569 = vsel %vm358, %v4550, 0
  %v4572 = vsel %vm358, %v4551, 0
  %v4575 = vsel %vm358, %v4552, 0
  %4577 = vmatprep.subr.bf16.mxu0 0
  %4578 = vmatpush1.bf16.msra.mxu0 %v2085
  %4579 = vmatprep.subr.bf16.mxu0 0
  %4580 = vmatpush1.bf16.msra.mxu0 0
  %4581 = vmatprep.subr.bf16.mxu0 0
  %4582 = vmatpush1.bf16.msra.mxu0 0
  %4583 = vmatprep.subr.bf16.mxu0 0
  %4584 = vmatpush1.bf16.msra.mxu0 0
  %4585 = vmatprep.subr.bf16.mxu0 0
  %4586 = vmatpush1.bf16.msra.mxu0 0
  %4587 = vmatprep.subr.bf16.mxu0 0
  %4588 = vmatpush1.bf16.msra.mxu0 0
  %4589 = vmatprep.subr.bf16.mxu0 0
  %4590 = vmatpush1.bf16.msra.mxu0 0
  %4591 = vmatprep.subr.bf16.mxu0 0
  %4592 = vmatpush1.bf16.msra.mxu0 0
  %4593 = vmatprep.subr.bf16.mxu0 0
  %4594 = vmatpush1.bf16.msra.mxu0 0
  %4595 = vmatprep.subr.bf16.mxu0 0
  %4596 = vmatpush1.bf16.msra.mxu0 0
  %4597 = vmatprep.subr.bf16.mxu0 0
  %4598 = vmatpush1.bf16.msra.mxu0 0
  %4599 = vmatprep.subr.bf16.mxu0 0
  %4600 = vmatpush1.bf16.msra.mxu0 0
  %4601 = vmatprep.subr.bf16.mxu0 0
  %4602 = vmatpush1.bf16.msra.mxu0 0
  %4603 = vmatprep.subr.bf16.mxu0 0
  %4604 = vmatpush1.bf16.msra.mxu0 0
  %4605 = vmatprep.subr.bf16.mxu0 0
  %4606 = vmatpush1.bf16.msra.mxu0 0
  %4607 = vmatprep.subr.bf16.mxu0 0
  %4608 = vmatpush1.bf16.msra.mxu0 0
  %4609 = vmatprep.mubr.bf16.mxu0 0
  %4610 = vmatmul.mubr.bf16.gmra.mrb[0].mxu0 %v4554
  %v4611 = vpop.f32.mrb[0].mxu0
  %v4612 = vadd.f32 0.0, %v4611
  %v4613 = vpop.f32.mrb[0].mxu0
  %v4614 = vpop.f32.mrb[0].mxu0
  %v4615 = vadd.f32 0.0, %v4614
  %v4616 = vpop.f32.mrb[0].mxu0
  %4617 = vmatprep.mubr.bf16.mxu0 0
  %4618 = vmatmul.mubr.bf16.gmra.mrb[0].mxu0 %v4557
  %v4619 = vpop.f32.mrb[0].mxu0
  %v4620 = vadd.f32 0.0, %v4619
  %v4621 = vpop.f32.mrb[0].mxu0
  %v4622 = vpop.f32.mrb[0].mxu0
  %v4623 = vadd.f32 0.0, %v4622
  %v4624 = vpop.f32.mrb[0].mxu0
  %4625 = vmatprep.mubr.bf16.mxu0 0
  %4626 = vmatmul.mubr.bf16.gmra.mrb[0].mxu0 %v4560
  %v4627 = vpop.f32.mrb[0].mxu0
  %v4628 = vadd.f32 0.0, %v4627
  %v4629 = vpop.f32.mrb[0].mxu0
  %v4630 = vpop.f32.mrb[0].mxu0
  %v4631 = vadd.f32 0.0, %v4630
  %v4632 = vpop.f32.mrb[0].mxu0
  %4633 = vmatprep.mubr.bf16.mxu0 0
  %4634 = vmatmul.mubr.bf16.gmra.mrb[0].mxu0 %v4563
  %v4635 = vpop.f32.mrb[0].mxu0
  %v4636 = vadd.f32 0.0, %v4635
  %v4637 = vpop.f32.mrb[0].mxu0
  %v4638 = vpop.f32.mrb[0].mxu0
  %v4639 = vadd.f32 0.0, %v4638
  %v4640 = vpop.f32.mrb[0].mxu0
  %4641 = vmatprep.mubr.bf16.mxu0 0
  %4642 = vmatmul.mubr.bf16.gmra.mrb[0].mxu0 %v4566
  %v4643 = vpop.f32.mrb[0].mxu0
  %v4644 = vadd.f32 0.0, %v4643
  %v4645 = vpop.f32.mrb[0].mxu0
  %v4646 = vpop.f32.mrb[0].mxu0
  %v4647 = vadd.f32 0.0, %v4646
  %v4648 = vpop.f32.mrb[0].mxu0
  %4649 = vmatprep.mubr.bf16.mxu0 0
  %4650 = vmatmul.mubr.bf16.gmra.mrb[0].mxu0 %v4569
  %v4651 = vpop.f32.mrb[0].mxu0
  %v4652 = vadd.f32 0.0, %v4651
  %v4653 = vpop.f32.mrb[0].mxu0
  %v4654 = vpop.f32.mrb[0].mxu0
  %v4655 = vadd.f32 0.0, %v4654
  %v4656 = vpop.f32.mrb[0].mxu0
  %4657 = vmatprep.mubr.bf16.mxu0 0
  %4658 = vmatmul.mubr.bf16.gmra.mrb[0].mxu0 %v4572
  %v4659 = vpop.f32.mrb[0].mxu0
  %v4660 = vadd.f32 0.0, %v4659
  %v4661 = vpop.f32.mrb[0].mxu0
  %v4662 = vpop.f32.mrb[0].mxu0
  %v4663 = vadd.f32 0.0, %v4662
  %v4664 = vpop.f32.mrb[0].mxu0
  %4665 = vmatprep.mubr.bf16.mxu0 0
  %4666 = vmatmul.mubr.bf16.gmra.mrb[0].mxu0 %v4575
  %v4667 = vpop.f32.mrb[0].mxu0
  %v4668 = vadd.f32 0.0, %v4667
  %v4669 = vpop.f32.mrb[0].mxu0
  %v4670 = vpop.f32.mrb[0].mxu0
  %v4671 = vadd.f32 0.0, %v4670
  %v4672 = vpop.f32.mrb[0].mxu0
  %4673 = vdwg.mxu0
  %v4674 = vadd.f32 %v4001, %v4612
  %v4675 = vadd.f32 %v4004, %v4615
  %v4676 = vadd.f32 %v4009, %v4620
  %v4677 = vadd.f32 %v4012, %v4623
  %v4678 = vadd.f32 %v4017, %v4628
  %v4679 = vadd.f32 %v4020, %v4631
  %v4680 = vadd.f32 %v4025, %v4636
  %v4681 = vadd.f32 %v4028, %v4639
  %v4682 = vadd.f32 %v4033, %v4644
  %v4683 = vadd.f32 %v4036, %v4647
  %v4684 = vadd.f32 %v4041, %v4652
  %v4685 = vadd.f32 %v4044, %v4655
  %v4686 = vadd.f32 %v4049, %v4660
  %v4687 = vadd.f32 %v4052, %v4663
  %v4688 = vadd.f32 %v4057, %v4668
  %v4689 = vadd.f32 %v4060, %v4671
  %4690 = vrot.lane.b32.xlu0 %v2835, 104
  %v4691 = vpop.permute.xlu0 %4690
  %4692 = vrot.lane.b32.xlu0 %v2836, 104
  %v4693 = vpop.permute.xlu0 %4692
  %4694 = vrot.lane.b32.xlu0 %v2837, 104
  %v4695 = vpop.permute.xlu0 %4694
  %4696 = vrot.lane.b32.xlu0 %v2838, 104
  %v4697 = vpop.permute.xlu0 %4696
  %4698 = vrot.lane.b32.xlu0 %v2839, 104
  %v4699 = vpop.permute.xlu0 %4698
  %4700 = vrot.lane.b32.xlu0 %v2840, 104
  %v4701 = vpop.permute.xlu0 %4700
  %4702 = vrot.lane.b32.xlu0 %v2841, 104
  %v4703 = vpop.permute.xlu0 %4702
  %4704 = vrot.lane.b32.xlu0 %v2842, 104
  %v4705 = vpop.permute.xlu0 %4704
  %4706 = vrot.lane.b32.xlu0 %v2835, 72
  %v4707 = vpop.permute.xlu0 %4706
  %4708 = vrot.lane.b32.xlu0 %v2836, 72
  %v4709 = vpop.permute.xlu0 %4708
  %4710 = vrot.lane.b32.xlu0 %v2837, 72
  %v4711 = vpop.permute.xlu0 %4710
  %4712 = vrot.lane.b32.xlu0 %v2838, 72
  %v4713 = vpop.permute.xlu0 %4712
  %4714 = vrot.lane.b32.xlu0 %v2839, 72
  %v4715 = vpop.permute.xlu0 %4714
  %4716 = vrot.lane.b32.xlu0 %v2840, 72
  %v4717 = vpop.permute.xlu0 %4716
  %4718 = vrot.lane.b32.xlu0 %v2841, 72
  %v4719 = vpop.permute.xlu0 %4718
  %4720 = vrot.lane.b32.xlu0 %v2842, 72
  %v4721 = vpop.permute.xlu0 %4720
  %v4723 = vsel %vm358, %v4691, 0
  %v4726 = vsel %vm358, %v4693, 0
  %v4729 = vsel %vm358, %v4695, 0
  %v4732 = vsel %vm358, %v4697, 0
  %v4735 = vsel %vm358, %v4699, 0
  %v4738 = vsel %vm358, %v4701, 0
  %v4741 = vsel %vm358, %v4703, 0
  %v4744 = vsel %vm358, %v4705, 0
  %v4747 = vsel %vm358, %v4707, 0
  %v4750 = vsel %vm358, %v4709, 0
  %v4753 = vsel %vm358, %v4711, 0
  %v4756 = vsel %vm358, %v4713, 0
  %v4759 = vsel %vm358, %v4715, 0
  %v4762 = vsel %vm358, %v4717, 0
  %v4765 = vsel %vm358, %v4719, 0
  %v4768 = vsel %vm358, %v4721, 0
  %4770 = vmatprep.subr.bf16.mxu0 0
  %4771 = vmatpush1.bf16.xpose.msra.mxu0 %v4747
  %4772 = vmatprep.subr.bf16.mxu0 0
  %4773 = vmatpush1.bf16.xpose.msra.mxu0 %v4750
  %4774 = vmatprep.subr.bf16.mxu0 0
  %4775 = vmatpush1.bf16.xpose.msra.mxu0 %v4753
  %4776 = vmatprep.subr.bf16.mxu0 0
  %4777 = vmatpush1.bf16.xpose.msra.mxu0 %v4756
  %4778 = vmatprep.subr.bf16.mxu0 0
  %4779 = vmatpush1.bf16.xpose.msra.mxu0 %v4759
  %4780 = vmatprep.subr.bf16.mxu0 0
  %4781 = vmatpush1.bf16.xpose.msra.mxu0 %v4762
  %4782 = vmatprep.subr.bf16.mxu0 0
  %4783 = vmatpush1.bf16.xpose.msra.mxu0 %v4765
  %4784 = vmatprep.subr.bf16.mxu0 0
  %4785 = vmatpush1.bf16.xpose.msra.mxu0 %v4768
  %4786 = vmatprep.subr.bf16.mxu0 0
  %4787 = vmatpush1.bf16.xpose.msra.mxu0 0
  %4788 = vmatprep.subr.bf16.mxu0 0
  %4789 = vmatpush1.bf16.xpose.msra.mxu0 0
  %4790 = vmatprep.subr.bf16.mxu0 0
  %4791 = vmatpush1.bf16.xpose.msra.mxu0 0
  %4792 = vmatprep.subr.bf16.mxu0 0
  %4793 = vmatpush1.bf16.xpose.msra.mxu0 0
  %4794 = vmatprep.subr.bf16.mxu0 0
  %4795 = vmatpush1.bf16.xpose.msra.mxu0 0
  %4796 = vmatprep.subr.bf16.mxu0 0
  %4797 = vmatpush1.bf16.xpose.msra.mxu0 0
  %4798 = vmatprep.subr.bf16.mxu0 0
  %4799 = vmatpush1.bf16.xpose.msra.mxu0 0
  %4800 = vmatprep.subr.bf16.mxu0 0
  %4801 = vmatpush1.bf16.xpose.msra.mxu0 0
  %4802 = vmatprep.mubr.bf16.mxu0 0
  %4803 = vmatmul.mubr.bf16.gmra.mrb[0].mxu0 %v4723
  %v4804 = vpop.f32.mrb[0].mxu0
  %v4805 = vadd.f32 0.0, %v4804
  %v4806 = vpop.f32.mrb[0].mxu0
  %v4807 = vpop.f32.mrb[0].mxu0
  %v4808 = vadd.f32 0.0, %v4807
  %v4809 = vpop.f32.mrb[0].mxu0
  %4810 = vmatprep.mubr.bf16.mxu0 0
  %4811 = vmatmul.mubr.bf16.gmra.mrb[0].mxu0 %v4726
  %v4812 = vpop.f32.mrb[0].mxu0
  %v4813 = vadd.f32 0.0, %v4812
  %v4814 = vpop.f32.mrb[0].mxu0
  %v4815 = vpop.f32.mrb[0].mxu0
  %v4816 = vadd.f32 0.0, %v4815
  %v4817 = vpop.f32.mrb[0].mxu0
  %4818 = vmatprep.mubr.bf16.mxu0 0
  %4819 = vmatmul.mubr.bf16.gmra.mrb[0].mxu0 %v4729
  %v4820 = vpop.f32.mrb[0].mxu0
  %v4821 = vadd.f32 0.0, %v4820
  %v4822 = vpop.f32.mrb[0].mxu0
  %v4823 = vpop.f32.mrb[0].mxu0
  %v4824 = vadd.f32 0.0, %v4823
  %v4825 = vpop.f32.mrb[0].mxu0
  %4826 = vmatprep.mubr.bf16.mxu0 0
  %4827 = vmatmul.mubr.bf16.gmra.mrb[0].mxu0 %v4732
  %v4828 = vpop.f32.mrb[0].mxu0
  %v4829 = vadd.f32 0.0, %v4828
  %v4830 = vpop.f32.mrb[0].mxu0
  %v4831 = vpop.f32.mrb[0].mxu0
  %v4832 = vadd.f32 0.0, %v4831
  %v4833 = vpop.f32.mrb[0].mxu0
  %4834 = vmatprep.mubr.bf16.mxu0 0
  %4835 = vmatmul.mubr.bf16.gmra.mrb[0].mxu0 %v4735
  %v4836 = vpop.f32.mrb[0].mxu0
  %v4837 = vadd.f32 0.0, %v4836
  %v4838 = vpop.f32.mrb[0].mxu0
  %v4839 = vpop.f32.mrb[0].mxu0
  %v4840 = vadd.f32 0.0, %v4839
  %v4841 = vpop.f32.mrb[0].mxu0
  %4842 = vmatprep.mubr.bf16.mxu0 0
  %4843 = vmatmul.mubr.bf16.gmra.mrb[0].mxu0 %v4738
  %v4844 = vpop.f32.mrb[0].mxu0
  %v4845 = vadd.f32 0.0, %v4844
  %v4846 = vpop.f32.mrb[0].mxu0
  %v4847 = vpop.f32.mrb[0].mxu0
  %v4848 = vadd.f32 0.0, %v4847
  %v4849 = vpop.f32.mrb[0].mxu0
  %4850 = vmatprep.mubr.bf16.mxu0 0
  %4851 = vmatmul.mubr.bf16.gmra.mrb[0].mxu0 %v4741
  %v4852 = vpop.f32.mrb[0].mxu0
  %v4853 = vadd.f32 0.0, %v4852
  %v4854 = vpop.f32.mrb[0].mxu0
  %v4855 = vpop.f32.mrb[0].mxu0
  %v4856 = vadd.f32 0.0, %v4855
  %v4857 = vpop.f32.mrb[0].mxu0
  %4858 = vmatprep.mubr.bf16.mxu0 0
  %4859 = vmatmul.mubr.bf16.gmra.mrb[0].mxu0 %v4744
  %v4860 = vpop.f32.mrb[0].mxu0
  %v4861 = vadd.f32 0.0, %v4860
  %v4862 = vpop.f32.mrb[0].mxu0
  %v4863 = vpop.f32.mrb[0].mxu0
  %v4864 = vadd.f32 0.0, %v4863
  %v4865 = vpop.f32.mrb[0].mxu0
  %4866 = vdwg.mxu0
  %v4867 = vmul.f32 %v4805, 0.35355338
  %v4868 = vmul.f32 %v4808, 0.35355338
  %v4869 = vmul.f32 %v4813, 0.35355338
  %v4870 = vmul.f32 %v4816, 0.35355338
  %v4871 = vmul.f32 %v4821, 0.35355338
  %v4872 = vmul.f32 %v4824, 0.35355338
  %v4873 = vmul.f32 %v4829, 0.35355338
  %v4874 = vmul.f32 %v4832, 0.35355338
  %v4875 = vmul.f32 %v4837, 0.35355338
  %v4876 = vmul.f32 %v4840, 0.35355338
  %v4877 = vmul.f32 %v4845, 0.35355338
  %v4878 = vmul.f32 %v4848, 0.35355338
  %v4879 = vmul.f32 %v4853, 0.35355338
  %v4880 = vmul.f32 %v4856, 0.35355338
  %v4881 = vmul.f32 %v4861, 0.35355338
  %v4882 = vmul.f32 %v4864, 0.35355338
  %v4883 = vadd.f32 %v4867, %v3032
  %v4884 = vadd.f32 %v4868, %v3032
  %v4885 = vadd.f32 %v4869, %v3032
  %v4886 = vadd.f32 %v4870, %v3032
  %v4887 = vadd.f32 %v4871, %v3032
  %v4888 = vadd.f32 %v4872, %v3032
  %v4889 = vadd.f32 %v4873, %v3032
  %v4890 = vadd.f32 %v4874, %v3032
  %v4891 = vadd.f32 %v4875, %v3032
  %v4892 = vadd.f32 %v4876, %v3032
  %v4893 = vadd.f32 %v4877, %v3032
  %v4894 = vadd.f32 %v4878, %v3032
  %v4895 = vadd.f32 %v4879, %v3032
  %v4896 = vadd.f32 %v4880, %v3032
  %v4897 = vadd.f32 %v4881, %v3032
  %v4898 = vadd.f32 %v4882, %v3032
  %4899 = vmax.xlane.f32.xlu0 %v4883
  %v4900 = vpop.xlane.xlu0 %4899
  %4901 = vmax.xlane.f32.xlu0 %v4884
  %v4902 = vpop.xlane.xlu0 %4901
  %4903 = vmax.xlane.f32.xlu0 %v4885
  %v4904 = vpop.xlane.xlu0 %4903
  %4905 = vmax.xlane.f32.xlu0 %v4886
  %v4906 = vpop.xlane.xlu0 %4905
  %4907 = vmax.xlane.f32.xlu0 %v4887
  %v4908 = vpop.xlane.xlu0 %4907
  %4909 = vmax.xlane.f32.xlu0 %v4888
  %v4910 = vpop.xlane.xlu0 %4909
  %4911 = vmax.xlane.f32.xlu0 %v4889
  %v4912 = vpop.xlane.xlu0 %4911
  %4913 = vmax.xlane.f32.xlu0 %v4890
  %v4914 = vpop.xlane.xlu0 %4913
  %4915 = vmax.xlane.f32.xlu0 %v4891
  %v4916 = vpop.xlane.xlu0 %4915
  %4917 = vmax.xlane.f32.xlu0 %v4892
  %v4918 = vpop.xlane.xlu0 %4917
  %4919 = vmax.xlane.f32.xlu0 %v4893
  %v4920 = vpop.xlane.xlu0 %4919
  %4921 = vmax.xlane.f32.xlu0 %v4894
  %v4922 = vpop.xlane.xlu0 %4921
  %4923 = vmax.xlane.f32.xlu0 %v4895
  %v4924 = vpop.xlane.xlu0 %4923
  %4925 = vmax.xlane.f32.xlu0 %v4896
  %v4926 = vpop.xlane.xlu0 %4925
  %4927 = vmax.xlane.f32.xlu0 %v4897
  %v4928 = vpop.xlane.xlu0 %4927
  %4929 = vmax.xlane.f32.xlu0 %v4898
  %v4930 = vpop.xlane.xlu0 %4929
  %v4931 = vsub.f32 %v4883, %v4900
  %v4932 = vsub.f32 %v4884, %v4902
  %v4933 = vsub.f32 %v4885, %v4904
  %v4934 = vsub.f32 %v4886, %v4906
  %v4935 = vsub.f32 %v4887, %v4908
  %v4936 = vsub.f32 %v4888, %v4910
  %v4937 = vsub.f32 %v4889, %v4912
  %v4938 = vsub.f32 %v4890, %v4914
  %v4939 = vsub.f32 %v4891, %v4916
  %v4940 = vsub.f32 %v4892, %v4918
  %v4941 = vsub.f32 %v4893, %v4920
  %v4942 = vsub.f32 %v4894, %v4922
  %v4943 = vsub.f32 %v4895, %v4924
  %v4944 = vsub.f32 %v4896, %v4926
  %v4945 = vsub.f32 %v4897, %v4928
  %v4946 = vsub.f32 %v4898, %v4930
  %v4947 = vmul.f32 %v4931, 1.442695
  %v4948 = vpow.pop %v4947
  %v4949 = vmul.f32 %v4932, 1.442695
  %v4950 = vpow.pop %v4949
  %v4951 = vmul.f32 %v4933, 1.442695
  %v4952 = vpow.pop %v4951
  %v4953 = vmul.f32 %v4934, 1.442695
  %v4954 = vpow.pop %v4953
  %v4955 = vmul.f32 %v4935, 1.442695
  %v4956 = vpow.pop %v4955
  %v4957 = vmul.f32 %v4936, 1.442695
  %v4958 = vpow.pop %v4957
  %v4959 = vmul.f32 %v4937, 1.442695
  %v4960 = vpow.pop %v4959
  %v4961 = vmul.f32 %v4938, 1.442695
  %v4962 = vpow.pop %v4961
  %v4963 = vmul.f32 %v4939, 1.442695
  %v4964 = vpow.pop %v4963
  %v4965 = vmul.f32 %v4940, 1.442695
  %v4966 = vpow.pop %v4965
  %v4967 = vmul.f32 %v4941, 1.442695
  %v4968 = vpow.pop %v4967
  %v4969 = vmul.f32 %v4942, 1.442695
  %v4970 = vpow.pop %v4969
  %v4971 = vmul.f32 %v4943, 1.442695
  %v4972 = vpow.pop %v4971
  %v4973 = vmul.f32 %v4944, 1.442695
  %v4974 = vpow.pop %v4973
  %v4975 = vmul.f32 %v4945, 1.442695
  %v4976 = vpow.pop %v4975
  %v4977 = vmul.f32 %v4946, 1.442695
  %v4978 = vpow.pop %v4977
  %4979 = vadd.xlane.f32.xlu0 %v4948
  %v4980 = vpop.xlane.xlu0 %4979
  %4981 = vadd.xlane.f32.xlu0 %v4950
  %v4982 = vpop.xlane.xlu0 %4981
  %4983 = vadd.xlane.f32.xlu0 %v4952
  %v4984 = vpop.xlane.xlu0 %4983
  %4985 = vadd.xlane.f32.xlu0 %v4954
  %v4986 = vpop.xlane.xlu0 %4985
  %4987 = vadd.xlane.f32.xlu0 %v4956
  %v4988 = vpop.xlane.xlu0 %4987
  %4989 = vadd.xlane.f32.xlu0 %v4958
  %v4990 = vpop.xlane.xlu0 %4989
  %4991 = vadd.xlane.f32.xlu0 %v4960
  %v4992 = vpop.xlane.xlu0 %4991
  %4993 = vadd.xlane.f32.xlu0 %v4962
  %v4994 = vpop.xlane.xlu0 %4993
  %4995 = vadd.xlane.f32.xlu0 %v4964
  %v4996 = vpop.xlane.xlu0 %4995
  %4997 = vadd.xlane.f32.xlu0 %v4966
  %v4998 = vpop.xlane.xlu0 %4997
  %4999 = vadd.xlane.f32.xlu0 %v4968
  %v5000 = vpop.xlane.xlu0 %4999
  %5001 = vadd.xlane.f32.xlu0 %v4970
  %v5002 = vpop.xlane.xlu0 %5001
  %5003 = vadd.xlane.f32.xlu0 %v4972
  %v5004 = vpop.xlane.xlu0 %5003
  %5005 = vadd.xlane.f32.xlu0 %v4974
  %v5006 = vpop.xlane.xlu0 %5005
  %5007 = vadd.xlane.f32.xlu0 %v4976
  %v5008 = vpop.xlane.xlu0 %5007
  %5009 = vadd.xlane.f32.xlu0 %v4978
  %v5010 = vpop.xlane.xlu0 %5009
  %v5011 = vpack.c.bf16 %v4950, %v4948
  %v5012 = vpack.c.bf16 %v4954, %v4952
  %v5013 = vpack.c.bf16 %v4958, %v4956
  %v5014 = vpack.c.bf16 %v4962, %v4960
  %v5015 = vpack.c.bf16 %v4966, %v4964
  %v5016 = vpack.c.bf16 %v4970, %v4968
  %v5017 = vpack.c.bf16 %v4974, %v4972
  %v5018 = vpack.c.bf16 %v4978, %v4976
  %5019 = vrot.lane.b32.xlu0 %v2835, 40
  %v5020 = vpop.permute.xlu0 %5019
  %5021 = vrot.lane.b32.xlu0 %v2836, 40
  %v5022 = vpop.permute.xlu0 %5021
  %5023 = vrot.lane.b32.xlu0 %v2837, 40
  %v5024 = vpop.permute.xlu0 %5023
  %5025 = vrot.lane.b32.xlu0 %v2838, 40
  %v5026 = vpop.permute.xlu0 %5025
  %5027 = vrot.lane.b32.xlu0 %v2839, 40
  %v5028 = vpop.permute.xlu0 %5027
  %5029 = vrot.lane.b32.xlu0 %v2840, 40
  %v5030 = vpop.permute.xlu0 %5029
  %5031 = vrot.lane.b32.xlu0 %v2841, 40
  %v5032 = vpop.permute.xlu0 %5031
  %5033 = vrot.lane.b32.xlu0 %v2842, 40
  %v5034 = vpop.permute.xlu0 %5033
  %5043 = vmatprep.subr.bf16.mxu0 0
  %5044 = vmatpush1.bf16.msra.mxu0 %v5020
  %5045 = vmatprep.subr.bf16.mxu0 0
  %5046 = vmatpush1.bf16.msra.mxu0 %v5022
  %5047 = vmatprep.subr.bf16.mxu0 0
  %5048 = vmatpush1.bf16.msra.mxu0 %v5024
  %5049 = vmatprep.subr.bf16.mxu0 0
  %5050 = vmatpush1.bf16.msra.mxu0 %v5026
  %5051 = vmatprep.subr.bf16.mxu0 0
  %5052 = vmatpush1.bf16.msra.mxu0 %v5028
  %5053 = vmatprep.subr.bf16.mxu0 0
  %5054 = vmatpush1.bf16.msra.mxu0 %v5030
  %5055 = vmatprep.subr.bf16.mxu0 0
  %5056 = vmatpush1.bf16.msra.mxu0 %v5032
  %5057 = vmatprep.subr.bf16.mxu0 0
  %5058 = vmatpush1.bf16.msra.mxu0 %v5034
  %5059 = vmatprep.subr.bf16.mxu0 0
  %5060 = vmatpush1.bf16.msra.mxu0 0
  %5061 = vmatprep.subr.bf16.mxu0 0
  %5062 = vmatpush1.bf16.msra.mxu0 0
  %5063 = vmatprep.subr.bf16.mxu0 0
  %5064 = vmatpush1.bf16.msra.mxu0 0
  %5065 = vmatprep.subr.bf16.mxu0 0
  %5066 = vmatpush1.bf16.msra.mxu0 0
  %5067 = vmatprep.subr.bf16.mxu0 0
  %5068 = vmatpush1.bf16.msra.mxu0 0
  %5069 = vmatprep.subr.bf16.mxu0 0
  %5070 = vmatpush1.bf16.msra.mxu0 0
  %5071 = vmatprep.subr.bf16.mxu0 0
  %5072 = vmatpush1.bf16.msra.mxu0 0
  %5073 = vmatprep.subr.bf16.mxu0 0
  %5074 = vmatpush1.bf16.msra.mxu0 0
  %5075 = vmatprep.mubr.bf16.mxu0 0
  %5076 = vmatmul.mubr.bf16.gmra.mrb[0].mxu0 %v5011
  %v5077 = vpop.f32.mrb[0].mxu0
  %v5078 = vadd.f32 0.0, %v5077
  %v5079 = vpop.f32.mrb[0].mxu0
  %v5080 = vpop.f32.mrb[0].mxu0
  %v5081 = vadd.f32 0.0, %v5080
  %v5082 = vpop.f32.mrb[0].mxu0
  %5083 = vmatprep.mubr.bf16.mxu0 0
  %5084 = vmatmul.mubr.bf16.gmra.mrb[0].mxu0 %v5012
  %v5085 = vpop.f32.mrb[0].mxu0
  %v5086 = vadd.f32 0.0, %v5085
  %v5087 = vpop.f32.mrb[0].mxu0
  %v5088 = vpop.f32.mrb[0].mxu0
  %v5089 = vadd.f32 0.0, %v5088
  %v5090 = vpop.f32.mrb[0].mxu0
  %5091 = vmatprep.mubr.bf16.mxu0 0
  %5092 = vmatmul.mubr.bf16.gmra.mrb[0].mxu0 %v5013
  %v5093 = vpop.f32.mrb[0].mxu0
  %v5094 = vadd.f32 0.0, %v5093
  %v5095 = vpop.f32.mrb[0].mxu0
  %v5096 = vpop.f32.mrb[0].mxu0
  %v5097 = vadd.f32 0.0, %v5096
  %v5098 = vpop.f32.mrb[0].mxu0
  %5099 = vmatprep.mubr.bf16.mxu0 0
  %5100 = vmatmul.mubr.bf16.gmra.mrb[0].mxu0 %v5014
  %v5101 = vpop.f32.mrb[0].mxu0
  %v5102 = vadd.f32 0.0, %v5101
  %v5103 = vpop.f32.mrb[0].mxu0
  %v5104 = vpop.f32.mrb[0].mxu0
  %v5105 = vadd.f32 0.0, %v5104
  %v5106 = vpop.f32.mrb[0].mxu0
  %5107 = vmatprep.mubr.bf16.mxu0 0
  %5108 = vmatmul.mubr.bf16.gmra.mrb[0].mxu0 %v5015
  %v5109 = vpop.f32.mrb[0].mxu0
  %v5110 = vadd.f32 0.0, %v5109
  %v5111 = vpop.f32.mrb[0].mxu0
  %v5112 = vpop.f32.mrb[0].mxu0
  %v5113 = vadd.f32 0.0, %v5112
  %v5114 = vpop.f32.mrb[0].mxu0
  %5115 = vmatprep.mubr.bf16.mxu0 0
  %5116 = vmatmul.mubr.bf16.gmra.mrb[0].mxu0 %v5016
  %v5117 = vpop.f32.mrb[0].mxu0
  %v5118 = vadd.f32 0.0, %v5117
  %v5119 = vpop.f32.mrb[0].mxu0
  %v5120 = vpop.f32.mrb[0].mxu0
  %v5121 = vadd.f32 0.0, %v5120
  %v5122 = vpop.f32.mrb[0].mxu0
  %5123 = vmatprep.mubr.bf16.mxu0 0
  %5124 = vmatmul.mubr.bf16.gmra.mrb[0].mxu0 %v5017
  %v5125 = vpop.f32.mrb[0].mxu0
  %v5126 = vadd.f32 0.0, %v5125
  %v5127 = vpop.f32.mrb[0].mxu0
  %v5128 = vpop.f32.mrb[0].mxu0
  %v5129 = vadd.f32 0.0, %v5128
  %v5130 = vpop.f32.mrb[0].mxu0
  %5131 = vmatprep.mubr.bf16.mxu0 0
  %5132 = vmatmul.mubr.bf16.gmra.mrb[0].mxu0 %v5018
  %v5133 = vpop.f32.mrb[0].mxu0
  %v5134 = vadd.f32 0.0, %v5133
  %v5135 = vpop.f32.mrb[0].mxu0
  %v5136 = vpop.f32.mrb[0].mxu0
  %v5137 = vadd.f32 0.0, %v5136
  %v5138 = vpop.f32.mrb[0].mxu0
  %5139 = vdwg.mxu0
  %v5140 = vrcp.pop %v4980
  %v5141 = vrcp.pop %v4982
  %v5142 = vrcp.pop %v4984
  %v5143 = vrcp.pop %v4986
  %v5144 = vrcp.pop %v4988
  %v5145 = vrcp.pop %v4990
  %v5146 = vrcp.pop %v4992
  %v5147 = vrcp.pop %v4994
  %v5148 = vrcp.pop %v4996
  %v5149 = vrcp.pop %v4998
  %v5150 = vrcp.pop %v5000
  %v5151 = vrcp.pop %v5002
  %v5152 = vrcp.pop %v5004
  %v5153 = vrcp.pop %v5006
  %v5154 = vrcp.pop %v5008
  %v5155 = vrcp.pop %v5010
  %v5156 = vmul.f32 %v5078, %v5140
  %v5157 = vmul.f32 %v5081, %v5141
  %v5158 = vmul.f32 %v5086, %v5142
  %v5159 = vmul.f32 %v5089, %v5143
  %v5160 = vmul.f32 %v5094, %v5144
  %v5161 = vmul.f32 %v5097, %v5145
  %v5162 = vmul.f32 %v5102, %v5146
  %v5163 = vmul.f32 %v5105, %v5147
  %v5164 = vmul.f32 %v5110, %v5148
  %v5165 = vmul.f32 %v5113, %v5149
  %v5166 = vmul.f32 %v5118, %v5150
  %v5167 = vmul.f32 %v5121, %v5151
  %v5168 = vmul.f32 %v5126, %v5152
  %v5169 = vmul.f32 %v5129, %v5153
  %v5170 = vmul.f32 %v5134, %v5154
  %v5171 = vmul.f32 %v5137, %v5155
  %v5172 = vpack.c.bf16 %v5157, %v5156
  %v5173 = vpack.c.bf16 %v5159, %v5158
  %v5174 = vpack.c.bf16 %v5161, %v5160
  %v5175 = vpack.c.bf16 %v5163, %v5162
  %v5176 = vpack.c.bf16 %v5165, %v5164
  %v5177 = vpack.c.bf16 %v5167, %v5166
  %v5178 = vpack.c.bf16 %v5169, %v5168
  %v5179 = vpack.c.bf16 %v5171, %v5170
  %v5181 = vsel %vm358, %v5172, 0
  %v5184 = vsel %vm358, %v5173, 0
  %v5187 = vsel %vm358, %v5174, 0
  %v5190 = vsel %vm358, %v5175, 0
  %v5193 = vsel %vm358, %v5176, 0
  %v5196 = vsel %vm358, %v5177, 0
  %v5199 = vsel %vm358, %v5178, 0
  %v5202 = vsel %vm358, %v5179, 0
  %5204 = vmatprep.subr.bf16.mxu0 0
  %5205 = vmatpush1.bf16.msra.mxu0 %v2718
  %5206 = vmatprep.subr.bf16.mxu0 0
  %5207 = vmatpush1.bf16.msra.mxu0 0
  %5208 = vmatprep.subr.bf16.mxu0 0
  %5209 = vmatpush1.bf16.msra.mxu0 0
  %5210 = vmatprep.subr.bf16.mxu0 0
  %5211 = vmatpush1.bf16.msra.mxu0 0
  %5212 = vmatprep.subr.bf16.mxu0 0
  %5213 = vmatpush1.bf16.msra.mxu0 0
  %5214 = vmatprep.subr.bf16.mxu0 0
  %5215 = vmatpush1.bf16.msra.mxu0 0
  %5216 = vmatprep.subr.bf16.mxu0 0
  %5217 = vmatpush1.bf16.msra.mxu0 0
  %5218 = vmatprep.subr.bf16.mxu0 0
  %5219 = vmatpush1.bf16.msra.mxu0 0
  %5220 = vmatprep.subr.bf16.mxu0 0
  %5221 = vmatpush1.bf16.msra.mxu0 0
  %5222 = vmatprep.subr.bf16.mxu0 0
  %5223 = vmatpush1.bf16.msra.mxu0 0
  %5224 = vmatprep.subr.bf16.mxu0 0
  %5225 = vmatpush1.bf16.msra.mxu0 0
  %5226 = vmatprep.subr.bf16.mxu0 0
  %5227 = vmatpush1.bf16.msra.mxu0 0
  %5228 = vmatprep.subr.bf16.mxu0 0
  %5229 = vmatpush1.bf16.msra.mxu0 0
  %5230 = vmatprep.subr.bf16.mxu0 0
  %5231 = vmatpush1.bf16.msra.mxu0 0
  %5232 = vmatprep.subr.bf16.mxu0 0
  %5233 = vmatpush1.bf16.msra.mxu0 0
  %5234 = vmatprep.subr.bf16.mxu0 0
  %5235 = vmatpush1.bf16.msra.mxu0 0
  %5236 = vmatprep.mubr.bf16.mxu0 0
  %5237 = vmatmul.mubr.bf16.gmra.mrb[0].mxu0 %v5181
  %v5238 = vpop.f32.mrb[0].mxu0
  %v5239 = vadd.f32 0.0, %v5238
  %v5240 = vpop.f32.mrb[0].mxu0
  %v5241 = vpop.f32.mrb[0].mxu0
  %v5242 = vadd.f32 0.0, %v5241
  %v5243 = vpop.f32.mrb[0].mxu0
  %5244 = vmatprep.mubr.bf16.mxu0 0
  %5245 = vmatmul.mubr.bf16.gmra.mrb[0].mxu0 %v5184
  %v5246 = vpop.f32.mrb[0].mxu0
  %v5247 = vadd.f32 0.0, %v5246
  %v5248 = vpop.f32.mrb[0].mxu0
  %v5249 = vpop.f32.mrb[0].mxu0
  %v5250 = vadd.f32 0.0, %v5249
  %v5251 = vpop.f32.mrb[0].mxu0
  %5252 = vmatprep.mubr.bf16.mxu0 0
  %5253 = vmatmul.mubr.bf16.gmra.mrb[0].mxu0 %v5187
  %v5254 = vpop.f32.mrb[0].mxu0
  %v5255 = vadd.f32 0.0, %v5254
  %v5256 = vpop.f32.mrb[0].mxu0
  %v5257 = vpop.f32.mrb[0].mxu0
  %v5258 = vadd.f32 0.0, %v5257
  %v5259 = vpop.f32.mrb[0].mxu0
  %5260 = vmatprep.mubr.bf16.mxu0 0
  %5261 = vmatmul.mubr.bf16.gmra.mrb[0].mxu0 %v5190
  %v5262 = vpop.f32.mrb[0].mxu0
  %v5263 = vadd.f32 0.0, %v5262
  %v5264 = vpop.f32.mrb[0].mxu0
  %v5265 = vpop.f32.mrb[0].mxu0
  %v5266 = vadd.f32 0.0, %v5265
  %v5267 = vpop.f32.mrb[0].mxu0
  %5268 = vmatprep.mubr.bf16.mxu0 0
  %5269 = vmatmul.mubr.bf16.gmra.mrb[0].mxu0 %v5193
  %v5270 = vpop.f32.mrb[0].mxu0
  %v5271 = vadd.f32 0.0, %v5270
  %v5272 = vpop.f32.mrb[0].mxu0
  %v5273 = vpop.f32.mrb[0].mxu0
  %v5274 = vadd.f32 0.0, %v5273
  %v5275 = vpop.f32.mrb[0].mxu0
  %5276 = vmatprep.mubr.bf16.mxu0 0
  %5277 = vmatmul.mubr.bf16.gmra.mrb[0].mxu0 %v5196
  %v5278 = vpop.f32.mrb[0].mxu0
  %v5279 = vadd.f32 0.0, %v5278
  %v5280 = vpop.f32.mrb[0].mxu0
  %v5281 = vpop.f32.mrb[0].mxu0
  %v5282 = vadd.f32 0.0, %v5281
  %v5283 = vpop.f32.mrb[0].mxu0
  %5284 = vmatprep.mubr.bf16.mxu0 0
  %5285 = vmatmul.mubr.bf16.gmra.mrb[0].mxu0 %v5199
  %v5286 = vpop.f32.mrb[0].mxu0
  %v5287 = vadd.f32 0.0, %v5286
  %v5288 = vpop.f32.mrb[0].mxu0
  %v5289 = vpop.f32.mrb[0].mxu0
  %v5290 = vadd.f32 0.0, %v5289
  %v5291 = vpop.f32.mrb[0].mxu0
  %5292 = vmatprep.mubr.bf16.mxu0 0
  %5293 = vmatmul.mubr.bf16.gmra.mrb[0].mxu0 %v5202
  %v5294 = vpop.f32.mrb[0].mxu0
  %v5295 = vadd.f32 0.0, %v5294
  %v5296 = vpop.f32.mrb[0].mxu0
  %v5297 = vpop.f32.mrb[0].mxu0
  %v5298 = vadd.f32 0.0, %v5297
  %v5299 = vpop.f32.mrb[0].mxu0
  %5300 = vdwg.mxu0
  %v5301 = vadd.f32 %v4674, %v5239
  %v5302 = vadd.f32 %v4675, %v5242
  %v5303 = vadd.f32 %v4676, %v5247
  %v5304 = vadd.f32 %v4677, %v5250
  %v5305 = vadd.f32 %v4678, %v5255
  %v5306 = vadd.f32 %v4679, %v5258
  %v5307 = vadd.f32 %v4680, %v5263
  %v5308 = vadd.f32 %v4681, %v5266
  %v5309 = vadd.f32 %v4682, %v5271
  %v5310 = vadd.f32 %v4683, %v5274
  %v5311 = vadd.f32 %v4684, %v5279
  %v5312 = vadd.f32 %v4685, %v5282
  %v5313 = vadd.f32 %v4686, %v5287
  %v5314 = vadd.f32 %v4687, %v5290
  %v5315 = vadd.f32 %v4688, %v5295
  %v5316 = vadd.f32 %v4689, %v5298
  %v5317 = vadd.f32 %v54, %v2817
  %v5318 = vadd.f32 %v55, %v2818
  %v5319 = vadd.f32 %v56, %v2819
  %v5320 = vadd.f32 %v57, %v2820
  %v5321 = vadd.f32 %v58, %v2821
  %v5322 = vadd.f32 %v59, %v2822
  %v5323 = vadd.f32 %v60, %v2823
  %v5324 = vadd.f32 %v61, %v2824
  %v5325 = vadd.f32 %v62, %v2825
  %v5326 = vadd.f32 %v63, %v2826
  %v5327 = vadd.f32 %v64, %v2827
  %v5328 = vadd.f32 %v65, %v2828
  %v5329 = vadd.f32 %v66, %v2829
  %v5330 = vadd.f32 %v67, %v2830
  %v5331 = vadd.f32 %v68, %v2831
  %v5332 = vadd.f32 %v69, %v2832
  %v5333 = vadd.f32 %v70, %v5301
  %v5334 = vadd.f32 %v71, %v5302
  %v5335 = vadd.f32 %v72, %v5303
  %v5336 = vadd.f32 %v73, %v5304
  %v5337 = vadd.f32 %v74, %v5305
  %v5338 = vadd.f32 %v75, %v5306
  %v5339 = vadd.f32 %v76, %v5307
  %v5340 = vadd.f32 %v77, %v5308
  %v5341 = vadd.f32 %v78, %v5309
  %v5342 = vadd.f32 %v79, %v5310
  %v5343 = vadd.f32 %v80, %v5311
  %v5344 = vadd.f32 %v81, %v5312
  %v5345 = vadd.f32 %v82, %v5313
  %v5346 = vadd.f32 %v83, %v5314
  %v5347 = vadd.f32 %v84, %v5315
  %v5348 = vadd.f32 %v85, %v5316
  %v5349 = vld [vmem:[%s5] sm:$0x1]
  %v5351 = vlaneseq
  %v5352 = vshrl.u32 %v5351, 7
  %v5353 = vsub.s32 0, %v5352
  %v5354 = vrot.slane %v5349, %v5353
  %v5356 = vadd.f32 %v5317, %v5354
  %v5357 = vadd.f32 %v5318, %v5354
  %v5358 = vadd.f32 %v5319, %v5354
  %v5359 = vadd.f32 %v5320, %v5354
  %v5360 = vadd.f32 %v5321, %v5354
  %v5361 = vadd.f32 %v5322, %v5354
  %v5362 = vadd.f32 %v5323, %v5354
  %v5363 = vadd.f32 %v5324, %v5354
  %v5364 = vadd.f32 %v5325, %v5354
  %v5365 = vadd.f32 %v5326, %v5354
  %v5366 = vadd.f32 %v5327, %v5354
  %v5367 = vadd.f32 %v5328, %v5354
  %v5368 = vadd.f32 %v5329, %v5354
  %v5369 = vadd.f32 %v5330, %v5354
  %v5370 = vadd.f32 %v5331, %v5354
  %v5371 = vadd.f32 %v5332, %v5354
  %v5372 = vadd.f32 %v5333, %v5354
  %v5373 = vadd.f32 %v5334, %v5354
  %v5374 = vadd.f32 %v5335, %v5354
  %v5375 = vadd.f32 %v5336, %v5354
  %v5376 = vadd.f32 %v5337, %v5354
  %v5377 = vadd.f32 %v5338, %v5354
  %v5378 = vadd.f32 %v5339, %v5354
  %v5379 = vadd.f32 %v5340, %v5354
  %v5380 = vadd.f32 %v5341, %v5354
  %v5381 = vadd.f32 %v5342, %v5354
  %v5382 = vadd.f32 %v5343, %v5354
  %v5383 = vadd.f32 %v5344, %v5354
  %v5384 = vadd.f32 %v5345, %v5354
  %v5385 = vadd.f32 %v5346, %v5354
  %v5386 = vadd.f32 %v5347, %v5354
  %v5387 = vadd.f32 %v5348, %v5354
  %v5388 = vsel %vm115, %v5356, 0.0
  %5389 = vadd.xlane.f32.xlu0 %v5388
  %v5390 = vpop.xlane.xlu0 %5389
  %v5391 = vsel %vm115, %v5357, 0.0
  %5392 = vadd.xlane.f32.xlu0 %v5391
  %v5393 = vpop.xlane.xlu0 %5392
  %v5394 = vsel %vm115, %v5358, 0.0
  %5395 = vadd.xlane.f32.xlu0 %v5394
  %v5396 = vpop.xlane.xlu0 %5395
  %v5397 = vsel %vm115, %v5359, 0.0
  %5398 = vadd.xlane.f32.xlu0 %v5397
  %v5399 = vpop.xlane.xlu0 %5398
  %v5400 = vsel %vm115, %v5360, 0.0
  %5401 = vadd.xlane.f32.xlu0 %v5400
  %v5402 = vpop.xlane.xlu0 %5401
  %v5403 = vsel %vm115, %v5361, 0.0
  %5404 = vadd.xlane.f32.xlu0 %v5403
  %v5405 = vpop.xlane.xlu0 %5404
  %v5406 = vsel %vm115, %v5362, 0.0
  %5407 = vadd.xlane.f32.xlu0 %v5406
  %v5408 = vpop.xlane.xlu0 %5407
  %v5409 = vsel %vm115, %v5363, 0.0
  %5410 = vadd.xlane.f32.xlu0 %v5409
  %v5411 = vpop.xlane.xlu0 %5410
  %v5412 = vsel %vm115, %v5364, 0.0
  %5413 = vadd.xlane.f32.xlu0 %v5412
  %v5414 = vpop.xlane.xlu0 %5413
  %v5415 = vsel %vm115, %v5365, 0.0
  %5416 = vadd.xlane.f32.xlu0 %v5415
  %v5417 = vpop.xlane.xlu0 %5416
  %v5418 = vsel %vm115, %v5366, 0.0
  %5419 = vadd.xlane.f32.xlu0 %v5418
  %v5420 = vpop.xlane.xlu0 %5419
  %v5421 = vsel %vm115, %v5367, 0.0
  %5422 = vadd.xlane.f32.xlu0 %v5421
  %v5423 = vpop.xlane.xlu0 %5422
  %v5424 = vsel %vm115, %v5368, 0.0
  %5425 = vadd.xlane.f32.xlu0 %v5424
  %v5426 = vpop.xlane.xlu0 %5425
  %v5427 = vsel %vm115, %v5369, 0.0
  %5428 = vadd.xlane.f32.xlu0 %v5427
  %v5429 = vpop.xlane.xlu0 %5428
  %v5430 = vsel %vm115, %v5370, 0.0
  %5431 = vadd.xlane.f32.xlu0 %v5430
  %v5432 = vpop.xlane.xlu0 %5431
  %v5433 = vsel %vm115, %v5371, 0.0
  %5434 = vadd.xlane.f32.xlu0 %v5433
  %v5435 = vpop.xlane.xlu0 %5434
  %v5436 = vsel %vm115, %v5372, 0.0
  %5437 = vadd.xlane.f32.xlu0 %v5436
  %v5438 = vpop.xlane.xlu0 %5437
  %v5439 = vsel %vm115, %v5373, 0.0
  %5440 = vadd.xlane.f32.xlu0 %v5439
  %v5441 = vpop.xlane.xlu0 %5440
  %v5442 = vsel %vm115, %v5374, 0.0
  %5443 = vadd.xlane.f32.xlu0 %v5442
  %v5444 = vpop.xlane.xlu0 %5443
  %v5445 = vsel %vm115, %v5375, 0.0
  %5446 = vadd.xlane.f32.xlu0 %v5445
  %v5447 = vpop.xlane.xlu0 %5446
  %v5448 = vsel %vm115, %v5376, 0.0
  %5449 = vadd.xlane.f32.xlu0 %v5448
  %v5450 = vpop.xlane.xlu0 %5449
  %v5451 = vsel %vm115, %v5377, 0.0
  %5452 = vadd.xlane.f32.xlu0 %v5451
  %v5453 = vpop.xlane.xlu0 %5452
  %v5454 = vsel %vm115, %v5378, 0.0
  %5455 = vadd.xlane.f32.xlu0 %v5454
  %v5456 = vpop.xlane.xlu0 %5455
  %v5457 = vsel %vm115, %v5379, 0.0
  %5458 = vadd.xlane.f32.xlu0 %v5457
  %v5459 = vpop.xlane.xlu0 %5458
  %v5460 = vsel %vm115, %v5380, 0.0
  %5461 = vadd.xlane.f32.xlu0 %v5460
  %v5462 = vpop.xlane.xlu0 %5461
  %v5463 = vsel %vm115, %v5381, 0.0
  %5464 = vadd.xlane.f32.xlu0 %v5463
  %v5465 = vpop.xlane.xlu0 %5464
  %v5466 = vsel %vm115, %v5382, 0.0
  %5467 = vadd.xlane.f32.xlu0 %v5466
  %v5468 = vpop.xlane.xlu0 %5467
  %v5469 = vsel %vm115, %v5383, 0.0
  %5470 = vadd.xlane.f32.xlu0 %v5469
  %v5471 = vpop.xlane.xlu0 %5470
  %v5472 = vsel %vm115, %v5384, 0.0
  %5473 = vadd.xlane.f32.xlu0 %v5472
  %v5474 = vpop.xlane.xlu0 %5473
  %v5475 = vsel %vm115, %v5385, 0.0
  %5476 = vadd.xlane.f32.xlu0 %v5475
  %v5477 = vpop.xlane.xlu0 %5476
  %v5478 = vsel %vm115, %v5386, 0.0
  %5479 = vadd.xlane.f32.xlu0 %v5478
  %v5480 = vpop.xlane.xlu0 %5479
  %v5481 = vsel %vm115, %v5387, 0.0
  %5482 = vadd.xlane.f32.xlu0 %v5481
  %v5483 = vpop.xlane.xlu0 %5482
  %v5484 = vrcp.pop 32.0
  %v5485 = vmul.f32 %v5390, %v5484
  %v5486 = vmul.f32 %v5393, %v5484
  %v5487 = vmul.f32 %v5396, %v5484
  %v5488 = vmul.f32 %v5399, %v5484
  %v5489 = vmul.f32 %v5402, %v5484
  %v5490 = vmul.f32 %v5405, %v5484
  %v5491 = vmul.f32 %v5408, %v5484
  %v5492 = vmul.f32 %v5411, %v5484
  %v5493 = vmul.f32 %v5414, %v5484
  %v5494 = vmul.f32 %v5417, %v5484
  %v5495 = vmul.f32 %v5420, %v5484
  %v5496 = vmul.f32 %v5423, %v5484
  %v5497 = vmul.f32 %v5426, %v5484
  %v5498 = vmul.f32 %v5429, %v5484
  %v5499 = vmul.f32 %v5432, %v5484
  %v5500 = vmul.f32 %v5435, %v5484
  %v5501 = vmul.f32 %v5438, %v5484
  %v5502 = vmul.f32 %v5441, %v5484
  %v5503 = vmul.f32 %v5444, %v5484
  %v5504 = vmul.f32 %v5447, %v5484
  %v5505 = vmul.f32 %v5450, %v5484
  %v5506 = vmul.f32 %v5453, %v5484
  %v5507 = vmul.f32 %v5456, %v5484
  %v5508 = vmul.f32 %v5459, %v5484
  %v5509 = vmul.f32 %v5462, %v5484
  %v5510 = vmul.f32 %v5465, %v5484
  %v5511 = vmul.f32 %v5468, %v5484
  %v5512 = vmul.f32 %v5471, %v5484
  %v5513 = vmul.f32 %v5474, %v5484
  %v5514 = vmul.f32 %v5477, %v5484
  %v5515 = vmul.f32 %v5480, %v5484
  %v5516 = vmul.f32 %v5483, %v5484
  %v5517 = vsub.f32 %v5356, %v5485
  %v5518 = vsub.f32 %v5357, %v5486
  %v5519 = vsub.f32 %v5358, %v5487
  %v5520 = vsub.f32 %v5359, %v5488
  %v5521 = vsub.f32 %v5360, %v5489
  %v5522 = vsub.f32 %v5361, %v5490
  %v5523 = vsub.f32 %v5362, %v5491
  %v5524 = vsub.f32 %v5363, %v5492
  %v5525 = vsub.f32 %v5364, %v5493
  %v5526 = vsub.f32 %v5365, %v5494
  %v5527 = vsub.f32 %v5366, %v5495
  %v5528 = vsub.f32 %v5367, %v5496
  %v5529 = vsub.f32 %v5368, %v5497
  %v5530 = vsub.f32 %v5369, %v5498
  %v5531 = vsub.f32 %v5370, %v5499
  %v5532 = vsub.f32 %v5371, %v5500
  %v5533 = vsub.f32 %v5372, %v5501
  %v5534 = vsub.f32 %v5373, %v5502
  %v5535 = vsub.f32 %v5374, %v5503
  %v5536 = vsub.f32 %v5375, %v5504
  %v5537 = vsub.f32 %v5376, %v5505
  %v5538 = vsub.f32 %v5377, %v5506
  %v5539 = vsub.f32 %v5378, %v5507
  %v5540 = vsub.f32 %v5379, %v5508
  %v5541 = vsub.f32 %v5380, %v5509
  %v5542 = vsub.f32 %v5381, %v5510
  %v5543 = vsub.f32 %v5382, %v5511
  %v5544 = vsub.f32 %v5383, %v5512
  %v5545 = vsub.f32 %v5384, %v5513
  %v5546 = vsub.f32 %v5385, %v5514
  %v5547 = vsub.f32 %v5386, %v5515
  %v5548 = vsub.f32 %v5387, %v5516
  %v5549 = vmul.f32 %v5517, %v5517
  %v5550 = vmul.f32 %v5518, %v5518
  %v5551 = vmul.f32 %v5519, %v5519
  %v5552 = vmul.f32 %v5520, %v5520
  %v5553 = vmul.f32 %v5521, %v5521
  %v5554 = vmul.f32 %v5522, %v5522
  %v5555 = vmul.f32 %v5523, %v5523
  %v5556 = vmul.f32 %v5524, %v5524
  %v5557 = vmul.f32 %v5525, %v5525
  %v5558 = vmul.f32 %v5526, %v5526
  %v5559 = vmul.f32 %v5527, %v5527
  %v5560 = vmul.f32 %v5528, %v5528
  %v5561 = vmul.f32 %v5529, %v5529
  %v5562 = vmul.f32 %v5530, %v5530
  %v5563 = vmul.f32 %v5531, %v5531
  %v5564 = vmul.f32 %v5532, %v5532
  %v5565 = vmul.f32 %v5533, %v5533
  %v5566 = vmul.f32 %v5534, %v5534
  %v5567 = vmul.f32 %v5535, %v5535
  %v5568 = vmul.f32 %v5536, %v5536
  %v5569 = vmul.f32 %v5537, %v5537
  %v5570 = vmul.f32 %v5538, %v5538
  %v5571 = vmul.f32 %v5539, %v5539
  %v5572 = vmul.f32 %v5540, %v5540
  %v5573 = vmul.f32 %v5541, %v5541
  %v5574 = vmul.f32 %v5542, %v5542
  %v5575 = vmul.f32 %v5543, %v5543
  %v5576 = vmul.f32 %v5544, %v5544
  %v5577 = vmul.f32 %v5545, %v5545
  %v5578 = vmul.f32 %v5546, %v5546
  %v5579 = vmul.f32 %v5547, %v5547
  %v5580 = vmul.f32 %v5548, %v5548
  %v5581 = vsel %vm115, %v5549, 0.0
  %5582 = vadd.xlane.f32.xlu0 %v5581
  %v5583 = vpop.xlane.xlu0 %5582
  %v5584 = vsel %vm115, %v5550, 0.0
  %5585 = vadd.xlane.f32.xlu0 %v5584
  %v5586 = vpop.xlane.xlu0 %5585
  %v5587 = vsel %vm115, %v5551, 0.0
  %5588 = vadd.xlane.f32.xlu0 %v5587
  %v5589 = vpop.xlane.xlu0 %5588
  %v5590 = vsel %vm115, %v5552, 0.0
  %5591 = vadd.xlane.f32.xlu0 %v5590
  %v5592 = vpop.xlane.xlu0 %5591
  %v5593 = vsel %vm115, %v5553, 0.0
  %5594 = vadd.xlane.f32.xlu0 %v5593
  %v5595 = vpop.xlane.xlu0 %5594
  %v5596 = vsel %vm115, %v5554, 0.0
  %5597 = vadd.xlane.f32.xlu0 %v5596
  %v5598 = vpop.xlane.xlu0 %5597
  %v5599 = vsel %vm115, %v5555, 0.0
  %5600 = vadd.xlane.f32.xlu0 %v5599
  %v5601 = vpop.xlane.xlu0 %5600
  %v5602 = vsel %vm115, %v5556, 0.0
  %5603 = vadd.xlane.f32.xlu0 %v5602
  %v5604 = vpop.xlane.xlu0 %5603
  %v5605 = vsel %vm115, %v5557, 0.0
  %5606 = vadd.xlane.f32.xlu0 %v5605
  %v5607 = vpop.xlane.xlu0 %5606
  %v5608 = vsel %vm115, %v5558, 0.0
  %5609 = vadd.xlane.f32.xlu0 %v5608
  %v5610 = vpop.xlane.xlu0 %5609
  %v5611 = vsel %vm115, %v5559, 0.0
  %5612 = vadd.xlane.f32.xlu0 %v5611
  %v5613 = vpop.xlane.xlu0 %5612
  %v5614 = vsel %vm115, %v5560, 0.0
  %5615 = vadd.xlane.f32.xlu0 %v5614
  %v5616 = vpop.xlane.xlu0 %5615
  %v5617 = vsel %vm115, %v5561, 0.0
  %5618 = vadd.xlane.f32.xlu0 %v5617
  %v5619 = vpop.xlane.xlu0 %5618
  %v5620 = vsel %vm115, %v5562, 0.0
  %5621 = vadd.xlane.f32.xlu0 %v5620
  %v5622 = vpop.xlane.xlu0 %5621
  %v5623 = vsel %vm115, %v5563, 0.0
  %5624 = vadd.xlane.f32.xlu0 %v5623
  %v5625 = vpop.xlane.xlu0 %5624
  %v5626 = vsel %vm115, %v5564, 0.0
  %5627 = vadd.xlane.f32.xlu0 %v5626
  %v5628 = vpop.xlane.xlu0 %5627
  %v5629 = vsel %vm115, %v5565, 0.0
  %5630 = vadd.xlane.f32.xlu0 %v5629
  %v5631 = vpop.xlane.xlu0 %5630
  %v5632 = vsel %vm115, %v5566, 0.0
  %5633 = vadd.xlane.f32.xlu0 %v5632
  %v5634 = vpop.xlane.xlu0 %5633
  %v5635 = vsel %vm115, %v5567, 0.0
  %5636 = vadd.xlane.f32.xlu0 %v5635
  %v5637 = vpop.xlane.xlu0 %5636
  %v5638 = vsel %vm115, %v5568, 0.0
  %5639 = vadd.xlane.f32.xlu0 %v5638
  %v5640 = vpop.xlane.xlu0 %5639
  %v5641 = vsel %vm115, %v5569, 0.0
  %5642 = vadd.xlane.f32.xlu0 %v5641
  %v5643 = vpop.xlane.xlu0 %5642
  %v5644 = vsel %vm115, %v5570, 0.0
  %5645 = vadd.xlane.f32.xlu0 %v5644
  %v5646 = vpop.xlane.xlu0 %5645
  %v5647 = vsel %vm115, %v5571, 0.0
  %5648 = vadd.xlane.f32.xlu0 %v5647
  %v5649 = vpop.xlane.xlu0 %5648
  %v5650 = vsel %vm115, %v5572, 0.0
  %5651 = vadd.xlane.f32.xlu0 %v5650
  %v5652 = vpop.xlane.xlu0 %5651
  %v5653 = vsel %vm115, %v5573, 0.0
  %5654 = vadd.xlane.f32.xlu0 %v5653
  %v5655 = vpop.xlane.xlu0 %5654
  %v5656 = vsel %vm115, %v5574, 0.0
  %5657 = vadd.xlane.f32.xlu0 %v5656
  %v5658 = vpop.xlane.xlu0 %5657
  %v5659 = vsel %vm115, %v5575, 0.0
  %5660 = vadd.xlane.f32.xlu0 %v5659
  %v5661 = vpop.xlane.xlu0 %5660
  %v5662 = vsel %vm115, %v5576, 0.0
  %5663 = vadd.xlane.f32.xlu0 %v5662
  %v5664 = vpop.xlane.xlu0 %5663
  %v5665 = vsel %vm115, %v5577, 0.0
  %5666 = vadd.xlane.f32.xlu0 %v5665
  %v5667 = vpop.xlane.xlu0 %5666
  %v5668 = vsel %vm115, %v5578, 0.0
  %5669 = vadd.xlane.f32.xlu0 %v5668
  %v5670 = vpop.xlane.xlu0 %5669
  %v5671 = vsel %vm115, %v5579, 0.0
  %5672 = vadd.xlane.f32.xlu0 %v5671
  %v5673 = vpop.xlane.xlu0 %5672
  %v5674 = vsel %vm115, %v5580, 0.0
  %5675 = vadd.xlane.f32.xlu0 %v5674
  %v5676 = vpop.xlane.xlu0 %5675
  %v5677 = vmul.f32 %v5583, %v5484
  %v5678 = vmul.f32 %v5586, %v5484
  %v5679 = vmul.f32 %v5589, %v5484
  %v5680 = vmul.f32 %v5592, %v5484
  %v5681 = vmul.f32 %v5595, %v5484
  %v5682 = vmul.f32 %v5598, %v5484
  %v5683 = vmul.f32 %v5601, %v5484
  %v5684 = vmul.f32 %v5604, %v5484
  %v5685 = vmul.f32 %v5607, %v5484
  %v5686 = vmul.f32 %v5610, %v5484
  %v5687 = vmul.f32 %v5613, %v5484
  %v5688 = vmul.f32 %v5616, %v5484
  %v5689 = vmul.f32 %v5619, %v5484
  %v5690 = vmul.f32 %v5622, %v5484
  %v5691 = vmul.f32 %v5625, %v5484
  %v5692 = vmul.f32 %v5628, %v5484
  %v5693 = vmul.f32 %v5631, %v5484
  %v5694 = vmul.f32 %v5634, %v5484
  %v5695 = vmul.f32 %v5637, %v5484
  %v5696 = vmul.f32 %v5640, %v5484
  %v5697 = vmul.f32 %v5643, %v5484
  %v5698 = vmul.f32 %v5646, %v5484
  %v5699 = vmul.f32 %v5649, %v5484
  %v5700 = vmul.f32 %v5652, %v5484
  %v5701 = vmul.f32 %v5655, %v5484
  %v5702 = vmul.f32 %v5658, %v5484
  %v5703 = vmul.f32 %v5661, %v5484
  %v5704 = vmul.f32 %v5664, %v5484
  %v5705 = vmul.f32 %v5667, %v5484
  %v5706 = vmul.f32 %v5670, %v5484
  %v5707 = vmul.f32 %v5673, %v5484
  %v5708 = vmul.f32 %v5676, %v5484
  %v5709 = vadd.f32 %v5677, 1e-05
  %v5710 = vadd.f32 %v5678, 1e-05
  %v5711 = vadd.f32 %v5679, 1e-05
  %v5712 = vadd.f32 %v5680, 1e-05
  %v5713 = vadd.f32 %v5681, 1e-05
  %v5714 = vadd.f32 %v5682, 1e-05
  %v5715 = vadd.f32 %v5683, 1e-05
  %v5716 = vadd.f32 %v5684, 1e-05
  %v5717 = vadd.f32 %v5685, 1e-05
  %v5718 = vadd.f32 %v5686, 1e-05
  %v5719 = vadd.f32 %v5687, 1e-05
  %v5720 = vadd.f32 %v5688, 1e-05
  %v5721 = vadd.f32 %v5689, 1e-05
  %v5722 = vadd.f32 %v5690, 1e-05
  %v5723 = vadd.f32 %v5691, 1e-05
  %v5724 = vadd.f32 %v5692, 1e-05
  %v5725 = vadd.f32 %v5693, 1e-05
  %v5726 = vadd.f32 %v5694, 1e-05
  %v5727 = vadd.f32 %v5695, 1e-05
  %v5728 = vadd.f32 %v5696, 1e-05
  %v5729 = vadd.f32 %v5697, 1e-05
  %v5730 = vadd.f32 %v5698, 1e-05
  %v5731 = vadd.f32 %v5699, 1e-05
  %v5732 = vadd.f32 %v5700, 1e-05
  %v5733 = vadd.f32 %v5701, 1e-05
  %v5734 = vadd.f32 %v5702, 1e-05
  %v5735 = vadd.f32 %v5703, 1e-05
  %v5736 = vadd.f32 %v5704, 1e-05
  %v5737 = vadd.f32 %v5705, 1e-05
  %v5738 = vadd.f32 %v5706, 1e-05
  %v5739 = vadd.f32 %v5707, 1e-05
  %v5740 = vadd.f32 %v5708, 1e-05
  %v5741 = vrsqrt.pop %v5709
  %v5742 = vrsqrt.pop %v5710
  %v5743 = vrsqrt.pop %v5711
  %v5744 = vrsqrt.pop %v5712
  %v5745 = vrsqrt.pop %v5713
  %v5746 = vrsqrt.pop %v5714
  %v5747 = vrsqrt.pop %v5715
  %v5748 = vrsqrt.pop %v5716
  %v5749 = vrsqrt.pop %v5717
  %v5750 = vrsqrt.pop %v5718
  %v5751 = vrsqrt.pop %v5719
  %v5752 = vrsqrt.pop %v5720
  %v5753 = vrsqrt.pop %v5721
  %v5754 = vrsqrt.pop %v5722
  %v5755 = vrsqrt.pop %v5723
  %v5756 = vrsqrt.pop %v5724
  %v5757 = vrsqrt.pop %v5725
  %v5758 = vrsqrt.pop %v5726
  %v5759 = vrsqrt.pop %v5727
  %v5760 = vrsqrt.pop %v5728
  %v5761 = vrsqrt.pop %v5729
  %v5762 = vrsqrt.pop %v5730
  %v5763 = vrsqrt.pop %v5731
  %v5764 = vrsqrt.pop %v5732
  %v5765 = vrsqrt.pop %v5733
  %v5766 = vrsqrt.pop %v5734
  %v5767 = vrsqrt.pop %v5735
  %v5768 = vrsqrt.pop %v5736
  %v5769 = vrsqrt.pop %v5737
  %v5770 = vrsqrt.pop %v5738
  %v5771 = vrsqrt.pop %v5739
  %v5772 = vrsqrt.pop %v5740
  %v5773 = vmul.f32 %v5517, %v5741
  %v5774 = vmul.f32 %v5518, %v5742
  %v5775 = vmul.f32 %v5519, %v5743
  %v5776 = vmul.f32 %v5520, %v5744
  %v5777 = vmul.f32 %v5521, %v5745
  %v5778 = vmul.f32 %v5522, %v5746
  %v5779 = vmul.f32 %v5523, %v5747
  %v5780 = vmul.f32 %v5524, %v5748
  %v5781 = vmul.f32 %v5525, %v5749
  %v5782 = vmul.f32 %v5526, %v5750
  %v5783 = vmul.f32 %v5527, %v5751
  %v5784 = vmul.f32 %v5528, %v5752
  %v5785 = vmul.f32 %v5529, %v5753
  %v5786 = vmul.f32 %v5530, %v5754
  %v5787 = vmul.f32 %v5531, %v5755
  %v5788 = vmul.f32 %v5532, %v5756
  %v5789 = vmul.f32 %v5533, %v5757
  %v5790 = vmul.f32 %v5534, %v5758
  %v5791 = vmul.f32 %v5535, %v5759
  %v5792 = vmul.f32 %v5536, %v5760
  %v5793 = vmul.f32 %v5537, %v5761
  %v5794 = vmul.f32 %v5538, %v5762
  %v5795 = vmul.f32 %v5539, %v5763
  %v5796 = vmul.f32 %v5540, %v5764
  %v5797 = vmul.f32 %v5541, %v5765
  %v5798 = vmul.f32 %v5542, %v5766
  %v5799 = vmul.f32 %v5543, %v5767
  %v5800 = vmul.f32 %v5544, %v5768
  %v5801 = vmul.f32 %v5545, %v5769
  %v5802 = vmul.f32 %v5546, %v5770
  %v5803 = vmul.f32 %v5547, %v5771
  %v5804 = vmul.f32 %v5548, %v5772
  %v5805 = vld [vmem:[%s6] sm:$0xff]
  %v5806 = vld [vmem:[%s6 + $0x8] sm:$0xff]
  %v5807 = vld [vmem:[%s6 + $0x10] sm:$0xff]
  %v5808 = vld [vmem:[%s6 + $0x18] sm:$0xff]
  %v5809 = vpack.c.bf16 %v5774, %v5773
  %v5810 = vpack.c.bf16 %v5776, %v5775
  %v5811 = vpack.c.bf16 %v5778, %v5777
  %v5812 = vpack.c.bf16 %v5780, %v5779
  %v5813 = vpack.c.bf16 %v5782, %v5781
  %v5814 = vpack.c.bf16 %v5784, %v5783
  %v5815 = vpack.c.bf16 %v5786, %v5785
  %v5816 = vpack.c.bf16 %v5788, %v5787
  %v5817 = vpack.c.bf16 %v5790, %v5789
  %v5818 = vpack.c.bf16 %v5792, %v5791
  %v5819 = vpack.c.bf16 %v5794, %v5793
  %v5820 = vpack.c.bf16 %v5796, %v5795
  %v5821 = vpack.c.bf16 %v5798, %v5797
  %v5822 = vpack.c.bf16 %v5800, %v5799
  %v5823 = vpack.c.bf16 %v5802, %v5801
  %v5824 = vpack.c.bf16 %v5804, %v5803
  %v5825 = vpack.c.bf16 %v5806, %v5805
  %v5826 = vpack.c.bf16 %v5808, %v5807
  %v5827 = vld [vmem:[%s7] sm:$0x1]
  %v5829 = vlaneseq
  %v5830 = vshrl.u32 %v5829, 7
  %v5831 = vsub.s32 0, %v5830
  %v5832 = vrot.slane %v5827, %v5831
  %v5835 = vsel %vm115, %v5809, 0
  %v5838 = vsel %vm115, %v5810, 0
  %v5841 = vsel %vm115, %v5811, 0
  %v5844 = vsel %vm115, %v5812, 0
  %v5847 = vsel %vm115, %v5813, 0
  %v5850 = vsel %vm115, %v5814, 0
  %v5853 = vsel %vm115, %v5815, 0
  %v5856 = vsel %vm115, %v5816, 0
  %v5859 = vsel %vm115, %v5817, 0
  %v5862 = vsel %vm115, %v5818, 0
  %v5865 = vsel %vm115, %v5819, 0
  %v5868 = vsel %vm115, %v5820, 0
  %v5871 = vsel %vm115, %v5821, 0
  %v5874 = vsel %vm115, %v5822, 0
  %v5877 = vsel %vm115, %v5823, 0
  %v5880 = vsel %vm115, %v5824, 0
  %5882 = vmatprep.subr.bf16.mxu0 0
  %5883 = vmatpush1.bf16.msra.mxu0 %v5825
  %5884 = vmatprep.subr.bf16.mxu0 0
  %5885 = vmatpush1.bf16.msra.mxu0 %v5826
  %5886 = vmatprep.subr.bf16.mxu0 0
  %5887 = vmatpush1.bf16.msra.mxu0 0
  %5888 = vmatprep.subr.bf16.mxu0 0
  %5889 = vmatpush1.bf16.msra.mxu0 0
  %5890 = vmatprep.subr.bf16.mxu0 0
  %5891 = vmatpush1.bf16.msra.mxu0 0
  %5892 = vmatprep.subr.bf16.mxu0 0
  %5893 = vmatpush1.bf16.msra.mxu0 0
  %5894 = vmatprep.subr.bf16.mxu0 0
  %5895 = vmatpush1.bf16.msra.mxu0 0
  %5896 = vmatprep.subr.bf16.mxu0 0
  %5897 = vmatpush1.bf16.msra.mxu0 0
  %5898 = vmatprep.subr.bf16.mxu0 0
  %5899 = vmatpush1.bf16.msra.mxu0 0
  %5900 = vmatprep.subr.bf16.mxu0 0
  %5901 = vmatpush1.bf16.msra.mxu0 0
  %5902 = vmatprep.subr.bf16.mxu0 0
  %5903 = vmatpush1.bf16.msra.mxu0 0
  %5904 = vmatprep.subr.bf16.mxu0 0
  %5905 = vmatpush1.bf16.msra.mxu0 0
  %5906 = vmatprep.subr.bf16.mxu0 0
  %5907 = vmatpush1.bf16.msra.mxu0 0
  %5908 = vmatprep.subr.bf16.mxu0 0
  %5909 = vmatpush1.bf16.msra.mxu0 0
  %5910 = vmatprep.subr.bf16.mxu0 0
  %5911 = vmatpush1.bf16.msra.mxu0 0
  %5912 = vmatprep.subr.bf16.mxu0 0
  %5913 = vmatpush1.bf16.msra.mxu0 0
  %5914 = vmatprep.mubr.bf16.mxu0 0
  %5915 = vmatmul.mubr.bf16.gmra.mrb[0].mxu0 %v5835
  %v5916 = vpop.f32.mrb[0].mxu0
  %v5917 = vadd.f32 %v5832, %v5916
  %v5918 = vpop.f32.mrb[0].mxu0
  %v5919 = vpop.f32.mrb[0].mxu0
  %v5920 = vadd.f32 %v5832, %v5919
  %v5921 = vpop.f32.mrb[0].mxu0
  %5922 = vmatprep.mubr.bf16.mxu0 0
  %5923 = vmatmul.mubr.bf16.gmra.mrb[0].mxu0 %v5838
  %v5924 = vpop.f32.mrb[0].mxu0
  %v5925 = vadd.f32 %v5832, %v5924
  %v5926 = vpop.f32.mrb[0].mxu0
  %v5927 = vpop.f32.mrb[0].mxu0
  %v5928 = vadd.f32 %v5832, %v5927
  %v5929 = vpop.f32.mrb[0].mxu0
  %5930 = vmatprep.mubr.bf16.mxu0 0
  %5931 = vmatmul.mubr.bf16.gmra.mrb[0].mxu0 %v5841
  %v5932 = vpop.f32.mrb[0].mxu0
  %v5933 = vadd.f32 %v5832, %v5932
  %v5934 = vpop.f32.mrb[0].mxu0
  %v5935 = vpop.f32.mrb[0].mxu0
  %v5936 = vadd.f32 %v5832, %v5935
  %v5937 = vpop.f32.mrb[0].mxu0
  %5938 = vmatprep.mubr.bf16.mxu0 0
  %5939 = vmatmul.mubr.bf16.gmra.mrb[0].mxu0 %v5844
  %v5940 = vpop.f32.mrb[0].mxu0
  %v5941 = vadd.f32 %v5832, %v5940
  %v5942 = vpop.f32.mrb[0].mxu0
  %v5943 = vpop.f32.mrb[0].mxu0
  %v5944 = vadd.f32 %v5832, %v5943
  %v5945 = vpop.f32.mrb[0].mxu0
  %5946 = vmatprep.mubr.bf16.mxu0 0
  %5947 = vmatmul.mubr.bf16.gmra.mrb[0].mxu0 %v5847
  %v5948 = vpop.f32.mrb[0].mxu0
  %v5949 = vadd.f32 %v5832, %v5948
  %v5950 = vpop.f32.mrb[0].mxu0
  %v5951 = vpop.f32.mrb[0].mxu0
  %v5952 = vadd.f32 %v5832, %v5951
  %v5953 = vpop.f32.mrb[0].mxu0
  %5954 = vmatprep.mubr.bf16.mxu0 0
  %5955 = vmatmul.mubr.bf16.gmra.mrb[0].mxu0 %v5850
  %v5956 = vpop.f32.mrb[0].mxu0
  %v5957 = vadd.f32 %v5832, %v5956
  %v5958 = vpop.f32.mrb[0].mxu0
  %v5959 = vpop.f32.mrb[0].mxu0
  %v5960 = vadd.f32 %v5832, %v5959
  %v5961 = vpop.f32.mrb[0].mxu0
  %5962 = vmatprep.mubr.bf16.mxu0 0
  %5963 = vmatmul.mubr.bf16.gmra.mrb[0].mxu0 %v5853
  %v5964 = vpop.f32.mrb[0].mxu0
  %v5965 = vadd.f32 %v5832, %v5964
  %v5966 = vpop.f32.mrb[0].mxu0
  %v5967 = vpop.f32.mrb[0].mxu0
  %v5968 = vadd.f32 %v5832, %v5967
  %v5969 = vpop.f32.mrb[0].mxu0
  %5970 = vmatprep.mubr.bf16.mxu0 0
  %5971 = vmatmul.mubr.bf16.gmra.mrb[0].mxu0 %v5856
  %v5972 = vpop.f32.mrb[0].mxu0
  %v5973 = vadd.f32 %v5832, %v5972
  %v5974 = vpop.f32.mrb[0].mxu0
  %v5975 = vpop.f32.mrb[0].mxu0
  %v5976 = vadd.f32 %v5832, %v5975
  %v5977 = vpop.f32.mrb[0].mxu0
  %5978 = vmatprep.mubr.bf16.mxu0 0
  %5979 = vmatmul.mubr.bf16.gmra.mrb[0].mxu0 %v5859
  %v5980 = vpop.f32.mrb[0].mxu0
  %v5981 = vadd.f32 %v5832, %v5980
  %v5982 = vpop.f32.mrb[0].mxu0
  %v5983 = vpop.f32.mrb[0].mxu0
  %v5984 = vadd.f32 %v5832, %v5983
  %v5985 = vpop.f32.mrb[0].mxu0
  %5986 = vmatprep.mubr.bf16.mxu0 0
  %5987 = vmatmul.mubr.bf16.gmra.mrb[0].mxu0 %v5862
  %v5988 = vpop.f32.mrb[0].mxu0
  %v5989 = vadd.f32 %v5832, %v5988
  %v5990 = vpop.f32.mrb[0].mxu0
  %v5991 = vpop.f32.mrb[0].mxu0
  %v5992 = vadd.f32 %v5832, %v5991
  %v5993 = vpop.f32.mrb[0].mxu0
  %5994 = vmatprep.mubr.bf16.mxu0 0
  %5995 = vmatmul.mubr.bf16.gmra.mrb[0].mxu0 %v5865
  %v5996 = vpop.f32.mrb[0].mxu0
  %v5997 = vadd.f32 %v5832, %v5996
  %v5998 = vpop.f32.mrb[0].mxu0
  %v5999 = vpop.f32.mrb[0].mxu0
  %v6000 = vadd.f32 %v5832, %v5999
  %v6001 = vpop.f32.mrb[0].mxu0
  %6002 = vmatprep.mubr.bf16.mxu0 0
  %6003 = vmatmul.mubr.bf16.gmra.mrb[0].mxu0 %v5868
  %v6004 = vpop.f32.mrb[0].mxu0
  %v6005 = vadd.f32 %v5832, %v6004
  %v6006 = vpop.f32.mrb[0].mxu0
  %v6007 = vpop.f32.mrb[0].mxu0
  %v6008 = vadd.f32 %v5832, %v6007
  %v6009 = vpop.f32.mrb[0].mxu0
  %6010 = vmatprep.mubr.bf16.mxu0 0
  %6011 = vmatmul.mubr.bf16.gmra.mrb[0].mxu0 %v5871
  %v6012 = vpop.f32.mrb[0].mxu0
  %v6013 = vadd.f32 %v5832, %v6012
  %v6014 = vpop.f32.mrb[0].mxu0
  %v6015 = vpop.f32.mrb[0].mxu0
  %v6016 = vadd.f32 %v5832, %v6015
  %v6017 = vpop.f32.mrb[0].mxu0
  %6018 = vmatprep.mubr.bf16.mxu0 0
  %6019 = vmatmul.mubr.bf16.gmra.mrb[0].mxu0 %v5874
  %v6020 = vpop.f32.mrb[0].mxu0
  %v6021 = vadd.f32 %v5832, %v6020
  %v6022 = vpop.f32.mrb[0].mxu0
  %v6023 = vpop.f32.mrb[0].mxu0
  %v6024 = vadd.f32 %v5832, %v6023
  %v6025 = vpop.f32.mrb[0].mxu0
  %6026 = vmatprep.mubr.bf16.mxu0 0
  %6027 = vmatmul.mubr.bf16.gmra.mrb[0].mxu0 %v5877
  %v6028 = vpop.f32.mrb[0].mxu0
  %v6029 = vadd.f32 %v5832, %v6028
  %v6030 = vpop.f32.mrb[0].mxu0
  %v6031 = vpop.f32.mrb[0].mxu0
  %v6032 = vadd.f32 %v5832, %v6031
  %v6033 = vpop.f32.mrb[0].mxu0
  %6034 = vmatprep.mubr.bf16.mxu0 0
  %6035 = vmatmul.mubr.bf16.gmra.mrb[0].mxu0 %v5880
  %v6036 = vpop.f32.mrb[0].mxu0
  %v6037 = vadd.f32 %v5832, %v6036
  %v6038 = vpop.f32.mrb[0].mxu0
  %v6039 = vpop.f32.mrb[0].mxu0
  %v6040 = vadd.f32 %v5832, %v6039
  %v6041 = vpop.f32.mrb[0].mxu0
  %6042 = vdwg.mxu0
  %v6043 = vmax.f32 %v5917, 0.0
  %v6044 = vmax.f32 %v5920, 0.0
  %v6045 = vmax.f32 %v5925, 0.0
  %v6046 = vmax.f32 %v5928, 0.0
  %v6047 = vmax.f32 %v5933, 0.0
  %v6048 = vmax.f32 %v5936, 0.0
  %v6049 = vmax.f32 %v5941, 0.0
  %v6050 = vmax.f32 %v5944, 0.0
  %v6051 = vmax.f32 %v5949, 0.0
  %v6052 = vmax.f32 %v5952, 0.0
  %v6053 = vmax.f32 %v5957, 0.0
  %v6054 = vmax.f32 %v5960, 0.0
  %v6055 = vmax.f32 %v5965, 0.0
  %v6056 = vmax.f32 %v5968, 0.0
  %v6057 = vmax.f32 %v5973, 0.0
  %v6058 = vmax.f32 %v5976, 0.0
  %v6059 = vmax.f32 %v5981, 0.0
  %v6060 = vmax.f32 %v5984, 0.0
  %v6061 = vmax.f32 %v5989, 0.0
  %v6062 = vmax.f32 %v5992, 0.0
  %v6063 = vmax.f32 %v5997, 0.0
  %v6064 = vmax.f32 %v6000, 0.0
  %v6065 = vmax.f32 %v6005, 0.0
  %v6066 = vmax.f32 %v6008, 0.0
  %v6067 = vmax.f32 %v6013, 0.0
  %v6068 = vmax.f32 %v6016, 0.0
  %v6069 = vmax.f32 %v6021, 0.0
  %v6070 = vmax.f32 %v6024, 0.0
  %v6071 = vmax.f32 %v6029, 0.0
  %v6072 = vmax.f32 %v6032, 0.0
  %v6073 = vmax.f32 %v6037, 0.0
  %v6074 = vmax.f32 %v6040, 0.0
  %v6075 = vld [vmem:[%s8] sm:$0xff]
  %v6076 = vld [vmem:[%s8 + $0x8] sm:$0xff]
  %v6077 = vld [vmem:[%s8 + $0x10] sm:$0xff]
  %v6078 = vld [vmem:[%s8 + $0x18] sm:$0xff]
  %v6079 = vld [vmem:[%s8 + $0x20] sm:$0xff]
  %v6080 = vld [vmem:[%s8 + $0x28] sm:$0xff]
  %v6081 = vld [vmem:[%s8 + $0x30] sm:$0xff]
  %v6082 = vld [vmem:[%s8 + $0x38] sm:$0xff]
  %v6083 = vpack.c.bf16 %v6044, %v6043
  %v6084 = vpack.c.bf16 %v6046, %v6045
  %v6085 = vpack.c.bf16 %v6048, %v6047
  %v6086 = vpack.c.bf16 %v6050, %v6049
  %v6087 = vpack.c.bf16 %v6052, %v6051
  %v6088 = vpack.c.bf16 %v6054, %v6053
  %v6089 = vpack.c.bf16 %v6056, %v6055
  %v6090 = vpack.c.bf16 %v6058, %v6057
  %v6091 = vpack.c.bf16 %v6060, %v6059
  %v6092 = vpack.c.bf16 %v6062, %v6061
  %v6093 = vpack.c.bf16 %v6064, %v6063
  %v6094 = vpack.c.bf16 %v6066, %v6065
  %v6095 = vpack.c.bf16 %v6068, %v6067
  %v6096 = vpack.c.bf16 %v6070, %v6069
  %v6097 = vpack.c.bf16 %v6072, %v6071
  %v6098 = vpack.c.bf16 %v6074, %v6073
  %v6099 = vpack.c.bf16 %v6076, %v6075
  %v6100 = vpack.c.bf16 %v6078, %v6077
  %v6101 = vpack.c.bf16 %v6080, %v6079
  %v6102 = vpack.c.bf16 %v6082, %v6081
  %vm6103 = vcmask 523264
  %v6105 = vsel %vm6103, %v6083, 0
  %v6108 = vsel %vm6103, %v6084, 0
  %v6111 = vsel %vm6103, %v6085, 0
  %v6114 = vsel %vm6103, %v6086, 0
  %v6117 = vsel %vm6103, %v6087, 0
  %v6120 = vsel %vm6103, %v6088, 0
  %v6123 = vsel %vm6103, %v6089, 0
  %v6126 = vsel %vm6103, %v6090, 0
  %v6129 = vsel %vm6103, %v6091, 0
  %v6132 = vsel %vm6103, %v6092, 0
  %v6135 = vsel %vm6103, %v6093, 0
  %v6138 = vsel %vm6103, %v6094, 0
  %v6141 = vsel %vm6103, %v6095, 0
  %v6144 = vsel %vm6103, %v6096, 0
  %v6147 = vsel %vm6103, %v6097, 0
  %v6150 = vsel %vm6103, %v6098, 0
  %6152 = vmatprep.subr.bf16.mxu0 0
  %6153 = vmatpush1.bf16.msra.mxu0 %v6099
  %6154 = vmatprep.subr.bf16.mxu0 0
  %6155 = vmatpush1.bf16.msra.mxu0 %v6100
  %6156 = vmatprep.subr.bf16.mxu0 0
  %6157 = vmatpush1.bf16.msra.mxu0 %v6101
  %6158 = vmatprep.subr.bf16.mxu0 0
  %6159 = vmatpush1.bf16.msra.mxu0 %v6102
  %6160 = vmatprep.subr.bf16.mxu0 0
  %6161 = vmatpush1.bf16.msra.mxu0 0
  %6162 = vmatprep.subr.bf16.mxu0 0
  %6163 = vmatpush1.bf16.msra.mxu0 0
  %6164 = vmatprep.subr.bf16.mxu0 0
  %6165 = vmatpush1.bf16.msra.mxu0 0
  %6166 = vmatprep.subr.bf16.mxu0 0
  %6167 = vmatpush1.bf16.msra.mxu0 0
  %6168 = vmatprep.subr.bf16.mxu0 0
  %6169 = vmatpush1.bf16.msra.mxu0 0
  %6170 = vmatprep.subr.bf16.mxu0 0
  %6171 = vmatpush1.bf16.msra.mxu0 0
  %6172 = vmatprep.subr.bf16.mxu0 0
  %6173 = vmatpush1.bf16.msra.mxu0 0
  %6174 = vmatprep.subr.bf16.mxu0 0
  %6175 = vmatpush1.bf16.msra.mxu0 0
  %6176 = vmatprep.subr.bf16.mxu0 0
  %6177 = vmatpush1.bf16.msra.mxu0 0
  %6178 = vmatprep.subr.bf16.mxu0 0
  %6179 = vmatpush1.bf16.msra.mxu0 0
  %6180 = vmatprep.subr.bf16.mxu0 0
  %6181 = vmatpush1.bf16.msra.mxu0 0
  %6182 = vmatprep.subr.bf16.mxu0 0
  %6183 = vmatpush1.bf16.msra.mxu0 0
  %6184 = vmatprep.mubr.bf16.mxu0 0
  %6185 = vmatmul.mubr.bf16.gmra.mrb[0].mxu0 %v6105
  %v6186 = vpop.f32.mrb[0].mxu0
  %v6187 = vadd.f32 0.0, %v6186
  %v6188 = vpop.f32.mrb[0].mxu0
  %v6189 = vpop.f32.mrb[0].mxu0
  %v6190 = vadd.f32 0.0, %v6189
  %v6191 = vpop.f32.mrb[0].mxu0
  %6192 = vmatprep.mubr.bf16.mxu0 0
  %6193 = vmatmul.mubr.bf16.gmra.mrb[0].mxu0 %v6108
  %v6194 = vpop.f32.mrb[0].mxu0
  %v6195 = vadd.f32 0.0, %v6194
  %v6196 = vpop.f32.mrb[0].mxu0
  %v6197 = vpop.f32.mrb[0].mxu0
  %v6198 = vadd.f32 0.0, %v6197
  %v6199 = vpop.f32.mrb[0].mxu0
  %6200 = vmatprep.mubr.bf16.mxu0 0
  %6201 = vmatmul.mubr.bf16.gmra.mrb[0].mxu0 %v6111
  %v6202 = vpop.f32.mrb[0].mxu0
  %v6203 = vadd.f32 0.0, %v6202
  %v6204 = vpop.f32.mrb[0].mxu0
  %v6205 = vpop.f32.mrb[0].mxu0
  %v6206 = vadd.f32 0.0, %v6205
  %v6207 = vpop.f32.mrb[0].mxu0
  %6208 = vmatprep.mubr.bf16.mxu0 0
  %6209 = vmatmul.mubr.bf16.gmra.mrb[0].mxu0 %v6114
  %v6210 = vpop.f32.mrb[0].mxu0
  %v6211 = vadd.f32 0.0, %v6210
  %v6212 = vpop.f32.mrb[0].mxu0
  %v6213 = vpop.f32.mrb[0].mxu0
  %v6214 = vadd.f32 0.0, %v6213
  %v6215 = vpop.f32.mrb[0].mxu0
  %6216 = vmatprep.mubr.bf16.mxu0 0
  %6217 = vmatmul.mubr.bf16.gmra.mrb[0].mxu0 %v6117
  %v6218 = vpop.f32.mrb[0].mxu0
  %v6219 = vadd.f32 0.0, %v6218
  %v6220 = vpop.f32.mrb[0].mxu0
  %v6221 = vpop.f32.mrb[0].mxu0
  %v6222 = vadd.f32 0.0, %v6221
  %v6223 = vpop.f32.mrb[0].mxu0
  %6224 = vmatprep.mubr.bf16.mxu0 0
  %6225 = vmatmul.mubr.bf16.gmra.mrb[0].mxu0 %v6120
  %v6226 = vpop.f32.mrb[0].mxu0
  %v6227 = vadd.f32 0.0, %v6226
  %v6228 = vpop.f32.mrb[0].mxu0
  %v6229 = vpop.f32.mrb[0].mxu0
  %v6230 = vadd.f32 0.0, %v6229
  %v6231 = vpop.f32.mrb[0].mxu0
  %6232 = vmatprep.mubr.bf16.mxu0 0
  %6233 = vmatmul.mubr.bf16.gmra.mrb[0].mxu0 %v6123
  %v6234 = vpop.f32.mrb[0].mxu0
  %v6235 = vadd.f32 0.0, %v6234
  %v6236 = vpop.f32.mrb[0].mxu0
  %v6237 = vpop.f32.mrb[0].mxu0
  %v6238 = vadd.f32 0.0, %v6237
  %v6239 = vpop.f32.mrb[0].mxu0
  %6240 = vmatprep.mubr.bf16.mxu0 0
  %6241 = vmatmul.mubr.bf16.gmra.mrb[0].mxu0 %v6126
  %v6242 = vpop.f32.mrb[0].mxu0
  %v6243 = vadd.f32 0.0, %v6242
  %v6244 = vpop.f32.mrb[0].mxu0
  %v6245 = vpop.f32.mrb[0].mxu0
  %v6246 = vadd.f32 0.0, %v6245
  %v6247 = vpop.f32.mrb[0].mxu0
  %6248 = vmatprep.mubr.bf16.mxu0 0
  %6249 = vmatmul.mubr.bf16.gmra.mrb[0].mxu0 %v6129
  %v6250 = vpop.f32.mrb[0].mxu0
  %v6251 = vadd.f32 0.0, %v6250
  %v6252 = vpop.f32.mrb[0].mxu0
  %v6253 = vpop.f32.mrb[0].mxu0
  %v6254 = vadd.f32 0.0, %v6253
  %v6255 = vpop.f32.mrb[0].mxu0
  %6256 = vmatprep.mubr.bf16.mxu0 0
  %6257 = vmatmul.mubr.bf16.gmra.mrb[0].mxu0 %v6132
  %v6258 = vpop.f32.mrb[0].mxu0
  %v6259 = vadd.f32 0.0, %v6258
  %v6260 = vpop.f32.mrb[0].mxu0
  %v6261 = vpop.f32.mrb[0].mxu0
  %v6262 = vadd.f32 0.0, %v6261
  %v6263 = vpop.f32.mrb[0].mxu0
  %6264 = vmatprep.mubr.bf16.mxu0 0
  %6265 = vmatmul.mubr.bf16.gmra.mrb[0].mxu0 %v6135
  %v6266 = vpop.f32.mrb[0].mxu0
  %v6267 = vadd.f32 0.0, %v6266
  %v6268 = vpop.f32.mrb[0].mxu0
  %v6269 = vpop.f32.mrb[0].mxu0
  %v6270 = vadd.f32 0.0, %v6269
  %v6271 = vpop.f32.mrb[0].mxu0
  %6272 = vmatprep.mubr.bf16.mxu0 0
  %6273 = vmatmul.mubr.bf16.gmra.mrb[0].mxu0 %v6138
  %v6274 = vpop.f32.mrb[0].mxu0
  %v6275 = vadd.f32 0.0, %v6274
  %v6276 = vpop.f32.mrb[0].mxu0
  %v6277 = vpop.f32.mrb[0].mxu0
  %v6278 = vadd.f32 0.0, %v6277
  %v6279 = vpop.f32.mrb[0].mxu0
  %6280 = vmatprep.mubr.bf16.mxu0 0
  %6281 = vmatmul.mubr.bf16.gmra.mrb[0].mxu0 %v6141
  %v6282 = vpop.f32.mrb[0].mxu0
  %v6283 = vadd.f32 0.0, %v6282
  %v6284 = vpop.f32.mrb[0].mxu0
  %v6285 = vpop.f32.mrb[0].mxu0
  %v6286 = vadd.f32 0.0, %v6285
  %v6287 = vpop.f32.mrb[0].mxu0
  %6288 = vmatprep.mubr.bf16.mxu0 0
  %6289 = vmatmul.mubr.bf16.gmra.mrb[0].mxu0 %v6144
  %v6290 = vpop.f32.mrb[0].mxu0
  %v6291 = vadd.f32 0.0, %v6290
  %v6292 = vpop.f32.mrb[0].mxu0
  %v6293 = vpop.f32.mrb[0].mxu0
  %v6294 = vadd.f32 0.0, %v6293
  %v6295 = vpop.f32.mrb[0].mxu0
  %6296 = vmatprep.mubr.bf16.mxu0 0
  %6297 = vmatmul.mubr.bf16.gmra.mrb[0].mxu0 %v6147
  %v6298 = vpop.f32.mrb[0].mxu0
  %v6299 = vadd.f32 0.0, %v6298
  %v6300 = vpop.f32.mrb[0].mxu0
  %v6301 = vpop.f32.mrb[0].mxu0
  %v6302 = vadd.f32 0.0, %v6301
  %v6303 = vpop.f32.mrb[0].mxu0
  %6304 = vmatprep.mubr.bf16.mxu0 0
  %6305 = vmatmul.mubr.bf16.gmra.mrb[0].mxu0 %v6150
  %v6306 = vpop.f32.mrb[0].mxu0
  %v6307 = vadd.f32 0.0, %v6306
  %v6308 = vpop.f32.mrb[0].mxu0
  %v6309 = vpop.f32.mrb[0].mxu0
  %v6310 = vadd.f32 0.0, %v6309
  %v6311 = vpop.f32.mrb[0].mxu0
  %6312 = vdwg.mxu0
  %v6313 = vadd.f32 %v5773, %v6187
  %v6314 = vadd.f32 %v5774, %v6190
  %v6315 = vadd.f32 %v5775, %v6195
  %v6316 = vadd.f32 %v5776, %v6198
  %v6317 = vadd.f32 %v5777, %v6203
  %v6318 = vadd.f32 %v5778, %v6206
  %v6319 = vadd.f32 %v5779, %v6211
  %v6320 = vadd.f32 %v5780, %v6214
  %v6321 = vadd.f32 %v5781, %v6219
  %v6322 = vadd.f32 %v5782, %v6222
  %v6323 = vadd.f32 %v5783, %v6227
  %v6324 = vadd.f32 %v5784, %v6230
  %v6325 = vadd.f32 %v5785, %v6235
  %v6326 = vadd.f32 %v5786, %v6238
  %v6327 = vadd.f32 %v5787, %v6243
  %v6328 = vadd.f32 %v5788, %v6246
  %v6329 = vadd.f32 %v5789, %v6251
  %v6330 = vadd.f32 %v5790, %v6254
  %v6331 = vadd.f32 %v5791, %v6259
  %v6332 = vadd.f32 %v5792, %v6262
  %v6333 = vadd.f32 %v5793, %v6267
  %v6334 = vadd.f32 %v5794, %v6270
  %v6335 = vadd.f32 %v5795, %v6275
  %v6336 = vadd.f32 %v5796, %v6278
  %v6337 = vadd.f32 %v5797, %v6283
  %v6338 = vadd.f32 %v5798, %v6286
  %v6339 = vadd.f32 %v5799, %v6291
  %v6340 = vadd.f32 %v5800, %v6294
  %v6341 = vadd.f32 %v5801, %v6299
  %v6342 = vadd.f32 %v5802, %v6302
  %v6343 = vadd.f32 %v5803, %v6307
  %v6344 = vadd.f32 %v5804, %v6310
  %v6345 = vld [vmem:[%s9] sm:$0x1]
  %v6347 = vlaneseq
  %v6348 = vshrl.u32 %v6347, 7
  %v6349 = vsub.s32 0, %v6348
  %v6350 = vrot.slane %v6345, %v6349
  %v6352 = vadd.f32 %v6313, %v6350
  %v6353 = vadd.f32 %v6314, %v6350
  %v6354 = vadd.f32 %v6315, %v6350
  %v6355 = vadd.f32 %v6316, %v6350
  %v6356 = vadd.f32 %v6317, %v6350
  %v6357 = vadd.f32 %v6318, %v6350
  %v6358 = vadd.f32 %v6319, %v6350
  %v6359 = vadd.f32 %v6320, %v6350
  %v6360 = vadd.f32 %v6321, %v6350
  %v6361 = vadd.f32 %v6322, %v6350
  %v6362 = vadd.f32 %v6323, %v6350
  %v6363 = vadd.f32 %v6324, %v6350
  %v6364 = vadd.f32 %v6325, %v6350
  %v6365 = vadd.f32 %v6326, %v6350
  %v6366 = vadd.f32 %v6327, %v6350
  %v6367 = vadd.f32 %v6328, %v6350
  %v6368 = vadd.f32 %v6329, %v6350
  %v6369 = vadd.f32 %v6330, %v6350
  %v6370 = vadd.f32 %v6331, %v6350
  %v6371 = vadd.f32 %v6332, %v6350
  %v6372 = vadd.f32 %v6333, %v6350
  %v6373 = vadd.f32 %v6334, %v6350
  %v6374 = vadd.f32 %v6335, %v6350
  %v6375 = vadd.f32 %v6336, %v6350
  %v6376 = vadd.f32 %v6337, %v6350
  %v6377 = vadd.f32 %v6338, %v6350
  %v6378 = vadd.f32 %v6339, %v6350
  %v6379 = vadd.f32 %v6340, %v6350
  %v6380 = vadd.f32 %v6341, %v6350
  %v6381 = vadd.f32 %v6342, %v6350
  %v6382 = vadd.f32 %v6343, %v6350
  %v6383 = vadd.f32 %v6344, %v6350
  %v6384 = vsel %vm115, %v6352, 0.0
  %6385 = vadd.xlane.f32.xlu0 %v6384
  %v6386 = vpop.xlane.xlu0 %6385
  %v6387 = vsel %vm115, %v6353, 0.0
  %6388 = vadd.xlane.f32.xlu0 %v6387
  %v6389 = vpop.xlane.xlu0 %6388
  %v6390 = vsel %vm115, %v6354, 0.0
  %6391 = vadd.xlane.f32.xlu0 %v6390
  %v6392 = vpop.xlane.xlu0 %6391
  %v6393 = vsel %vm115, %v6355, 0.0
  %6394 = vadd.xlane.f32.xlu0 %v6393
  %v6395 = vpop.xlane.xlu0 %6394
  %v6396 = vsel %vm115, %v6356, 0.0
  %6397 = vadd.xlane.f32.xlu0 %v6396
  %v6398 = vpop.xlane.xlu0 %6397
  %v6399 = vsel %vm115, %v6357, 0.0
  %6400 = vadd.xlane.f32.xlu0 %v6399
  %v6401 = vpop.xlane.xlu0 %6400
  %v6402 = vsel %vm115, %v6358, 0.0
  %6403 = vadd.xlane.f32.xlu0 %v6402
  %v6404 = vpop.xlane.xlu0 %6403
  %v6405 = vsel %vm115, %v6359, 0.0
  %6406 = vadd.xlane.f32.xlu0 %v6405
  %v6407 = vpop.xlane.xlu0 %6406
  %v6408 = vsel %vm115, %v6360, 0.0
  %6409 = vadd.xlane.f32.xlu0 %v6408
  %v6410 = vpop.xlane.xlu0 %6409
  %v6411 = vsel %vm115, %v6361, 0.0
  %6412 = vadd.xlane.f32.xlu0 %v6411
  %v6413 = vpop.xlane.xlu0 %6412
  %v6414 = vsel %vm115, %v6362, 0.0
  %6415 = vadd.xlane.f32.xlu0 %v6414
  %v6416 = vpop.xlane.xlu0 %6415
  %v6417 = vsel %vm115, %v6363, 0.0
  %6418 = vadd.xlane.f32.xlu0 %v6417
  %v6419 = vpop.xlane.xlu0 %6418
  %v6420 = vsel %vm115, %v6364, 0.0
  %6421 = vadd.xlane.f32.xlu0 %v6420
  %v6422 = vpop.xlane.xlu0 %6421
  %v6423 = vsel %vm115, %v6365, 0.0
  %6424 = vadd.xlane.f32.xlu0 %v6423
  %v6425 = vpop.xlane.xlu0 %6424
  %v6426 = vsel %vm115, %v6366, 0.0
  %6427 = vadd.xlane.f32.xlu0 %v6426
  %v6428 = vpop.xlane.xlu0 %6427
  %v6429 = vsel %vm115, %v6367, 0.0
  %6430 = vadd.xlane.f32.xlu0 %v6429
  %v6431 = vpop.xlane.xlu0 %6430
  %v6432 = vsel %vm115, %v6368, 0.0
  %6433 = vadd.xlane.f32.xlu0 %v6432
  %v6434 = vpop.xlane.xlu0 %6433
  %v6435 = vsel %vm115, %v6369, 0.0
  %6436 = vadd.xlane.f32.xlu0 %v6435
  %v6437 = vpop.xlane.xlu0 %6436
  %v6438 = vsel %vm115, %v6370, 0.0
  %6439 = vadd.xlane.f32.xlu0 %v6438
  %v6440 = vpop.xlane.xlu0 %6439
  %v6441 = vsel %vm115, %v6371, 0.0
  %6442 = vadd.xlane.f32.xlu0 %v6441
  %v6443 = vpop.xlane.xlu0 %6442
  %v6444 = vsel %vm115, %v6372, 0.0
  %6445 = vadd.xlane.f32.xlu0 %v6444
  %v6446 = vpop.xlane.xlu0 %6445
  %v6447 = vsel %vm115, %v6373, 0.0
  %6448 = vadd.xlane.f32.xlu0 %v6447
  %v6449 = vpop.xlane.xlu0 %6448
  %v6450 = vsel %vm115, %v6374, 0.0
  %6451 = vadd.xlane.f32.xlu0 %v6450
  %v6452 = vpop.xlane.xlu0 %6451
  %v6453 = vsel %vm115, %v6375, 0.0
  %6454 = vadd.xlane.f32.xlu0 %v6453
  %v6455 = vpop.xlane.xlu0 %6454
  %v6456 = vsel %vm115, %v6376, 0.0
  %6457 = vadd.xlane.f32.xlu0 %v6456
  %v6458 = vpop.xlane.xlu0 %6457
  %v6459 = vsel %vm115, %v6377, 0.0
  %6460 = vadd.xlane.f32.xlu0 %v6459
  %v6461 = vpop.xlane.xlu0 %6460
  %v6462 = vsel %vm115, %v6378, 0.0
  %6463 = vadd.xlane.f32.xlu0 %v6462
  %v6464 = vpop.xlane.xlu0 %6463
  %v6465 = vsel %vm115, %v6379, 0.0
  %6466 = vadd.xlane.f32.xlu0 %v6465
  %v6467 = vpop.xlane.xlu0 %6466
  %v6468 = vsel %vm115, %v6380, 0.0
  %6469 = vadd.xlane.f32.xlu0 %v6468
  %v6470 = vpop.xlane.xlu0 %6469
  %v6471 = vsel %vm115, %v6381, 0.0
  %6472 = vadd.xlane.f32.xlu0 %v6471
  %v6473 = vpop.xlane.xlu0 %6472
  %v6474 = vsel %vm115, %v6382, 0.0
  %6475 = vadd.xlane.f32.xlu0 %v6474
  %v6476 = vpop.xlane.xlu0 %6475
  %v6477 = vsel %vm115, %v6383, 0.0
  %6478 = vadd.xlane.f32.xlu0 %v6477
  %v6479 = vpop.xlane.xlu0 %6478
  %v6480 = vmul.f32 %v6386, %v5484
  %v6481 = vmul.f32 %v6389, %v5484
  %v6482 = vmul.f32 %v6392, %v5484
  %v6483 = vmul.f32 %v6395, %v5484
  %v6484 = vmul.f32 %v6398, %v5484
  %v6485 = vmul.f32 %v6401, %v5484
  %v6486 = vmul.f32 %v6404, %v5484
  %v6487 = vmul.f32 %v6407, %v5484
  %v6488 = vmul.f32 %v6410, %v5484
  %v6489 = vmul.f32 %v6413, %v5484
  %v6490 = vmul.f32 %v6416, %v5484
  %v6491 = vmul.f32 %v6419, %v5484
  %v6492 = vmul.f32 %v6422, %v5484
  %v6493 = vmul.f32 %v6425, %v5484
  %v6494 = vmul.f32 %v6428, %v5484
  %v6495 = vmul.f32 %v6431, %v5484
  %v6496 = vmul.f32 %v6434, %v5484
  %v6497 = vmul.f32 %v6437, %v5484
  %v6498 = vmul.f32 %v6440, %v5484
  %v6499 = vmul.f32 %v6443, %v5484
  %v6500 = vmul.f32 %v6446, %v5484
  %v6501 = vmul.f32 %v6449, %v5484
  %v6502 = vmul.f32 %v6452, %v5484
  %v6503 = vmul.f32 %v6455, %v5484
  %v6504 = vmul.f32 %v6458, %v5484
  %v6505 = vmul.f32 %v6461, %v5484
  %v6506 = vmul.f32 %v6464, %v5484
  %v6507 = vmul.f32 %v6467, %v5484
  %v6508 = vmul.f32 %v6470, %v5484
  %v6509 = vmul.f32 %v6473, %v5484
  %v6510 = vmul.f32 %v6476, %v5484
  %v6511 = vmul.f32 %v6479, %v5484
  %v6512 = vsub.f32 %v6352, %v6480
  %v6513 = vsub.f32 %v6353, %v6481
  %v6514 = vsub.f32 %v6354, %v6482
  %v6515 = vsub.f32 %v6355, %v6483
  %v6516 = vsub.f32 %v6356, %v6484
  %v6517 = vsub.f32 %v6357, %v6485
  %v6518 = vsub.f32 %v6358, %v6486
  %v6519 = vsub.f32 %v6359, %v6487
  %v6520 = vsub.f32 %v6360, %v6488
  %v6521 = vsub.f32 %v6361, %v6489
  %v6522 = vsub.f32 %v6362, %v6490
  %v6523 = vsub.f32 %v6363, %v6491
  %v6524 = vsub.f32 %v6364, %v6492
  %v6525 = vsub.f32 %v6365, %v6493
  %v6526 = vsub.f32 %v6366, %v6494
  %v6527 = vsub.f32 %v6367, %v6495
  %v6528 = vsub.f32 %v6368, %v6496
  %v6529 = vsub.f32 %v6369, %v6497
  %v6530 = vsub.f32 %v6370, %v6498
  %v6531 = vsub.f32 %v6371, %v6499
  %v6532 = vsub.f32 %v6372, %v6500
  %v6533 = vsub.f32 %v6373, %v6501
  %v6534 = vsub.f32 %v6374, %v6502
  %v6535 = vsub.f32 %v6375, %v6503
  %v6536 = vsub.f32 %v6376, %v6504
  %v6537 = vsub.f32 %v6377, %v6505
  %v6538 = vsub.f32 %v6378, %v6506
  %v6539 = vsub.f32 %v6379, %v6507
  %v6540 = vsub.f32 %v6380, %v6508
  %v6541 = vsub.f32 %v6381, %v6509
  %v6542 = vsub.f32 %v6382, %v6510
  %v6543 = vsub.f32 %v6383, %v6511
  %v6544 = vmul.f32 %v6512, %v6512
  %v6545 = vmul.f32 %v6513, %v6513
  %v6546 = vmul.f32 %v6514, %v6514
  %v6547 = vmul.f32 %v6515, %v6515
  %v6548 = vmul.f32 %v6516, %v6516
  %v6549 = vmul.f32 %v6517, %v6517
  %v6550 = vmul.f32 %v6518, %v6518
  %v6551 = vmul.f32 %v6519, %v6519
  %v6552 = vmul.f32 %v6520, %v6520
  %v6553 = vmul.f32 %v6521, %v6521
  %v6554 = vmul.f32 %v6522, %v6522
  %v6555 = vmul.f32 %v6523, %v6523
  %v6556 = vmul.f32 %v6524, %v6524
  %v6557 = vmul.f32 %v6525, %v6525
  %v6558 = vmul.f32 %v6526, %v6526
  %v6559 = vmul.f32 %v6527, %v6527
  %v6560 = vmul.f32 %v6528, %v6528
  %v6561 = vmul.f32 %v6529, %v6529
  %v6562 = vmul.f32 %v6530, %v6530
  %v6563 = vmul.f32 %v6531, %v6531
  %v6564 = vmul.f32 %v6532, %v6532
  %v6565 = vmul.f32 %v6533, %v6533
  %v6566 = vmul.f32 %v6534, %v6534
  %v6567 = vmul.f32 %v6535, %v6535
  %v6568 = vmul.f32 %v6536, %v6536
  %v6569 = vmul.f32 %v6537, %v6537
  %v6570 = vmul.f32 %v6538, %v6538
  %v6571 = vmul.f32 %v6539, %v6539
  %v6572 = vmul.f32 %v6540, %v6540
  %v6573 = vmul.f32 %v6541, %v6541
  %v6574 = vmul.f32 %v6542, %v6542
  %v6575 = vmul.f32 %v6543, %v6543
  %v6576 = vsel %vm115, %v6544, 0.0
  %6577 = vadd.xlane.f32.xlu0 %v6576
  %v6578 = vpop.xlane.xlu0 %6577
  %v6579 = vsel %vm115, %v6545, 0.0
  %6580 = vadd.xlane.f32.xlu0 %v6579
  %v6581 = vpop.xlane.xlu0 %6580
  %v6582 = vsel %vm115, %v6546, 0.0
  %6583 = vadd.xlane.f32.xlu0 %v6582
  %v6584 = vpop.xlane.xlu0 %6583
  %v6585 = vsel %vm115, %v6547, 0.0
  %6586 = vadd.xlane.f32.xlu0 %v6585
  %v6587 = vpop.xlane.xlu0 %6586
  %v6588 = vsel %vm115, %v6548, 0.0
  %6589 = vadd.xlane.f32.xlu0 %v6588
  %v6590 = vpop.xlane.xlu0 %6589
  %v6591 = vsel %vm115, %v6549, 0.0
  %6592 = vadd.xlane.f32.xlu0 %v6591
  %v6593 = vpop.xlane.xlu0 %6592
  %v6594 = vsel %vm115, %v6550, 0.0
  %6595 = vadd.xlane.f32.xlu0 %v6594
  %v6596 = vpop.xlane.xlu0 %6595
  %v6597 = vsel %vm115, %v6551, 0.0
  %6598 = vadd.xlane.f32.xlu0 %v6597
  %v6599 = vpop.xlane.xlu0 %6598
  %v6600 = vsel %vm115, %v6552, 0.0
  %6601 = vadd.xlane.f32.xlu0 %v6600
  %v6602 = vpop.xlane.xlu0 %6601
  %v6603 = vsel %vm115, %v6553, 0.0
  %6604 = vadd.xlane.f32.xlu0 %v6603
  %v6605 = vpop.xlane.xlu0 %6604
  %v6606 = vsel %vm115, %v6554, 0.0
  %6607 = vadd.xlane.f32.xlu0 %v6606
  %v6608 = vpop.xlane.xlu0 %6607
  %v6609 = vsel %vm115, %v6555, 0.0
  %6610 = vadd.xlane.f32.xlu0 %v6609
  %v6611 = vpop.xlane.xlu0 %6610
  %v6612 = vsel %vm115, %v6556, 0.0
  %6613 = vadd.xlane.f32.xlu0 %v6612
  %v6614 = vpop.xlane.xlu0 %6613
  %v6615 = vsel %vm115, %v6557, 0.0
  %6616 = vadd.xlane.f32.xlu0 %v6615
  %v6617 = vpop.xlane.xlu0 %6616
  %v6618 = vsel %vm115, %v6558, 0.0
  %6619 = vadd.xlane.f32.xlu0 %v6618
  %v6620 = vpop.xlane.xlu0 %6619
  %v6621 = vsel %vm115, %v6559, 0.0
  %6622 = vadd.xlane.f32.xlu0 %v6621
  %v6623 = vpop.xlane.xlu0 %6622
  %v6624 = vsel %vm115, %v6560, 0.0
  %6625 = vadd.xlane.f32.xlu0 %v6624
  %v6626 = vpop.xlane.xlu0 %6625
  %v6627 = vsel %vm115, %v6561, 0.0
  %6628 = vadd.xlane.f32.xlu0 %v6627
  %v6629 = vpop.xlane.xlu0 %6628
  %v6630 = vsel %vm115, %v6562, 0.0
  %6631 = vadd.xlane.f32.xlu0 %v6630
  %v6632 = vpop.xlane.xlu0 %6631
  %v6633 = vsel %vm115, %v6563, 0.0
  %6634 = vadd.xlane.f32.xlu0 %v6633
  %v6635 = vpop.xlane.xlu0 %6634
  %v6636 = vsel %vm115, %v6564, 0.0
  %6637 = vadd.xlane.f32.xlu0 %v6636
  %v6638 = vpop.xlane.xlu0 %6637
  %v6639 = vsel %vm115, %v6565, 0.0
  %6640 = vadd.xlane.f32.xlu0 %v6639
  %v6641 = vpop.xlane.xlu0 %6640
  %v6642 = vsel %vm115, %v6566, 0.0
  %6643 = vadd.xlane.f32.xlu0 %v6642
  %v6644 = vpop.xlane.xlu0 %6643
  %v6645 = vsel %vm115, %v6567, 0.0
  %6646 = vadd.xlane.f32.xlu0 %v6645
  %v6647 = vpop.xlane.xlu0 %6646
  %v6648 = vsel %vm115, %v6568, 0.0
  %6649 = vadd.xlane.f32.xlu0 %v6648
  %v6650 = vpop.xlane.xlu0 %6649
  %v6651 = vsel %vm115, %v6569, 0.0
  %6652 = vadd.xlane.f32.xlu0 %v6651
  %v6653 = vpop.xlane.xlu0 %6652
  %v6654 = vsel %vm115, %v6570, 0.0
  %6655 = vadd.xlane.f32.xlu0 %v6654
  %v6656 = vpop.xlane.xlu0 %6655
  %v6657 = vsel %vm115, %v6571, 0.0
  %6658 = vadd.xlane.f32.xlu0 %v6657
  %v6659 = vpop.xlane.xlu0 %6658
  %v6660 = vsel %vm115, %v6572, 0.0
  %6661 = vadd.xlane.f32.xlu0 %v6660
  %v6662 = vpop.xlane.xlu0 %6661
  %v6663 = vsel %vm115, %v6573, 0.0
  %6664 = vadd.xlane.f32.xlu0 %v6663
  %v6665 = vpop.xlane.xlu0 %6664
  %v6666 = vsel %vm115, %v6574, 0.0
  %6667 = vadd.xlane.f32.xlu0 %v6666
  %v6668 = vpop.xlane.xlu0 %6667
  %v6669 = vsel %vm115, %v6575, 0.0
  %6670 = vadd.xlane.f32.xlu0 %v6669
  %v6671 = vpop.xlane.xlu0 %6670
  %v6672 = vmul.f32 %v6578, %v5484
  %v6673 = vmul.f32 %v6581, %v5484
  %v6674 = vmul.f32 %v6584, %v5484
  %v6675 = vmul.f32 %v6587, %v5484
  %v6676 = vmul.f32 %v6590, %v5484
  %v6677 = vmul.f32 %v6593, %v5484
  %v6678 = vmul.f32 %v6596, %v5484
  %v6679 = vmul.f32 %v6599, %v5484
  %v6680 = vmul.f32 %v6602, %v5484
  %v6681 = vmul.f32 %v6605, %v5484
  %v6682 = vmul.f32 %v6608, %v5484
  %v6683 = vmul.f32 %v6611, %v5484
  %v6684 = vmul.f32 %v6614, %v5484
  %v6685 = vmul.f32 %v6617, %v5484
  %v6686 = vmul.f32 %v6620, %v5484
  %v6687 = vmul.f32 %v6623, %v5484
  %v6688 = vmul.f32 %v6626, %v5484
  %v6689 = vmul.f32 %v6629, %v5484
  %v6690 = vmul.f32 %v6632, %v5484
  %v6691 = vmul.f32 %v6635, %v5484
  %v6692 = vmul.f32 %v6638, %v5484
  %v6693 = vmul.f32 %v6641, %v5484
  %v6694 = vmul.f32 %v6644, %v5484
  %v6695 = vmul.f32 %v6647, %v5484
  %v6696 = vmul.f32 %v6650, %v5484
  %v6697 = vmul.f32 %v6653, %v5484
  %v6698 = vmul.f32 %v6656, %v5484
  %v6699 = vmul.f32 %v6659, %v5484
  %v6700 = vmul.f32 %v6662, %v5484
  %v6701 = vmul.f32 %v6665, %v5484
  %v6702 = vmul.f32 %v6668, %v5484
  %v6703 = vmul.f32 %v6671, %v5484
  %v6704 = vadd.f32 %v6672, 1e-05
  %v6705 = vadd.f32 %v6673, 1e-05
  %v6706 = vadd.f32 %v6674, 1e-05
  %v6707 = vadd.f32 %v6675, 1e-05
  %v6708 = vadd.f32 %v6676, 1e-05
  %v6709 = vadd.f32 %v6677, 1e-05
  %v6710 = vadd.f32 %v6678, 1e-05
  %v6711 = vadd.f32 %v6679, 1e-05
  %v6712 = vadd.f32 %v6680, 1e-05
  %v6713 = vadd.f32 %v6681, 1e-05
  %v6714 = vadd.f32 %v6682, 1e-05
  %v6715 = vadd.f32 %v6683, 1e-05
  %v6716 = vadd.f32 %v6684, 1e-05
  %v6717 = vadd.f32 %v6685, 1e-05
  %v6718 = vadd.f32 %v6686, 1e-05
  %v6719 = vadd.f32 %v6687, 1e-05
  %v6720 = vadd.f32 %v6688, 1e-05
  %v6721 = vadd.f32 %v6689, 1e-05
  %v6722 = vadd.f32 %v6690, 1e-05
  %v6723 = vadd.f32 %v6691, 1e-05
  %v6724 = vadd.f32 %v6692, 1e-05
  %v6725 = vadd.f32 %v6693, 1e-05
  %v6726 = vadd.f32 %v6694, 1e-05
  %v6727 = vadd.f32 %v6695, 1e-05
  %v6728 = vadd.f32 %v6696, 1e-05
  %v6729 = vadd.f32 %v6697, 1e-05
  %v6730 = vadd.f32 %v6698, 1e-05
  %v6731 = vadd.f32 %v6699, 1e-05
  %v6732 = vadd.f32 %v6700, 1e-05
  %v6733 = vadd.f32 %v6701, 1e-05
  %v6734 = vadd.f32 %v6702, 1e-05
  %v6735 = vadd.f32 %v6703, 1e-05
  %v6736 = vrsqrt.pop %v6704
  %v6737 = vrsqrt.pop %v6705
  %v6738 = vrsqrt.pop %v6706
  %v6739 = vrsqrt.pop %v6707
  %v6740 = vrsqrt.pop %v6708
  %v6741 = vrsqrt.pop %v6709
  %v6742 = vrsqrt.pop %v6710
  %v6743 = vrsqrt.pop %v6711
  %v6744 = vrsqrt.pop %v6712
  %v6745 = vrsqrt.pop %v6713
  %v6746 = vrsqrt.pop %v6714
  %v6747 = vrsqrt.pop %v6715
  %v6748 = vrsqrt.pop %v6716
  %v6749 = vrsqrt.pop %v6717
  %v6750 = vrsqrt.pop %v6718
  %v6751 = vrsqrt.pop %v6719
  %v6752 = vrsqrt.pop %v6720
  %v6753 = vrsqrt.pop %v6721
  %v6754 = vrsqrt.pop %v6722
  %v6755 = vrsqrt.pop %v6723
  %v6756 = vrsqrt.pop %v6724
  %v6757 = vrsqrt.pop %v6725
  %v6758 = vrsqrt.pop %v6726
  %v6759 = vrsqrt.pop %v6727
  %v6760 = vrsqrt.pop %v6728
  %v6761 = vrsqrt.pop %v6729
  %v6762 = vrsqrt.pop %v6730
  %v6763 = vrsqrt.pop %v6731
  %v6764 = vrsqrt.pop %v6732
  %v6765 = vrsqrt.pop %v6733
  %v6766 = vrsqrt.pop %v6734
  %v6767 = vrsqrt.pop %v6735
  %v6768 = vmul.f32 %v6512, %v6736
  %v6769 = vmul.f32 %v6513, %v6737
  %v6770 = vmul.f32 %v6514, %v6738
  %v6771 = vmul.f32 %v6515, %v6739
  %v6772 = vmul.f32 %v6516, %v6740
  %v6773 = vmul.f32 %v6517, %v6741
  %v6774 = vmul.f32 %v6518, %v6742
  %v6775 = vmul.f32 %v6519, %v6743
  %v6776 = vmul.f32 %v6520, %v6744
  %v6777 = vmul.f32 %v6521, %v6745
  %v6778 = vmul.f32 %v6522, %v6746
  %v6779 = vmul.f32 %v6523, %v6747
  %v6780 = vmul.f32 %v6524, %v6748
  %v6781 = vmul.f32 %v6525, %v6749
  %v6782 = vmul.f32 %v6526, %v6750
  %v6783 = vmul.f32 %v6527, %v6751
  %v6784 = vmul.f32 %v6528, %v6752
  %v6785 = vmul.f32 %v6529, %v6753
  %v6786 = vmul.f32 %v6530, %v6754
  %v6787 = vmul.f32 %v6531, %v6755
  %v6788 = vmul.f32 %v6532, %v6756
  %v6789 = vmul.f32 %v6533, %v6757
  %v6790 = vmul.f32 %v6534, %v6758
  %v6791 = vmul.f32 %v6535, %v6759
  %v6792 = vmul.f32 %v6536, %v6760
  %v6793 = vmul.f32 %v6537, %v6761
  %v6794 = vmul.f32 %v6538, %v6762
  %v6795 = vmul.f32 %v6539, %v6763
  %v6796 = vmul.f32 %v6540, %v6764
  %v6797 = vmul.f32 %v6541, %v6765
  %v6798 = vmul.f32 %v6542, %v6766
  %v6799 = vmul.f32 %v6543, %v6767
  %v6800 = vld [vmem:[%s10] sm:$0xff]
  %v6801 = vld [vmem:[%s10 + $0x8] sm:$0xff]
  %v6802 = vld [vmem:[%s10 + $0x10] sm:$0xff]
  %v6803 = vld [vmem:[%s10 + $0x18] sm:$0xff]
  %v6804 = vpack.c.bf16 %v6769, %v6768
  %v6805 = vpack.c.bf16 %v6771, %v6770
  %v6806 = vpack.c.bf16 %v6773, %v6772
  %v6807 = vpack.c.bf16 %v6775, %v6774
  %v6808 = vpack.c.bf16 %v6777, %v6776
  %v6809 = vpack.c.bf16 %v6779, %v6778
  %v6810 = vpack.c.bf16 %v6781, %v6780
  %v6811 = vpack.c.bf16 %v6783, %v6782
  %v6812 = vpack.c.bf16 %v6785, %v6784
  %v6813 = vpack.c.bf16 %v6787, %v6786
  %v6814 = vpack.c.bf16 %v6789, %v6788
  %v6815 = vpack.c.bf16 %v6791, %v6790
  %v6816 = vpack.c.bf16 %v6793, %v6792
  %v6817 = vpack.c.bf16 %v6795, %v6794
  %v6818 = vpack.c.bf16 %v6797, %v6796
  %v6819 = vpack.c.bf16 %v6799, %v6798
  %v6820 = vpack.c.bf16 %v6801, %v6800
  %v6821 = vpack.c.bf16 %v6803, %v6802
  %v6822 = vld [vmem:[%s11] sm:$0x1]
  %v6824 = vlaneseq
  %v6825 = vshrl.u32 %v6824, 7
  %v6826 = vsub.s32 0, %v6825
  %v6827 = vrot.slane %v6822, %v6826
  %v6830 = vsel %vm115, %v6804, 0
  %v6833 = vsel %vm115, %v6805, 0
  %v6836 = vsel %vm115, %v6806, 0
  %v6839 = vsel %vm115, %v6807, 0
  %v6842 = vsel %vm115, %v6808, 0
  %v6845 = vsel %vm115, %v6809, 0
  %v6848 = vsel %vm115, %v6810, 0
  %v6851 = vsel %vm115, %v6811, 0
  %v6854 = vsel %vm115, %v6812, 0
  %v6857 = vsel %vm115, %v6813, 0
  %v6860 = vsel %vm115, %v6814, 0
  %v6863 = vsel %vm115, %v6815, 0
  %v6866 = vsel %vm115, %v6816, 0
  %v6869 = vsel %vm115, %v6817, 0
  %v6872 = vsel %vm115, %v6818, 0
  %v6875 = vsel %vm115, %v6819, 0
  %6877 = vmatprep.subr.bf16.mxu0 0
  %6878 = vmatpush1.bf16.msra.mxu0 %v6820
  %6879 = vmatprep.subr.bf16.mxu0 0
  %6880 = vmatpush1.bf16.msra.mxu0 %v6821
  %6881 = vmatprep.subr.bf16.mxu0 0
  %6882 = vmatpush1.bf16.msra.mxu0 0
  %6883 = vmatprep.subr.bf16.mxu0 0
  %6884 = vmatpush1.bf16.msra.mxu0 0
  %6885 = vmatprep.subr.bf16.mxu0 0
  %6886 = vmatpush1.bf16.msra.mxu0 0
  %6887 = vmatprep.subr.bf16.mxu0 0
  %6888 = vmatpush1.bf16.msra.mxu0 0
  %6889 = vmatprep.subr.bf16.mxu0 0
  %6890 = vmatpush1.bf16.msra.mxu0 0
  %6891 = vmatprep.subr.bf16.mxu0 0
  %6892 = vmatpush1.bf16.msra.mxu0 0
  %6893 = vmatprep.subr.bf16.mxu0 0
  %6894 = vmatpush1.bf16.msra.mxu0 0
  %6895 = vmatprep.subr.bf16.mxu0 0
  %6896 = vmatpush1.bf16.msra.mxu0 0
  %6897 = vmatprep.subr.bf16.mxu0 0
  %6898 = vmatpush1.bf16.msra.mxu0 0
  %6899 = vmatprep.subr.bf16.mxu0 0
  %6900 = vmatpush1.bf16.msra.mxu0 0
  %6901 = vmatprep.subr.bf16.mxu0 0
  %6902 = vmatpush1.bf16.msra.mxu0 0
  %6903 = vmatprep.subr.bf16.mxu0 0
  %6904 = vmatpush1.bf16.msra.mxu0 0
  %6905 = vmatprep.subr.bf16.mxu0 0
  %6906 = vmatpush1.bf16.msra.mxu0 0
  %6907 = vmatprep.subr.bf16.mxu0 0
  %6908 = vmatpush1.bf16.msra.mxu0 0
  %6909 = vmatprep.mubr.bf16.mxu0 0
  %6910 = vmatmul.mubr.bf16.gmra.mrb[0].mxu0 %v6830
  %v6911 = vpop.f32.mrb[0].mxu0
  %v6912 = vadd.f32 %v6827, %v6911
  %v6913 = vpop.f32.mrb[0].mxu0
  %v6914 = vpop.f32.mrb[0].mxu0
  %v6915 = vadd.f32 %v6827, %v6914
  %v6916 = vpop.f32.mrb[0].mxu0
  %6917 = vmatprep.mubr.bf16.mxu0 0
  %6918 = vmatmul.mubr.bf16.gmra.mrb[0].mxu0 %v6833
  %v6919 = vpop.f32.mrb[0].mxu0
  %v6920 = vadd.f32 %v6827, %v6919
  %v6921 = vpop.f32.mrb[0].mxu0
  %v6922 = vpop.f32.mrb[0].mxu0
  %v6923 = vadd.f32 %v6827, %v6922
  %v6924 = vpop.f32.mrb[0].mxu0
  %6925 = vmatprep.mubr.bf16.mxu0 0
  %6926 = vmatmul.mubr.bf16.gmra.mrb[0].mxu0 %v6836
  %v6927 = vpop.f32.mrb[0].mxu0
  %v6928 = vadd.f32 %v6827, %v6927
  %v6929 = vpop.f32.mrb[0].mxu0
  %v6930 = vpop.f32.mrb[0].mxu0
  %v6931 = vadd.f32 %v6827, %v6930
  %v6932 = vpop.f32.mrb[0].mxu0
  %6933 = vmatprep.mubr.bf16.mxu0 0
  %6934 = vmatmul.mubr.bf16.gmra.mrb[0].mxu0 %v6839
  %v6935 = vpop.f32.mrb[0].mxu0
  %v6936 = vadd.f32 %v6827, %v6935
  %v6937 = vpop.f32.mrb[0].mxu0
  %v6938 = vpop.f32.mrb[0].mxu0
  %v6939 = vadd.f32 %v6827, %v6938
  %v6940 = vpop.f32.mrb[0].mxu0
  %6941 = vmatprep.mubr.bf16.mxu0 0
  %6942 = vmatmul.mubr.bf16.gmra.mrb[0].mxu0 %v6842
  %v6943 = vpop.f32.mrb[0].mxu0
  %v6944 = vadd.f32 %v6827, %v6943
  %v6945 = vpop.f32.mrb[0].mxu0
  %v6946 = vpop.f32.mrb[0].mxu0
  %v6947 = vadd.f32 %v6827, %v6946
  %v6948 = vpop.f32.mrb[0].mxu0
  %6949 = vmatprep.mubr.bf16.mxu0 0
  %6950 = vmatmul.mubr.bf16.gmra.mrb[0].mxu0 %v6845
  %v6951 = vpop.f32.mrb[0].mxu0
  %v6952 = vadd.f32 %v6827, %v6951
  %v6953 = vpop.f32.mrb[0].mxu0
  %v6954 = vpop.f32.mrb[0].mxu0
  %v6955 = vadd.f32 %v6827, %v6954
  %v6956 = vpop.f32.mrb[0].mxu0
  %6957 = vmatprep.mubr.bf16.mxu0 0
  %6958 = vmatmul.mubr.bf16.gmra.mrb[0].mxu0 %v6848
  %v6959 = vpop.f32.mrb[0].mxu0
  %v6960 = vadd.f32 %v6827, %v6959
  %v6961 = vpop.f32.mrb[0].mxu0
  %v6962 = vpop.f32.mrb[0].mxu0
  %v6963 = vadd.f32 %v6827, %v6962
  %v6964 = vpop.f32.mrb[0].mxu0
  %6965 = vmatprep.mubr.bf16.mxu0 0
  %6966 = vmatmul.mubr.bf16.gmra.mrb[0].mxu0 %v6851
  %v6967 = vpop.f32.mrb[0].mxu0
  %v6968 = vadd.f32 %v6827, %v6967
  %v6969 = vpop.f32.mrb[0].mxu0
  %v6970 = vpop.f32.mrb[0].mxu0
  %v6971 = vadd.f32 %v6827, %v6970
  %v6972 = vpop.f32.mrb[0].mxu0
  %6973 = vmatprep.mubr.bf16.mxu0 0
  %6974 = vmatmul.mubr.bf16.gmra.mrb[0].mxu0 %v6854
  %v6975 = vpop.f32.mrb[0].mxu0
  %v6976 = vadd.f32 %v6827, %v6975
  %v6977 = vpop.f32.mrb[0].mxu0
  %v6978 = vpop.f32.mrb[0].mxu0
  %v6979 = vadd.f32 %v6827, %v6978
  %v6980 = vpop.f32.mrb[0].mxu0
  %6981 = vmatprep.mubr.bf16.mxu0 0
  %6982 = vmatmul.mubr.bf16.gmra.mrb[0].mxu0 %v6857
  %v6983 = vpop.f32.mrb[0].mxu0
  %v6984 = vadd.f32 %v6827, %v6983
  %v6985 = vpop.f32.mrb[0].mxu0
  %v6986 = vpop.f32.mrb[0].mxu0
  %v6987 = vadd.f32 %v6827, %v6986
  %v6988 = vpop.f32.mrb[0].mxu0
  %6989 = vmatprep.mubr.bf16.mxu0 0
  %6990 = vmatmul.mubr.bf16.gmra.mrb[0].mxu0 %v6860
  %v6991 = vpop.f32.mrb[0].mxu0
  %v6992 = vadd.f32 %v6827, %v6991
  %v6993 = vpop.f32.mrb[0].mxu0
  %v6994 = vpop.f32.mrb[0].mxu0
  %v6995 = vadd.f32 %v6827, %v6994
  %v6996 = vpop.f32.mrb[0].mxu0
  %6997 = vmatprep.mubr.bf16.mxu0 0
  %6998 = vmatmul.mubr.bf16.gmra.mrb[0].mxu0 %v6863
  %v6999 = vpop.f32.mrb[0].mxu0
  %v7000 = vadd.f32 %v6827, %v6999
  %v7001 = vpop.f32.mrb[0].mxu0
  %v7002 = vpop.f32.mrb[0].mxu0
  %v7003 = vadd.f32 %v6827, %v7002
  %v7004 = vpop.f32.mrb[0].mxu0
  %7005 = vmatprep.mubr.bf16.mxu0 0
  %7006 = vmatmul.mubr.bf16.gmra.mrb[0].mxu0 %v6866
  %v7007 = vpop.f32.mrb[0].mxu0
  %v7008 = vadd.f32 %v6827, %v7007
  %v7009 = vpop.f32.mrb[0].mxu0
  %v7010 = vpop.f32.mrb[0].mxu0
  %v7011 = vadd.f32 %v6827, %v7010
  %v7012 = vpop.f32.mrb[0].mxu0
  %7013 = vmatprep.mubr.bf16.mxu0 0
  %7014 = vmatmul.mubr.bf16.gmra.mrb[0].mxu0 %v6869
  %v7015 = vpop.f32.mrb[0].mxu0
  %v7016 = vadd.f32 %v6827, %v7015
  %v7017 = vpop.f32.mrb[0].mxu0
  %v7018 = vpop.f32.mrb[0].mxu0
  %v7019 = vadd.f32 %v6827, %v7018
  %v7020 = vpop.f32.mrb[0].mxu0
  %7021 = vmatprep.mubr.bf16.mxu0 0
  %7022 = vmatmul.mubr.bf16.gmra.mrb[0].mxu0 %v6872
  %v7023 = vpop.f32.mrb[0].mxu0
  %v7024 = vadd.f32 %v6827, %v7023
  %v7025 = vpop.f32.mrb[0].mxu0
  %v7026 = vpop.f32.mrb[0].mxu0
  %v7027 = vadd.f32 %v6827, %v7026
  %v7028 = vpop.f32.mrb[0].mxu0
  %7029 = vmatprep.mubr.bf16.mxu0 0
  %7030 = vmatmul.mubr.bf16.gmra.mrb[0].mxu0 %v6875
  %v7031 = vpop.f32.mrb[0].mxu0
  %v7032 = vadd.f32 %v6827, %v7031
  %v7033 = vpop.f32.mrb[0].mxu0
  %v7034 = vpop.f32.mrb[0].mxu0
  %v7035 = vadd.f32 %v6827, %v7034
  %v7036 = vpop.f32.mrb[0].mxu0
  %7037 = vdwg.mxu0
  %v7038 = vmax.f32 %v6912, 0.0
  %v7039 = vmax.f32 %v6915, 0.0
  %v7040 = vmax.f32 %v6920, 0.0
  %v7041 = vmax.f32 %v6923, 0.0
  %v7042 = vmax.f32 %v6928, 0.0
  %v7043 = vmax.f32 %v6931, 0.0
  %v7044 = vmax.f32 %v6936, 0.0
  %v7045 = vmax.f32 %v6939, 0.0
  %v7046 = vmax.f32 %v6944, 0.0
  %v7047 = vmax.f32 %v6947, 0.0
  %v7048 = vmax.f32 %v6952, 0.0
  %v7049 = vmax.f32 %v6955, 0.0
  %v7050 = vmax.f32 %v6960, 0.0
  %v7051 = vmax.f32 %v6963, 0.0
  %v7052 = vmax.f32 %v6968, 0.0
  %v7053 = vmax.f32 %v6971, 0.0
  %v7054 = vmax.f32 %v6976, 0.0
  %v7055 = vmax.f32 %v6979, 0.0
  %v7056 = vmax.f32 %v6984, 0.0
  %v7057 = vmax.f32 %v6987, 0.0
  %v7058 = vmax.f32 %v6992, 0.0
  %v7059 = vmax.f32 %v6995, 0.0
  %v7060 = vmax.f32 %v7000, 0.0
  %v7061 = vmax.f32 %v7003, 0.0
  %v7062 = vmax.f32 %v7008, 0.0
  %v7063 = vmax.f32 %v7011, 0.0
  %v7064 = vmax.f32 %v7016, 0.0
  %v7065 = vmax.f32 %v7019, 0.0
  %v7066 = vmax.f32 %v7024, 0.0
  %v7067 = vmax.f32 %v7027, 0.0
  %v7068 = vmax.f32 %v7032, 0.0
  %v7069 = vmax.f32 %v7035, 0.0
  %v7070 = vld [vmem:[%s12] sm:$0xff]
  %v7071 = vld [vmem:[%s12 + $0x8] sm:$0xff]
  %v7072 = vpack.c.bf16 %v7039, %v7038
  %v7073 = vpack.c.bf16 %v7041, %v7040
  %v7074 = vpack.c.bf16 %v7043, %v7042
  %v7075 = vpack.c.bf16 %v7045, %v7044
  %v7076 = vpack.c.bf16 %v7047, %v7046
  %v7077 = vpack.c.bf16 %v7049, %v7048
  %v7078 = vpack.c.bf16 %v7051, %v7050
  %v7079 = vpack.c.bf16 %v7053, %v7052
  %v7080 = vpack.c.bf16 %v7055, %v7054
  %v7081 = vpack.c.bf16 %v7057, %v7056
  %v7082 = vpack.c.bf16 %v7059, %v7058
  %v7083 = vpack.c.bf16 %v7061, %v7060
  %v7084 = vpack.c.bf16 %v7063, %v7062
  %v7085 = vpack.c.bf16 %v7065, %v7064
  %v7086 = vpack.c.bf16 %v7067, %v7066
  %v7087 = vpack.c.bf16 %v7069, %v7068
  %v7088 = vpack.c.bf16 %v7071, %v7070
  %vm7089 = vcmask 130048
  %v7091 = vsel %vm7089, %v7072, 0
  %v7094 = vsel %vm7089, %v7073, 0
  %v7097 = vsel %vm7089, %v7074, 0
  %v7100 = vsel %vm7089, %v7075, 0
  %v7103 = vsel %vm7089, %v7076, 0
  %v7106 = vsel %vm7089, %v7077, 0
  %v7109 = vsel %vm7089, %v7078, 0
  %v7112 = vsel %vm7089, %v7079, 0
  %v7115 = vsel %vm7089, %v7080, 0
  %v7118 = vsel %vm7089, %v7081, 0
  %v7121 = vsel %vm7089, %v7082, 0
  %v7124 = vsel %vm7089, %v7083, 0
  %v7127 = vsel %vm7089, %v7084, 0
  %v7130 = vsel %vm7089, %v7085, 0
  %v7133 = vsel %vm7089, %v7086, 0
  %v7136 = vsel %vm7089, %v7087, 0
  %7138 = vmatprep.subr.bf16.mxu0 0
  %7139 = vmatpush1.bf16.msra.mxu0 %v7088
  %7140 = vmatprep.subr.bf16.mxu0 0
  %7141 = vmatpush1.bf16.msra.mxu0 0
  %7142 = vmatprep.subr.bf16.mxu0 0
  %7143 = vmatpush1.bf16.msra.mxu0 0
  %7144 = vmatprep.subr.bf16.mxu0 0
  %7145 = vmatpush1.bf16.msra.mxu0 0
  %7146 = vmatprep.subr.bf16.mxu0 0
  %7147 = vmatpush1.bf16.msra.mxu0 0
  %7148 = vmatprep.subr.bf16.mxu0 0
  %7149 = vmatpush1.bf16.msra.mxu0 0
  %7150 = vmatprep.subr.bf16.mxu0 0
  %7151 = vmatpush1.bf16.msra.mxu0 0
  %7152 = vmatprep.subr.bf16.mxu0 0
  %7153 = vmatpush1.bf16.msra.mxu0 0
  %7154 = vmatprep.subr.bf16.mxu0 0
  %7155 = vmatpush1.bf16.msra.mxu0 0
  %7156 = vmatprep.subr.bf16.mxu0 0
  %7157 = vmatpush1.bf16.msra.mxu0 0
  %7158 = vmatprep.subr.bf16.mxu0 0
  %7159 = vmatpush1.bf16.msra.mxu0 0
  %7160 = vmatprep.subr.bf16.mxu0 0
  %7161 = vmatpush1.bf16.msra.mxu0 0
  %7162 = vmatprep.subr.bf16.mxu0 0
  %7163 = vmatpush1.bf16.msra.mxu0 0
  %7164 = vmatprep.subr.bf16.mxu0 0
  %7165 = vmatpush1.bf16.msra.mxu0 0
  %7166 = vmatprep.subr.bf16.mxu0 0
  %7167 = vmatpush1.bf16.msra.mxu0 0
  %7168 = vmatprep.subr.bf16.mxu0 0
  %7169 = vmatpush1.bf16.msra.mxu0 0
  %7170 = vmatprep.mubr.bf16.mxu0 0
  %7171 = vmatmul.mubr.bf16.gmra.mrb[0].mxu0 %v7091
  %v7172 = vpop.f32.mrb[0].mxu0
  %v7173 = vadd.f32 0.0, %v7172
  %v7174 = vpop.f32.mrb[0].mxu0
  %v7175 = vpop.f32.mrb[0].mxu0
  %v7176 = vadd.f32 0.0, %v7175
  %v7177 = vpop.f32.mrb[0].mxu0
  %7178 = vmatprep.mubr.bf16.mxu0 0
  %7179 = vmatmul.mubr.bf16.gmra.mrb[0].mxu0 %v7094
  %v7180 = vpop.f32.mrb[0].mxu0
  %v7181 = vadd.f32 0.0, %v7180
  %v7182 = vpop.f32.mrb[0].mxu0
  %v7183 = vpop.f32.mrb[0].mxu0
  %v7184 = vadd.f32 0.0, %v7183
  %v7185 = vpop.f32.mrb[0].mxu0
  %7186 = vmatprep.mubr.bf16.mxu0 0
  %7187 = vmatmul.mubr.bf16.gmra.mrb[0].mxu0 %v7097
  %v7188 = vpop.f32.mrb[0].mxu0
  %v7189 = vadd.f32 0.0, %v7188
  %v7190 = vpop.f32.mrb[0].mxu0
  %v7191 = vpop.f32.mrb[0].mxu0
  %v7192 = vadd.f32 0.0, %v7191
  %v7193 = vpop.f32.mrb[0].mxu0
  %7194 = vmatprep.mubr.bf16.mxu0 0
  %7195 = vmatmul.mubr.bf16.gmra.mrb[0].mxu0 %v7100
  %v7196 = vpop.f32.mrb[0].mxu0
  %v7197 = vadd.f32 0.0, %v7196
  %v7198 = vpop.f32.mrb[0].mxu0
  %v7199 = vpop.f32.mrb[0].mxu0
  %v7200 = vadd.f32 0.0, %v7199
  %v7201 = vpop.f32.mrb[0].mxu0
  %7202 = vmatprep.mubr.bf16.mxu0 0
  %7203 = vmatmul.mubr.bf16.gmra.mrb[0].mxu0 %v7103
  %v7204 = vpop.f32.mrb[0].mxu0
  %v7205 = vadd.f32 0.0, %v7204
  %v7206 = vpop.f32.mrb[0].mxu0
  %v7207 = vpop.f32.mrb[0].mxu0
  %v7208 = vadd.f32 0.0, %v7207
  %v7209 = vpop.f32.mrb[0].mxu0
  %7210 = vmatprep.mubr.bf16.mxu0 0
  %7211 = vmatmul.mubr.bf16.gmra.mrb[0].mxu0 %v7106
  %v7212 = vpop.f32.mrb[0].mxu0
  %v7213 = vadd.f32 0.0, %v7212
  %v7214 = vpop.f32.mrb[0].mxu0
  %v7215 = vpop.f32.mrb[0].mxu0
  %v7216 = vadd.f32 0.0, %v7215
  %v7217 = vpop.f32.mrb[0].mxu0
  %7218 = vmatprep.mubr.bf16.mxu0 0
  %7219 = vmatmul.mubr.bf16.gmra.mrb[0].mxu0 %v7109
  %v7220 = vpop.f32.mrb[0].mxu0
  %v7221 = vadd.f32 0.0, %v7220
  %v7222 = vpop.f32.mrb[0].mxu0
  %v7223 = vpop.f32.mrb[0].mxu0
  %v7224 = vadd.f32 0.0, %v7223
  %v7225 = vpop.f32.mrb[0].mxu0
  %7226 = vmatprep.mubr.bf16.mxu0 0
  %7227 = vmatmul.mubr.bf16.gmra.mrb[0].mxu0 %v7112
  %v7228 = vpop.f32.mrb[0].mxu0
  %v7229 = vadd.f32 0.0, %v7228
  %v7230 = vpop.f32.mrb[0].mxu0
  %v7231 = vpop.f32.mrb[0].mxu0
  %v7232 = vadd.f32 0.0, %v7231
  %v7233 = vpop.f32.mrb[0].mxu0
  %7234 = vmatprep.mubr.bf16.mxu0 0
  %7235 = vmatmul.mubr.bf16.gmra.mrb[0].mxu0 %v7115
  %v7236 = vpop.f32.mrb[0].mxu0
  %v7237 = vadd.f32 0.0, %v7236
  %v7238 = vpop.f32.mrb[0].mxu0
  %v7239 = vpop.f32.mrb[0].mxu0
  %v7240 = vadd.f32 0.0, %v7239
  %v7241 = vpop.f32.mrb[0].mxu0
  %7242 = vmatprep.mubr.bf16.mxu0 0
  %7243 = vmatmul.mubr.bf16.gmra.mrb[0].mxu0 %v7118
  %v7244 = vpop.f32.mrb[0].mxu0
  %v7245 = vadd.f32 0.0, %v7244
  %v7246 = vpop.f32.mrb[0].mxu0
  %v7247 = vpop.f32.mrb[0].mxu0
  %v7248 = vadd.f32 0.0, %v7247
  %v7249 = vpop.f32.mrb[0].mxu0
  %7250 = vmatprep.mubr.bf16.mxu0 0
  %7251 = vmatmul.mubr.bf16.gmra.mrb[0].mxu0 %v7121
  %v7252 = vpop.f32.mrb[0].mxu0
  %v7253 = vadd.f32 0.0, %v7252
  %v7254 = vpop.f32.mrb[0].mxu0
  %v7255 = vpop.f32.mrb[0].mxu0
  %v7256 = vadd.f32 0.0, %v7255
  %v7257 = vpop.f32.mrb[0].mxu0
  %7258 = vmatprep.mubr.bf16.mxu0 0
  %7259 = vmatmul.mubr.bf16.gmra.mrb[0].mxu0 %v7124
  %v7260 = vpop.f32.mrb[0].mxu0
  %v7261 = vadd.f32 0.0, %v7260
  %v7262 = vpop.f32.mrb[0].mxu0
  %v7263 = vpop.f32.mrb[0].mxu0
  %v7264 = vadd.f32 0.0, %v7263
  %v7265 = vpop.f32.mrb[0].mxu0
  %7266 = vmatprep.mubr.bf16.mxu0 0
  %7267 = vmatmul.mubr.bf16.gmra.mrb[0].mxu0 %v7127
  %v7268 = vpop.f32.mrb[0].mxu0
  %v7269 = vadd.f32 0.0, %v7268
  %v7270 = vpop.f32.mrb[0].mxu0
  %v7271 = vpop.f32.mrb[0].mxu0
  %v7272 = vadd.f32 0.0, %v7271
  %v7273 = vpop.f32.mrb[0].mxu0
  %7274 = vmatprep.mubr.bf16.mxu0 0
  %7275 = vmatmul.mubr.bf16.gmra.mrb[0].mxu0 %v7130
  %v7276 = vpop.f32.mrb[0].mxu0
  %v7277 = vadd.f32 0.0, %v7276
  %v7278 = vpop.f32.mrb[0].mxu0
  %v7279 = vpop.f32.mrb[0].mxu0
  %v7280 = vadd.f32 0.0, %v7279
  %v7281 = vpop.f32.mrb[0].mxu0
  %7282 = vmatprep.mubr.bf16.mxu0 0
  %7283 = vmatmul.mubr.bf16.gmra.mrb[0].mxu0 %v7133
  %v7284 = vpop.f32.mrb[0].mxu0
  %v7285 = vadd.f32 0.0, %v7284
  %v7286 = vpop.f32.mrb[0].mxu0
  %v7287 = vpop.f32.mrb[0].mxu0
  %v7288 = vadd.f32 0.0, %v7287
  %v7289 = vpop.f32.mrb[0].mxu0
  %7290 = vmatprep.mubr.bf16.mxu0 0
  %7291 = vmatmul.mubr.bf16.gmra.mrb[0].mxu0 %v7136
  %v7292 = vpop.f32.mrb[0].mxu0
  %v7293 = vadd.f32 0.0, %v7292
  %v7294 = vpop.f32.mrb[0].mxu0
  %v7295 = vpop.f32.mrb[0].mxu0
  %v7296 = vadd.f32 0.0, %v7295
  %v7297 = vpop.f32.mrb[0].mxu0
  %7298 = vdwg.mxu0
  %v7299 = vadd.f32 %v6768, %v7173
  %v7300 = vadd.f32 %v6769, %v7176
  %v7301 = vadd.f32 %v6770, %v7181
  %v7302 = vadd.f32 %v6771, %v7184
  %v7303 = vadd.f32 %v6772, %v7189
  %v7304 = vadd.f32 %v6773, %v7192
  %v7305 = vadd.f32 %v6774, %v7197
  %v7306 = vadd.f32 %v6775, %v7200
  %v7307 = vadd.f32 %v6776, %v7205
  %v7308 = vadd.f32 %v6777, %v7208
  %v7309 = vadd.f32 %v6778, %v7213
  %v7310 = vadd.f32 %v6779, %v7216
  %v7311 = vadd.f32 %v6780, %v7221
  %v7312 = vadd.f32 %v6781, %v7224
  %v7313 = vadd.f32 %v6782, %v7229
  %v7314 = vadd.f32 %v6783, %v7232
  %v7315 = vadd.f32 %v6784, %v7237
  %v7316 = vadd.f32 %v6785, %v7240
  %v7317 = vadd.f32 %v6786, %v7245
  %v7318 = vadd.f32 %v6787, %v7248
  %v7319 = vadd.f32 %v6788, %v7253
  %v7320 = vadd.f32 %v6789, %v7256
  %v7321 = vadd.f32 %v6790, %v7261
  %v7322 = vadd.f32 %v6791, %v7264
  %v7323 = vadd.f32 %v6792, %v7269
  %v7324 = vadd.f32 %v6793, %v7272
  %v7325 = vadd.f32 %v6794, %v7277
  %v7326 = vadd.f32 %v6795, %v7280
  %v7327 = vadd.f32 %v6796, %v7285
  %v7328 = vadd.f32 %v6797, %v7288
  %v7329 = vadd.f32 %v6798, %v7293
  %v7330 = vadd.f32 %v6799, %v7296
  %v7331 = vld [vmem:[%s13] sm:$0x1]
  %v7333 = vlaneseq
  %v7334 = vshrl.u32 %v7333, 7
  %v7335 = vsub.s32 0, %v7334
  %v7336 = vrot.slane %v7331, %v7335
  %v7338 = vadd.f32 %v7299, %v7336
  %v7339 = vadd.f32 %v7300, %v7336
  %v7340 = vadd.f32 %v7301, %v7336
  %v7341 = vadd.f32 %v7302, %v7336
  %v7342 = vadd.f32 %v7303, %v7336
  %v7343 = vadd.f32 %v7304, %v7336
  %v7344 = vadd.f32 %v7305, %v7336
  %v7345 = vadd.f32 %v7306, %v7336
  %v7346 = vadd.f32 %v7307, %v7336
  %v7347 = vadd.f32 %v7308, %v7336
  %v7348 = vadd.f32 %v7309, %v7336
  %v7349 = vadd.f32 %v7310, %v7336
  %v7350 = vadd.f32 %v7311, %v7336
  %v7351 = vadd.f32 %v7312, %v7336
  %v7352 = vadd.f32 %v7313, %v7336
  %v7353 = vadd.f32 %v7314, %v7336
  %v7354 = vadd.f32 %v7315, %v7336
  %v7355 = vadd.f32 %v7316, %v7336
  %v7356 = vadd.f32 %v7317, %v7336
  %v7357 = vadd.f32 %v7318, %v7336
  %v7358 = vadd.f32 %v7319, %v7336
  %v7359 = vadd.f32 %v7320, %v7336
  %v7360 = vadd.f32 %v7321, %v7336
  %v7361 = vadd.f32 %v7322, %v7336
  %v7362 = vadd.f32 %v7323, %v7336
  %v7363 = vadd.f32 %v7324, %v7336
  %v7364 = vadd.f32 %v7325, %v7336
  %v7365 = vadd.f32 %v7326, %v7336
  %v7366 = vadd.f32 %v7327, %v7336
  %v7367 = vadd.f32 %v7328, %v7336
  %v7368 = vadd.f32 %v7329, %v7336
  %v7369 = vadd.f32 %v7330, %v7336
  %v7370 = vadd.f32 %v54, %v7338
  %v7371 = vadd.f32 %v55, %v7339
  %v7372 = vadd.f32 %v56, %v7340
  %v7373 = vadd.f32 %v57, %v7341
  %v7374 = vadd.f32 %v58, %v7342
  %v7375 = vadd.f32 %v59, %v7343
  %v7376 = vadd.f32 %v60, %v7344
  %v7377 = vadd.f32 %v61, %v7345
  %v7378 = vadd.f32 %v62, %v7346
  %v7379 = vadd.f32 %v63, %v7347
  %v7380 = vadd.f32 %v64, %v7348
  %v7381 = vadd.f32 %v65, %v7349
  %v7382 = vadd.f32 %v66, %v7350
  %v7383 = vadd.f32 %v67, %v7351
  %v7384 = vadd.f32 %v68, %v7352
  %v7385 = vadd.f32 %v69, %v7353
  %v7386 = vadd.f32 %v70, %v7354
  %v7387 = vadd.f32 %v71, %v7355
  %v7388 = vadd.f32 %v72, %v7356
  %v7389 = vadd.f32 %v73, %v7357
  %v7390 = vadd.f32 %v74, %v7358
  %v7391 = vadd.f32 %v75, %v7359
  %v7392 = vadd.f32 %v76, %v7360
  %v7393 = vadd.f32 %v77, %v7361
  %v7394 = vadd.f32 %v78, %v7362
  %v7395 = vadd.f32 %v79, %v7363
  %v7396 = vadd.f32 %v80, %v7364
  %v7397 = vadd.f32 %v81, %v7365
  %v7398 = vadd.f32 %v82, %v7366
  %v7399 = vadd.f32 %v83, %v7367
  %v7400 = vadd.f32 %v84, %v7368
  %v7401 = vadd.f32 %v85, %v7369
  %v7402 = vsel %vm115, %v7370, 0.0
  %7403 = vadd.xlane.f32.xlu0 %v7402
  %v7404 = vpop.xlane.xlu0 %7403
  %v7405 = vsel %vm115, %v7371, 0.0
  %7406 = vadd.xlane.f32.xlu0 %v7405
  %v7407 = vpop.xlane.xlu0 %7406
  %v7408 = vsel %vm115, %v7372, 0.0
  %7409 = vadd.xlane.f32.xlu0 %v7408
  %v7410 = vpop.xlane.xlu0 %7409
  %v7411 = vsel %vm115, %v7373, 0.0
  %7412 = vadd.xlane.f32.xlu0 %v7411
  %v7413 = vpop.xlane.xlu0 %7412
  %v7414 = vsel %vm115, %v7374, 0.0
  %7415 = vadd.xlane.f32.xlu0 %v7414
  %v7416 = vpop.xlane.xlu0 %7415
  %v7417 = vsel %vm115, %v7375, 0.0
  %7418 = vadd.xlane.f32.xlu0 %v7417
  %v7419 = vpop.xlane.xlu0 %7418
  %v7420 = vsel %vm115, %v7376, 0.0
  %7421 = vadd.xlane.f32.xlu0 %v7420
  %v7422 = vpop.xlane.xlu0 %7421
  %v7423 = vsel %vm115, %v7377, 0.0
  %7424 = vadd.xlane.f32.xlu0 %v7423
  %v7425 = vpop.xlane.xlu0 %7424
  %v7426 = vsel %vm115, %v7378, 0.0
  %7427 = vadd.xlane.f32.xlu0 %v7426
  %v7428 = vpop.xlane.xlu0 %7427
  %v7429 = vsel %vm115, %v7379, 0.0
  %7430 = vadd.xlane.f32.xlu0 %v7429
  %v7431 = vpop.xlane.xlu0 %7430
  %v7432 = vsel %vm115, %v7380, 0.0
  %7433 = vadd.xlane.f32.xlu0 %v7432
  %v7434 = vpop.xlane.xlu0 %7433
  %v7435 = vsel %vm115, %v7381, 0.0
  %7436 = vadd.xlane.f32.xlu0 %v7435
  %v7437 = vpop.xlane.xlu0 %7436
  %v7438 = vsel %vm115, %v7382, 0.0
  %7439 = vadd.xlane.f32.xlu0 %v7438
  %v7440 = vpop.xlane.xlu0 %7439
  %v7441 = vsel %vm115, %v7383, 0.0
  %7442 = vadd.xlane.f32.xlu0 %v7441
  %v7443 = vpop.xlane.xlu0 %7442
  %v7444 = vsel %vm115, %v7384, 0.0
  %7445 = vadd.xlane.f32.xlu0 %v7444
  %v7446 = vpop.xlane.xlu0 %7445
  %v7447 = vsel %vm115, %v7385, 0.0
  %7448 = vadd.xlane.f32.xlu0 %v7447
  %v7449 = vpop.xlane.xlu0 %7448
  %v7450 = vsel %vm115, %v7386, 0.0
  %7451 = vadd.xlane.f32.xlu0 %v7450
  %v7452 = vpop.xlane.xlu0 %7451
  %v7453 = vsel %vm115, %v7387, 0.0
  %7454 = vadd.xlane.f32.xlu0 %v7453
  %v7455 = vpop.xlane.xlu0 %7454
  %v7456 = vsel %vm115, %v7388, 0.0
  %7457 = vadd.xlane.f32.xlu0 %v7456
  %v7458 = vpop.xlane.xlu0 %7457
  %v7459 = vsel %vm115, %v7389, 0.0
  %7460 = vadd.xlane.f32.xlu0 %v7459
  %v7461 = vpop.xlane.xlu0 %7460
  %v7462 = vsel %vm115, %v7390, 0.0
  %7463 = vadd.xlane.f32.xlu0 %v7462
  %v7464 = vpop.xlane.xlu0 %7463
  %v7465 = vsel %vm115, %v7391, 0.0
  %7466 = vadd.xlane.f32.xlu0 %v7465
  %v7467 = vpop.xlane.xlu0 %7466
  %v7468 = vsel %vm115, %v7392, 0.0
  %7469 = vadd.xlane.f32.xlu0 %v7468
  %v7470 = vpop.xlane.xlu0 %7469
  %v7471 = vsel %vm115, %v7393, 0.0
  %7472 = vadd.xlane.f32.xlu0 %v7471
  %v7473 = vpop.xlane.xlu0 %7472
  %v7474 = vsel %vm115, %v7394, 0.0
  %7475 = vadd.xlane.f32.xlu0 %v7474
  %v7476 = vpop.xlane.xlu0 %7475
  %v7477 = vsel %vm115, %v7395, 0.0
  %7478 = vadd.xlane.f32.xlu0 %v7477
  %v7479 = vpop.xlane.xlu0 %7478
  %v7480 = vsel %vm115, %v7396, 0.0
  %7481 = vadd.xlane.f32.xlu0 %v7480
  %v7482 = vpop.xlane.xlu0 %7481
  %v7483 = vsel %vm115, %v7397, 0.0
  %7484 = vadd.xlane.f32.xlu0 %v7483
  %v7485 = vpop.xlane.xlu0 %7484
  %v7486 = vsel %vm115, %v7398, 0.0
  %7487 = vadd.xlane.f32.xlu0 %v7486
  %v7488 = vpop.xlane.xlu0 %7487
  %v7489 = vsel %vm115, %v7399, 0.0
  %7490 = vadd.xlane.f32.xlu0 %v7489
  %v7491 = vpop.xlane.xlu0 %7490
  %v7492 = vsel %vm115, %v7400, 0.0
  %7493 = vadd.xlane.f32.xlu0 %v7492
  %v7494 = vpop.xlane.xlu0 %7493
  %v7495 = vsel %vm115, %v7401, 0.0
  %7496 = vadd.xlane.f32.xlu0 %v7495
  %v7497 = vpop.xlane.xlu0 %7496
  %v7498 = vmul.f32 %v7404, %v5484
  %v7499 = vmul.f32 %v7407, %v5484
  %v7500 = vmul.f32 %v7410, %v5484
  %v7501 = vmul.f32 %v7413, %v5484
  %v7502 = vmul.f32 %v7416, %v5484
  %v7503 = vmul.f32 %v7419, %v5484
  %v7504 = vmul.f32 %v7422, %v5484
  %v7505 = vmul.f32 %v7425, %v5484
  %v7506 = vmul.f32 %v7428, %v5484
  %v7507 = vmul.f32 %v7431, %v5484
  %v7508 = vmul.f32 %v7434, %v5484
  %v7509 = vmul.f32 %v7437, %v5484
  %v7510 = vmul.f32 %v7440, %v5484
  %v7511 = vmul.f32 %v7443, %v5484
  %v7512 = vmul.f32 %v7446, %v5484
  %v7513 = vmul.f32 %v7449, %v5484
  %v7514 = vmul.f32 %v7452, %v5484
  %v7515 = vmul.f32 %v7455, %v5484
  %v7516 = vmul.f32 %v7458, %v5484
  %v7517 = vmul.f32 %v7461, %v5484
  %v7518 = vmul.f32 %v7464, %v5484
  %v7519 = vmul.f32 %v7467, %v5484
  %v7520 = vmul.f32 %v7470, %v5484
  %v7521 = vmul.f32 %v7473, %v5484
  %v7522 = vmul.f32 %v7476, %v5484
  %v7523 = vmul.f32 %v7479, %v5484
  %v7524 = vmul.f32 %v7482, %v5484
  %v7525 = vmul.f32 %v7485, %v5484
  %v7526 = vmul.f32 %v7488, %v5484
  %v7527 = vmul.f32 %v7491, %v5484
  %v7528 = vmul.f32 %v7494, %v5484
  %v7529 = vmul.f32 %v7497, %v5484
  %v7530 = vsub.f32 %v7370, %v7498
  %v7531 = vsub.f32 %v7371, %v7499
  %v7532 = vsub.f32 %v7372, %v7500
  %v7533 = vsub.f32 %v7373, %v7501
  %v7534 = vsub.f32 %v7374, %v7502
  %v7535 = vsub.f32 %v7375, %v7503
  %v7536 = vsub.f32 %v7376, %v7504
  %v7537 = vsub.f32 %v7377, %v7505
  %v7538 = vsub.f32 %v7378, %v7506
  %v7539 = vsub.f32 %v7379, %v7507
  %v7540 = vsub.f32 %v7380, %v7508
  %v7541 = vsub.f32 %v7381, %v7509
  %v7542 = vsub.f32 %v7382, %v7510
  %v7543 = vsub.f32 %v7383, %v7511
  %v7544 = vsub.f32 %v7384, %v7512
  %v7545 = vsub.f32 %v7385, %v7513
  %v7546 = vsub.f32 %v7386, %v7514
  %v7547 = vsub.f32 %v7387, %v7515
  %v7548 = vsub.f32 %v7388, %v7516
  %v7549 = vsub.f32 %v7389, %v7517
  %v7550 = vsub.f32 %v7390, %v7518
  %v7551 = vsub.f32 %v7391, %v7519
  %v7552 = vsub.f32 %v7392, %v7520
  %v7553 = vsub.f32 %v7393, %v7521
  %v7554 = vsub.f32 %v7394, %v7522
  %v7555 = vsub.f32 %v7395, %v7523
  %v7556 = vsub.f32 %v7396, %v7524
  %v7557 = vsub.f32 %v7397, %v7525
  %v7558 = vsub.f32 %v7398, %v7526
  %v7559 = vsub.f32 %v7399, %v7527
  %v7560 = vsub.f32 %v7400, %v7528
  %v7561 = vsub.f32 %v7401, %v7529
  %v7562 = vmul.f32 %v7530, %v7530
  %v7563 = vmul.f32 %v7531, %v7531
  %v7564 = vmul.f32 %v7532, %v7532
  %v7565 = vmul.f32 %v7533, %v7533
  %v7566 = vmul.f32 %v7534, %v7534
  %v7567 = vmul.f32 %v7535, %v7535
  %v7568 = vmul.f32 %v7536, %v7536
  %v7569 = vmul.f32 %v7537, %v7537
  %v7570 = vmul.f32 %v7538, %v7538
  %v7571 = vmul.f32 %v7539, %v7539
  %v7572 = vmul.f32 %v7540, %v7540
  %v7573 = vmul.f32 %v7541, %v7541
  %v7574 = vmul.f32 %v7542, %v7542
  %v7575 = vmul.f32 %v7543, %v7543
  %v7576 = vmul.f32 %v7544, %v7544
  %v7577 = vmul.f32 %v7545, %v7545
  %v7578 = vmul.f32 %v7546, %v7546
  %v7579 = vmul.f32 %v7547, %v7547
  %v7580 = vmul.f32 %v7548, %v7548
  %v7581 = vmul.f32 %v7549, %v7549
  %v7582 = vmul.f32 %v7550, %v7550
  %v7583 = vmul.f32 %v7551, %v7551
  %v7584 = vmul.f32 %v7552, %v7552
  %v7585 = vmul.f32 %v7553, %v7553
  %v7586 = vmul.f32 %v7554, %v7554
  %v7587 = vmul.f32 %v7555, %v7555
  %v7588 = vmul.f32 %v7556, %v7556
  %v7589 = vmul.f32 %v7557, %v7557
  %v7590 = vmul.f32 %v7558, %v7558
  %v7591 = vmul.f32 %v7559, %v7559
  %v7592 = vmul.f32 %v7560, %v7560
  %v7593 = vmul.f32 %v7561, %v7561
  %v7594 = vsel %vm115, %v7562, 0.0
  %7595 = vadd.xlane.f32.xlu0 %v7594
  %v7596 = vpop.xlane.xlu0 %7595
  %v7597 = vsel %vm115, %v7563, 0.0
  %7598 = vadd.xlane.f32.xlu0 %v7597
  %v7599 = vpop.xlane.xlu0 %7598
  %v7600 = vsel %vm115, %v7564, 0.0
  %7601 = vadd.xlane.f32.xlu0 %v7600
  %v7602 = vpop.xlane.xlu0 %7601
  %v7603 = vsel %vm115, %v7565, 0.0
  %7604 = vadd.xlane.f32.xlu0 %v7603
  %v7605 = vpop.xlane.xlu0 %7604
  %v7606 = vsel %vm115, %v7566, 0.0
  %7607 = vadd.xlane.f32.xlu0 %v7606
  %v7608 = vpop.xlane.xlu0 %7607
  %v7609 = vsel %vm115, %v7567, 0.0
  %7610 = vadd.xlane.f32.xlu0 %v7609
  %v7611 = vpop.xlane.xlu0 %7610
  %v7612 = vsel %vm115, %v7568, 0.0
  %7613 = vadd.xlane.f32.xlu0 %v7612
  %v7614 = vpop.xlane.xlu0 %7613
  %v7615 = vsel %vm115, %v7569, 0.0
  %7616 = vadd.xlane.f32.xlu0 %v7615
  %v7617 = vpop.xlane.xlu0 %7616
  %v7618 = vsel %vm115, %v7570, 0.0
  %7619 = vadd.xlane.f32.xlu0 %v7618
  %v7620 = vpop.xlane.xlu0 %7619
  %v7621 = vsel %vm115, %v7571, 0.0
  %7622 = vadd.xlane.f32.xlu0 %v7621
  %v7623 = vpop.xlane.xlu0 %7622
  %v7624 = vsel %vm115, %v7572, 0.0
  %7625 = vadd.xlane.f32.xlu0 %v7624
  %v7626 = vpop.xlane.xlu0 %7625
  %v7627 = vsel %vm115, %v7573, 0.0
  %7628 = vadd.xlane.f32.xlu0 %v7627
  %v7629 = vpop.xlane.xlu0 %7628
  %v7630 = vsel %vm115, %v7574, 0.0
  %7631 = vadd.xlane.f32.xlu0 %v7630
  %v7632 = vpop.xlane.xlu0 %7631
  %v7633 = vsel %vm115, %v7575, 0.0
  %7634 = vadd.xlane.f32.xlu0 %v7633
  %v7635 = vpop.xlane.xlu0 %7634
  %v7636 = vsel %vm115, %v7576, 0.0
  %7637 = vadd.xlane.f32.xlu0 %v7636
  %v7638 = vpop.xlane.xlu0 %7637
  %v7639 = vsel %vm115, %v7577, 0.0
  %7640 = vadd.xlane.f32.xlu0 %v7639
  %v7641 = vpop.xlane.xlu0 %7640
  %v7642 = vsel %vm115, %v7578, 0.0
  %7643 = vadd.xlane.f32.xlu0 %v7642
  %v7644 = vpop.xlane.xlu0 %7643
  %v7645 = vsel %vm115, %v7579, 0.0
  %7646 = vadd.xlane.f32.xlu0 %v7645
  %v7647 = vpop.xlane.xlu0 %7646
  %v7648 = vsel %vm115, %v7580, 0.0
  %7649 = vadd.xlane.f32.xlu0 %v7648
  %v7650 = vpop.xlane.xlu0 %7649
  %v7651 = vsel %vm115, %v7581, 0.0
  %7652 = vadd.xlane.f32.xlu0 %v7651
  %v7653 = vpop.xlane.xlu0 %7652
  %v7654 = vsel %vm115, %v7582, 0.0
  %7655 = vadd.xlane.f32.xlu0 %v7654
  %v7656 = vpop.xlane.xlu0 %7655
  %v7657 = vsel %vm115, %v7583, 0.0
  %7658 = vadd.xlane.f32.xlu0 %v7657
  %v7659 = vpop.xlane.xlu0 %7658
  %v7660 = vsel %vm115, %v7584, 0.0
  %7661 = vadd.xlane.f32.xlu0 %v7660
  %v7662 = vpop.xlane.xlu0 %7661
  %v7663 = vsel %vm115, %v7585, 0.0
  %7664 = vadd.xlane.f32.xlu0 %v7663
  %v7665 = vpop.xlane.xlu0 %7664
  %v7666 = vsel %vm115, %v7586, 0.0
  %7667 = vadd.xlane.f32.xlu0 %v7666
  %v7668 = vpop.xlane.xlu0 %7667
  %v7669 = vsel %vm115, %v7587, 0.0
  %7670 = vadd.xlane.f32.xlu0 %v7669
  %v7671 = vpop.xlane.xlu0 %7670
  %v7672 = vsel %vm115, %v7588, 0.0
  %7673 = vadd.xlane.f32.xlu0 %v7672
  %v7674 = vpop.xlane.xlu0 %7673
  %v7675 = vsel %vm115, %v7589, 0.0
  %7676 = vadd.xlane.f32.xlu0 %v7675
  %v7677 = vpop.xlane.xlu0 %7676
  %v7678 = vsel %vm115, %v7590, 0.0
  %7679 = vadd.xlane.f32.xlu0 %v7678
  %v7680 = vpop.xlane.xlu0 %7679
  %v7681 = vsel %vm115, %v7591, 0.0
  %7682 = vadd.xlane.f32.xlu0 %v7681
  %v7683 = vpop.xlane.xlu0 %7682
  %v7684 = vsel %vm115, %v7592, 0.0
  %7685 = vadd.xlane.f32.xlu0 %v7684
  %v7686 = vpop.xlane.xlu0 %7685
  %v7687 = vsel %vm115, %v7593, 0.0
  %7688 = vadd.xlane.f32.xlu0 %v7687
  %v7689 = vpop.xlane.xlu0 %7688
  %v7690 = vmul.f32 %v7596, %v5484
  %v7691 = vmul.f32 %v7599, %v5484
  %v7692 = vmul.f32 %v7602, %v5484
  %v7693 = vmul.f32 %v7605, %v5484
  %v7694 = vmul.f32 %v7608, %v5484
  %v7695 = vmul.f32 %v7611, %v5484
  %v7696 = vmul.f32 %v7614, %v5484
  %v7697 = vmul.f32 %v7617, %v5484
  %v7698 = vmul.f32 %v7620, %v5484
  %v7699 = vmul.f32 %v7623, %v5484
  %v7700 = vmul.f32 %v7626, %v5484
  %v7701 = vmul.f32 %v7629, %v5484
  %v7702 = vmul.f32 %v7632, %v5484
  %v7703 = vmul.f32 %v7635, %v5484
  %v7704 = vmul.f32 %v7638, %v5484
  %v7705 = vmul.f32 %v7641, %v5484
  %v7706 = vmul.f32 %v7644, %v5484
  %v7707 = vmul.f32 %v7647, %v5484
  %v7708 = vmul.f32 %v7650, %v5484
  %v7709 = vmul.f32 %v7653, %v5484
  %v7710 = vmul.f32 %v7656, %v5484
  %v7711 = vmul.f32 %v7659, %v5484
  %v7712 = vmul.f32 %v7662, %v5484
  %v7713 = vmul.f32 %v7665, %v5484
  %v7714 = vmul.f32 %v7668, %v5484
  %v7715 = vmul.f32 %v7671, %v5484
  %v7716 = vmul.f32 %v7674, %v5484
  %v7717 = vmul.f32 %v7677, %v5484
  %v7718 = vmul.f32 %v7680, %v5484
  %v7719 = vmul.f32 %v7683, %v5484
  %v7720 = vmul.f32 %v7686, %v5484
  %v7721 = vmul.f32 %v7689, %v5484
  %v7722 = vadd.f32 %v7690, 1e-05
  %v7723 = vadd.f32 %v7691, 1e-05
  %v7724 = vadd.f32 %v7692, 1e-05
  %v7725 = vadd.f32 %v7693, 1e-05
  %v7726 = vadd.f32 %v7694, 1e-05
  %v7727 = vadd.f32 %v7695, 1e-05
  %v7728 = vadd.f32 %v7696, 1e-05
  %v7729 = vadd.f32 %v7697, 1e-05
  %v7730 = vadd.f32 %v7698, 1e-05
  %v7731 = vadd.f32 %v7699, 1e-05
  %v7732 = vadd.f32 %v7700, 1e-05
  %v7733 = vadd.f32 %v7701, 1e-05
  %v7734 = vadd.f32 %v7702, 1e-05
  %v7735 = vadd.f32 %v7703, 1e-05
  %v7736 = vadd.f32 %v7704, 1e-05
  %v7737 = vadd.f32 %v7705, 1e-05
  %v7738 = vadd.f32 %v7706, 1e-05
  %v7739 = vadd.f32 %v7707, 1e-05
  %v7740 = vadd.f32 %v7708, 1e-05
  %v7741 = vadd.f32 %v7709, 1e-05
  %v7742 = vadd.f32 %v7710, 1e-05
  %v7743 = vadd.f32 %v7711, 1e-05
  %v7744 = vadd.f32 %v7712, 1e-05
  %v7745 = vadd.f32 %v7713, 1e-05
  %v7746 = vadd.f32 %v7714, 1e-05
  %v7747 = vadd.f32 %v7715, 1e-05
  %v7748 = vadd.f32 %v7716, 1e-05
  %v7749 = vadd.f32 %v7717, 1e-05
  %v7750 = vadd.f32 %v7718, 1e-05
  %v7751 = vadd.f32 %v7719, 1e-05
  %v7752 = vadd.f32 %v7720, 1e-05
  %v7753 = vadd.f32 %v7721, 1e-05
  %v7754 = vrsqrt.pop %v7722
  %v7755 = vrsqrt.pop %v7723
  %v7756 = vrsqrt.pop %v7724
  %v7757 = vrsqrt.pop %v7725
  %v7758 = vrsqrt.pop %v7726
  %v7759 = vrsqrt.pop %v7727
  %v7760 = vrsqrt.pop %v7728
  %v7761 = vrsqrt.pop %v7729
  %v7762 = vrsqrt.pop %v7730
  %v7763 = vrsqrt.pop %v7731
  %v7764 = vrsqrt.pop %v7732
  %v7765 = vrsqrt.pop %v7733
  %v7766 = vrsqrt.pop %v7734
  %v7767 = vrsqrt.pop %v7735
  %v7768 = vrsqrt.pop %v7736
  %v7769 = vrsqrt.pop %v7737
  %v7770 = vrsqrt.pop %v7738
  %v7771 = vrsqrt.pop %v7739
  %v7772 = vrsqrt.pop %v7740
  %v7773 = vrsqrt.pop %v7741
  %v7774 = vrsqrt.pop %v7742
  %v7775 = vrsqrt.pop %v7743
  %v7776 = vrsqrt.pop %v7744
  %v7777 = vrsqrt.pop %v7745
  %v7778 = vrsqrt.pop %v7746
  %v7779 = vrsqrt.pop %v7747
  %v7780 = vrsqrt.pop %v7748
  %v7781 = vrsqrt.pop %v7749
  %v7782 = vrsqrt.pop %v7750
  %v7783 = vrsqrt.pop %v7751
  %v7784 = vrsqrt.pop %v7752
  %v7785 = vrsqrt.pop %v7753
  %v7786 = vmul.f32 %v7530, %v7754
  %v7787 = vmul.f32 %v7531, %v7755
  %v7788 = vmul.f32 %v7532, %v7756
  %v7789 = vmul.f32 %v7533, %v7757
  %v7790 = vmul.f32 %v7534, %v7758
  %v7791 = vmul.f32 %v7535, %v7759
  %v7792 = vmul.f32 %v7536, %v7760
  %v7793 = vmul.f32 %v7537, %v7761
  %v7794 = vmul.f32 %v7538, %v7762
  %v7795 = vmul.f32 %v7539, %v7763
  %v7796 = vmul.f32 %v7540, %v7764
  %v7797 = vmul.f32 %v7541, %v7765
  %v7798 = vmul.f32 %v7542, %v7766
  %v7799 = vmul.f32 %v7543, %v7767
  %v7800 = vmul.f32 %v7544, %v7768
  %v7801 = vmul.f32 %v7545, %v7769
  %v7802 = vmul.f32 %v7546, %v7770
  %v7803 = vmul.f32 %v7547, %v7771
  %v7804 = vmul.f32 %v7548, %v7772
  %v7805 = vmul.f32 %v7549, %v7773
  %v7806 = vmul.f32 %v7550, %v7774
  %v7807 = vmul.f32 %v7551, %v7775
  %v7808 = vmul.f32 %v7552, %v7776
  %v7809 = vmul.f32 %v7553, %v7777
  %v7810 = vmul.f32 %v7554, %v7778
  %v7811 = vmul.f32 %v7555, %v7779
  %v7812 = vmul.f32 %v7556, %v7780
  %v7813 = vmul.f32 %v7557, %v7781
  %v7814 = vmul.f32 %v7558, %v7782
  %v7815 = vmul.f32 %v7559, %v7783
  %v7816 = vmul.f32 %v7560, %v7784
  %v7817 = vmul.f32 %v7561, %v7785
  %v7818 = vld [vmem:[%s14] sm:$0x1]
  %v7820 = vlaneseq
  %v7821 = vshrl.u32 %v7820, 7
  %v7822 = vsub.s32 0, %v7821
  %v7823 = vrot.slane %v7818, %v7822
  %v7825 = vmul.f32 %v7786, %v7823
  %v7826 = vmul.f32 %v7787, %v7823
  %v7827 = vmul.f32 %v7788, %v7823
  %v7828 = vmul.f32 %v7789, %v7823
  %v7829 = vmul.f32 %v7790, %v7823
  %v7830 = vmul.f32 %v7791, %v7823
  %v7831 = vmul.f32 %v7792, %v7823
  %v7832 = vmul.f32 %v7793, %v7823
  %v7833 = vmul.f32 %v7794, %v7823
  %v7834 = vmul.f32 %v7795, %v7823
  %v7835 = vmul.f32 %v7796, %v7823
  %v7836 = vmul.f32 %v7797, %v7823
  %v7837 = vmul.f32 %v7798, %v7823
  %v7838 = vmul.f32 %v7799, %v7823
  %v7839 = vmul.f32 %v7800, %v7823
  %v7840 = vmul.f32 %v7801, %v7823
  %v7841 = vmul.f32 %v7802, %v7823
  %v7842 = vmul.f32 %v7803, %v7823
  %v7843 = vmul.f32 %v7804, %v7823
  %v7844 = vmul.f32 %v7805, %v7823
  %v7845 = vmul.f32 %v7806, %v7823
  %v7846 = vmul.f32 %v7807, %v7823
  %v7847 = vmul.f32 %v7808, %v7823
  %v7848 = vmul.f32 %v7809, %v7823
  %v7849 = vmul.f32 %v7810, %v7823
  %v7850 = vmul.f32 %v7811, %v7823
  %v7851 = vmul.f32 %v7812, %v7823
  %v7852 = vmul.f32 %v7813, %v7823
  %v7853 = vmul.f32 %v7814, %v7823
  %v7854 = vmul.f32 %v7815, %v7823
  %v7855 = vmul.f32 %v7816, %v7823
  %v7856 = vmul.f32 %v7817, %v7823
  %v7857 = vld [vmem:[%s15] sm:$0x1]
  %v7859 = vlaneseq
  %v7860 = vshrl.u32 %v7859, 7
  %v7861 = vsub.s32 0, %v7860
  %v7862 = vrot.slane %v7857, %v7861
  %v7864 = vadd.f32 %v7825, %v7862
  %v7865 = vadd.f32 %v7826, %v7862
  %v7866 = vadd.f32 %v7827, %v7862
  %v7867 = vadd.f32 %v7828, %v7862
  %v7868 = vadd.f32 %v7829, %v7862
  %v7869 = vadd.f32 %v7830, %v7862
  %v7870 = vadd.f32 %v7831, %v7862
  %v7871 = vadd.f32 %v7832, %v7862
  %v7872 = vadd.f32 %v7833, %v7862
  %v7873 = vadd.f32 %v7834, %v7862
  %v7874 = vadd.f32 %v7835, %v7862
  %v7875 = vadd.f32 %v7836, %v7862
  %v7876 = vadd.f32 %v7837, %v7862
  %v7877 = vadd.f32 %v7838, %v7862
  %v7878 = vadd.f32 %v7839, %v7862
  %v7879 = vadd.f32 %v7840, %v7862
  %v7880 = vadd.f32 %v7841, %v7862
  %v7881 = vadd.f32 %v7842, %v7862
  %v7882 = vadd.f32 %v7843, %v7862
  %v7883 = vadd.f32 %v7844, %v7862
  %v7884 = vadd.f32 %v7845, %v7862
  %v7885 = vadd.f32 %v7846, %v7862
  %v7886 = vadd.f32 %v7847, %v7862
  %v7887 = vadd.f32 %v7848, %v7862
  %v7888 = vadd.f32 %v7849, %v7862
  %v7889 = vadd.f32 %v7850, %v7862
  %v7890 = vadd.f32 %v7851, %v7862
  %v7891 = vadd.f32 %v7852, %v7862
  %v7892 = vadd.f32 %v7853, %v7862
  %v7893 = vadd.f32 %v7854, %v7862
  %v7894 = vadd.f32 %v7855, %v7862
  %v7895 = vadd.f32 %v7856, %v7862
  %7896 = vst.msk [vmem:[%s16] sm:$0xff] %vm115, %v7864
  %7897 = vst.msk [vmem:[%s16 + $0x8] sm:$0xff] %vm115, %v7865
  %7898 = vst.msk [vmem:[%s16 + $0x10] sm:$0xff] %vm115, %v7866
  %7899 = vst.msk [vmem:[%s16 + $0x18] sm:$0xff] %vm115, %v7867
  %7900 = vst.msk [vmem:[%s16 + $0x20] sm:$0xff] %vm115, %v7868
  %7901 = vst.msk [vmem:[%s16 + $0x28] sm:$0xff] %vm115, %v7869
  %7902 = vst.msk [vmem:[%s16 + $0x30] sm:$0xff] %vm115, %v7870
  %7903 = vst.msk [vmem:[%s16 + $0x38] sm:$0xff] %vm115, %v7871
  %7904 = vst.msk [vmem:[%s16 + $0x40] sm:$0xff] %vm115, %v7872
  %7905 = vst.msk [vmem:[%s16 + $0x48] sm:$0xff] %vm115, %v7873
  %7906 = vst.msk [vmem:[%s16 + $0x50] sm:$0xff] %vm115, %v7874
  %7907 = vst.msk [vmem:[%s16 + $0x58] sm:$0xff] %vm115, %v7875
  %7908 = vst.msk [vmem:[%s16 + $0x60] sm:$0xff] %vm115, %v7876
  %7909 = vst.msk [vmem:[%s16 + $0x68] sm:$0xff] %vm115, %v7877
  %7910 = vst.msk [vmem:[%s16 + $0x70] sm:$0xff] %vm115, %v7878
  %7911 = vst.msk [vmem:[%s16 + $0x78] sm:$0xff] %vm115, %v7879
  %7912 = vst.msk [vmem:[%s16 + $0x80] sm:$0xff] %vm115, %v7880
  %7913 = vst.msk [vmem:[%s16 + $0x88] sm:$0xff] %vm115, %v7881
  %7914 = vst.msk [vmem:[%s16 + $0x90] sm:$0xff] %vm115, %v7882
  %7915 = vst.msk [vmem:[%s16 + $0x98] sm:$0xff] %vm115, %v7883
  %7916 = vst.msk [vmem:[%s16 + $0xa0] sm:$0xff] %vm115, %v7884
  %7917 = vst.msk [vmem:[%s16 + $0xa8] sm:$0xff] %vm115, %v7885
  %7918 = vst.msk [vmem:[%s16 + $0xb0] sm:$0xff] %vm115, %v7886
  %7919 = vst.msk [vmem:[%s16 + $0xb8] sm:$0xff] %vm115, %v7887
  %7920 = vst.msk [vmem:[%s16 + $0xc0] sm:$0xff] %vm115, %v7888
  %7921 = vst.msk [vmem:[%s16 + $0xc8] sm:$0xff] %vm115, %v7889
  %7922 = vst.msk [vmem:[%s16 + $0xd0] sm:$0xff] %vm115, %v7890
  %7923 = vst.msk [vmem:[%s16 + $0xd8] sm:$0xff] %vm115, %v7891
  %7924 = vst.msk [vmem:[%s16 + $0xe0] sm:$0xff] %vm115, %v7892
  %7925 = vst.msk [vmem:[%s16 + $0xe8] sm:$0xff] %vm115, %v7893
  %7926 = vst.msk [vmem:[%s16 + $0xf0] sm:$0xff] %vm115, %v7894
  %7927 = vst.msk [vmem:[%s16 + $0xf8] sm:$0xff] %vm115, %v7895
  // Predicated region
  $region66: #{adapter_transformer_encoder_layer.1} parent=0 // pred_check
    _
  $region67: #{adapter_transformer_encoder_layer.1} parent=0 // pred_check_branch
    %7929 = sbr.rel (0) target = $region69
  $region68: #{adapter_transformer_encoder_layer.1} parent=0 // pred_region
    _
  $region69: #{adapter_transformer_encoder_layer.1} parent=0 // pred_fallthru
    _
  // Predicated region
  $region70: #{adapter_transformer_encoder_layer.1} parent=0 // pred_check
    _
  $region71: #{adapter_transformer_encoder_layer.1} parent=0 // pred_check_branch
    %7931 = sbr.rel (0) target = $region73
  $region72: #{adapter_transformer_encoder_layer.1} parent=0 // pred_region
    _
  $region73: #{adapter_transformer_encoder_layer.1} parent=0 // pred_fallthru
    _

</llo_original>
